<compile_context>
chip_gen: v7x
topology: tpu7x:2x2x1
jax: 0.10.0
libtpu: 0.0.40
codegen_flags: <defaults>
</compile_context>

<pallas_src>
import math

import jax
import jax.numpy as jnp
from jax import lax
from jax.experimental import pallas as pl
from jax.experimental.pallas import tpu as pltpu


def _gelu(x):
    # tanh-approximate GELU: the transcendental goes to the EUP slot instead of
    # a long VALU erf polynomial (PyTorch nn.GELU() is the exact-erf variant;
    # max abs deviation of the tanh form is ~1e-3).
    c = 0.7978845608028654  # sqrt(2/pi)
    return 0.5 * x * (1.0 + jnp.tanh(c * (x + 0.044715 * x * x * x)))


def _layernorm(x, g, b, inv_n, eps=1e-5):
    mu = jnp.sum(x, axis=-1, keepdims=True) * inv_n
    xc = x - mu
    var = jnp.sum(xc * xc, axis=-1, keepdims=True) * inv_n
    return xc * lax.rsqrt(var + eps) * g + b


def mixer_kernel(xc_ref, pe_ref, cw_ref,
                 tw1_ref, tb1_ref, tw2_ref, tb2_ref,
                 ln2g_ref, ln2b_ref,
                 cw1_ref, cb1_ref, cw2_ref, cb2_ref,
                 hlng_ref, hlnb_ref, hw_ref, hb_ref,
                 out_ref):
    f32 = jnp.float32
    bf16 = jnp.bfloat16
    TB, L, C3 = xc_ref.shape
    nb = tw1_ref.shape[0]
    H = cw_ref.shape[1]
    inv_L = 1.0 / L
    inv_H = 1.0 / H

    # --- TokenEmbedding: Conv1d(k=3, padding='same', padding_mode='circular')
    # fused into a single K=3*C_in bf16 matmul on the flattened [TB*L, 3C]
    # slab.  The circular shifts were built once in the wrapper; conv bias +
    # positional embedding are pre-folded into pe_ref.
    xc = xc_ref[...].reshape(TB * L, C3)                                  # bf16
    h = jnp.dot(xc, cw_ref[...], preferred_element_type=f32) + pe_ref[...]  # (TB*L, H) f32

    for i in range(nb):
        # NOTE: the reference MixerBlock computes layer_norm_1(x) and then
        # immediately overwrites it (y = x.permute(0,2,1)), so the LN1 result
        # is dead code; faithfully, token mixing reads the raw residual stream.
        w1b = jnp.broadcast_to(tw1_ref[i], (TB,) + tw1_ref.shape[1:])     # (TB, tm, L) bf16
        w2b = jnp.broadcast_to(tw2_ref[i], (TB,) + tw2_ref.shape[1:])     # (TB, L, tm) bf16
        h3 = h.astype(bf16).reshape(TB, L, H)
        u = jnp.einsum("btl,blh->bth", w1b, h3, preferred_element_type=f32)
        u = _gelu(u + tb1_ref[i][None])                                   # (TB, tm, H) f32
        z = jnp.einsum("blt,bth->blh", w2b, u.astype(bf16),
                       preferred_element_type=f32)
        z = z + tb2_ref[i][None]                                          # (TB, L, H) f32
        h = h + z.reshape(TB * L, H)

        # Channel-mixing MLP with pre-LayerNorm on the whole [TB*L, H] slab.
        yn = _layernorm(h, ln2g_ref[i], ln2b_ref[i], inv_H)
        c = _gelu(jnp.dot(yn.astype(bf16), cw1_ref[i],
                          preferred_element_type=f32) + cb1_ref[i])
        h = h + (jnp.dot(c.astype(bf16), cw2_ref[i],
                         preferred_element_type=f32) + cb2_ref[i])

    # --- Head: LayerNorm -> per-sample mean over tokens -> one batched Linear.
    hn = _layernorm(h, hlng_ref[...], hlnb_ref[...], inv_H)
    pooled = jnp.sum(hn.reshape(TB, L, H), axis=1) * inv_L                # (TB, H) f32
    logits = (jnp.dot(pooled.astype(bf16), hw_ref[...],
                      preferred_element_type=f32) + hb_ref[...])          # (TB, 128)
    out_ref[0] = logits


def make_params(key, *, L, c_in, hidden, tm, cm, nb, num_class):
    ks = jax.random.split(key, 12)
    f32, bf16 = jnp.float32, jnp.bfloat16

    def nrm(k, shape, scale, dtype=jnp.float32):
        return (scale * jax.random.normal(k, shape)).astype(dtype)

    fan_in_conv = c_in * 3
    conv_std = math.sqrt(2.0 / (1.0 + 0.01 ** 2) / fan_in_conv)  # kaiming fan_in / leaky_relu

    params = dict(
        # Fused circular-conv weight: conv_w[k*c_in + c, d] == torch W[d, c, k],
        # matching the wrapper's concat order [x[l-1], x[l], x[l+1]].
        conv_w=nrm(ks[0], (3 * c_in, hidden), conv_std, bf16),
        conv_b=nrm(ks[1], (1, hidden), 0.05),
        # token MLP weights kept in PyTorch [out_features, in_features] layout
        tok_w1=nrm(ks[2], (nb, tm, L), 1.0 / math.sqrt(L), bf16),
        tok_b1=nrm(ks[3], (nb, tm, 1), 0.02),        # per-output-feature, NOT pre-broadcast
        tok_w2=nrm(ks[4], (nb, L, tm), 1.0 / math.sqrt(tm), bf16),
        tok_b2=nrm(ks[5], (nb, L, 1), 0.02),
        ln2_g=jnp.ones((nb, 1, hidden), f32),
        ln2_b=jnp.zeros((nb, 1, hidden), f32),
        # channel MLP weights stored transposed ([in, out]) for x @ W
        ch_w1=nrm(ks[6], (nb, hidden, cm), 1.0 / math.sqrt(hidden), bf16),
        ch_b1=nrm(ks[7], (nb, 1, cm), 0.02),
        ch_w2=nrm(ks[8], (nb, cm, hidden), 1.0 / math.sqrt(cm), bf16),
        ch_b2=nrm(ks[9], (nb, 1, hidden), 0.02),
        hln_g=jnp.ones((1, hidden), f32),
        hln_b=jnp.zeros((1, hidden), f32),
        head_w=nrm(ks[10], (hidden, num_class), 1.0 / math.sqrt(hidden), bf16),
        head_b=nrm(ks[11], (1, num_class), 0.02),
    )
    # PositionalEmbedding buffer pe[:L]  (sin on even cols, cos on odd cols).
    pos = jnp.arange(L, dtype=f32)[:, None]
    div = jnp.exp(jnp.arange(0, hidden, 2, dtype=f32)
                  * (-math.log(10000.0) / hidden))
    pe = jnp.zeros((L, hidden), f32)
    pe = pe.at[:, 0::2].set(jnp.sin(pos * div))
    pe = pe.at[:, 1::2].set(jnp.cos(pos * div))
    params["pe"] = pe
    # layer_norm_1 params exist in the PyTorch module but its output is
    # discarded in MixerBlock.forward, so they are not materialized here.
    # NOTE: production configs should pick hidden/cm as multiples of 128 and L
    # a multiple of 8 for full lane/sublane fill (config-level, not kernel).
    return params


def _choose_tb(batch, seq_len, *, min_steps=1, max_rows=512):
    """Samples per grid step.  Default: one fat step (v5e/v6e — single
    TensorCore, fewer steps amortize per-step overhead and fill the MXU M dim),
    capped so the per-step activation slab stays ~max_rows token rows.  Pass
    min_steps=2 on v7x so the 'parallel' batch axis can shard across both
    TensorCores of the megacore."""
    tb = max(1, min(batch, max(1, max_rows // max(seq_len, 1))))
    if tb >= 8:
        tb -= tb % 8          # multiples of 8 -> full unmasked (8,128) output stores
    while min_steps > 1 and tb > 1 and -(-batch // tb) < min_steps:
        tb = max(1, tb // 2)
    return tb


def mlp_mixer_forward(x, params, *, batch_block=None, min_steps=1,
                      single_buffer_weights=True):
    B, L, c_in = x.shape
    num_class = params["head_w"].shape[-1]
    nc_pad = ((num_class + 127) // 128) * 128     # lane-dense, unmasked output stores

    TB = (_choose_tb(B, L, min_steps=min_steps)
          if batch_block is None else batch_block)
    n_steps = -(-B // TB)
    Bp = n_steps * TB
    xp = jnp.pad(x, ((0, Bp - B), (0, 0), (0, 0))) if Bp != B else x

    # One-time layout plumbing (trace-time XLA ops, not per-grid-step work):
    #  * circular-shifted 3-tap slab for the fused conv matmul (bf16 operand),
    #  * conv bias folded into the batch-tiled positional embedding,
    #  * head weight/bias zero-padded to a lane-dense 128-wide output.
    xc = jnp.concatenate(
        [jnp.roll(xp, 1, axis=1), xp, jnp.roll(xp, -1, axis=1)],
        axis=-1).astype(jnp.bfloat16)                                     # (Bp, L, 3C)
    pe_tiled = (jnp.tile(params["pe"], (TB, 1)) + params["conv_b"]).astype(jnp.float32)
    head_w = jnp.pad(params["head_w"], ((0, 0), (0, nc_pad - num_class)))  # (H, 128) bf16
    head_b = jnp.pad(params["head_b"], ((0, 0), (0, nc_pad - num_class)))  # (1, 128) f32

    args = [pe_tiled, params["conv_w"],
            params["tok_w1"], params["tok_b1"], params["tok_w2"], params["tok_b2"],
            params["ln2_g"], params["ln2_b"],
            params["ch_w1"], params["ch_b1"], params["ch_w2"], params["ch_b2"],
            params["hln_g"], params["hln_b"], head_w, head_b]

    def run(weight_mode):
        def full_spec(a):
            nd = a.ndim
            return pl.BlockSpec(a.shape, lambda b, _nd=nd: (0,) * _nd,
                                pipeline_mode=weight_mode)

        in_specs = [pl.BlockSpec((TB, L, 3 * c_in), lambda b: (b, 0, 0))]
        in_specs += [full_spec(a) for a in args]

        return pl.pallas_call(
            mixer_kernel,
            out_shape=jax.ShapeDtypeStruct((n_steps, TB, nc_pad), jnp.float32),
            grid=(n_steps,),
            in_specs=in_specs,
            out_specs=pl.BlockSpec((1, TB, nc_pad), lambda b: (b, 0, 0)),
            compiler_params=pltpu.CompilerParams(
                dimension_semantics=("parallel",),
                vmem_limit_bytes=32 * 1024 * 1024),
        )(xc, *args)

    if single_buffer_weights:
        try:
            # Weights never change across the batch grid -> single-buffered
            # (halves their resident VMEM footprint vs default double-buffer).
            out = run(pl.Buffered(1))
        except Exception:
            out = run(None)   # fallback if this JAX build rejects Buffered(1)
    else:
        out = run(None)
    return out.reshape(Bp, nc_pad)[:B, :num_class]


def mlp_mixer_reference(x, params):
    """Pure-JAX forward (no Pallas) with the same bf16-matmul / f32-accumulate
    numerics, used to validate the kernel."""
    f32, bf16 = jnp.float32, jnp.bfloat16
    hidden = params["conv_w"].shape[1]
    nb = params["tok_w1"].shape[0]
    inv_h = 1.0 / hidden
    xc = jnp.concatenate(
        [jnp.roll(x, 1, axis=1), x, jnp.roll(x, -1, axis=1)], axis=-1).astype(bf16)
    h = (jnp.einsum("blc,ch->blh", xc, params["conv_w"], preferred_element_type=f32)
         + params["conv_b"] + params["pe"])
    for i in range(nb):
        u = _gelu(jnp.einsum("tl,blh->bth", params["tok_w1"][i], h.astype(bf16),
                             preferred_element_type=f32) + params["tok_b1"][i])
        z = jnp.einsum("lt,bth->blh", params["tok_w2"][i], u.astype(bf16),
                       preferred_element_type=f32) + params["tok_b2"][i]
        h = h + z
        yn = _layernorm(h, params["ln2_g"][i], params["ln2_b"][i], inv_h)
        c = _gelu(jnp.einsum("blh,hc->blc", yn.astype(bf16), params["ch_w1"][i],
                             preferred_element_type=f32) + params["ch_b1"][i])
        h = h + (jnp.einsum("blc,ch->blh", c.astype(bf16), params["ch_w2"][i],
                            preferred_element_type=f32) + params["ch_b2"][i])
    hn = _layernorm(h, params["hln_g"], params["hln_b"], inv_h)
    pooled = jnp.mean(hn, axis=1)                                         # (B, H)
    return (jnp.dot(pooled.astype(bf16), params["head_w"],
                    preferred_element_type=f32) + params["head_b"])


if __name__ == "__main__":
    # MlpMixer(token_dim=8, c_in=4, hidden_dim=32, mlp_token_dim=16,
    #          mlp_channel_dim=64, num_block=2, num_class=8), batch 8.
    B, L, C_IN = 8, 8, 4
    HIDDEN, TOK_MLP, CH_MLP = 32, 16, 64
    NUM_BLOCK, NUM_CLASS = 2, 8

    key = jax.random.PRNGKey(0)
    kx, kp = jax.random.split(key)
    x = jax.random.normal(kx, (B, L, C_IN), dtype=jnp.float32)
    params = make_params(kp, L=L, c_in=C_IN, hidden=HIDDEN, tm=TOK_MLP,
                         cm=CH_MLP, nb=NUM_BLOCK, num_class=NUM_CLASS)

    # Default: one fat grid step, TB=8 (full (8,128) output tile).
    out = mlp_mixer_forward(x, params)
    jax.block_until_ready(out)
    assert out.shape == (B, NUM_CLASS), out.shape

    # Correctness check against a pure-JAX implementation with matching
    # bf16-matmul / f32-accumulate numerics.
    ref = mlp_mixer_reference(x, params)
    max_err = float(jnp.max(jnp.abs(out - ref)))
    assert max_err < 2e-2, f"kernel vs pure-JAX reference mismatch: {max_err}"

    # Exercise the multi-step 'parallel' batch grid (v7x megacore path) and
    # the batch index_map machinery.
    out2 = mlp_mixer_forward(x, params, batch_block=4)   # grid=(2,), TB=4
    jax.block_until_ready(out2)
    max_err2 = float(jnp.max(jnp.abs(out2 - ref)))
    assert max_err2 < 2e-2, f"multi-step kernel mismatch: {max_err2}"

    print("KERNEL_OK")
</pallas_src>

<mosaic_0001>
module attributes {stable_mosaic.version = 11 : i64} {
  func.func @mixer_kernel(%arg0: i32, %arg1: memref<8x8x12xbf16, #tpu.memory_space<vmem>>, %arg2: memref<64x32xf32, #tpu.memory_space<vmem>>, %arg3: memref<12x32xbf16, #tpu.memory_space<vmem>>, %arg4: memref<2x16x8xbf16, #tpu.memory_space<vmem>>, %arg5: memref<2x16x1xf32, #tpu.memory_space<vmem>>, %arg6: memref<2x8x16xbf16, #tpu.memory_space<vmem>>, %arg7: memref<2x8x1xf32, #tpu.memory_space<vmem>>, %arg8: memref<2x1x32xf32, #tpu.memory_space<vmem>>, %arg9: memref<2x1x32xf32, #tpu.memory_space<vmem>>, %arg10: memref<2x32x64xbf16, #tpu.memory_space<vmem>>, %arg11: memref<2x1x64xf32, #tpu.memory_space<vmem>>, %arg12: memref<2x64x32xbf16, #tpu.memory_space<vmem>>, %arg13: memref<2x1x32xf32, #tpu.memory_space<vmem>>, %arg14: memref<1x32xf32, #tpu.memory_space<vmem>>, %arg15: memref<1x32xf32, #tpu.memory_space<vmem>>, %arg16: memref<32x128xbf16, #tpu.memory_space<vmem>>, %arg17: memref<1x128xf32, #tpu.memory_space<vmem>>, %arg18: memref<1x8x128xf32, #tpu.memory_space<vmem>>) attributes {dimension_semantics = [#tpu.dimension_semantics<parallel>], iteration_bounds = array<i64: 1>, scalar_prefetch = 0 : i64, scratch_operands = 0 : i64, tpu.core_type = #tpu.core_type<tc>, window_params = [{transform_indices = @transform_0, window_bounds = array<i64: 8, 8, 12>}, {pipeline_mode = #tpu.pipeline_mode<synchronous>, transform_indices = @transform_1, window_bounds = array<i64: 64, 32>}, {pipeline_mode = #tpu.pipeline_mode<synchronous>, transform_indices = @transform_2, window_bounds = array<i64: 12, 32>}, {pipeline_mode = #tpu.pipeline_mode<synchronous>, transform_indices = @transform_3, window_bounds = array<i64: 2, 16, 8>}, {pipeline_mode = #tpu.pipeline_mode<synchronous>, transform_indices = @transform_4, window_bounds = array<i64: 2, 16, 1>}, {pipeline_mode = #tpu.pipeline_mode<synchronous>, transform_indices = @transform_5, window_bounds = array<i64: 2, 8, 16>}, {pipeline_mode = #tpu.pipeline_mode<synchronous>, transform_indices = @transform_6, window_bounds = array<i64: 2, 8, 1>}, {pipeline_mode = #tpu.pipeline_mode<synchronous>, transform_indices = @transform_7, window_bounds = array<i64: 2, 1, 32>}, {pipeline_mode = #tpu.pipeline_mode<synchronous>, transform_indices = @transform_8, window_bounds = array<i64: 2, 1, 32>}, {pipeline_mode = #tpu.pipeline_mode<synchronous>, transform_indices = @transform_9, window_bounds = array<i64: 2, 32, 64>}, {pipeline_mode = #tpu.pipeline_mode<synchronous>, transform_indices = @transform_10, window_bounds = array<i64: 2, 1, 64>}, {pipeline_mode = #tpu.pipeline_mode<synchronous>, transform_indices = @transform_11, window_bounds = array<i64: 2, 64, 32>}, {pipeline_mode = #tpu.pipeline_mode<synchronous>, transform_indices = @transform_12, window_bounds = array<i64: 2, 1, 32>}, {pipeline_mode = #tpu.pipeline_mode<synchronous>, transform_indices = @transform_13, window_bounds = array<i64: 1, 32>}, {pipeline_mode = #tpu.pipeline_mode<synchronous>, transform_indices = @transform_14, window_bounds = array<i64: 1, 32>}, {pipeline_mode = #tpu.pipeline_mode<synchronous>, transform_indices = @transform_15, window_bounds = array<i64: 32, 128>}, {pipeline_mode = #tpu.pipeline_mode<synchronous>, transform_indices = @transform_16, window_bounds = array<i64: 1, 128>}, {transform_indices = @transform_17, window_bounds = array<i64: 1, 8, 128>}]} {
    %c0 = arith.constant 0 : index
    %c0_0 = arith.constant 0 : index
    %c0_1 = arith.constant 0 : index
    %0 = vector.load %arg1[%c0, %c0_0, %c0_1] : memref<8x8x12xbf16, #tpu.memory_space<vmem>>, vector<8x8x12xbf16>
    %1 = vector.shape_cast %0 : vector<8x8x12xbf16> to vector<64x12xbf16>
    %c0_2 = arith.constant 0 : index
    %c0_3 = arith.constant 0 : index
    %2 = vector.load %arg3[%c0_2, %c0_3] : memref<12x32xbf16, #tpu.memory_space<vmem>>, vector<12x32xbf16>
    %cst = arith.constant dense<0.000000e+00> : vector<64x32xf32>
    %3 = tpu.matmul %1, %2, %cst {dimension_numbers = #tpu.dot_dimension_numbers<[1], [0], [0], [1], [0, 0, 1, 1], [], []>} : vector<64x12xbf16>, vector<12x32xbf16>, vector<64x32xf32> -> vector<64x32xf32>
    %c0_4 = arith.constant 0 : index
    %c0_5 = arith.constant 0 : index
    %4 = vector.load %arg2[%c0_4, %c0_5] : memref<64x32xf32, #tpu.memory_space<vmem>>, vector<64x32xf32>
    %5 = arith.addf %3, %4 : vector<64x32xf32>
    %c0_6 = arith.constant 0 : index
    %c0_7 = arith.constant 0 : index
    %c0_8 = arith.constant 0 : index
    %6 = vector.load %arg4[%c0_6, %c0_7, %c0_8] : memref<2x16x8xbf16, #tpu.memory_space<vmem>>, vector<1x16x8xbf16>
    %7 = vector.shape_cast %6 : vector<1x16x8xbf16> to vector<16x8xbf16>
    %8 = vector.shape_cast %7 : vector<16x8xbf16> to vector<1x16x8xbf16>
    %9 = vector.broadcast %8 : vector<1x16x8xbf16> to vector<8x16x8xbf16>
    %c0_9 = arith.constant 0 : index
    %c0_10 = arith.constant 0 : index
    %c0_11 = arith.constant 0 : index
    %10 = vector.load %arg6[%c0_9, %c0_10, %c0_11] : memref<2x8x16xbf16, #tpu.memory_space<vmem>>, vector<1x8x16xbf16>
    %11 = vector.shape_cast %10 : vector<1x8x16xbf16> to vector<8x16xbf16>
    %12 = vector.shape_cast %11 : vector<8x16xbf16> to vector<1x8x16xbf16>
    %13 = vector.broadcast %12 : vector<1x8x16xbf16> to vector<8x8x16xbf16>
    %14 = arith.truncf %5 : vector<64x32xf32> to vector<64x32xbf16>
    %15 = vector.shape_cast %14 : vector<64x32xbf16> to vector<8x8x32xbf16>
    "tpu.trace_start"() <{level = 10 : i32, message = "btl,blh->bth"}> : () -> ()
    %cst_12 = arith.constant dense<0.000000e+00> : vector<8x16x32xf32>
    %16 = tpu.matmul %9, %15, %cst_12 {dimension_numbers = #tpu.dot_dimension_numbers<[2], [1], [1], [2], [0, 0, 0, 1, 1, 2], [0], [0]>} : vector<8x16x8xbf16>, vector<8x8x32xbf16>, vector<8x16x32xf32> -> vector<8x16x32xf32>
    "tpu.trace_stop"() : () -> ()
    %c0_13 = arith.constant 0 : index
    %c0_14 = arith.constant 0 : index
    %c0_15 = arith.constant 0 : index
    %17 = vector.load %arg5[%c0_13, %c0_14, %c0_15] : memref<2x16x1xf32, #tpu.memory_space<vmem>>, vector<1x16x1xf32>
    %18 = vector.shape_cast %17 : vector<1x16x1xf32> to vector<16x1xf32>
    %19 = vector.shape_cast %18 : vector<16x1xf32> to vector<1x16x1xf32>
    %20 = vector.broadcast %19 : vector<1x16x1xf32> to vector<8x16x32xf32>
    %21 = arith.addf %16, %20 : vector<8x16x32xf32>
    %cst_16 = arith.constant 5.000000e-01 : f32
    %22 = vector.broadcast %cst_16 : f32 to vector<8x16x32xf32>
    %23 = arith.mulf %22, %21 : vector<8x16x32xf32>
    %cst_17 = arith.constant 4.471500e-02 : f32
    %24 = vector.broadcast %cst_17 : f32 to vector<8x16x32xf32>
    %25 = arith.mulf %24, %21 : vector<8x16x32xf32>
    %26 = arith.mulf %25, %21 : vector<8x16x32xf32>
    %27 = arith.mulf %26, %21 : vector<8x16x32xf32>
    %28 = arith.addf %21, %27 : vector<8x16x32xf32>
    %cst_18 = arith.constant 0.797884583 : f32
    %29 = vector.broadcast %cst_18 : f32 to vector<8x16x32xf32>
    %30 = arith.mulf %29, %28 : vector<8x16x32xf32>
    %31 = math.tanh %30 : vector<8x16x32xf32>
    %cst_19 = arith.constant 1.000000e+00 : f32
    %32 = vector.broadcast %cst_19 : f32 to vector<8x16x32xf32>
    %33 = arith.addf %32, %31 : vector<8x16x32xf32>
    %34 = arith.mulf %23, %33 : vector<8x16x32xf32>
    %35 = arith.truncf %34 : vector<8x16x32xf32> to vector<8x16x32xbf16>
    "tpu.trace_start"() <{level = 10 : i32, message = "blt,bth->blh"}> : () -> ()
    %cst_20 = arith.constant dense<0.000000e+00> : vector<8x8x32xf32>
    %36 = tpu.matmul %13, %35, %cst_20 {dimension_numbers = #tpu.dot_dimension_numbers<[2], [1], [1], [2], [0, 0, 0, 1, 1, 2], [0], [0]>} : vector<8x8x16xbf16>, vector<8x16x32xbf16>, vector<8x8x32xf32> -> vector<8x8x32xf32>
    "tpu.trace_stop"() : () -> ()
    %c0_21 = arith.constant 0 : index
    %c0_22 = arith.constant 0 : index
    %c0_23 = arith.constant 0 : index
    %37 = vector.load %arg7[%c0_21, %c0_22, %c0_23] : memref<2x8x1xf32, #tpu.memory_space<vmem>>, vector<1x8x1xf32>
    %38 = vector.shape_cast %37 : vector<1x8x1xf32> to vector<8x1xf32>
    %39 = vector.shape_cast %38 : vector<8x1xf32> to vector<1x8x1xf32>
    %40 = vector.broadcast %39 : vector<1x8x1xf32> to vector<8x8x32xf32>
    %41 = arith.addf %36, %40 : vector<8x8x32xf32>
    %42 = vector.shape_cast %41 : vector<8x8x32xf32> to vector<64x32xf32>
    %43 = arith.addf %5, %42 : vector<64x32xf32>
    %c0_24 = arith.constant 0 : index
    %c0_25 = arith.constant 0 : index
    %c0_26 = arith.constant 0 : index
    %44 = vector.load %arg8[%c0_24, %c0_25, %c0_26] : memref<2x1x32xf32, #tpu.memory_space<vmem>>, vector<1x1x32xf32>
    %45 = vector.shape_cast %44 : vector<1x1x32xf32> to vector<1x32xf32>
    %c0_27 = arith.constant 0 : index
    %c0_28 = arith.constant 0 : index
    %c0_29 = arith.constant 0 : index
    %46 = vector.load %arg9[%c0_27, %c0_28, %c0_29] : memref<2x1x32xf32, #tpu.memory_space<vmem>>, vector<1x1x32xf32>
    %47 = vector.shape_cast %46 : vector<1x1x32xf32> to vector<1x32xf32>
    %cst_30 = arith.constant dense<0.000000e+00> : vector<64xf32>
    %48 = vector.multi_reduction <add>, %43, %cst_30 [1] : vector<64x32xf32> to vector<64xf32>
    %49 = vector.shape_cast %48 : vector<64xf32> to vector<64x1xf32>
    %cst_31 = arith.constant 3.125000e-02 : f32
    %50 = vector.broadcast %cst_31 : f32 to vector<64x1xf32>
    %51 = arith.mulf %49, %50 : vector<64x1xf32>
    %52 = vector.broadcast %51 : vector<64x1xf32> to vector<64x32xf32>
    %53 = arith.subf %43, %52 : vector<64x32xf32>
    %54 = arith.mulf %53, %53 : vector<64x32xf32>
    %cst_32 = arith.constant dense<0.000000e+00> : vector<64xf32>
    %55 = vector.multi_reduction <add>, %54, %cst_32 [1] : vector<64x32xf32> to vector<64xf32>
    %56 = vector.shape_cast %55 : vector<64xf32> to vector<64x1xf32>
    %cst_33 = arith.constant 3.125000e-02 : f32
    %57 = vector.broadcast %cst_33 : f32 to vector<64x1xf32>
    %58 = arith.mulf %56, %57 : vector<64x1xf32>
    %cst_34 = arith.constant 9.99999974E-6 : f32
    %59 = vector.broadcast %cst_34 : f32 to vector<64x1xf32>
    %60 = arith.addf %58, %59 : vector<64x1xf32>
    %61 = math.rsqrt %60 : vector<64x1xf32>
    %62 = vector.broadcast %61 : vector<64x1xf32> to vector<64x32xf32>
    %63 = arith.mulf %53, %62 : vector<64x32xf32>
    %64 = vector.broadcast %45 : vector<1x32xf32> to vector<64x32xf32>
    %65 = arith.mulf %63, %64 : vector<64x32xf32>
    %66 = vector.broadcast %47 : vector<1x32xf32> to vector<64x32xf32>
    %67 = arith.addf %65, %66 : vector<64x32xf32>
    %68 = arith.truncf %67 : vector<64x32xf32> to vector<64x32xbf16>
    %c0_35 = arith.constant 0 : index
    %c0_36 = arith.constant 0 : index
    %c0_37 = arith.constant 0 : index
    %69 = vector.load %arg10[%c0_35, %c0_36, %c0_37] : memref<2x32x64xbf16, #tpu.memory_space<vmem>>, vector<1x32x64xbf16>
    %70 = vector.shape_cast %69 : vector<1x32x64xbf16> to vector<32x64xbf16>
    %cst_38 = arith.constant dense<0.000000e+00> : vector<64x64xf32>
    %71 = tpu.matmul %68, %70, %cst_38 {dimension_numbers = #tpu.dot_dimension_numbers<[1], [0], [0], [1], [0, 0, 1, 1], [], []>} : vector<64x32xbf16>, vector<32x64xbf16>, vector<64x64xf32> -> vector<64x64xf32>
    %c0_39 = arith.constant 0 : index
    %c0_40 = arith.constant 0 : index
    %c0_41 = arith.constant 0 : index
    %72 = vector.load %arg11[%c0_39, %c0_40, %c0_41] : memref<2x1x64xf32, #tpu.memory_space<vmem>>, vector<1x1x64xf32>
    %73 = vector.shape_cast %72 : vector<1x1x64xf32> to vector<1x64xf32>
    %74 = vector.broadcast %73 : vector<1x64xf32> to vector<64x64xf32>
    %75 = arith.addf %71, %74 : vector<64x64xf32>
    %cst_42 = arith.constant 5.000000e-01 : f32
    %76 = vector.broadcast %cst_42 : f32 to vector<64x64xf32>
    %77 = arith.mulf %76, %75 : vector<64x64xf32>
    %cst_43 = arith.constant 4.471500e-02 : f32
    %78 = vector.broadcast %cst_43 : f32 to vector<64x64xf32>
    %79 = arith.mulf %78, %75 : vector<64x64xf32>
    %80 = arith.mulf %79, %75 : vector<64x64xf32>
    %81 = arith.mulf %80, %75 : vector<64x64xf32>
    %82 = arith.addf %75, %81 : vector<64x64xf32>
    %cst_44 = arith.constant 0.797884583 : f32
    %83 = vector.broadcast %cst_44 : f32 to vector<64x64xf32>
    %84 = arith.mulf %83, %82 : vector<64x64xf32>
    %85 = math.tanh %84 : vector<64x64xf32>
    %cst_45 = arith.constant 1.000000e+00 : f32
    %86 = vector.broadcast %cst_45 : f32 to vector<64x64xf32>
    %87 = arith.addf %86, %85 : vector<64x64xf32>
    %88 = arith.mulf %77, %87 : vector<64x64xf32>
    %89 = arith.truncf %88 : vector<64x64xf32> to vector<64x64xbf16>
    %c0_46 = arith.constant 0 : index
    %c0_47 = arith.constant 0 : index
    %c0_48 = arith.constant 0 : index
    %90 = vector.load %arg12[%c0_46, %c0_47, %c0_48] : memref<2x64x32xbf16, #tpu.memory_space<vmem>>, vector<1x64x32xbf16>
    %91 = vector.shape_cast %90 : vector<1x64x32xbf16> to vector<64x32xbf16>
    %cst_49 = arith.constant dense<0.000000e+00> : vector<64x32xf32>
    %92 = tpu.matmul %89, %91, %cst_49 {dimension_numbers = #tpu.dot_dimension_numbers<[1], [0], [0], [1], [0, 0, 1, 1], [], []>} : vector<64x64xbf16>, vector<64x32xbf16>, vector<64x32xf32> -> vector<64x32xf32>
    %c0_50 = arith.constant 0 : index
    %c0_51 = arith.constant 0 : index
    %c0_52 = arith.constant 0 : index
    %93 = vector.load %arg13[%c0_50, %c0_51, %c0_52] : memref<2x1x32xf32, #tpu.memory_space<vmem>>, vector<1x1x32xf32>
    %94 = vector.shape_cast %93 : vector<1x1x32xf32> to vector<1x32xf32>
    %95 = vector.broadcast %94 : vector<1x32xf32> to vector<64x32xf32>
    %96 = arith.addf %92, %95 : vector<64x32xf32>
    %97 = arith.addf %43, %96 : vector<64x32xf32>
    %c1 = arith.constant 1 : index
    %c0_53 = arith.constant 0 : index
    %c0_54 = arith.constant 0 : index
    %98 = vector.load %arg4[%c1, %c0_53, %c0_54] : memref<2x16x8xbf16, #tpu.memory_space<vmem>>, vector<1x16x8xbf16>
    %99 = vector.shape_cast %98 : vector<1x16x8xbf16> to vector<16x8xbf16>
    %100 = vector.shape_cast %99 : vector<16x8xbf16> to vector<1x16x8xbf16>
    %101 = vector.broadcast %100 : vector<1x16x8xbf16> to vector<8x16x8xbf16>
    %c1_55 = arith.constant 1 : index
    %c0_56 = arith.constant 0 : index
    %c0_57 = arith.constant 0 : index
    %102 = vector.load %arg6[%c1_55, %c0_56, %c0_57] : memref<2x8x16xbf16, #tpu.memory_space<vmem>>, vector<1x8x16xbf16>
    %103 = vector.shape_cast %102 : vector<1x8x16xbf16> to vector<8x16xbf16>
    %104 = vector.shape_cast %103 : vector<8x16xbf16> to vector<1x8x16xbf16>
    %105 = vector.broadcast %104 : vector<1x8x16xbf16> to vector<8x8x16xbf16>
    %106 = arith.truncf %97 : vector<64x32xf32> to vector<64x32xbf16>
    %107 = vector.shape_cast %106 : vector<64x32xbf16> to vector<8x8x32xbf16>
    "tpu.trace_start"() <{level = 10 : i32, message = "btl,blh->bth"}> : () -> ()
    %cst_58 = arith.constant dense<0.000000e+00> : vector<8x16x32xf32>
    %108 = tpu.matmul %101, %107, %cst_58 {dimension_numbers = #tpu.dot_dimension_numbers<[2], [1], [1], [2], [0, 0, 0, 1, 1, 2], [0], [0]>} : vector<8x16x8xbf16>, vector<8x8x32xbf16>, vector<8x16x32xf32> -> vector<8x16x32xf32>
    "tpu.trace_stop"() : () -> ()
    %c1_59 = arith.constant 1 : index
    %c0_60 = arith.constant 0 : index
    %c0_61 = arith.constant 0 : index
    %109 = vector.load %arg5[%c1_59, %c0_60, %c0_61] : memref<2x16x1xf32, #tpu.memory_space<vmem>>, vector<1x16x1xf32>
    %110 = vector.shape_cast %109 : vector<1x16x1xf32> to vector<16x1xf32>
    %111 = vector.shape_cast %110 : vector<16x1xf32> to vector<1x16x1xf32>
    %112 = vector.broadcast %111 : vector<1x16x1xf32> to vector<8x16x32xf32>
    %113 = arith.addf %108, %112 : vector<8x16x32xf32>
    %cst_62 = arith.constant 5.000000e-01 : f32
    %114 = vector.broadcast %cst_62 : f32 to vector<8x16x32xf32>
    %115 = arith.mulf %114, %113 : vector<8x16x32xf32>
    %cst_63 = arith.constant 4.471500e-02 : f32
    %116 = vector.broadcast %cst_63 : f32 to vector<8x16x32xf32>
    %117 = arith.mulf %116, %113 : vector<8x16x32xf32>
    %118 = arith.mulf %117, %113 : vector<8x16x32xf32>
    %119 = arith.mulf %118, %113 : vector<8x16x32xf32>
    %120 = arith.addf %113, %119 : vector<8x16x32xf32>
    %cst_64 = arith.constant 0.797884583 : f32
    %121 = vector.broadcast %cst_64 : f32 to vector<8x16x32xf32>
    %122 = arith.mulf %121, %120 : vector<8x16x32xf32>
    %123 = math.tanh %122 : vector<8x16x32xf32>
    %cst_65 = arith.constant 1.000000e+00 : f32
    %124 = vector.broadcast %cst_65 : f32 to vector<8x16x32xf32>
    %125 = arith.addf %124, %123 : vector<8x16x32xf32>
    %126 = arith.mulf %115, %125 : vector<8x16x32xf32>
    %127 = arith.truncf %126 : vector<8x16x32xf32> to vector<8x16x32xbf16>
    "tpu.trace_start"() <{level = 10 : i32, message = "blt,bth->blh"}> : () -> ()
    %cst_66 = arith.constant dense<0.000000e+00> : vector<8x8x32xf32>
    %128 = tpu.matmul %105, %127, %cst_66 {dimension_numbers = #tpu.dot_dimension_numbers<[2], [1], [1], [2], [0, 0, 0, 1, 1, 2], [0], [0]>} : vector<8x8x16xbf16>, vector<8x16x32xbf16>, vector<8x8x32xf32> -> vector<8x8x32xf32>
    "tpu.trace_stop"() : () -> ()
    %c1_67 = arith.constant 1 : index
    %c0_68 = arith.constant 0 : index
    %c0_69 = arith.constant 0 : index
    %129 = vector.load %arg7[%c1_67, %c0_68, %c0_69] : memref<2x8x1xf32, #tpu.memory_space<vmem>>, vector<1x8x1xf32>
    %130 = vector.shape_cast %129 : vector<1x8x1xf32> to vector<8x1xf32>
    %131 = vector.shape_cast %130 : vector<8x1xf32> to vector<1x8x1xf32>
    %132 = vector.broadcast %131 : vector<1x8x1xf32> to vector<8x8x32xf32>
    %133 = arith.addf %128, %132 : vector<8x8x32xf32>
    %134 = vector.shape_cast %133 : vector<8x8x32xf32> to vector<64x32xf32>
    %135 = arith.addf %97, %134 : vector<64x32xf32>
    %c1_70 = arith.constant 1 : index
    %c0_71 = arith.constant 0 : index
    %c0_72 = arith.constant 0 : index
    %136 = vector.load %arg8[%c1_70, %c0_71, %c0_72] : memref<2x1x32xf32, #tpu.memory_space<vmem>>, vector<1x1x32xf32>
    %137 = vector.shape_cast %136 : vector<1x1x32xf32> to vector<1x32xf32>
    %c1_73 = arith.constant 1 : index
    %c0_74 = arith.constant 0 : index
    %c0_75 = arith.constant 0 : index
    %138 = vector.load %arg9[%c1_73, %c0_74, %c0_75] : memref<2x1x32xf32, #tpu.memory_space<vmem>>, vector<1x1x32xf32>
    %139 = vector.shape_cast %138 : vector<1x1x32xf32> to vector<1x32xf32>
    %cst_76 = arith.constant dense<0.000000e+00> : vector<64xf32>
    %140 = vector.multi_reduction <add>, %135, %cst_76 [1] : vector<64x32xf32> to vector<64xf32>
    %141 = vector.shape_cast %140 : vector<64xf32> to vector<64x1xf32>
    %cst_77 = arith.constant 3.125000e-02 : f32
    %142 = vector.broadcast %cst_77 : f32 to vector<64x1xf32>
    %143 = arith.mulf %141, %142 : vector<64x1xf32>
    %144 = vector.broadcast %143 : vector<64x1xf32> to vector<64x32xf32>
    %145 = arith.subf %135, %144 : vector<64x32xf32>
    %146 = arith.mulf %145, %145 : vector<64x32xf32>
    %cst_78 = arith.constant dense<0.000000e+00> : vector<64xf32>
    %147 = vector.multi_reduction <add>, %146, %cst_78 [1] : vector<64x32xf32> to vector<64xf32>
    %148 = vector.shape_cast %147 : vector<64xf32> to vector<64x1xf32>
    %cst_79 = arith.constant 3.125000e-02 : f32
    %149 = vector.broadcast %cst_79 : f32 to vector<64x1xf32>
    %150 = arith.mulf %148, %149 : vector<64x1xf32>
    %cst_80 = arith.constant 9.99999974E-6 : f32
    %151 = vector.broadcast %cst_80 : f32 to vector<64x1xf32>
    %152 = arith.addf %150, %151 : vector<64x1xf32>
    %153 = math.rsqrt %152 : vector<64x1xf32>
    %154 = vector.broadcast %153 : vector<64x1xf32> to vector<64x32xf32>
    %155 = arith.mulf %145, %154 : vector<64x32xf32>
    %156 = vector.broadcast %137 : vector<1x32xf32> to vector<64x32xf32>
    %157 = arith.mulf %155, %156 : vector<64x32xf32>
    %158 = vector.broadcast %139 : vector<1x32xf32> to vector<64x32xf32>
    %159 = arith.addf %157, %158 : vector<64x32xf32>
    %160 = arith.truncf %159 : vector<64x32xf32> to vector<64x32xbf16>
    %c1_81 = arith.constant 1 : index
    %c0_82 = arith.constant 0 : index
    %c0_83 = arith.constant 0 : index
    %161 = vector.load %arg10[%c1_81, %c0_82, %c0_83] : memref<2x32x64xbf16, #tpu.memory_space<vmem>>, vector<1x32x64xbf16>
    %162 = vector.shape_cast %161 : vector<1x32x64xbf16> to vector<32x64xbf16>
    %cst_84 = arith.constant dense<0.000000e+00> : vector<64x64xf32>
    %163 = tpu.matmul %160, %162, %cst_84 {dimension_numbers = #tpu.dot_dimension_numbers<[1], [0], [0], [1], [0, 0, 1, 1], [], []>} : vector<64x32xbf16>, vector<32x64xbf16>, vector<64x64xf32> -> vector<64x64xf32>
    %c1_85 = arith.constant 1 : index
    %c0_86 = arith.constant 0 : index
    %c0_87 = arith.constant 0 : index
    %164 = vector.load %arg11[%c1_85, %c0_86, %c0_87] : memref<2x1x64xf32, #tpu.memory_space<vmem>>, vector<1x1x64xf32>
    %165 = vector.shape_cast %164 : vector<1x1x64xf32> to vector<1x64xf32>
    %166 = vector.broadcast %165 : vector<1x64xf32> to vector<64x64xf32>
    %167 = arith.addf %163, %166 : vector<64x64xf32>
    %cst_88 = arith.constant 5.000000e-01 : f32
    %168 = vector.broadcast %cst_88 : f32 to vector<64x64xf32>
    %169 = arith.mulf %168, %167 : vector<64x64xf32>
    %cst_89 = arith.constant 4.471500e-02 : f32
    %170 = vector.broadcast %cst_89 : f32 to vector<64x64xf32>
    %171 = arith.mulf %170, %167 : vector<64x64xf32>
    %172 = arith.mulf %171, %167 : vector<64x64xf32>
    %173 = arith.mulf %172, %167 : vector<64x64xf32>
    %174 = arith.addf %167, %173 : vector<64x64xf32>
    %cst_90 = arith.constant 0.797884583 : f32
    %175 = vector.broadcast %cst_90 : f32 to vector<64x64xf32>
    %176 = arith.mulf %175, %174 : vector<64x64xf32>
    %177 = math.tanh %176 : vector<64x64xf32>
    %cst_91 = arith.constant 1.000000e+00 : f32
    %178 = vector.broadcast %cst_91 : f32 to vector<64x64xf32>
    %179 = arith.addf %178, %177 : vector<64x64xf32>
    %180 = arith.mulf %169, %179 : vector<64x64xf32>
    %181 = arith.truncf %180 : vector<64x64xf32> to vector<64x64xbf16>
    %c1_92 = arith.constant 1 : index
    %c0_93 = arith.constant 0 : index
    %c0_94 = arith.constant 0 : index
    %182 = vector.load %arg12[%c1_92, %c0_93, %c0_94] : memref<2x64x32xbf16, #tpu.memory_space<vmem>>, vector<1x64x32xbf16>
    %183 = vector.shape_cast %182 : vector<1x64x32xbf16> to vector<64x32xbf16>
    %cst_95 = arith.constant dense<0.000000e+00> : vector<64x32xf32>
    %184 = tpu.matmul %181, %183, %cst_95 {dimension_numbers = #tpu.dot_dimension_numbers<[1], [0], [0], [1], [0, 0, 1, 1], [], []>} : vector<64x64xbf16>, vector<64x32xbf16>, vector<64x32xf32> -> vector<64x32xf32>
    %c1_96 = arith.constant 1 : index
    %c0_97 = arith.constant 0 : index
    %c0_98 = arith.constant 0 : index
    %185 = vector.load %arg13[%c1_96, %c0_97, %c0_98] : memref<2x1x32xf32, #tpu.memory_space<vmem>>, vector<1x1x32xf32>
    %186 = vector.shape_cast %185 : vector<1x1x32xf32> to vector<1x32xf32>
    %187 = vector.broadcast %186 : vector<1x32xf32> to vector<64x32xf32>
    %188 = arith.addf %184, %187 : vector<64x32xf32>
    %189 = arith.addf %135, %188 : vector<64x32xf32>
    %c0_99 = arith.constant 0 : index
    %c0_100 = arith.constant 0 : index
    %190 = vector.load %arg14[%c0_99, %c0_100] : memref<1x32xf32, #tpu.memory_space<vmem>>, vector<1x32xf32>
    %c0_101 = arith.constant 0 : index
    %c0_102 = arith.constant 0 : index
    %191 = vector.load %arg15[%c0_101, %c0_102] : memref<1x32xf32, #tpu.memory_space<vmem>>, vector<1x32xf32>
    %cst_103 = arith.constant dense<0.000000e+00> : vector<64xf32>
    %192 = vector.multi_reduction <add>, %189, %cst_103 [1] : vector<64x32xf32> to vector<64xf32>
    %193 = vector.shape_cast %192 : vector<64xf32> to vector<64x1xf32>
    %cst_104 = arith.constant 3.125000e-02 : f32
    %194 = vector.broadcast %cst_104 : f32 to vector<64x1xf32>
    %195 = arith.mulf %193, %194 : vector<64x1xf32>
    %196 = vector.broadcast %195 : vector<64x1xf32> to vector<64x32xf32>
    %197 = arith.subf %189, %196 : vector<64x32xf32>
    %198 = arith.mulf %197, %197 : vector<64x32xf32>
    %cst_105 = arith.constant dense<0.000000e+00> : vector<64xf32>
    %199 = vector.multi_reduction <add>, %198, %cst_105 [1] : vector<64x32xf32> to vector<64xf32>
    %200 = vector.shape_cast %199 : vector<64xf32> to vector<64x1xf32>
    %cst_106 = arith.constant 3.125000e-02 : f32
    %201 = vector.broadcast %cst_106 : f32 to vector<64x1xf32>
    %202 = arith.mulf %200, %201 : vector<64x1xf32>
    %cst_107 = arith.constant 9.99999974E-6 : f32
    %203 = vector.broadcast %cst_107 : f32 to vector<64x1xf32>
    %204 = arith.addf %202, %203 : vector<64x1xf32>
    %205 = math.rsqrt %204 : vector<64x1xf32>
    %206 = vector.broadcast %205 : vector<64x1xf32> to vector<64x32xf32>
    %207 = arith.mulf %197, %206 : vector<64x32xf32>
    %208 = vector.broadcast %190 : vector<1x32xf32> to vector<64x32xf32>
    %209 = arith.mulf %207, %208 : vector<64x32xf32>
    %210 = vector.broadcast %191 : vector<1x32xf32> to vector<64x32xf32>
    %211 = arith.addf %209, %210 : vector<64x32xf32>
    %212 = vector.shape_cast %211 : vector<64x32xf32> to vector<8x8x32xf32>
    %cst_108 = arith.constant dense<0.000000e+00> : vector<8x32xf32>
    %213 = vector.multi_reduction <add>, %212, %cst_108 [1] : vector<8x8x32xf32> to vector<8x32xf32>
    %cst_109 = arith.constant 1.250000e-01 : f32
    %214 = vector.broadcast %cst_109 : f32 to vector<8x32xf32>
    %215 = arith.mulf %213, %214 : vector<8x32xf32>
    %216 = arith.truncf %215 : vector<8x32xf32> to vector<8x32xbf16>
    %c0_110 = arith.constant 0 : index
    %c0_111 = arith.constant 0 : index
    %217 = vector.load %arg16[%c0_110, %c0_111] : memref<32x128xbf16, #tpu.memory_space<vmem>>, vector<32x128xbf16>
    %cst_112 = arith.constant dense<0.000000e+00> : vector<8x128xf32>
    %218 = tpu.matmul %216, %217, %cst_112 {dimension_numbers = #tpu.dot_dimension_numbers<[1], [0], [0], [1], [0, 0, 1, 1], [], []>} : vector<8x32xbf16>, vector<32x128xbf16>, vector<8x128xf32> -> vector<8x128xf32>
    %c0_113 = arith.constant 0 : index
    %c0_114 = arith.constant 0 : index
    %219 = vector.load %arg17[%c0_113, %c0_114] : memref<1x128xf32, #tpu.memory_space<vmem>>, vector<1x128xf32>
    %220 = vector.broadcast %219 : vector<1x128xf32> to vector<8x128xf32>
    %221 = arith.addf %218, %220 : vector<8x128xf32>
    %c0_115 = arith.constant 0 : index
    %c0_116 = arith.constant 0 : index
    %c0_117 = arith.constant 0 : index
    %222 = vector.load %arg18[%c0_115, %c0_116, %c0_117] : memref<1x8x128xf32, #tpu.memory_space<vmem>>, vector<1x8x128xf32>
    %223 = vector.shape_cast %222 : vector<1x8x128xf32> to vector<8x128xf32>
    %224 = vector.shape_cast %221 : vector<8x128xf32> to vector<1x8x128xf32>
    tpu.vector_store %arg18[%c0_115, %c0_116, %c0_117], %224 {strides = array<i32>} : memref<1x8x128xf32, #tpu.memory_space<vmem>>, vector<1x8x128xf32>,
    return
  }
  func.func @transform_0(%arg0: i32) -> (i32, i32, i32) {
    %c0_i32 = arith.constant 0 : i32
    %c0_i32_0 = arith.constant 0 : i32
    %c0_i32_1 = arith.constant 0 : i32
    return %arg0, %c0_i32, %c0_i32_0 : i32, i32, i32
  }
  func.func @transform_1(%arg0: i32) -> (i32, i32) {
    %c0_i32 = arith.constant 0 : i32
    %c0_i32_0 = arith.constant 0 : i32
    %c0_i32_1 = arith.constant 0 : i32
    return %c0_i32, %c0_i32_0 : i32, i32
  }
  func.func @transform_2(%arg0: i32) -> (i32, i32) {
    %c0_i32 = arith.constant 0 : i32
    %c0_i32_0 = arith.constant 0 : i32
    %c0_i32_1 = arith.constant 0 : i32
    return %c0_i32, %c0_i32_0 : i32, i32
  }
  func.func @transform_3(%arg0: i32) -> (i32, i32, i32) {
    %c0_i32 = arith.constant 0 : i32
    %c0_i32_0 = arith.constant 0 : i32
    %c0_i32_1 = arith.constant 0 : i32
    %c0_i32_2 = arith.constant 0 : i32
    return %c0_i32, %c0_i32_0, %c0_i32_1 : i32, i32, i32
  }
  func.func @transform_4(%arg0: i32) -> (i32, i32, i32) {
    %c0_i32 = arith.constant 0 : i32
    %c0_i32_0 = arith.constant 0 : i32
    %c0_i32_1 = arith.constant 0 : i32
    %c0_i32_2 = arith.constant 0 : i32
    return %c0_i32, %c0_i32_0, %c0_i32_1 : i32, i32, i32
  }
  func.func @transform_5(%arg0: i32) -> (i32, i32, i32) {
    %c0_i32 = arith.constant 0 : i32
    %c0_i32_0 = arith.constant 0 : i32
    %c0_i32_1 = arith.constant 0 : i32
    %c0_i32_2 = arith.constant 0 : i32
    return %c0_i32, %c0_i32_0, %c0_i32_1 : i32, i32, i32
  }
  func.func @transform_6(%arg0: i32) -> (i32, i32, i32) {
    %c0_i32 = arith.constant 0 : i32
    %c0_i32_0 = arith.constant 0 : i32
    %c0_i32_1 = arith.constant 0 : i32
    %c0_i32_2 = arith.constant 0 : i32
    return %c0_i32, %c0_i32_0, %c0_i32_1 : i32, i32, i32
  }
  func.func @transform_7(%arg0: i32) -> (i32, i32, i32) {
    %c0_i32 = arith.constant 0 : i32
    %c0_i32_0 = arith.constant 0 : i32
    %c0_i32_1 = arith.constant 0 : i32
    %c0_i32_2 = arith.constant 0 : i32
    return %c0_i32, %c0_i32_0, %c0_i32_1 : i32, i32, i32
  }
  func.func @transform_8(%arg0: i32) -> (i32, i32, i32) {
    %c0_i32 = arith.constant 0 : i32
    %c0_i32_0 = arith.constant 0 : i32
    %c0_i32_1 = arith.constant 0 : i32
    %c0_i32_2 = arith.constant 0 : i32
    return %c0_i32, %c0_i32_0, %c0_i32_1 : i32, i32, i32
  }
  func.func @transform_9(%arg0: i32) -> (i32, i32, i32) {
    %c0_i32 = arith.constant 0 : i32
    %c0_i32_0 = arith.constant 0 : i32
    %c0_i32_1 = arith.constant 0 : i32
    %c0_i32_2 = arith.constant 0 : i32
    return %c0_i32, %c0_i32_0, %c0_i32_1 : i32, i32, i32
  }
  func.func @transform_10(%arg0: i32) -> (i32, i32, i32) {
    %c0_i32 = arith.constant 0 : i32
    %c0_i32_0 = arith.constant 0 : i32
    %c0_i32_1 = arith.constant 0 : i32
    %c0_i32_2 = arith.constant 0 : i32
    return %c0_i32, %c0_i32_0, %c0_i32_1 : i32, i32, i32
  }
  func.func @transform_11(%arg0: i32) -> (i32, i32, i32) {
    %c0_i32 = arith.constant 0 : i32
    %c0_i32_0 = arith.constant 0 : i32
    %c0_i32_1 = arith.constant 0 : i32
    %c0_i32_2 = arith.constant 0 : i32
    return %c0_i32, %c0_i32_0, %c0_i32_1 : i32, i32, i32
  }
  func.func @transform_12(%arg0: i32) -> (i32, i32, i32) {
    %c0_i32 = arith.constant 0 : i32
    %c0_i32_0 = arith.constant 0 : i32
    %c0_i32_1 = arith.constant 0 : i32
    %c0_i32_2 = arith.constant 0 : i32
    return %c0_i32, %c0_i32_0, %c0_i32_1 : i32, i32, i32
  }
  func.func @transform_13(%arg0: i32) -> (i32, i32) {
    %c0_i32 = arith.constant 0 : i32
    %c0_i32_0 = arith.constant 0 : i32
    %c0_i32_1 = arith.constant 0 : i32
    return %c0_i32, %c0_i32_0 : i32, i32
  }
  func.func @transform_14(%arg0: i32) -> (i32, i32) {
    %c0_i32 = arith.constant 0 : i32
    %c0_i32_0 = arith.constant 0 : i32
    %c0_i32_1 = arith.constant 0 : i32
    return %c0_i32, %c0_i32_0 : i32, i32
  }
  func.func @transform_15(%arg0: i32) -> (i32, i32) {
    %c0_i32 = arith.constant 0 : i32
    %c0_i32_0 = arith.constant 0 : i32
    %c0_i32_1 = arith.constant 0 : i32
    return %c0_i32, %c0_i32_0 : i32, i32
  }
  func.func @transform_16(%arg0: i32) -> (i32, i32) {
    %c0_i32 = arith.constant 0 : i32
    %c0_i32_0 = arith.constant 0 : i32
    %c0_i32_1 = arith.constant 0 : i32
    return %c0_i32, %c0_i32_0 : i32, i32
  }
  func.func @transform_17(%arg0: i32) -> (i32, i32, i32) {
    %c0_i32 = arith.constant 0 : i32
    %c0_i32_0 = arith.constant 0 : i32
    %c0_i32_1 = arith.constant 0 : i32
    return %arg0, %c0_i32, %c0_i32_0 : i32, i32, i32
  }
}

module attributes {stable_mosaic.version = 11 : i64} {
  func.func @mixer_kernel(%arg0: i32, %arg1: memref<8x8x12xbf16, #tpu.memory_space<vmem>>, %arg2: memref<64x32xf32, #tpu.memory_space<vmem>>, %arg3: memref<12x32xbf16, #tpu.memory_space<vmem>>, %arg4: memref<2x16x8xbf16, #tpu.memory_space<vmem>>, %arg5: memref<2x16x1xf32, #tpu.memory_space<vmem>>, %arg6: memref<2x8x16xbf16, #tpu.memory_space<vmem>>, %arg7: memref<2x8x1xf32, #tpu.memory_space<vmem>>, %arg8: memref<2x1x32xf32, #tpu.memory_space<vmem>>, %arg9: memref<2x1x32xf32, #tpu.memory_space<vmem>>, %arg10: memref<2x32x64xbf16, #tpu.memory_space<vmem>>, %arg11: memref<2x1x64xf32, #tpu.memory_space<vmem>>, %arg12: memref<2x64x32xbf16, #tpu.memory_space<vmem>>, %arg13: memref<2x1x32xf32, #tpu.memory_space<vmem>>, %arg14: memref<1x32xf32, #tpu.memory_space<vmem>>, %arg15: memref<1x32xf32, #tpu.memory_space<vmem>>, %arg16: memref<32x128xbf16, #tpu.memory_space<vmem>>, %arg17: memref<1x128xf32, #tpu.memory_space<vmem>>, %arg18: memref<1x8x128xf32, #tpu.memory_space<vmem>>) attributes {dimension_semantics = [#tpu.dimension_semantics<parallel>], iteration_bounds = array<i64: 1>, scalar_prefetch = 0 : i64, scratch_operands = 0 : i64, tpu.core_type = #tpu.core_type<tc>, window_params = [{transform_indices = @transform_0, window_bounds = array<i64: 8, 8, 12>}, {pipeline_mode = #tpu.pipeline_mode<synchronous>, transform_indices = @transform_1, window_bounds = array<i64: 64, 32>}, {pipeline_mode = #tpu.pipeline_mode<synchronous>, transform_indices = @transform_2, window_bounds = array<i64: 12, 32>}, {pipeline_mode = #tpu.pipeline_mode<synchronous>, transform_indices = @transform_3, window_bounds = array<i64: 2, 16, 8>}, {pipeline_mode = #tpu.pipeline_mode<synchronous>, transform_indices = @transform_4, window_bounds = array<i64: 2, 16, 1>}, {pipeline_mode = #tpu.pipeline_mode<synchronous>, transform_indices = @transform_5, window_bounds = array<i64: 2, 8, 16>}, {pipeline_mode = #tpu.pipeline_mode<synchronous>, transform_indices = @transform_6, window_bounds = array<i64: 2, 8, 1>}, {pipeline_mode = #tpu.pipeline_mode<synchronous>, transform_indices = @transform_7, window_bounds = array<i64: 2, 1, 32>}, {pipeline_mode = #tpu.pipeline_mode<synchronous>, transform_indices = @transform_8, window_bounds = array<i64: 2, 1, 32>}, {pipeline_mode = #tpu.pipeline_mode<synchronous>, transform_indices = @transform_9, window_bounds = array<i64: 2, 32, 64>}, {pipeline_mode = #tpu.pipeline_mode<synchronous>, transform_indices = @transform_10, window_bounds = array<i64: 2, 1, 64>}, {pipeline_mode = #tpu.pipeline_mode<synchronous>, transform_indices = @transform_11, window_bounds = array<i64: 2, 64, 32>}, {pipeline_mode = #tpu.pipeline_mode<synchronous>, transform_indices = @transform_12, window_bounds = array<i64: 2, 1, 32>}, {pipeline_mode = #tpu.pipeline_mode<synchronous>, transform_indices = @transform_13, window_bounds = array<i64: 1, 32>}, {pipeline_mode = #tpu.pipeline_mode<synchronous>, transform_indices = @transform_14, window_bounds = array<i64: 1, 32>}, {pipeline_mode = #tpu.pipeline_mode<synchronous>, transform_indices = @transform_15, window_bounds = array<i64: 32, 128>}, {pipeline_mode = #tpu.pipeline_mode<synchronous>, transform_indices = @transform_16, window_bounds = array<i64: 1, 128>}, {transform_indices = @transform_17, window_bounds = array<i64: 1, 8, 128>}]} {
    %c0 = arith.constant 0 : index
    %c0_0 = arith.constant 0 : index
    %c0_1 = arith.constant 0 : index
    %0 = vector.load %arg1[%c0, %c0_0, %c0_1] : memref<8x8x12xbf16, #tpu.memory_space<vmem>>, vector<8x8x12xbf16>
    %1 = vector.shape_cast %0 : vector<8x8x12xbf16> to vector<64x12xbf16>
    %c0_2 = arith.constant 0 : index
    %c0_3 = arith.constant 0 : index
    %2 = vector.load %arg3[%c0_2, %c0_3] : memref<12x32xbf16, #tpu.memory_space<vmem>>, vector<12x32xbf16>
    %cst = arith.constant dense<0.000000e+00> : vector<64x32xf32>
    %3 = tpu.matmul %1, %2, %cst {dimension_numbers = #tpu.dot_dimension_numbers<[1], [0], [0], [1], [0, 0, 1, 1], [], []>} : vector<64x12xbf16>, vector<12x32xbf16>, vector<64x32xf32> -> vector<64x32xf32>
    %c0_4 = arith.constant 0 : index
    %c0_5 = arith.constant 0 : index
    %4 = vector.load %arg2[%c0_4, %c0_5] : memref<64x32xf32, #tpu.memory_space<vmem>>, vector<64x32xf32>
    %5 = arith.addf %3, %4 : vector<64x32xf32>
    %c0_6 = arith.constant 0 : index
    %c0_7 = arith.constant 0 : index
    %c0_8 = arith.constant 0 : index
    %6 = vector.load %arg4[%c0_6, %c0_7, %c0_8] : memref<2x16x8xbf16, #tpu.memory_space<vmem>>, vector<1x16x8xbf16>
    %7 = vector.shape_cast %6 : vector<1x16x8xbf16> to vector<16x8xbf16>
    %8 = vector.shape_cast %7 : vector<16x8xbf16> to vector<1x16x8xbf16>
    %9 = vector.broadcast %8 : vector<1x16x8xbf16> to vector<8x16x8xbf16>
    %c0_9 = arith.constant 0 : index
    %c0_10 = arith.constant 0 : index
    %c0_11 = arith.constant 0 : index
    %10 = vector.load %arg6[%c0_9, %c0_10, %c0_11] : memref<2x8x16xbf16, #tpu.memory_space<vmem>>, vector<1x8x16xbf16>
    %11 = vector.shape_cast %10 : vector<1x8x16xbf16> to vector<8x16xbf16>
    %12 = vector.shape_cast %11 : vector<8x16xbf16> to vector<1x8x16xbf16>
    %13 = vector.broadcast %12 : vector<1x8x16xbf16> to vector<8x8x16xbf16>
    %14 = arith.truncf %5 : vector<64x32xf32> to vector<64x32xbf16>
    %15 = vector.shape_cast %14 : vector<64x32xbf16> to vector<8x8x32xbf16>
    "tpu.trace_start"() <{level = 10 : i32, message = "btl,blh->bth"}> : () -> ()
    %cst_12 = arith.constant dense<0.000000e+00> : vector<8x16x32xf32>
    %16 = tpu.matmul %9, %15, %cst_12 {dimension_numbers = #tpu.dot_dimension_numbers<[2], [1], [1], [2], [0, 0, 0, 1, 1, 2], [0], [0]>} : vector<8x16x8xbf16>, vector<8x8x32xbf16>, vector<8x16x32xf32> -> vector<8x16x32xf32>
    "tpu.trace_stop"() : () -> ()
    %c0_13 = arith.constant 0 : index
    %c0_14 = arith.constant 0 : index
    %c0_15 = arith.constant 0 : index
    %17 = vector.load %arg5[%c0_13, %c0_14, %c0_15] : memref<2x16x1xf32, #tpu.memory_space<vmem>>, vector<1x16x1xf32>
    %18 = vector.shape_cast %17 : vector<1x16x1xf32> to vector<16x1xf32>
    %19 = vector.shape_cast %18 : vector<16x1xf32> to vector<1x16x1xf32>
    %20 = vector.broadcast %19 : vector<1x16x1xf32> to vector<8x16x32xf32>
    %21 = arith.addf %16, %20 : vector<8x16x32xf32>
    %cst_16 = arith.constant 5.000000e-01 : f32
    %22 = vector.broadcast %cst_16 : f32 to vector<8x16x32xf32>
    %23 = arith.mulf %22, %21 : vector<8x16x32xf32>
    %cst_17 = arith.constant 4.471500e-02 : f32
    %24 = vector.broadcast %cst_17 : f32 to vector<8x16x32xf32>
    %25 = arith.mulf %24, %21 : vector<8x16x32xf32>
    %26 = arith.mulf %25, %21 : vector<8x16x32xf32>
    %27 = arith.mulf %26, %21 : vector<8x16x32xf32>
    %28 = arith.addf %21, %27 : vector<8x16x32xf32>
    %cst_18 = arith.constant 0.797884583 : f32
    %29 = vector.broadcast %cst_18 : f32 to vector<8x16x32xf32>
    %30 = arith.mulf %29, %28 : vector<8x16x32xf32>
    %31 = math.tanh %30 : vector<8x16x32xf32>
    %cst_19 = arith.constant 1.000000e+00 : f32
    %32 = vector.broadcast %cst_19 : f32 to vector<8x16x32xf32>
    %33 = arith.addf %32, %31 : vector<8x16x32xf32>
    %34 = arith.mulf %23, %33 : vector<8x16x32xf32>
    %35 = arith.truncf %34 : vector<8x16x32xf32> to vector<8x16x32xbf16>
    "tpu.trace_start"() <{level = 10 : i32, message = "blt,bth->blh"}> : () -> ()
    %cst_20 = arith.constant dense<0.000000e+00> : vector<8x8x32xf32>
    %36 = tpu.matmul %13, %35, %cst_20 {dimension_numbers = #tpu.dot_dimension_numbers<[2], [1], [1], [2], [0, 0, 0, 1, 1, 2], [0], [0]>} : vector<8x8x16xbf16>, vector<8x16x32xbf16>, vector<8x8x32xf32> -> vector<8x8x32xf32>
    "tpu.trace_stop"() : () -> ()
    %c0_21 = arith.constant 0 : index
    %c0_22 = arith.constant 0 : index
    %c0_23 = arith.constant 0 : index
    %37 = vector.load %arg7[%c0_21, %c0_22, %c0_23] : memref<2x8x1xf32, #tpu.memory_space<vmem>>, vector<1x8x1xf32>
    %38 = vector.shape_cast %37 : vector<1x8x1xf32> to vector<8x1xf32>
    %39 = vector.shape_cast %38 : vector<8x1xf32> to vector<1x8x1xf32>
    %40 = vector.broadcast %39 : vector<1x8x1xf32> to vector<8x8x32xf32>
    %41 = arith.addf %36, %40 : vector<8x8x32xf32>
    %42 = vector.shape_cast %41 : vector<8x8x32xf32> to vector<64x32xf32>
    %43 = arith.addf %5, %42 : vector<64x32xf32>
    %c0_24 = arith.constant 0 : index
    %c0_25 = arith.constant 0 : index
    %c0_26 = arith.constant 0 : index
    %44 = vector.load %arg8[%c0_24, %c0_25, %c0_26] : memref<2x1x32xf32, #tpu.memory_space<vmem>>, vector<1x1x32xf32>
    %45 = vector.shape_cast %44 : vector<1x1x32xf32> to vector<1x32xf32>
    %c0_27 = arith.constant 0 : index
    %c0_28 = arith.constant 0 : index
    %c0_29 = arith.constant 0 : index
    %46 = vector.load %arg9[%c0_27, %c0_28, %c0_29] : memref<2x1x32xf32, #tpu.memory_space<vmem>>, vector<1x1x32xf32>
    %47 = vector.shape_cast %46 : vector<1x1x32xf32> to vector<1x32xf32>
    %cst_30 = arith.constant dense<0.000000e+00> : vector<64xf32>
    %48 = vector.multi_reduction <add>, %43, %cst_30 [1] : vector<64x32xf32> to vector<64xf32>
    %49 = vector.shape_cast %48 : vector<64xf32> to vector<64x1xf32>
    %cst_31 = arith.constant 3.125000e-02 : f32
    %50 = vector.broadcast %cst_31 : f32 to vector<64x1xf32>
    %51 = arith.mulf %49, %50 : vector<64x1xf32>
    %52 = vector.broadcast %51 : vector<64x1xf32> to vector<64x32xf32>
    %53 = arith.subf %43, %52 : vector<64x32xf32>
    %54 = arith.mulf %53, %53 : vector<64x32xf32>
    %cst_32 = arith.constant dense<0.000000e+00> : vector<64xf32>
    %55 = vector.multi_reduction <add>, %54, %cst_32 [1] : vector<64x32xf32> to vector<64xf32>
    %56 = vector.shape_cast %55 : vector<64xf32> to vector<64x1xf32>
    %cst_33 = arith.constant 3.125000e-02 : f32
    %57 = vector.broadcast %cst_33 : f32 to vector<64x1xf32>
    %58 = arith.mulf %56, %57 : vector<64x1xf32>
    %cst_34 = arith.constant 9.99999974E-6 : f32
    %59 = vector.broadcast %cst_34 : f32 to vector<64x1xf32>
    %60 = arith.addf %58, %59 : vector<64x1xf32>
    %61 = math.rsqrt %60 : vector<64x1xf32>
    %62 = vector.broadcast %61 : vector<64x1xf32> to vector<64x32xf32>
    %63 = arith.mulf %53, %62 : vector<64x32xf32>
    %64 = vector.broadcast %45 : vector<1x32xf32> to vector<64x32xf32>
    %65 = arith.mulf %63, %64 : vector<64x32xf32>
    %66 = vector.broadcast %47 : vector<1x32xf32> to vector<64x32xf32>
    %67 = arith.addf %65, %66 : vector<64x32xf32>
    %68 = arith.truncf %67 : vector<64x32xf32> to vector<64x32xbf16>
    %c0_35 = arith.constant 0 : index
    %c0_36 = arith.constant 0 : index
    %c0_37 = arith.constant 0 : index
    %69 = vector.load %arg10[%c0_35, %c0_36, %c0_37] : memref<2x32x64xbf16, #tpu.memory_space<vmem>>, vector<1x32x64xbf16>
    %70 = vector.shape_cast %69 : vector<1x32x64xbf16> to vector<32x64xbf16>
    %cst_38 = arith.constant dense<0.000000e+00> : vector<64x64xf32>
    %71 = tpu.matmul %68, %70, %cst_38 {dimension_numbers = #tpu.dot_dimension_numbers<[1], [0], [0], [1], [0, 0, 1, 1], [], []>} : vector<64x32xbf16>, vector<32x64xbf16>, vector<64x64xf32> -> vector<64x64xf32>
    %c0_39 = arith.constant 0 : index
    %c0_40 = arith.constant 0 : index
    %c0_41 = arith.constant 0 : index
    %72 = vector.load %arg11[%c0_39, %c0_40, %c0_41] : memref<2x1x64xf32, #tpu.memory_space<vmem>>, vector<1x1x64xf32>
    %73 = vector.shape_cast %72 : vector<1x1x64xf32> to vector<1x64xf32>
    %74 = vector.broadcast %73 : vector<1x64xf32> to vector<64x64xf32>
    %75 = arith.addf %71, %74 : vector<64x64xf32>
    %cst_42 = arith.constant 5.000000e-01 : f32
    %76 = vector.broadcast %cst_42 : f32 to vector<64x64xf32>
    %77 = arith.mulf %76, %75 : vector<64x64xf32>
    %cst_43 = arith.constant 4.471500e-02 : f32
    %78 = vector.broadcast %cst_43 : f32 to vector<64x64xf32>
    %79 = arith.mulf %78, %75 : vector<64x64xf32>
    %80 = arith.mulf %79, %75 : vector<64x64xf32>
    %81 = arith.mulf %80, %75 : vector<64x64xf32>
    %82 = arith.addf %75, %81 : vector<64x64xf32>
    %cst_44 = arith.constant 0.797884583 : f32
    %83 = vector.broadcast %cst_44 : f32 to vector<64x64xf32>
    %84 = arith.mulf %83, %82 : vector<64x64xf32>
    %85 = math.tanh %84 : vector<64x64xf32>
    %cst_45 = arith.constant 1.000000e+00 : f32
    %86 = vector.broadcast %cst_45 : f32 to vector<64x64xf32>
    %87 = arith.addf %86, %85 : vector<64x64xf32>
    %88 = arith.mulf %77, %87 : vector<64x64xf32>
    %89 = arith.truncf %88 : vector<64x64xf32> to vector<64x64xbf16>
    %c0_46 = arith.constant 0 : index
    %c0_47 = arith.constant 0 : index
    %c0_48 = arith.constant 0 : index
    %90 = vector.load %arg12[%c0_46, %c0_47, %c0_48] : memref<2x64x32xbf16, #tpu.memory_space<vmem>>, vector<1x64x32xbf16>
    %91 = vector.shape_cast %90 : vector<1x64x32xbf16> to vector<64x32xbf16>
    %cst_49 = arith.constant dense<0.000000e+00> : vector<64x32xf32>
    %92 = tpu.matmul %89, %91, %cst_49 {dimension_numbers = #tpu.dot_dimension_numbers<[1], [0], [0], [1], [0, 0, 1, 1], [], []>} : vector<64x64xbf16>, vector<64x32xbf16>, vector<64x32xf32> -> vector<64x32xf32>
    %c0_50 = arith.constant 0 : index
    %c0_51 = arith.constant 0 : index
    %c0_52 = arith.constant 0 : index
    %93 = vector.load %arg13[%c0_50, %c0_51, %c0_52] : memref<2x1x32xf32, #tpu.memory_space<vmem>>, vector<1x1x32xf32>
    %94 = vector.shape_cast %93 : vector<1x1x32xf32> to vector<1x32xf32>
    %95 = vector.broadcast %94 : vector<1x32xf32> to vector<64x32xf32>
    %96 = arith.addf %92, %95 : vector<64x32xf32>
    %97 = arith.addf %43, %96 : vector<64x32xf32>
    %c1 = arith.constant 1 : index
    %c0_53 = arith.constant 0 : index
    %c0_54 = arith.constant 0 : index
    %98 = vector.load %arg4[%c1, %c0_53, %c0_54] : memref<2x16x8xbf16, #tpu.memory_space<vmem>>, vector<1x16x8xbf16>
    %99 = vector.shape_cast %98 : vector<1x16x8xbf16> to vector<16x8xbf16>
    %100 = vector.shape_cast %99 : vector<16x8xbf16> to vector<1x16x8xbf16>
    %101 = vector.broadcast %100 : vector<1x16x8xbf16> to vector<8x16x8xbf16>
    %c1_55 = arith.constant 1 : index
    %c0_56 = arith.constant 0 : index
    %c0_57 = arith.constant 0 : index
    %102 = vector.load %arg6[%c1_55, %c0_56, %c0_57] : memref<2x8x16xbf16, #tpu.memory_space<vmem>>, vector<1x8x16xbf16>
    %103 = vector.shape_cast %102 : vector<1x8x16xbf16> to vector<8x16xbf16>
    %104 = vector.shape_cast %103 : vector<8x16xbf16> to vector<1x8x16xbf16>
    %105 = vector.broadcast %104 : vector<1x8x16xbf16> to vector<8x8x16xbf16>
    %106 = arith.truncf %97 : vector<64x32xf32> to vector<64x32xbf16>
    %107 = vector.shape_cast %106 : vector<64x32xbf16> to vector<8x8x32xbf16>
    "tpu.trace_start"() <{level = 10 : i32, message = "btl,blh->bth"}> : () -> ()
    %cst_58 = arith.constant dense<0.000000e+00> : vector<8x16x32xf32>
    %108 = tpu.matmul %101, %107, %cst_58 {dimension_numbers = #tpu.dot_dimension_numbers<[2], [1], [1], [2], [0, 0, 0, 1, 1, 2], [0], [0]>} : vector<8x16x8xbf16>, vector<8x8x32xbf16>, vector<8x16x32xf32> -> vector<8x16x32xf32>
    "tpu.trace_stop"() : () -> ()
    %c1_59 = arith.constant 1 : index
    %c0_60 = arith.constant 0 : index
    %c0_61 = arith.constant 0 : index
    %109 = vector.load %arg5[%c1_59, %c0_60, %c0_61] : memref<2x16x1xf32, #tpu.memory_space<vmem>>, vector<1x16x1xf32>
    %110 = vector.shape_cast %109 : vector<1x16x1xf32> to vector<16x1xf32>
    %111 = vector.shape_cast %110 : vector<16x1xf32> to vector<1x16x1xf32>
    %112 = vector.broadcast %111 : vector<1x16x1xf32> to vector<8x16x32xf32>
    %113 = arith.addf %108, %112 : vector<8x16x32xf32>
    %cst_62 = arith.constant 5.000000e-01 : f32
    %114 = vector.broadcast %cst_62 : f32 to vector<8x16x32xf32>
    %115 = arith.mulf %114, %113 : vector<8x16x32xf32>
    %cst_63 = arith.constant 4.471500e-02 : f32
    %116 = vector.broadcast %cst_63 : f32 to vector<8x16x32xf32>
    %117 = arith.mulf %116, %113 : vector<8x16x32xf32>
    %118 = arith.mulf %117, %113 : vector<8x16x32xf32>
    %119 = arith.mulf %118, %113 : vector<8x16x32xf32>
    %120 = arith.addf %113, %119 : vector<8x16x32xf32>
    %cst_64 = arith.constant 0.797884583 : f32
    %121 = vector.broadcast %cst_64 : f32 to vector<8x16x32xf32>
    %122 = arith.mulf %121, %120 : vector<8x16x32xf32>
    %123 = math.tanh %122 : vector<8x16x32xf32>
    %cst_65 = arith.constant 1.000000e+00 : f32
    %124 = vector.broadcast %cst_65 : f32 to vector<8x16x32xf32>
    %125 = arith.addf %124, %123 : vector<8x16x32xf32>
    %126 = arith.mulf %115, %125 : vector<8x16x32xf32>
    %127 = arith.truncf %126 : vector<8x16x32xf32> to vector<8x16x32xbf16>
    "tpu.trace_start"() <{level = 10 : i32, message = "blt,bth->blh"}> : () -> ()
    %cst_66 = arith.constant dense<0.000000e+00> : vector<8x8x32xf32>
    %128 = tpu.matmul %105, %127, %cst_66 {dimension_numbers = #tpu.dot_dimension_numbers<[2], [1], [1], [2], [0, 0, 0, 1, 1, 2], [0], [0]>} : vector<8x8x16xbf16>, vector<8x16x32xbf16>, vector<8x8x32xf32> -> vector<8x8x32xf32>
    "tpu.trace_stop"() : () -> ()
    %c1_67 = arith.constant 1 : index
    %c0_68 = arith.constant 0 : index
    %c0_69 = arith.constant 0 : index
    %129 = vector.load %arg7[%c1_67, %c0_68, %c0_69] : memref<2x8x1xf32, #tpu.memory_space<vmem>>, vector<1x8x1xf32>
    %130 = vector.shape_cast %129 : vector<1x8x1xf32> to vector<8x1xf32>
    %131 = vector.shape_cast %130 : vector<8x1xf32> to vector<1x8x1xf32>
    %132 = vector.broadcast %131 : vector<1x8x1xf32> to vector<8x8x32xf32>
    %133 = arith.addf %128, %132 : vector<8x8x32xf32>
    %134 = vector.shape_cast %133 : vector<8x8x32xf32> to vector<64x32xf32>
    %135 = arith.addf %97, %134 : vector<64x32xf32>
    %c1_70 = arith.constant 1 : index
    %c0_71 = arith.constant 0 : index
    %c0_72 = arith.constant 0 : index
    %136 = vector.load %arg8[%c1_70, %c0_71, %c0_72] : memref<2x1x32xf32, #tpu.memory_space<vmem>>, vector<1x1x32xf32>
    %137 = vector.shape_cast %136 : vector<1x1x32xf32> to vector<1x32xf32>
    %c1_73 = arith.constant 1 : index
    %c0_74 = arith.constant 0 : index
    %c0_75 = arith.constant 0 : index
    %138 = vector.load %arg9[%c1_73, %c0_74, %c0_75] : memref<2x1x32xf32, #tpu.memory_space<vmem>>, vector<1x1x32xf32>
    %139 = vector.shape_cast %138 : vector<1x1x32xf32> to vector<1x32xf32>
    %cst_76 = arith.constant dense<0.000000e+00> : vector<64xf32>
    %140 = vector.multi_reduction <add>, %135, %cst_76 [1] : vector<64x32xf32> to vector<64xf32>
    %141 = vector.shape_cast %140 : vector<64xf32> to vector<64x1xf32>
    %cst_77 = arith.constant 3.125000e-02 : f32
    %142 = vector.broadcast %cst_77 : f32 to vector<64x1xf32>
    %143 = arith.mulf %141, %142 : vector<64x1xf32>
    %144 = vector.broadcast %143 : vector<64x1xf32> to vector<64x32xf32>
    %145 = arith.subf %135, %144 : vector<64x32xf32>
    %146 = arith.mulf %145, %145 : vector<64x32xf32>
    %cst_78 = arith.constant dense<0.000000e+00> : vector<64xf32>
    %147 = vector.multi_reduction <add>, %146, %cst_78 [1] : vector<64x32xf32> to vector<64xf32>
    %148 = vector.shape_cast %147 : vector<64xf32> to vector<64x1xf32>
    %cst_79 = arith.constant 3.125000e-02 : f32
    %149 = vector.broadcast %cst_79 : f32 to vector<64x1xf32>
    %150 = arith.mulf %148, %149 : vector<64x1xf32>
    %cst_80 = arith.constant 9.99999974E-6 : f32
    %151 = vector.broadcast %cst_80 : f32 to vector<64x1xf32>
    %152 = arith.addf %150, %151 : vector<64x1xf32>
    %153 = math.rsqrt %152 : vector<64x1xf32>
    %154 = vector.broadcast %153 : vector<64x1xf32> to vector<64x32xf32>
    %155 = arith.mulf %145, %154 : vector<64x32xf32>
    %156 = vector.broadcast %137 : vector<1x32xf32> to vector<64x32xf32>
    %157 = arith.mulf %155, %156 : vector<64x32xf32>
    %158 = vector.broadcast %139 : vector<1x32xf32> to vector<64x32xf32>
    %159 = arith.addf %157, %158 : vector<64x32xf32>
    %160 = arith.truncf %159 : vector<64x32xf32> to vector<64x32xbf16>
    %c1_81 = arith.constant 1 : index
    %c0_82 = arith.constant 0 : index
    %c0_83 = arith.constant 0 : index
    %161 = vector.load %arg10[%c1_81, %c0_82, %c0_83] : memref<2x32x64xbf16, #tpu.memory_space<vmem>>, vector<1x32x64xbf16>
    %162 = vector.shape_cast %161 : vector<1x32x64xbf16> to vector<32x64xbf16>
    %cst_84 = arith.constant dense<0.000000e+00> : vector<64x64xf32>
    %163 = tpu.matmul %160, %162, %cst_84 {dimension_numbers = #tpu.dot_dimension_numbers<[1], [0], [0], [1], [0, 0, 1, 1], [], []>} : vector<64x32xbf16>, vector<32x64xbf16>, vector<64x64xf32> -> vector<64x64xf32>
    %c1_85 = arith.constant 1 : index
    %c0_86 = arith.constant 0 : index
    %c0_87 = arith.constant 0 : index
    %164 = vector.load %arg11[%c1_85, %c0_86, %c0_87] : memref<2x1x64xf32, #tpu.memory_space<vmem>>, vector<1x1x64xf32>
    %165 = vector.shape_cast %164 : vector<1x1x64xf32> to vector<1x64xf32>
    %166 = vector.broadcast %165 : vector<1x64xf32> to vector<64x64xf32>
    %167 = arith.addf %163, %166 : vector<64x64xf32>
    %cst_88 = arith.constant 5.000000e-01 : f32
    %168 = vector.broadcast %cst_88 : f32 to vector<64x64xf32>
    %169 = arith.mulf %168, %167 : vector<64x64xf32>
    %cst_89 = arith.constant 4.471500e-02 : f32
    %170 = vector.broadcast %cst_89 : f32 to vector<64x64xf32>
    %171 = arith.mulf %170, %167 : vector<64x64xf32>
    %172 = arith.mulf %171, %167 : vector<64x64xf32>
    %173 = arith.mulf %172, %167 : vector<64x64xf32>
    %174 = arith.addf %167, %173 : vector<64x64xf32>
    %cst_90 = arith.constant 0.797884583 : f32
    %175 = vector.broadcast %cst_90 : f32 to vector<64x64xf32>
    %176 = arith.mulf %175, %174 : vector<64x64xf32>
    %177 = math.tanh %176 : vector<64x64xf32>
    %cst_91 = arith.constant 1.000000e+00 : f32
    %178 = vector.broadcast %cst_91 : f32 to vector<64x64xf32>
    %179 = arith.addf %178, %177 : vector<64x64xf32>
    %180 = arith.mulf %169, %179 : vector<64x64xf32>
    %181 = arith.truncf %180 : vector<64x64xf32> to vector<64x64xbf16>
    %c1_92 = arith.constant 1 : index
    %c0_93 = arith.constant 0 : index
    %c0_94 = arith.constant 0 : index
    %182 = vector.load %arg12[%c1_92, %c0_93, %c0_94] : memref<2x64x32xbf16, #tpu.memory_space<vmem>>, vector<1x64x32xbf16>
    %183 = vector.shape_cast %182 : vector<1x64x32xbf16> to vector<64x32xbf16>
    %cst_95 = arith.constant dense<0.000000e+00> : vector<64x32xf32>
    %184 = tpu.matmul %181, %183, %cst_95 {dimension_numbers = #tpu.dot_dimension_numbers<[1], [0], [0], [1], [0, 0, 1, 1], [], []>} : vector<64x64xbf16>, vector<64x32xbf16>, vector<64x32xf32> -> vector<64x32xf32>
    %c1_96 = arith.constant 1 : index
    %c0_97 = arith.constant 0 : index
    %c0_98 = arith.constant 0 : index
    %185 = vector.load %arg13[%c1_96, %c0_97, %c0_98] : memref<2x1x32xf32, #tpu.memory_space<vmem>>, vector<1x1x32xf32>
    %186 = vector.shape_cast %185 : vector<1x1x32xf32> to vector<1x32xf32>
    %187 = vector.broadcast %186 : vector<1x32xf32> to vector<64x32xf32>
    %188 = arith.addf %184, %187 : vector<64x32xf32>
    %189 = arith.addf %135, %188 : vector<64x32xf32>
    %c0_99 = arith.constant 0 : index
    %c0_100 = arith.constant 0 : index
    %190 = vector.load %arg14[%c0_99, %c0_100] : memref<1x32xf32, #tpu.memory_space<vmem>>, vector<1x32xf32>
    %c0_101 = arith.constant 0 : index
    %c0_102 = arith.constant 0 : index
    %191 = vector.load %arg15[%c0_101, %c0_102] : memref<1x32xf32, #tpu.memory_space<vmem>>, vector<1x32xf32>
    %cst_103 = arith.constant dense<0.000000e+00> : vector<64xf32>
    %192 = vector.multi_reduction <add>, %189, %cst_103 [1] : vector<64x32xf32> to vector<64xf32>
    %193 = vector.shape_cast %192 : vector<64xf32> to vector<64x1xf32>
    %cst_104 = arith.constant 3.125000e-02 : f32
    %194 = vector.broadcast %cst_104 : f32 to vector<64x1xf32>
    %195 = arith.mulf %193, %194 : vector<64x1xf32>
    %196 = vector.broadcast %195 : vector<64x1xf32> to vector<64x32xf32>
    %197 = arith.subf %189, %196 : vector<64x32xf32>
    %198 = arith.mulf %197, %197 : vector<64x32xf32>
    %cst_105 = arith.constant dense<0.000000e+00> : vector<64xf32>
    %199 = vector.multi_reduction <add>, %198, %cst_105 [1] : vector<64x32xf32> to vector<64xf32>
    %200 = vector.shape_cast %199 : vector<64xf32> to vector<64x1xf32>
    %cst_106 = arith.constant 3.125000e-02 : f32
    %201 = vector.broadcast %cst_106 : f32 to vector<64x1xf32>
    %202 = arith.mulf %200, %201 : vector<64x1xf32>
    %cst_107 = arith.constant 9.99999974E-6 : f32
    %203 = vector.broadcast %cst_107 : f32 to vector<64x1xf32>
    %204 = arith.addf %202, %203 : vector<64x1xf32>
    %205 = math.rsqrt %204 : vector<64x1xf32>
    %206 = vector.broadcast %205 : vector<64x1xf32> to vector<64x32xf32>
    %207 = arith.mulf %197, %206 : vector<64x32xf32>
    %208 = vector.broadcast %190 : vector<1x32xf32> to vector<64x32xf32>
    %209 = arith.mulf %207, %208 : vector<64x32xf32>
    %210 = vector.broadcast %191 : vector<1x32xf32> to vector<64x32xf32>
    %211 = arith.addf %209, %210 : vector<64x32xf32>
    %212 = vector.shape_cast %211 : vector<64x32xf32> to vector<8x8x32xf32>
    %cst_108 = arith.constant dense<0.000000e+00> : vector<8x32xf32>
    %213 = vector.multi_reduction <add>, %212, %cst_108 [1] : vector<8x8x32xf32> to vector<8x32xf32>
    %cst_109 = arith.constant 1.250000e-01 : f32
    %214 = vector.broadcast %cst_109 : f32 to vector<8x32xf32>
    %215 = arith.mulf %213, %214 : vector<8x32xf32>
    %216 = arith.truncf %215 : vector<8x32xf32> to vector<8x32xbf16>
    %c0_110 = arith.constant 0 : index
    %c0_111 = arith.constant 0 : index
    %217 = vector.load %arg16[%c0_110, %c0_111] : memref<32x128xbf16, #tpu.memory_space<vmem>>, vector<32x128xbf16>
    %cst_112 = arith.constant dense<0.000000e+00> : vector<8x128xf32>
    %218 = tpu.matmul %216, %217, %cst_112 {dimension_numbers = #tpu.dot_dimension_numbers<[1], [0], [0], [1], [0, 0, 1, 1], [], []>} : vector<8x32xbf16>, vector<32x128xbf16>, vector<8x128xf32> -> vector<8x128xf32>
    %c0_113 = arith.constant 0 : index
    %c0_114 = arith.constant 0 : index
    %219 = vector.load %arg17[%c0_113, %c0_114] : memref<1x128xf32, #tpu.memory_space<vmem>>, vector<1x128xf32>
    %220 = vector.broadcast %219 : vector<1x128xf32> to vector<8x128xf32>
    %221 = arith.addf %218, %220 : vector<8x128xf32>
    %c0_115 = arith.constant 0 : index
    %c0_116 = arith.constant 0 : index
    %c0_117 = arith.constant 0 : index
    %222 = vector.load %arg18[%c0_115, %c0_116, %c0_117] : memref<1x8x128xf32, #tpu.memory_space<vmem>>, vector<1x8x128xf32>
    %223 = vector.shape_cast %222 : vector<1x8x128xf32> to vector<8x128xf32>
    %224 = vector.shape_cast %221 : vector<8x128xf32> to vector<1x8x128xf32>
    tpu.vector_store %arg18[%c0_115, %c0_116, %c0_117], %224 {strides = array<i32>} : memref<1x8x128xf32, #tpu.memory_space<vmem>>, vector<1x8x128xf32>,
    return
  }
  func.func @transform_0(%arg0: i32) -> (i32, i32, i32) {
    %c0_i32 = arith.constant 0 : i32
    %c0_i32_0 = arith.constant 0 : i32
    %c0_i32_1 = arith.constant 0 : i32
    return %arg0, %c0_i32, %c0_i32_0 : i32, i32, i32
  }
  func.func @transform_1(%arg0: i32) -> (i32, i32) {
    %c0_i32 = arith.constant 0 : i32
    %c0_i32_0 = arith.constant 0 : i32
    %c0_i32_1 = arith.constant 0 : i32
    return %c0_i32, %c0_i32_0 : i32, i32
  }
  func.func @transform_2(%arg0: i32) -> (i32, i32) {
    %c0_i32 = arith.constant 0 : i32
    %c0_i32_0 = arith.constant 0 : i32
    %c0_i32_1 = arith.constant 0 : i32
    return %c0_i32, %c0_i32_0 : i32, i32
  }
  func.func @transform_3(%arg0: i32) -> (i32, i32, i32) {
    %c0_i32 = arith.constant 0 : i32
    %c0_i32_0 = arith.constant 0 : i32
    %c0_i32_1 = arith.constant 0 : i32
    %c0_i32_2 = arith.constant 0 : i32
    return %c0_i32, %c0_i32_0, %c0_i32_1 : i32, i32, i32
  }
  func.func @transform_4(%arg0: i32) -> (i32, i32, i32) {
    %c0_i32 = arith.constant 0 : i32
    %c0_i32_0 = arith.constant 0 : i32
    %c0_i32_1 = arith.constant 0 : i32
    %c0_i32_2 = arith.constant 0 : i32
    return %c0_i32, %c0_i32_0, %c0_i32_1 : i32, i32, i32
  }
  func.func @transform_5(%arg0: i32) -> (i32, i32, i32) {
    %c0_i32 = arith.constant 0 : i32
    %c0_i32_0 = arith.constant 0 : i32
    %c0_i32_1 = arith.constant 0 : i32
    %c0_i32_2 = arith.constant 0 : i32
    return %c0_i32, %c0_i32_0, %c0_i32_1 : i32, i32, i32
  }
  func.func @transform_6(%arg0: i32) -> (i32, i32, i32) {
    %c0_i32 = arith.constant 0 : i32
    %c0_i32_0 = arith.constant 0 : i32
    %c0_i32_1 = arith.constant 0 : i32
    %c0_i32_2 = arith.constant 0 : i32
    return %c0_i32, %c0_i32_0, %c0_i32_1 : i32, i32, i32
  }
  func.func @transform_7(%arg0: i32) -> (i32, i32, i32) {
    %c0_i32 = arith.constant 0 : i32
    %c0_i32_0 = arith.constant 0 : i32
    %c0_i32_1 = arith.constant 0 : i32
    %c0_i32_2 = arith.constant 0 : i32
    return %c0_i32, %c0_i32_0, %c0_i32_1 : i32, i32, i32
  }
  func.func @transform_8(%arg0: i32) -> (i32, i32, i32) {
    %c0_i32 = arith.constant 0 : i32
    %c0_i32_0 = arith.constant 0 : i32
    %c0_i32_1 = arith.constant 0 : i32
    %c0_i32_2 = arith.constant 0 : i32
    return %c0_i32, %c0_i32_0, %c0_i32_1 : i32, i32, i32
  }
  func.func @transform_9(%arg0: i32) -> (i32, i32, i32) {
    %c0_i32 = arith.constant 0 : i32
    %c0_i32_0 = arith.constant 0 : i32
    %c0_i32_1 = arith.constant 0 : i32
    %c0_i32_2 = arith.constant 0 : i32
    return %c0_i32, %c0_i32_0, %c0_i32_1 : i32, i32, i32
  }
  func.func @transform_10(%arg0: i32) -> (i32, i32, i32) {
    %c0_i32 = arith.constant 0 : i32
    %c0_i32_0 = arith.constant 0 : i32
    %c0_i32_1 = arith.constant 0 : i32
    %c0_i32_2 = arith.constant 0 : i32
    return %c0_i32, %c0_i32_0, %c0_i32_1 : i32, i32, i32
  }
  func.func @transform_11(%arg0: i32) -> (i32, i32, i32) {
    %c0_i32 = arith.constant 0 : i32
    %c0_i32_0 = arith.constant 0 : i32
    %c0_i32_1 = arith.constant 0 : i32
    %c0_i32_2 = arith.constant 0 : i32
    return %c0_i32, %c0_i32_0, %c0_i32_1 : i32, i32, i32
  }
  func.func @transform_12(%arg0: i32) -> (i32, i32, i32) {
    %c0_i32 = arith.constant 0 : i32
    %c0_i32_0 = arith.constant 0 : i32
    %c0_i32_1 = arith.constant 0 : i32
    %c0_i32_2 = arith.constant 0 : i32
    return %c0_i32, %c0_i32_0, %c0_i32_1 : i32, i32, i32
  }
  func.func @transform_13(%arg0: i32) -> (i32, i32) {
    %c0_i32 = arith.constant 0 : i32
    %c0_i32_0 = arith.constant 0 : i32
    %c0_i32_1 = arith.constant 0 : i32
    return %c0_i32, %c0_i32_0 : i32, i32
  }
  func.func @transform_14(%arg0: i32) -> (i32, i32) {
    %c0_i32 = arith.constant 0 : i32
    %c0_i32_0 = arith.constant 0 : i32
    %c0_i32_1 = arith.constant 0 : i32
    return %c0_i32, %c0_i32_0 : i32, i32
  }
  func.func @transform_15(%arg0: i32) -> (i32, i32) {
    %c0_i32 = arith.constant 0 : i32
    %c0_i32_0 = arith.constant 0 : i32
    %c0_i32_1 = arith.constant 0 : i32
    return %c0_i32, %c0_i32_0 : i32, i32
  }
  func.func @transform_16(%arg0: i32) -> (i32, i32) {
    %c0_i32 = arith.constant 0 : i32
    %c0_i32_0 = arith.constant 0 : i32
    %c0_i32_1 = arith.constant 0 : i32
    return %c0_i32, %c0_i32_0 : i32, i32
  }
  func.func @transform_17(%arg0: i32) -> (i32, i32, i32) {
    %c0_i32 = arith.constant 0 : i32
    %c0_i32_0 = arith.constant 0 : i32
    %c0_i32_1 = arith.constant 0 : i32
    return %arg0, %c0_i32, %c0_i32_0 : i32, i32, i32
  }
}

</mosaic_0001>

<llo_original>
// kernel: tpu_custom_call.1
$region0: #{tpu_custom_call.1}
  #allocation0 [shape = 'u32[]', space=smem, size = 0x4, offset = 0x4, fixed_abs, tag = 'smem constant byte address 0x4 - core index']
  #allocation1 [shape = 'u32[144,128]{1,0:T(1,128)}', space=vmem, size = 0x12000, scoped, tag = 'internal scratch']
  %s0 = inlined_call_operand.vmem [shape: bf16[8,8,12], index: 0, kind: input, shape index: {}]
  %s1 = inlined_call_operand.vmem [shape: f32[64,32], index: 1, kind: input, shape index: {}]
  %s2 = inlined_call_operand.vmem [shape: bf16[12,32], index: 2, kind: input, shape index: {}]
  %s3 = inlined_call_operand.vmem [shape: bf16[2,16,8], index: 3, kind: input, shape index: {}]
  %s4 = inlined_call_operand.vmem [shape: f32[2,16,1], index: 4, kind: input, shape index: {}]
  %s5 = inlined_call_operand.vmem [shape: bf16[2,8,16], index: 5, kind: input, shape index: {}]
  %s6 = inlined_call_operand.vmem [shape: f32[2,8,1], index: 6, kind: input, shape index: {}]
  %s7 = inlined_call_operand.vmem [shape: f32[2,1,32], index: 7, kind: input, shape index: {}]
  %s8 = inlined_call_operand.vmem [shape: f32[2,1,32], index: 8, kind: input, shape index: {}]
  %s9 = inlined_call_operand.vmem [shape: bf16[2,32,64], index: 9, kind: input, shape index: {}]
  %s10 = inlined_call_operand.vmem [shape: f32[2,1,64], index: 10, kind: input, shape index: {}]
  %s11 = inlined_call_operand.vmem [shape: bf16[2,64,32], index: 11, kind: input, shape index: {}]
  %s12 = inlined_call_operand.vmem [shape: f32[2,1,32], index: 12, kind: input, shape index: {}]
  %s13 = inlined_call_operand.vmem [shape: f32[1,32], index: 13, kind: input, shape index: {}]
  %s14 = inlined_call_operand.vmem [shape: f32[1,32], index: 14, kind: input, shape index: {}]
  %s15 = inlined_call_operand.vmem [shape: bf16[32,128], index: 15, kind: input, shape index: {}]
  %s16 = inlined_call_operand.vmem [shape: f32[1,128], index: 16, kind: input, shape index: {}]
  %s17 = inlined_call_operand.hbm [shape: f32[1,8,128], index: 17, kind: output, shape index: {}]
  %s18 = sld [smem:[#allocation0]]
  $region78: #{tpu_custom_call.1} parent=0
    _
  %s20 = ssub.s32 1, %s18
  %s21 = scalar_select 0, %s20, %s18
  $region1: #{tpu_custom_call.1} parent=0
    #allocation2 [shape = 'u8[4096]{0}', space=vmem, size = 0x1000, scoped, tag = 'output window, operand 0, single buffered']
    #allocation3 [shape = 's32[1]{0}', space=sflag, size = 0x4, scoped, tag = 'scoped memory for tpu_custom_call.1']
    %22 = vsyncpa [#allocation3], 0
    // Predicated region
    $region2: #{tpu_custom_call.1} parent=1 // pred_check
      _
    $region3: #{tpu_custom_call.1} parent=1 // pred_check_branch
      %24 = sbr.rel (0) target = $region5
    $region4: #{tpu_custom_call.1} parent=1 // pred_region
      _
    $region5: #{tpu_custom_call.1} parent=1 // pred_fallthru
      _
    // Predicated region
    $region6: #{tpu_custom_call.1} parent=1 // pred_check
      _
    $region7: #{tpu_custom_call.1} parent=1 // pred_check_branch
      %26 = sbr.rel (0) target = $region9
    $region8: #{tpu_custom_call.1} parent=1 // pred_region
      _
    $region9: #{tpu_custom_call.1} parent=1 // pred_fallthru
      _
    // Predicated region
    $region10: #{tpu_custom_call.1} parent=1 // pred_check
      _
    $region11: #{tpu_custom_call.1} parent=1 // pred_check_branch
      %28 = sbr.rel (0) target = $region13
    $region12: #{tpu_custom_call.1} parent=1 // pred_region
      _
    $region13: #{tpu_custom_call.1} parent=1 // pred_fallthru
      _
    // Predicated region
    $region14: #{tpu_custom_call.1} parent=1 // pred_check
      _
    $region15: #{tpu_custom_call.1} parent=1 // pred_check_branch
      %30 = sbr.rel (0) target = $region17
    $region16: #{tpu_custom_call.1} parent=1 // pred_region
      _
    $region17: #{tpu_custom_call.1} parent=1 // pred_fallthru
      _
    // Predicated region
    $region18: #{tpu_custom_call.1} parent=1 // pred_check
      _
    $region19: #{tpu_custom_call.1} parent=1 // pred_check_branch
      %32 = sbr.rel (0) target = $region21
    $region20: #{tpu_custom_call.1} parent=1 // pred_region
      _
    $region21: #{tpu_custom_call.1} parent=1 // pred_fallthru
      _
    // Predicated region
    $region22: #{tpu_custom_call.1} parent=1 // pred_check
      _
    $region23: #{tpu_custom_call.1} parent=1 // pred_check_branch
      %34 = sbr.rel (0) target = $region25
    $region24: #{tpu_custom_call.1} parent=1 // pred_region
      _
    $region25: #{tpu_custom_call.1} parent=1 // pred_fallthru
      _
    // Predicated region
    $region26: #{tpu_custom_call.1} parent=1 // pred_check
      _
    $region27: #{tpu_custom_call.1} parent=1 // pred_check_branch
      %36 = sbr.rel (0) target = $region29
    $region28: #{tpu_custom_call.1} parent=1 // pred_region
      _
    $region29: #{tpu_custom_call.1} parent=1 // pred_fallthru
      _
    // Predicated region
    $region30: #{tpu_custom_call.1} parent=1 // pred_check
      _
    $region31: #{tpu_custom_call.1} parent=1 // pred_check_branch
      %38 = sbr.rel (0) target = $region33
    $region32: #{tpu_custom_call.1} parent=1 // pred_region
      _
    $region33: #{tpu_custom_call.1} parent=1 // pred_fallthru
      _
    // Predicated region
    $region34: #{tpu_custom_call.1} parent=1 // pred_check
      _
    $region35: #{tpu_custom_call.1} parent=1 // pred_check_branch
      %40 = sbr.rel (0) target = $region37
    $region36: #{tpu_custom_call.1} parent=1 // pred_region
      _
    $region37: #{tpu_custom_call.1} parent=1 // pred_fallthru
      _
    // Predicated region
    $region38: #{tpu_custom_call.1} parent=1 // pred_check
      _
    $region39: #{tpu_custom_call.1} parent=1 // pred_check_branch
      %42 = sbr.rel (0) target = $region41
    $region40: #{tpu_custom_call.1} parent=1 // pred_region
      _
    $region41: #{tpu_custom_call.1} parent=1 // pred_fallthru
      _
    // Predicated region
    $region42: #{tpu_custom_call.1} parent=1 // pred_check
      _
    $region43: #{tpu_custom_call.1} parent=1 // pred_check_branch
      %44 = sbr.rel (0) target = $region45
    $region44: #{tpu_custom_call.1} parent=1 // pred_region
      _
    $region45: #{tpu_custom_call.1} parent=1 // pred_fallthru
      _
    // Predicated region
    $region46: #{tpu_custom_call.1} parent=1 // pred_check
      _
    $region47: #{tpu_custom_call.1} parent=1 // pred_check_branch
      %46 = sbr.rel (0) target = $region49
    $region48: #{tpu_custom_call.1} parent=1 // pred_region
      _
    $region49: #{tpu_custom_call.1} parent=1 // pred_fallthru
      _
    // Predicated region
    $region50: #{tpu_custom_call.1} parent=1 // pred_check
      _
    $region51: #{tpu_custom_call.1} parent=1 // pred_check_branch
      %48 = sbr.rel (0) target = $region53
    $region52: #{tpu_custom_call.1} parent=1 // pred_region
      _
    $region53: #{tpu_custom_call.1} parent=1 // pred_fallthru
      _
    // Predicated region
    $region54: #{tpu_custom_call.1} parent=1 // pred_check
      _
    $region55: #{tpu_custom_call.1} parent=1 // pred_check_branch
      %50 = sbr.rel (0) target = $region57
    $region56: #{tpu_custom_call.1} parent=1 // pred_region
      _
    $region57: #{tpu_custom_call.1} parent=1 // pred_fallthru
      _
    // Predicated region
    $region58: #{tpu_custom_call.1} parent=1 // pred_check
      _
    $region59: #{tpu_custom_call.1} parent=1 // pred_check_branch
      %52 = sbr.rel (0) target = $region61
    $region60: #{tpu_custom_call.1} parent=1 // pred_region
      _
    $region61: #{tpu_custom_call.1} parent=1 // pred_fallthru
      _
    // Predicated region
    $region62: #{tpu_custom_call.1} parent=1 // pred_check
      _
    $region63: #{tpu_custom_call.1} parent=1 // pred_check_branch
      %54 = sbr.rel (0) target = $region65
    $region64: #{tpu_custom_call.1} parent=1 // pred_region
      _
    $region65: #{tpu_custom_call.1} parent=1 // pred_fallthru
      _
    // Predicated region
    $region66: #{tpu_custom_call.1} parent=1 // pred_check
      _
    $region67: #{tpu_custom_call.1} parent=1 // pred_check_branch
      %56 = sbr.rel (0) target = $region69
    $region68: #{tpu_custom_call.1} parent=1 // pred_region
      _
    $region69: #{tpu_custom_call.1} parent=1 // pred_fallthru
      _
    %v58 = vld [vmem:[%s0] sm:$0xf]
    %v59 = vld [vmem:[%s0 + $0x4] sm:$0xf]
    %v60 = vld [vmem:[%s0 + $0x8] sm:$0xf]
    %v61 = vld [vmem:[%s0 + $0xc] sm:$0xf]
    %v62 = vld [vmem:[%s0 + $0x10] sm:$0xf]
    %v63 = vld [vmem:[%s0 + $0x14] sm:$0xf]
    %v64 = vld [vmem:[%s0 + $0x18] sm:$0xf]
    %v65 = vld [vmem:[%s0 + $0x1c] sm:$0xf]
    %v66 = vld [vmem:[%s2] sm:$0xf]
    %v67 = vld [vmem:[%s2 + $0x4] sm:$0x3]
    %v68 = vld [vmem:[%s1] sm:$0xff]
    %v69 = vld [vmem:[%s1 + $0x8] sm:$0xff]
    %v70 = vld [vmem:[%s1 + $0x10] sm:$0xff]
    %v71 = vld [vmem:[%s1 + $0x18] sm:$0xff]
    %v72 = vld [vmem:[%s1 + $0x20] sm:$0xff]
    %v73 = vld [vmem:[%s1 + $0x28] sm:$0xff]
    %v74 = vld [vmem:[%s1 + $0x30] sm:$0xff]
    %v75 = vld [vmem:[%s1 + $0x38] sm:$0xff]
    %v84 = vunpack.c.l.b16 %v58
    %v85 = vunpack.c.l.b16 %v59
    %v86 = vunpack.c.l.b16 %v60
    %v87 = vunpack.c.l.b16 %v61
    %v88 = vunpack.c.l.b16 %v62
    %v89 = vunpack.c.l.b16 %v63
    %v90 = vunpack.c.l.b16 %v64
    %v91 = vunpack.c.l.b16 %v65
    %v92 = vpack.c.b16 %v85, %v84
    %v93 = vpack.c.b16 %v87, %v86
    %v94 = vpack.c.b16 %v89, %v88
    %v95 = vpack.c.b16 %v91, %v90
    %v98 = vunpack.c.l.b16 %v66
    %v99 = vunpack.c.l.b16 %v67
    %v100 = vpack.c.b16 %v99, %v98
    %vm101 = vcmask 97280
    %v103 = vsel %vm101, %v92, 0
    %v106 = vsel %vm101, %v93, 0
    %v109 = vsel %vm101, %v94, 0
    %v112 = vsel %vm101, %v95, 0
    %vm114 = vcmask 1045504
    %v116 = vsel %vm114, %v100, 0
    %118 = vmatprep.subr.bf16.mxu0 0
    %119 = vmatpush1.bf16.msra.mxu0 %v116
    %120 = vmatprep.subr.bf16.mxu0 0
    %121 = vmatpush1.bf16.msra.mxu0 0
    %122 = vmatprep.subr.bf16.mxu0 0
    %123 = vmatpush1.bf16.msra.mxu0 0
    %124 = vmatprep.subr.bf16.mxu0 0
    %125 = vmatpush1.bf16.msra.mxu0 0
    %126 = vmatprep.subr.bf16.mxu0 0
    %127 = vmatpush1.bf16.msra.mxu0 0
    %128 = vmatprep.subr.bf16.mxu0 0
    %129 = vmatpush1.bf16.msra.mxu0 0
    %130 = vmatprep.subr.bf16.mxu0 0
    %131 = vmatpush1.bf16.msra.mxu0 0
    %132 = vmatprep.subr.bf16.mxu0 0
    %133 = vmatpush1.bf16.msra.mxu0 0
    %134 = vmatprep.subr.bf16.mxu0 0
    %135 = vmatpush1.bf16.msra.mxu0 0
    %136 = vmatprep.subr.bf16.mxu0 0
    %137 = vmatpush1.bf16.msra.mxu0 0
    %138 = vmatprep.subr.bf16.mxu0 0
    %139 = vmatpush1.bf16.msra.mxu0 0
    %140 = vmatprep.subr.bf16.mxu0 0
    %141 = vmatpush1.bf16.msra.mxu0 0
    %142 = vmatprep.subr.bf16.mxu0 0
    %143 = vmatpush1.bf16.msra.mxu0 0
    %144 = vmatprep.subr.bf16.mxu0 0
    %145 = vmatpush1.bf16.msra.mxu0 0
    %146 = vmatprep.subr.bf16.mxu0 0
    %147 = vmatpush1.bf16.msra.mxu0 0
    %148 = vmatprep.subr.bf16.mxu0 0
    %149 = vmatpush1.bf16.msra.mxu0 0
    %150 = vmatprep.mubr.bf16.mxu0 0
    %151 = vmatmul.mubr.bf16.gmra.mrb[0].mxu0 %v103
    %v152 = vpop.f32.mrb[0].mxu0
    %v153 = vadd.f32 %v68, %v152
    %v154 = vpop.f32.mrb[0].mxu0
    %v155 = vpop.f32.mrb[0].mxu0
    %v156 = vadd.f32 %v69, %v155
    %v157 = vpop.f32.mrb[0].mxu0
    %158 = vmatprep.mubr.bf16.mxu0 0
    %159 = vmatmul.mubr.bf16.gmra.mrb[0].mxu0 %v106
    %v160 = vpop.f32.mrb[0].mxu0
    %v161 = vadd.f32 %v70, %v160
    %v162 = vpop.f32.mrb[0].mxu0
    %v163 = vpop.f32.mrb[0].mxu0
    %v164 = vadd.f32 %v71, %v163
    %v165 = vpop.f32.mrb[0].mxu0
    %166 = vmatprep.mubr.bf16.mxu0 0
    %167 = vmatmul.mubr.bf16.gmra.mrb[0].mxu0 %v109
    %v168 = vpop.f32.mrb[0].mxu0
    %v169 = vadd.f32 %v72, %v168
    %v170 = vpop.f32.mrb[0].mxu0
    %v171 = vpop.f32.mrb[0].mxu0
    %v172 = vadd.f32 %v73, %v171
    %v173 = vpop.f32.mrb[0].mxu0
    %174 = vmatprep.mubr.bf16.mxu0 0
    %175 = vmatmul.mubr.bf16.gmra.mrb[0].mxu0 %v112
    %v176 = vpop.f32.mrb[0].mxu0
    %v177 = vadd.f32 %v74, %v176
    %v178 = vpop.f32.mrb[0].mxu0
    %v179 = vpop.f32.mrb[0].mxu0
    %v180 = vadd.f32 %v75, %v179
    %v181 = vpop.f32.mrb[0].mxu0
    %182 = vdwg.mxu0
    %v183 = vld [vmem:[%s3] sm:$0xf]
    %v184 = vld [vmem:[%s3 + $0x4] sm:$0xf]
    %v185 = vld [vmem:[%s5] sm:$0xf]
    %v186 = vpack.c.bf16 %v156, %v153
    %v187 = vpack.c.bf16 %v164, %v161
    %v188 = vpack.c.bf16 %v172, %v169
    %v189 = vpack.c.bf16 %v180, %v177
    %v194 = vunpack.c.l.b16 %v186
    %v195 = vunpack.c.h.b16 %v186
    %v196 = vunpack.c.l.b16 %v187
    %v197 = vunpack.c.h.b16 %v187
    %v198 = vunpack.c.l.b16 %v188
    %v199 = vunpack.c.h.b16 %v188
    %v200 = vunpack.c.l.b16 %v189
    %v201 = vunpack.c.h.b16 %v189
    %v202 = vpack.c.b16 %v194, %v194
    %v203 = vpack.c.b16 %v195, %v195
    %v204 = vpack.c.b16 %v196, %v196
    %v205 = vpack.c.b16 %v197, %v197
    %v206 = vpack.c.b16 %v198, %v198
    %v207 = vpack.c.b16 %v199, %v199
    %v208 = vpack.c.b16 %v200, %v200
    %v209 = vpack.c.b16 %v201, %v201
    %v210 = vld [vmem:[%s4] sm:$0xff]
    %v211 = vld [vmem:[%s4 + $0x8] sm:$0xff]
    %213 = vset.pattern.permute.xlu0 0
    %214 = vperm.xlu0 %213, %v210
    %v215 = vpop.permute.xlu0 %214
    %218 = vset.pattern.permute.xlu0 0
    %219 = vperm.xlu0 %218, %v211
    %v220 = vpop.permute.xlu0 %219
    %v224 = vunpack.c.l.b16 %v183
    %v225 = vunpack.c.l.b16 %v184
    %v226 = vpack.c.b16 %v225, %v224
    %vm227 = vcmask 64512
    %v229 = vsel %vm227, %v226, 0
    %vm231 = vcmask 1043456
    %v233 = vsel %vm231, %v202, 0
    %235 = vmatprep.subr.bf16.mxu0 0
    %236 = vmatpush1.bf16.msra.mxu0 %v233
    %237 = vmatprep.subr.bf16.mxu0 0
    %238 = vmatpush1.bf16.msra.mxu0 0
    %239 = vmatprep.subr.bf16.mxu0 0
    %240 = vmatpush1.bf16.msra.mxu0 0
    %241 = vmatprep.subr.bf16.mxu0 0
    %242 = vmatpush1.bf16.msra.mxu0 0
    %243 = vmatprep.subr.bf16.mxu0 0
    %244 = vmatpush1.bf16.msra.mxu0 0
    %245 = vmatprep.subr.bf16.mxu0 0
    %246 = vmatpush1.bf16.msra.mxu0 0
    %247 = vmatprep.subr.bf16.mxu0 0
    %248 = vmatpush1.bf16.msra.mxu0 0
    %249 = vmatprep.subr.bf16.mxu0 0
    %250 = vmatpush1.bf16.msra.mxu0 0
    %251 = vmatprep.subr.bf16.mxu0 0
    %252 = vmatpush1.bf16.msra.mxu0 0
    %253 = vmatprep.subr.bf16.mxu0 0
    %254 = vmatpush1.bf16.msra.mxu0 0
    %255 = vmatprep.subr.bf16.mxu0 0
    %256 = vmatpush1.bf16.msra.mxu0 0
    %257 = vmatprep.subr.bf16.mxu0 0
    %258 = vmatpush1.bf16.msra.mxu0 0
    %259 = vmatprep.subr.bf16.mxu0 0
    %260 = vmatpush1.bf16.msra.mxu0 0
    %261 = vmatprep.subr.bf16.mxu0 0
    %262 = vmatpush1.bf16.msra.mxu0 0
    %263 = vmatprep.subr.bf16.mxu0 0
    %264 = vmatpush1.bf16.msra.mxu0 0
    %265 = vmatprep.subr.bf16.mxu0 0
    %266 = vmatpush1.bf16.msra.mxu0 0
    %267 = vmatprep.mubr.bf16.mxu0 0
    %268 = vmatmul.mubr.bf16.gmra.mrb[0].mxu0 %v229
    %v269 = vpop.f32.mrb[0].mxu0
    %v270 = vadd.f32 %v215, %v269
    %v271 = vpop.f32.mrb[0].mxu0
    %v272 = vpop.f32.mrb[0].mxu0
    %v273 = vadd.f32 %v220, %v272
    %v274 = vpop.f32.mrb[0].mxu0
    %275 = vdwg.mxu0
    %v277 = vsel %vm231, %v203, 0
    %279 = vmatprep.subr.bf16.mxu0 0
    %280 = vmatpush1.bf16.msra.mxu0 %v277
    %281 = vmatprep.subr.bf16.mxu0 0
    %282 = vmatpush1.bf16.msra.mxu0 0
    %283 = vmatprep.subr.bf16.mxu0 0
    %284 = vmatpush1.bf16.msra.mxu0 0
    %285 = vmatprep.subr.bf16.mxu0 0
    %286 = vmatpush1.bf16.msra.mxu0 0
    %287 = vmatprep.subr.bf16.mxu0 0
    %288 = vmatpush1.bf16.msra.mxu0 0
    %289 = vmatprep.subr.bf16.mxu0 0
    %290 = vmatpush1.bf16.msra.mxu0 0
    %291 = vmatprep.subr.bf16.mxu0 0
    %292 = vmatpush1.bf16.msra.mxu0 0
    %293 = vmatprep.subr.bf16.mxu0 0
    %294 = vmatpush1.bf16.msra.mxu0 0
    %295 = vmatprep.subr.bf16.mxu0 0
    %296 = vmatpush1.bf16.msra.mxu0 0
    %297 = vmatprep.subr.bf16.mxu0 0
    %298 = vmatpush1.bf16.msra.mxu0 0
    %299 = vmatprep.subr.bf16.mxu0 0
    %300 = vmatpush1.bf16.msra.mxu0 0
    %301 = vmatprep.subr.bf16.mxu0 0
    %302 = vmatpush1.bf16.msra.mxu0 0
    %303 = vmatprep.subr.bf16.mxu0 0
    %304 = vmatpush1.bf16.msra.mxu0 0
    %305 = vmatprep.subr.bf16.mxu0 0
    %306 = vmatpush1.bf16.msra.mxu0 0
    %307 = vmatprep.subr.bf16.mxu0 0
    %308 = vmatpush1.bf16.msra.mxu0 0
    %309 = vmatprep.subr.bf16.mxu0 0
    %310 = vmatpush1.bf16.msra.mxu0 0
    %311 = vmatprep.mubr.bf16.mxu0 0
    %312 = vmatmul.mubr.bf16.gmra.mrb[0].mxu0 %v229
    %v313 = vpop.f32.mrb[0].mxu0
    %v314 = vadd.f32 %v215, %v313
    %v315 = vpop.f32.mrb[0].mxu0
    %v316 = vpop.f32.mrb[0].mxu0
    %v317 = vadd.f32 %v220, %v316
    %v318 = vpop.f32.mrb[0].mxu0
    %319 = vdwg.mxu0
    %v321 = vsel %vm231, %v204, 0
    %323 = vmatprep.subr.bf16.mxu0 0
    %324 = vmatpush1.bf16.msra.mxu0 %v321
    %325 = vmatprep.subr.bf16.mxu0 0
    %326 = vmatpush1.bf16.msra.mxu0 0
    %327 = vmatprep.subr.bf16.mxu0 0
    %328 = vmatpush1.bf16.msra.mxu0 0
    %329 = vmatprep.subr.bf16.mxu0 0
    %330 = vmatpush1.bf16.msra.mxu0 0
    %331 = vmatprep.subr.bf16.mxu0 0
    %332 = vmatpush1.bf16.msra.mxu0 0
    %333 = vmatprep.subr.bf16.mxu0 0
    %334 = vmatpush1.bf16.msra.mxu0 0
    %335 = vmatprep.subr.bf16.mxu0 0
    %336 = vmatpush1.bf16.msra.mxu0 0
    %337 = vmatprep.subr.bf16.mxu0 0
    %338 = vmatpush1.bf16.msra.mxu0 0
    %339 = vmatprep.subr.bf16.mxu0 0
    %340 = vmatpush1.bf16.msra.mxu0 0
    %341 = vmatprep.subr.bf16.mxu0 0
    %342 = vmatpush1.bf16.msra.mxu0 0
    %343 = vmatprep.subr.bf16.mxu0 0
    %344 = vmatpush1.bf16.msra.mxu0 0
    %345 = vmatprep.subr.bf16.mxu0 0
    %346 = vmatpush1.bf16.msra.mxu0 0
    %347 = vmatprep.subr.bf16.mxu0 0
    %348 = vmatpush1.bf16.msra.mxu0 0
    %349 = vmatprep.subr.bf16.mxu0 0
    %350 = vmatpush1.bf16.msra.mxu0 0
    %351 = vmatprep.subr.bf16.mxu0 0
    %352 = vmatpush1.bf16.msra.mxu0 0
    %353 = vmatprep.subr.bf16.mxu0 0
    %354 = vmatpush1.bf16.msra.mxu0 0
    %355 = vmatprep.mubr.bf16.mxu0 0
    %356 = vmatmul.mubr.bf16.gmra.mrb[0].mxu0 %v229
    %v357 = vpop.f32.mrb[0].mxu0
    %v358 = vadd.f32 %v215, %v357
    %v359 = vpop.f32.mrb[0].mxu0
    %v360 = vpop.f32.mrb[0].mxu0
    %v361 = vadd.f32 %v220, %v360
    %v362 = vpop.f32.mrb[0].mxu0
    %363 = vdwg.mxu0
    %v365 = vsel %vm231, %v205, 0
    %367 = vmatprep.subr.bf16.mxu0 0
    %368 = vmatpush1.bf16.msra.mxu0 %v365
    %369 = vmatprep.subr.bf16.mxu0 0
    %370 = vmatpush1.bf16.msra.mxu0 0
    %371 = vmatprep.subr.bf16.mxu0 0
    %372 = vmatpush1.bf16.msra.mxu0 0
    %373 = vmatprep.subr.bf16.mxu0 0
    %374 = vmatpush1.bf16.msra.mxu0 0
    %375 = vmatprep.subr.bf16.mxu0 0
    %376 = vmatpush1.bf16.msra.mxu0 0
    %377 = vmatprep.subr.bf16.mxu0 0
    %378 = vmatpush1.bf16.msra.mxu0 0
    %379 = vmatprep.subr.bf16.mxu0 0
    %380 = vmatpush1.bf16.msra.mxu0 0
    %381 = vmatprep.subr.bf16.mxu0 0
    %382 = vmatpush1.bf16.msra.mxu0 0
    %383 = vmatprep.subr.bf16.mxu0 0
    %384 = vmatpush1.bf16.msra.mxu0 0
    %385 = vmatprep.subr.bf16.mxu0 0
    %386 = vmatpush1.bf16.msra.mxu0 0
    %387 = vmatprep.subr.bf16.mxu0 0
    %388 = vmatpush1.bf16.msra.mxu0 0
    %389 = vmatprep.subr.bf16.mxu0 0
    %390 = vmatpush1.bf16.msra.mxu0 0
    %391 = vmatprep.subr.bf16.mxu0 0
    %392 = vmatpush1.bf16.msra.mxu0 0
    %393 = vmatprep.subr.bf16.mxu0 0
    %394 = vmatpush1.bf16.msra.mxu0 0
    %395 = vmatprep.subr.bf16.mxu0 0
    %396 = vmatpush1.bf16.msra.mxu0 0
    %397 = vmatprep.subr.bf16.mxu0 0
    %398 = vmatpush1.bf16.msra.mxu0 0
    %399 = vmatprep.mubr.bf16.mxu0 0
    %400 = vmatmul.mubr.bf16.gmra.mrb[0].mxu0 %v229
    %v401 = vpop.f32.mrb[0].mxu0
    %v402 = vadd.f32 %v215, %v401
    %v403 = vpop.f32.mrb[0].mxu0
    %v404 = vpop.f32.mrb[0].mxu0
    %v405 = vadd.f32 %v220, %v404
    %v406 = vpop.f32.mrb[0].mxu0
    %407 = vdwg.mxu0
    %v409 = vsel %vm231, %v206, 0
    %411 = vmatprep.subr.bf16.mxu0 0
    %412 = vmatpush1.bf16.msra.mxu0 %v409
    %413 = vmatprep.subr.bf16.mxu0 0
    %414 = vmatpush1.bf16.msra.mxu0 0
    %415 = vmatprep.subr.bf16.mxu0 0
    %416 = vmatpush1.bf16.msra.mxu0 0
    %417 = vmatprep.subr.bf16.mxu0 0
    %418 = vmatpush1.bf16.msra.mxu0 0
    %419 = vmatprep.subr.bf16.mxu0 0
    %420 = vmatpush1.bf16.msra.mxu0 0
    %421 = vmatprep.subr.bf16.mxu0 0
    %422 = vmatpush1.bf16.msra.mxu0 0
    %423 = vmatprep.subr.bf16.mxu0 0
    %424 = vmatpush1.bf16.msra.mxu0 0
    %425 = vmatprep.subr.bf16.mxu0 0
    %426 = vmatpush1.bf16.msra.mxu0 0
    %427 = vmatprep.subr.bf16.mxu0 0
    %428 = vmatpush1.bf16.msra.mxu0 0
    %429 = vmatprep.subr.bf16.mxu0 0
    %430 = vmatpush1.bf16.msra.mxu0 0
    %431 = vmatprep.subr.bf16.mxu0 0
    %432 = vmatpush1.bf16.msra.mxu0 0
    %433 = vmatprep.subr.bf16.mxu0 0
    %434 = vmatpush1.bf16.msra.mxu0 0
    %435 = vmatprep.subr.bf16.mxu0 0
    %436 = vmatpush1.bf16.msra.mxu0 0
    %437 = vmatprep.subr.bf16.mxu0 0
    %438 = vmatpush1.bf16.msra.mxu0 0
    %439 = vmatprep.subr.bf16.mxu0 0
    %440 = vmatpush1.bf16.msra.mxu0 0
    %441 = vmatprep.subr.bf16.mxu0 0
    %442 = vmatpush1.bf16.msra.mxu0 0
    %443 = vmatprep.mubr.bf16.mxu0 0
    %444 = vmatmul.mubr.bf16.gmra.mrb[0].mxu0 %v229
    %v445 = vpop.f32.mrb[0].mxu0
    %v446 = vadd.f32 %v215, %v445
    %v447 = vpop.f32.mrb[0].mxu0
    %v448 = vpop.f32.mrb[0].mxu0
    %v449 = vadd.f32 %v220, %v448
    %v450 = vpop.f32.mrb[0].mxu0
    %451 = vdwg.mxu0
    %v453 = vsel %vm231, %v207, 0
    %455 = vmatprep.subr.bf16.mxu0 0
    %456 = vmatpush1.bf16.msra.mxu0 %v453
    %457 = vmatprep.subr.bf16.mxu0 0
    %458 = vmatpush1.bf16.msra.mxu0 0
    %459 = vmatprep.subr.bf16.mxu0 0
    %460 = vmatpush1.bf16.msra.mxu0 0
    %461 = vmatprep.subr.bf16.mxu0 0
    %462 = vmatpush1.bf16.msra.mxu0 0
    %463 = vmatprep.subr.bf16.mxu0 0
    %464 = vmatpush1.bf16.msra.mxu0 0
    %465 = vmatprep.subr.bf16.mxu0 0
    %466 = vmatpush1.bf16.msra.mxu0 0
    %467 = vmatprep.subr.bf16.mxu0 0
    %468 = vmatpush1.bf16.msra.mxu0 0
    %469 = vmatprep.subr.bf16.mxu0 0
    %470 = vmatpush1.bf16.msra.mxu0 0
    %471 = vmatprep.subr.bf16.mxu0 0
    %472 = vmatpush1.bf16.msra.mxu0 0
    %473 = vmatprep.subr.bf16.mxu0 0
    %474 = vmatpush1.bf16.msra.mxu0 0
    %475 = vmatprep.subr.bf16.mxu0 0
    %476 = vmatpush1.bf16.msra.mxu0 0
    %477 = vmatprep.subr.bf16.mxu0 0
    %478 = vmatpush1.bf16.msra.mxu0 0
    %479 = vmatprep.subr.bf16.mxu0 0
    %480 = vmatpush1.bf16.msra.mxu0 0
    %481 = vmatprep.subr.bf16.mxu0 0
    %482 = vmatpush1.bf16.msra.mxu0 0
    %483 = vmatprep.subr.bf16.mxu0 0
    %484 = vmatpush1.bf16.msra.mxu0 0
    %485 = vmatprep.subr.bf16.mxu0 0
    %486 = vmatpush1.bf16.msra.mxu0 0
    %487 = vmatprep.mubr.bf16.mxu0 0
    %488 = vmatmul.mubr.bf16.gmra.mrb[0].mxu0 %v229
    %v489 = vpop.f32.mrb[0].mxu0
    %v490 = vadd.f32 %v215, %v489
    %v491 = vpop.f32.mrb[0].mxu0
    %v492 = vpop.f32.mrb[0].mxu0
    %v493 = vadd.f32 %v220, %v492
    %v494 = vpop.f32.mrb[0].mxu0
    %495 = vdwg.mxu0
    %v497 = vsel %vm231, %v208, 0
    %499 = vmatprep.subr.bf16.mxu0 0
    %500 = vmatpush1.bf16.msra.mxu0 %v497
    %501 = vmatprep.subr.bf16.mxu0 0
    %502 = vmatpush1.bf16.msra.mxu0 0
    %503 = vmatprep.subr.bf16.mxu0 0
    %504 = vmatpush1.bf16.msra.mxu0 0
    %505 = vmatprep.subr.bf16.mxu0 0
    %506 = vmatpush1.bf16.msra.mxu0 0
    %507 = vmatprep.subr.bf16.mxu0 0
    %508 = vmatpush1.bf16.msra.mxu0 0
    %509 = vmatprep.subr.bf16.mxu0 0
    %510 = vmatpush1.bf16.msra.mxu0 0
    %511 = vmatprep.subr.bf16.mxu0 0
    %512 = vmatpush1.bf16.msra.mxu0 0
    %513 = vmatprep.subr.bf16.mxu0 0
    %514 = vmatpush1.bf16.msra.mxu0 0
    %515 = vmatprep.subr.bf16.mxu0 0
    %516 = vmatpush1.bf16.msra.mxu0 0
    %517 = vmatprep.subr.bf16.mxu0 0
    %518 = vmatpush1.bf16.msra.mxu0 0
    %519 = vmatprep.subr.bf16.mxu0 0
    %520 = vmatpush1.bf16.msra.mxu0 0
    %521 = vmatprep.subr.bf16.mxu0 0
    %522 = vmatpush1.bf16.msra.mxu0 0
    %523 = vmatprep.subr.bf16.mxu0 0
    %524 = vmatpush1.bf16.msra.mxu0 0
    %525 = vmatprep.subr.bf16.mxu0 0
    %526 = vmatpush1.bf16.msra.mxu0 0
    %527 = vmatprep.subr.bf16.mxu0 0
    %528 = vmatpush1.bf16.msra.mxu0 0
    %529 = vmatprep.subr.bf16.mxu0 0
    %530 = vmatpush1.bf16.msra.mxu0 0
    %531 = vmatprep.mubr.bf16.mxu0 0
    %532 = vmatmul.mubr.bf16.gmra.mrb[0].mxu0 %v229
    %v533 = vpop.f32.mrb[0].mxu0
    %v534 = vadd.f32 %v215, %v533
    %v535 = vpop.f32.mrb[0].mxu0
    %v536 = vpop.f32.mrb[0].mxu0
    %v537 = vadd.f32 %v220, %v536
    %v538 = vpop.f32.mrb[0].mxu0
    %539 = vdwg.mxu0
    %v541 = vsel %vm231, %v209, 0
    %543 = vmatprep.subr.bf16.mxu0 0
    %544 = vmatpush1.bf16.msra.mxu0 %v541
    %545 = vmatprep.subr.bf16.mxu0 0
    %546 = vmatpush1.bf16.msra.mxu0 0
    %547 = vmatprep.subr.bf16.mxu0 0
    %548 = vmatpush1.bf16.msra.mxu0 0
    %549 = vmatprep.subr.bf16.mxu0 0
    %550 = vmatpush1.bf16.msra.mxu0 0
    %551 = vmatprep.subr.bf16.mxu0 0
    %552 = vmatpush1.bf16.msra.mxu0 0
    %553 = vmatprep.subr.bf16.mxu0 0
    %554 = vmatpush1.bf16.msra.mxu0 0
    %555 = vmatprep.subr.bf16.mxu0 0
    %556 = vmatpush1.bf16.msra.mxu0 0
    %557 = vmatprep.subr.bf16.mxu0 0
    %558 = vmatpush1.bf16.msra.mxu0 0
    %559 = vmatprep.subr.bf16.mxu0 0
    %560 = vmatpush1.bf16.msra.mxu0 0
    %561 = vmatprep.subr.bf16.mxu0 0
    %562 = vmatpush1.bf16.msra.mxu0 0
    %563 = vmatprep.subr.bf16.mxu0 0
    %564 = vmatpush1.bf16.msra.mxu0 0
    %565 = vmatprep.subr.bf16.mxu0 0
    %566 = vmatpush1.bf16.msra.mxu0 0
    %567 = vmatprep.subr.bf16.mxu0 0
    %568 = vmatpush1.bf16.msra.mxu0 0
    %569 = vmatprep.subr.bf16.mxu0 0
    %570 = vmatpush1.bf16.msra.mxu0 0
    %571 = vmatprep.subr.bf16.mxu0 0
    %572 = vmatpush1.bf16.msra.mxu0 0
    %573 = vmatprep.subr.bf16.mxu0 0
    %574 = vmatpush1.bf16.msra.mxu0 0
    %575 = vmatprep.mubr.bf16.mxu0 0
    %576 = vmatmul.mubr.bf16.gmra.mrb[0].mxu0 %v229
    %v577 = vpop.f32.mrb[0].mxu0
    %v578 = vadd.f32 %v215, %v577
    %v579 = vpop.f32.mrb[0].mxu0
    %v580 = vpop.f32.mrb[0].mxu0
    %v581 = vadd.f32 %v220, %v580
    %v582 = vpop.f32.mrb[0].mxu0
    %583 = vdwg.mxu0
    %v584 = vmul.f32 %v270, 0.5
    %v585 = vmul.f32 %v273, 0.5
    %v586 = vmul.f32 %v314, 0.5
    %v587 = vmul.f32 %v317, 0.5
    %v588 = vmul.f32 %v358, 0.5
    %v589 = vmul.f32 %v361, 0.5
    %v590 = vmul.f32 %v402, 0.5
    %v591 = vmul.f32 %v405, 0.5
    %v592 = vmul.f32 %v446, 0.5
    %v593 = vmul.f32 %v449, 0.5
    %v594 = vmul.f32 %v490, 0.5
    %v595 = vmul.f32 %v493, 0.5
    %v596 = vmul.f32 %v534, 0.5
    %v597 = vmul.f32 %v537, 0.5
    %v598 = vmul.f32 %v578, 0.5
    %v599 = vmul.f32 %v581, 0.5
    %v600 = vmul.f32 %v270, 0.044715
    %v601 = vmul.f32 %v273, 0.044715
    %v602 = vmul.f32 %v314, 0.044715
    %v603 = vmul.f32 %v317, 0.044715
    %v604 = vmul.f32 %v358, 0.044715
    %v605 = vmul.f32 %v361, 0.044715
    %v606 = vmul.f32 %v402, 0.044715
    %v607 = vmul.f32 %v405, 0.044715
    %v608 = vmul.f32 %v446, 0.044715
    %v609 = vmul.f32 %v449, 0.044715
    %v610 = vmul.f32 %v490, 0.044715
    %v611 = vmul.f32 %v493, 0.044715
    %v612 = vmul.f32 %v534, 0.044715
    %v613 = vmul.f32 %v537, 0.044715
    %v614 = vmul.f32 %v578, 0.044715
    %v615 = vmul.f32 %v581, 0.044715
    %v616 = vmul.f32 %v600, %v270
    %v617 = vmul.f32 %v601, %v273
    %v618 = vmul.f32 %v602, %v314
    %v619 = vmul.f32 %v603, %v317
    %v620 = vmul.f32 %v604, %v358
    %v621 = vmul.f32 %v605, %v361
    %v622 = vmul.f32 %v606, %v402
    %v623 = vmul.f32 %v607, %v405
    %v624 = vmul.f32 %v608, %v446
    %v625 = vmul.f32 %v609, %v449
    %v626 = vmul.f32 %v610, %v490
    %v627 = vmul.f32 %v611, %v493
    %v628 = vmul.f32 %v612, %v534
    %v629 = vmul.f32 %v613, %v537
    %v630 = vmul.f32 %v614, %v578
    %v631 = vmul.f32 %v615, %v581
    %v632 = vmul.f32 %v616, %v270
    %v633 = vmul.f32 %v617, %v273
    %v634 = vmul.f32 %v618, %v314
    %v635 = vmul.f32 %v619, %v317
    %v636 = vmul.f32 %v620, %v358
    %v637 = vmul.f32 %v621, %v361
    %v638 = vmul.f32 %v622, %v402
    %v639 = vmul.f32 %v623, %v405
    %v640 = vmul.f32 %v624, %v446
    %v641 = vmul.f32 %v625, %v449
    %v642 = vmul.f32 %v626, %v490
    %v643 = vmul.f32 %v627, %v493
    %v644 = vmul.f32 %v628, %v534
    %v645 = vmul.f32 %v629, %v537
    %v646 = vmul.f32 %v630, %v578
    %v647 = vmul.f32 %v631, %v581
    %v648 = vadd.f32 %v270, %v632
    %v649 = vadd.f32 %v273, %v633
    %v650 = vadd.f32 %v314, %v634
    %v651 = vadd.f32 %v317, %v635
    %v652 = vadd.f32 %v358, %v636
    %v653 = vadd.f32 %v361, %v637
    %v654 = vadd.f32 %v402, %v638
    %v655 = vadd.f32 %v405, %v639
    %v656 = vadd.f32 %v446, %v640
    %v657 = vadd.f32 %v449, %v641
    %v658 = vadd.f32 %v490, %v642
    %v659 = vadd.f32 %v493, %v643
    %v660 = vadd.f32 %v534, %v644
    %v661 = vadd.f32 %v537, %v645
    %v662 = vadd.f32 %v578, %v646
    %v663 = vadd.f32 %v581, %v647
    %v664 = vmul.f32 %v648, 0.7978846
    %v665 = vmul.f32 %v649, 0.7978846
    %v666 = vmul.f32 %v650, 0.7978846
    %v667 = vmul.f32 %v651, 0.7978846
    %v668 = vmul.f32 %v652, 0.7978846
    %v669 = vmul.f32 %v653, 0.7978846
    %v670 = vmul.f32 %v654, 0.7978846
    %v671 = vmul.f32 %v655, 0.7978846
    %v672 = vmul.f32 %v656, 0.7978846
    %v673 = vmul.f32 %v657, 0.7978846
    %v674 = vmul.f32 %v658, 0.7978846
    %v675 = vmul.f32 %v659, 0.7978846
    %v676 = vmul.f32 %v660, 0.7978846
    %v677 = vmul.f32 %v661, 0.7978846
    %v678 = vmul.f32 %v662, 0.7978846
    %v679 = vmul.f32 %v663, 0.7978846
    %v680 = vtanh.pop %v664
    %v681 = vtanh.pop %v665
    %v682 = vtanh.pop %v666
    %v683 = vtanh.pop %v667
    %v684 = vtanh.pop %v668
    %v685 = vtanh.pop %v669
    %v686 = vtanh.pop %v670
    %v687 = vtanh.pop %v671
    %v688 = vtanh.pop %v672
    %v689 = vtanh.pop %v673
    %v690 = vtanh.pop %v674
    %v691 = vtanh.pop %v675
    %v692 = vtanh.pop %v676
    %v693 = vtanh.pop %v677
    %v694 = vtanh.pop %v678
    %v695 = vtanh.pop %v679
    %v696 = vadd.f32 %v680, 1.0
    %v697 = vadd.f32 %v681, 1.0
    %v698 = vadd.f32 %v682, 1.0
    %v699 = vadd.f32 %v683, 1.0
    %v700 = vadd.f32 %v684, 1.0
    %v701 = vadd.f32 %v685, 1.0
    %v702 = vadd.f32 %v686, 1.0
    %v703 = vadd.f32 %v687, 1.0
    %v704 = vadd.f32 %v688, 1.0
    %v705 = vadd.f32 %v689, 1.0
    %v706 = vadd.f32 %v690, 1.0
    %v707 = vadd.f32 %v691, 1.0
    %v708 = vadd.f32 %v692, 1.0
    %v709 = vadd.f32 %v693, 1.0
    %v710 = vadd.f32 %v694, 1.0
    %v711 = vadd.f32 %v695, 1.0
    %v712 = vmul.f32 %v584, %v696
    %v713 = vmul.f32 %v585, %v697
    %v714 = vmul.f32 %v586, %v698
    %v715 = vmul.f32 %v587, %v699
    %v716 = vmul.f32 %v588, %v700
    %v717 = vmul.f32 %v589, %v701
    %v718 = vmul.f32 %v590, %v702
    %v719 = vmul.f32 %v591, %v703
    %v720 = vmul.f32 %v592, %v704
    %v721 = vmul.f32 %v593, %v705
    %v722 = vmul.f32 %v594, %v706
    %v723 = vmul.f32 %v595, %v707
    %v724 = vmul.f32 %v596, %v708
    %v725 = vmul.f32 %v597, %v709
    %v726 = vmul.f32 %v598, %v710
    %v727 = vmul.f32 %v599, %v711
    %v728 = vpack.c.bf16 %v713, %v712
    %v729 = vpack.c.bf16 %v715, %v714
    %v730 = vpack.c.bf16 %v717, %v716
    %v731 = vpack.c.bf16 %v719, %v718
    %v732 = vpack.c.bf16 %v721, %v720
    %v733 = vpack.c.bf16 %v723, %v722
    %v734 = vpack.c.bf16 %v725, %v724
    %v735 = vpack.c.bf16 %v727, %v726
    %v736 = vld [vmem:[%s6] sm:$0xff]
    %738 = vset.pattern.permute.xlu0 0
    %739 = vperm.xlu0 %738, %v736
    %v740 = vpop.permute.xlu0 %739
    %vm742 = vcmask 130048
    %v744 = vsel %vm742, %v185, 0
    %746 = vmatprep.subr.bf16.mxu0 0
    %747 = vmatpush1.bf16.msra.mxu0 %v728
    %748 = vmatprep.subr.bf16.mxu0 0
    %749 = vmatpush1.bf16.msra.mxu0 0
    %750 = vmatprep.subr.bf16.mxu0 0
    %751 = vmatpush1.bf16.msra.mxu0 0
    %752 = vmatprep.subr.bf16.mxu0 0
    %753 = vmatpush1.bf16.msra.mxu0 0
    %754 = vmatprep.subr.bf16.mxu0 0
    %755 = vmatpush1.bf16.msra.mxu0 0
    %756 = vmatprep.subr.bf16.mxu0 0
    %757 = vmatpush1.bf16.msra.mxu0 0
    %758 = vmatprep.subr.bf16.mxu0 0
    %759 = vmatpush1.bf16.msra.mxu0 0
    %760 = vmatprep.subr.bf16.mxu0 0
    %761 = vmatpush1.bf16.msra.mxu0 0
    %762 = vmatprep.subr.bf16.mxu0 0
    %763 = vmatpush1.bf16.msra.mxu0 0
    %764 = vmatprep.subr.bf16.mxu0 0
    %765 = vmatpush1.bf16.msra.mxu0 0
    %766 = vmatprep.subr.bf16.mxu0 0
    %767 = vmatpush1.bf16.msra.mxu0 0
    %768 = vmatprep.subr.bf16.mxu0 0
    %769 = vmatpush1.bf16.msra.mxu0 0
    %770 = vmatprep.subr.bf16.mxu0 0
    %771 = vmatpush1.bf16.msra.mxu0 0
    %772 = vmatprep.subr.bf16.mxu0 0
    %773 = vmatpush1.bf16.msra.mxu0 0
    %774 = vmatprep.subr.bf16.mxu0 0
    %775 = vmatpush1.bf16.msra.mxu0 0
    %776 = vmatprep.subr.bf16.mxu0 0
    %777 = vmatpush1.bf16.msra.mxu0 0
    %778 = vmatprep.mubr.bf16.mxu0 0
    %779 = vmatmul.mubr.bf16.gmra.mrb[0].mxu0 %v744
    %v780 = vpop.f32.mrb[0].mxu0
    %v781 = vadd.f32 %v740, %v780
    %v782 = vpop.f32.mrb[0].mxu0
    %v783 = vpop.f32.mrb[0].mxu0
    %v784 = vpop.f32.mrb[0].mxu0
    %785 = vdwg.mxu0
    %786 = vmatprep.subr.bf16.mxu0 0
    %787 = vmatpush1.bf16.msra.mxu0 %v729
    %788 = vmatprep.subr.bf16.mxu0 0
    %789 = vmatpush1.bf16.msra.mxu0 0
    %790 = vmatprep.subr.bf16.mxu0 0
    %791 = vmatpush1.bf16.msra.mxu0 0
    %792 = vmatprep.subr.bf16.mxu0 0
    %793 = vmatpush1.bf16.msra.mxu0 0
    %794 = vmatprep.subr.bf16.mxu0 0
    %795 = vmatpush1.bf16.msra.mxu0 0
    %796 = vmatprep.subr.bf16.mxu0 0
    %797 = vmatpush1.bf16.msra.mxu0 0
    %798 = vmatprep.subr.bf16.mxu0 0
    %799 = vmatpush1.bf16.msra.mxu0 0
    %800 = vmatprep.subr.bf16.mxu0 0
    %801 = vmatpush1.bf16.msra.mxu0 0
    %802 = vmatprep.subr.bf16.mxu0 0
    %803 = vmatpush1.bf16.msra.mxu0 0
    %804 = vmatprep.subr.bf16.mxu0 0
    %805 = vmatpush1.bf16.msra.mxu0 0
    %806 = vmatprep.subr.bf16.mxu0 0
    %807 = vmatpush1.bf16.msra.mxu0 0
    %808 = vmatprep.subr.bf16.mxu0 0
    %809 = vmatpush1.bf16.msra.mxu0 0
    %810 = vmatprep.subr.bf16.mxu0 0
    %811 = vmatpush1.bf16.msra.mxu0 0
    %812 = vmatprep.subr.bf16.mxu0 0
    %813 = vmatpush1.bf16.msra.mxu0 0
    %814 = vmatprep.subr.bf16.mxu0 0
    %815 = vmatpush1.bf16.msra.mxu0 0
    %816 = vmatprep.subr.bf16.mxu0 0
    %817 = vmatpush1.bf16.msra.mxu0 0
    %818 = vmatprep.mubr.bf16.mxu0 0
    %819 = vmatmul.mubr.bf16.gmra.mrb[0].mxu0 %v744
    %v820 = vpop.f32.mrb[0].mxu0
    %v821 = vadd.f32 %v740, %v820
    %v822 = vpop.f32.mrb[0].mxu0
    %v823 = vpop.f32.mrb[0].mxu0
    %v824 = vpop.f32.mrb[0].mxu0
    %825 = vdwg.mxu0
    %826 = vmatprep.subr.bf16.mxu0 0
    %827 = vmatpush1.bf16.msra.mxu0 %v730
    %828 = vmatprep.subr.bf16.mxu0 0
    %829 = vmatpush1.bf16.msra.mxu0 0
    %830 = vmatprep.subr.bf16.mxu0 0
    %831 = vmatpush1.bf16.msra.mxu0 0
    %832 = vmatprep.subr.bf16.mxu0 0
    %833 = vmatpush1.bf16.msra.mxu0 0
    %834 = vmatprep.subr.bf16.mxu0 0
    %835 = vmatpush1.bf16.msra.mxu0 0
    %836 = vmatprep.subr.bf16.mxu0 0
    %837 = vmatpush1.bf16.msra.mxu0 0
    %838 = vmatprep.subr.bf16.mxu0 0
    %839 = vmatpush1.bf16.msra.mxu0 0
    %840 = vmatprep.subr.bf16.mxu0 0
    %841 = vmatpush1.bf16.msra.mxu0 0
    %842 = vmatprep.subr.bf16.mxu0 0
    %843 = vmatpush1.bf16.msra.mxu0 0
    %844 = vmatprep.subr.bf16.mxu0 0
    %845 = vmatpush1.bf16.msra.mxu0 0
    %846 = vmatprep.subr.bf16.mxu0 0
    %847 = vmatpush1.bf16.msra.mxu0 0
    %848 = vmatprep.subr.bf16.mxu0 0
    %849 = vmatpush1.bf16.msra.mxu0 0
    %850 = vmatprep.subr.bf16.mxu0 0
    %851 = vmatpush1.bf16.msra.mxu0 0
    %852 = vmatprep.subr.bf16.mxu0 0
    %853 = vmatpush1.bf16.msra.mxu0 0
    %854 = vmatprep.subr.bf16.mxu0 0
    %855 = vmatpush1.bf16.msra.mxu0 0
    %856 = vmatprep.subr.bf16.mxu0 0
    %857 = vmatpush1.bf16.msra.mxu0 0
    %858 = vmatprep.mubr.bf16.mxu0 0
    %859 = vmatmul.mubr.bf16.gmra.mrb[0].mxu0 %v744
    %v860 = vpop.f32.mrb[0].mxu0
    %v861 = vadd.f32 %v740, %v860
    %v862 = vpop.f32.mrb[0].mxu0
    %v863 = vpop.f32.mrb[0].mxu0
    %v864 = vpop.f32.mrb[0].mxu0
    %865 = vdwg.mxu0
    %866 = vmatprep.subr.bf16.mxu0 0
    %867 = vmatpush1.bf16.msra.mxu0 %v731
    %868 = vmatprep.subr.bf16.mxu0 0
    %869 = vmatpush1.bf16.msra.mxu0 0
    %870 = vmatprep.subr.bf16.mxu0 0
    %871 = vmatpush1.bf16.msra.mxu0 0
    %872 = vmatprep.subr.bf16.mxu0 0
    %873 = vmatpush1.bf16.msra.mxu0 0
    %874 = vmatprep.subr.bf16.mxu0 0
    %875 = vmatpush1.bf16.msra.mxu0 0
    %876 = vmatprep.subr.bf16.mxu0 0
    %877 = vmatpush1.bf16.msra.mxu0 0
    %878 = vmatprep.subr.bf16.mxu0 0
    %879 = vmatpush1.bf16.msra.mxu0 0
    %880 = vmatprep.subr.bf16.mxu0 0
    %881 = vmatpush1.bf16.msra.mxu0 0
    %882 = vmatprep.subr.bf16.mxu0 0
    %883 = vmatpush1.bf16.msra.mxu0 0
    %884 = vmatprep.subr.bf16.mxu0 0
    %885 = vmatpush1.bf16.msra.mxu0 0
    %886 = vmatprep.subr.bf16.mxu0 0
    %887 = vmatpush1.bf16.msra.mxu0 0
    %888 = vmatprep.subr.bf16.mxu0 0
    %889 = vmatpush1.bf16.msra.mxu0 0
    %890 = vmatprep.subr.bf16.mxu0 0
    %891 = vmatpush1.bf16.msra.mxu0 0
    %892 = vmatprep.subr.bf16.mxu0 0
    %893 = vmatpush1.bf16.msra.mxu0 0
    %894 = vmatprep.subr.bf16.mxu0 0
    %895 = vmatpush1.bf16.msra.mxu0 0
    %896 = vmatprep.subr.bf16.mxu0 0
    %897 = vmatpush1.bf16.msra.mxu0 0
    %898 = vmatprep.mubr.bf16.mxu0 0
    %899 = vmatmul.mubr.bf16.gmra.mrb[0].mxu0 %v744
    %v900 = vpop.f32.mrb[0].mxu0
    %v901 = vadd.f32 %v740, %v900
    %v902 = vpop.f32.mrb[0].mxu0
    %v903 = vpop.f32.mrb[0].mxu0
    %v904 = vpop.f32.mrb[0].mxu0
    %905 = vdwg.mxu0
    %906 = vmatprep.subr.bf16.mxu0 0
    %907 = vmatpush1.bf16.msra.mxu0 %v732
    %908 = vmatprep.subr.bf16.mxu0 0
    %909 = vmatpush1.bf16.msra.mxu0 0
    %910 = vmatprep.subr.bf16.mxu0 0
    %911 = vmatpush1.bf16.msra.mxu0 0
    %912 = vmatprep.subr.bf16.mxu0 0
    %913 = vmatpush1.bf16.msra.mxu0 0
    %914 = vmatprep.subr.bf16.mxu0 0
    %915 = vmatpush1.bf16.msra.mxu0 0
    %916 = vmatprep.subr.bf16.mxu0 0
    %917 = vmatpush1.bf16.msra.mxu0 0
    %918 = vmatprep.subr.bf16.mxu0 0
    %919 = vmatpush1.bf16.msra.mxu0 0
    %920 = vmatprep.subr.bf16.mxu0 0
    %921 = vmatpush1.bf16.msra.mxu0 0
    %922 = vmatprep.subr.bf16.mxu0 0
    %923 = vmatpush1.bf16.msra.mxu0 0
    %924 = vmatprep.subr.bf16.mxu0 0
    %925 = vmatpush1.bf16.msra.mxu0 0
    %926 = vmatprep.subr.bf16.mxu0 0
    %927 = vmatpush1.bf16.msra.mxu0 0
    %928 = vmatprep.subr.bf16.mxu0 0
    %929 = vmatpush1.bf16.msra.mxu0 0
    %930 = vmatprep.subr.bf16.mxu0 0
    %931 = vmatpush1.bf16.msra.mxu0 0
    %932 = vmatprep.subr.bf16.mxu0 0
    %933 = vmatpush1.bf16.msra.mxu0 0
    %934 = vmatprep.subr.bf16.mxu0 0
    %935 = vmatpush1.bf16.msra.mxu0 0
    %936 = vmatprep.subr.bf16.mxu0 0
    %937 = vmatpush1.bf16.msra.mxu0 0
    %938 = vmatprep.mubr.bf16.mxu0 0
    %939 = vmatmul.mubr.bf16.gmra.mrb[0].mxu0 %v744
    %v940 = vpop.f32.mrb[0].mxu0
    %v941 = vadd.f32 %v740, %v940
    %v942 = vpop.f32.mrb[0].mxu0
    %v943 = vpop.f32.mrb[0].mxu0
    %v944 = vpop.f32.mrb[0].mxu0
    %945 = vdwg.mxu0
    %946 = vmatprep.subr.bf16.mxu0 0
    %947 = vmatpush1.bf16.msra.mxu0 %v733
    %948 = vmatprep.subr.bf16.mxu0 0
    %949 = vmatpush1.bf16.msra.mxu0 0
    %950 = vmatprep.subr.bf16.mxu0 0
    %951 = vmatpush1.bf16.msra.mxu0 0
    %952 = vmatprep.subr.bf16.mxu0 0
    %953 = vmatpush1.bf16.msra.mxu0 0
    %954 = vmatprep.subr.bf16.mxu0 0
    %955 = vmatpush1.bf16.msra.mxu0 0
    %956 = vmatprep.subr.bf16.mxu0 0
    %957 = vmatpush1.bf16.msra.mxu0 0
    %958 = vmatprep.subr.bf16.mxu0 0
    %959 = vmatpush1.bf16.msra.mxu0 0
    %960 = vmatprep.subr.bf16.mxu0 0
    %961 = vmatpush1.bf16.msra.mxu0 0
    %962 = vmatprep.subr.bf16.mxu0 0
    %963 = vmatpush1.bf16.msra.mxu0 0
    %964 = vmatprep.subr.bf16.mxu0 0
    %965 = vmatpush1.bf16.msra.mxu0 0
    %966 = vmatprep.subr.bf16.mxu0 0
    %967 = vmatpush1.bf16.msra.mxu0 0
    %968 = vmatprep.subr.bf16.mxu0 0
    %969 = vmatpush1.bf16.msra.mxu0 0
    %970 = vmatprep.subr.bf16.mxu0 0
    %971 = vmatpush1.bf16.msra.mxu0 0
    %972 = vmatprep.subr.bf16.mxu0 0
    %973 = vmatpush1.bf16.msra.mxu0 0
    %974 = vmatprep.subr.bf16.mxu0 0
    %975 = vmatpush1.bf16.msra.mxu0 0
    %976 = vmatprep.subr.bf16.mxu0 0
    %977 = vmatpush1.bf16.msra.mxu0 0
    %978 = vmatprep.mubr.bf16.mxu0 0
    %979 = vmatmul.mubr.bf16.gmra.mrb[0].mxu0 %v744
    %v980 = vpop.f32.mrb[0].mxu0
    %v981 = vadd.f32 %v740, %v980
    %v982 = vpop.f32.mrb[0].mxu0
    %v983 = vpop.f32.mrb[0].mxu0
    %v984 = vpop.f32.mrb[0].mxu0
    %985 = vdwg.mxu0
    %986 = vmatprep.subr.bf16.mxu0 0
    %987 = vmatpush1.bf16.msra.mxu0 %v734
    %988 = vmatprep.subr.bf16.mxu0 0
    %989 = vmatpush1.bf16.msra.mxu0 0
    %990 = vmatprep.subr.bf16.mxu0 0
    %991 = vmatpush1.bf16.msra.mxu0 0
    %992 = vmatprep.subr.bf16.mxu0 0
    %993 = vmatpush1.bf16.msra.mxu0 0
    %994 = vmatprep.subr.bf16.mxu0 0
    %995 = vmatpush1.bf16.msra.mxu0 0
    %996 = vmatprep.subr.bf16.mxu0 0
    %997 = vmatpush1.bf16.msra.mxu0 0
    %998 = vmatprep.subr.bf16.mxu0 0
    %999 = vmatpush1.bf16.msra.mxu0 0
    %1000 = vmatprep.subr.bf16.mxu0 0
    %1001 = vmatpush1.bf16.msra.mxu0 0
    %1002 = vmatprep.subr.bf16.mxu0 0
    %1003 = vmatpush1.bf16.msra.mxu0 0
    %1004 = vmatprep.subr.bf16.mxu0 0
    %1005 = vmatpush1.bf16.msra.mxu0 0
    %1006 = vmatprep.subr.bf16.mxu0 0
    %1007 = vmatpush1.bf16.msra.mxu0 0
    %1008 = vmatprep.subr.bf16.mxu0 0
    %1009 = vmatpush1.bf16.msra.mxu0 0
    %1010 = vmatprep.subr.bf16.mxu0 0
    %1011 = vmatpush1.bf16.msra.mxu0 0
    %1012 = vmatprep.subr.bf16.mxu0 0
    %1013 = vmatpush1.bf16.msra.mxu0 0
    %1014 = vmatprep.subr.bf16.mxu0 0
    %1015 = vmatpush1.bf16.msra.mxu0 0
    %1016 = vmatprep.subr.bf16.mxu0 0
    %1017 = vmatpush1.bf16.msra.mxu0 0
    %1018 = vmatprep.mubr.bf16.mxu0 0
    %1019 = vmatmul.mubr.bf16.gmra.mrb[0].mxu0 %v744
    %v1020 = vpop.f32.mrb[0].mxu0
    %v1021 = vadd.f32 %v740, %v1020
    %v1022 = vpop.f32.mrb[0].mxu0
    %v1023 = vpop.f32.mrb[0].mxu0
    %v1024 = vpop.f32.mrb[0].mxu0
    %1025 = vdwg.mxu0
    %1026 = vmatprep.subr.bf16.mxu0 0
    %1027 = vmatpush1.bf16.msra.mxu0 %v735
    %1028 = vmatprep.subr.bf16.mxu0 0
    %1029 = vmatpush1.bf16.msra.mxu0 0
    %1030 = vmatprep.subr.bf16.mxu0 0
    %1031 = vmatpush1.bf16.msra.mxu0 0
    %1032 = vmatprep.subr.bf16.mxu0 0
    %1033 = vmatpush1.bf16.msra.mxu0 0
    %1034 = vmatprep.subr.bf16.mxu0 0
    %1035 = vmatpush1.bf16.msra.mxu0 0
    %1036 = vmatprep.subr.bf16.mxu0 0
    %1037 = vmatpush1.bf16.msra.mxu0 0
    %1038 = vmatprep.subr.bf16.mxu0 0
    %1039 = vmatpush1.bf16.msra.mxu0 0
    %1040 = vmatprep.subr.bf16.mxu0 0
    %1041 = vmatpush1.bf16.msra.mxu0 0
    %1042 = vmatprep.subr.bf16.mxu0 0
    %1043 = vmatpush1.bf16.msra.mxu0 0
    %1044 = vmatprep.subr.bf16.mxu0 0
    %1045 = vmatpush1.bf16.msra.mxu0 0
    %1046 = vmatprep.subr.bf16.mxu0 0
    %1047 = vmatpush1.bf16.msra.mxu0 0
    %1048 = vmatprep.subr.bf16.mxu0 0
    %1049 = vmatpush1.bf16.msra.mxu0 0
    %1050 = vmatprep.subr.bf16.mxu0 0
    %1051 = vmatpush1.bf16.msra.mxu0 0
    %1052 = vmatprep.subr.bf16.mxu0 0
    %1053 = vmatpush1.bf16.msra.mxu0 0
    %1054 = vmatprep.subr.bf16.mxu0 0
    %1055 = vmatpush1.bf16.msra.mxu0 0
    %1056 = vmatprep.subr.bf16.mxu0 0
    %1057 = vmatpush1.bf16.msra.mxu0 0
    %1058 = vmatprep.mubr.bf16.mxu0 0
    %1059 = vmatmul.mubr.bf16.gmra.mrb[0].mxu0 %v744
    %v1060 = vpop.f32.mrb[0].mxu0
    %v1061 = vadd.f32 %v740, %v1060
    %v1062 = vpop.f32.mrb[0].mxu0
    %v1063 = vpop.f32.mrb[0].mxu0
    %v1064 = vpop.f32.mrb[0].mxu0
    %1065 = vdwg.mxu0
    %v1066 = vadd.f32 %v153, %v781
    %v1067 = vadd.f32 %v156, %v821
    %v1068 = vadd.f32 %v161, %v861
    %v1069 = vadd.f32 %v164, %v901
    %v1070 = vadd.f32 %v169, %v941
    %v1071 = vadd.f32 %v172, %v981
    %v1072 = vadd.f32 %v177, %v1021
    %v1073 = vadd.f32 %v180, %v1061
    %v1074 = vld [vmem:[%s7] sm:$0x1]
    %v1075 = vld [vmem:[%s8] sm:$0x1]
    %vm1076 = vcmask 261120
    %v1077 = vsel %vm1076, %v1066, 0.0
    %1078 = vadd.xlane.f32.xlu0 %v1077
    %v1079 = vpop.xlane.xlu0 %1078
    %v1080 = vsel %vm1076, %v1067, 0.0
    %1081 = vadd.xlane.f32.xlu0 %v1080
    %v1082 = vpop.xlane.xlu0 %1081
    %v1083 = vsel %vm1076, %v1068, 0.0
    %1084 = vadd.xlane.f32.xlu0 %v1083
    %v1085 = vpop.xlane.xlu0 %1084
    %v1086 = vsel %vm1076, %v1069, 0.0
    %1087 = vadd.xlane.f32.xlu0 %v1086
    %v1088 = vpop.xlane.xlu0 %1087
    %v1089 = vsel %vm1076, %v1070, 0.0
    %1090 = vadd.xlane.f32.xlu0 %v1089
    %v1091 = vpop.xlane.xlu0 %1090
    %v1092 = vsel %vm1076, %v1071, 0.0
    %1093 = vadd.xlane.f32.xlu0 %v1092
    %v1094 = vpop.xlane.xlu0 %1093
    %v1095 = vsel %vm1076, %v1072, 0.0
    %1096 = vadd.xlane.f32.xlu0 %v1095
    %v1097 = vpop.xlane.xlu0 %1096
    %v1098 = vsel %vm1076, %v1073, 0.0
    %1099 = vadd.xlane.f32.xlu0 %v1098
    %v1100 = vpop.xlane.xlu0 %1099
    %v1101 = vmul.f32 %v1079, 0.03125
    %v1102 = vmul.f32 %v1082, 0.03125
    %v1103 = vmul.f32 %v1085, 0.03125
    %v1104 = vmul.f32 %v1088, 0.03125
    %v1105 = vmul.f32 %v1091, 0.03125
    %v1106 = vmul.f32 %v1094, 0.03125
    %v1107 = vmul.f32 %v1097, 0.03125
    %v1108 = vmul.f32 %v1100, 0.03125
    %v1109 = vsub.f32 %v1066, %v1101
    %v1110 = vsub.f32 %v1067, %v1102
    %v1111 = vsub.f32 %v1068, %v1103
    %v1112 = vsub.f32 %v1069, %v1104
    %v1113 = vsub.f32 %v1070, %v1105
    %v1114 = vsub.f32 %v1071, %v1106
    %v1115 = vsub.f32 %v1072, %v1107
    %v1116 = vsub.f32 %v1073, %v1108
    %v1117 = vmul.f32 %v1109, %v1109
    %v1118 = vmul.f32 %v1110, %v1110
    %v1119 = vmul.f32 %v1111, %v1111
    %v1120 = vmul.f32 %v1112, %v1112
    %v1121 = vmul.f32 %v1113, %v1113
    %v1122 = vmul.f32 %v1114, %v1114
    %v1123 = vmul.f32 %v1115, %v1115
    %v1124 = vmul.f32 %v1116, %v1116
    %v1125 = vsel %vm1076, %v1117, 0.0
    %1126 = vadd.xlane.f32.xlu0 %v1125
    %v1127 = vpop.xlane.xlu0 %1126
    %v1128 = vsel %vm1076, %v1118, 0.0
    %1129 = vadd.xlane.f32.xlu0 %v1128
    %v1130 = vpop.xlane.xlu0 %1129
    %v1131 = vsel %vm1076, %v1119, 0.0
    %1132 = vadd.xlane.f32.xlu0 %v1131
    %v1133 = vpop.xlane.xlu0 %1132
    %v1134 = vsel %vm1076, %v1120, 0.0
    %1135 = vadd.xlane.f32.xlu0 %v1134
    %v1136 = vpop.xlane.xlu0 %1135
    %v1137 = vsel %vm1076, %v1121, 0.0
    %1138 = vadd.xlane.f32.xlu0 %v1137
    %v1139 = vpop.xlane.xlu0 %1138
    %v1140 = vsel %vm1076, %v1122, 0.0
    %1141 = vadd.xlane.f32.xlu0 %v1140
    %v1142 = vpop.xlane.xlu0 %1141
    %v1143 = vsel %vm1076, %v1123, 0.0
    %1144 = vadd.xlane.f32.xlu0 %v1143
    %v1145 = vpop.xlane.xlu0 %1144
    %v1146 = vsel %vm1076, %v1124, 0.0
    %1147 = vadd.xlane.f32.xlu0 %v1146
    %v1148 = vpop.xlane.xlu0 %1147
    %v1149 = vmul.f32 %v1127, 0.03125
    %v1150 = vmul.f32 %v1130, 0.03125
    %v1151 = vmul.f32 %v1133, 0.03125
    %v1152 = vmul.f32 %v1136, 0.03125
    %v1153 = vmul.f32 %v1139, 0.03125
    %v1154 = vmul.f32 %v1142, 0.03125
    %v1155 = vmul.f32 %v1145, 0.03125
    %v1156 = vmul.f32 %v1148, 0.03125
    %v1157 = vadd.f32 %v1149, 1e-05
    %v1158 = vadd.f32 %v1150, 1e-05
    %v1159 = vadd.f32 %v1151, 1e-05
    %v1160 = vadd.f32 %v1152, 1e-05
    %v1161 = vadd.f32 %v1153, 1e-05
    %v1162 = vadd.f32 %v1154, 1e-05
    %v1163 = vadd.f32 %v1155, 1e-05
    %v1164 = vadd.f32 %v1156, 1e-05
    %v1165 = vrsqrt.pop %v1157
    %v1166 = vrsqrt.pop %v1158
    %v1167 = vrsqrt.pop %v1159
    %v1168 = vrsqrt.pop %v1160
    %v1169 = vrsqrt.pop %v1161
    %v1170 = vrsqrt.pop %v1162
    %v1171 = vrsqrt.pop %v1163
    %v1172 = vrsqrt.pop %v1164
    %v1173 = vmul.f32 %v1109, %v1165
    %v1174 = vmul.f32 %v1110, %v1166
    %v1175 = vmul.f32 %v1111, %v1167
    %v1176 = vmul.f32 %v1112, %v1168
    %v1177 = vmul.f32 %v1113, %v1169
    %v1178 = vmul.f32 %v1114, %v1170
    %v1179 = vmul.f32 %v1115, %v1171
    %v1180 = vmul.f32 %v1116, %v1172
    %v1182 = vlaneseq
    %v1183 = vshrl.u32 %v1182, 7
    %v1184 = vsub.s32 0, %v1183
    %v1185 = vrot.slane %v1074, %v1184
    %v1187 = vmul.f32 %v1173, %v1185
    %v1188 = vmul.f32 %v1174, %v1185
    %v1189 = vmul.f32 %v1175, %v1185
    %v1190 = vmul.f32 %v1176, %v1185
    %v1191 = vmul.f32 %v1177, %v1185
    %v1192 = vmul.f32 %v1178, %v1185
    %v1193 = vmul.f32 %v1179, %v1185
    %v1194 = vmul.f32 %v1180, %v1185
    %v1196 = vlaneseq
    %v1197 = vshrl.u32 %v1196, 7
    %v1198 = vsub.s32 0, %v1197
    %v1199 = vrot.slane %v1075, %v1198
    %v1201 = vadd.f32 %v1187, %v1199
    %v1202 = vadd.f32 %v1188, %v1199
    %v1203 = vadd.f32 %v1189, %v1199
    %v1204 = vadd.f32 %v1190, %v1199
    %v1205 = vadd.f32 %v1191, %v1199
    %v1206 = vadd.f32 %v1192, %v1199
    %v1207 = vadd.f32 %v1193, %v1199
    %v1208 = vadd.f32 %v1194, %v1199
    %v1209 = vpack.c.bf16 %v1202, %v1201
    %v1210 = vpack.c.bf16 %v1204, %v1203
    %v1211 = vpack.c.bf16 %v1206, %v1205
    %v1212 = vpack.c.bf16 %v1208, %v1207
    %v1213 = vld [vmem:[%s9] sm:$0xf]
    %v1214 = vld [vmem:[%s9 + $0x4] sm:$0xf]
    %v1215 = vld [vmem:[%s9 + $0x8] sm:$0xf]
    %v1216 = vld [vmem:[%s9 + $0xc] sm:$0xf]
    %v1217 = vld [vmem:[%s10] sm:$0x1]
    %v1219 = vlaneseq
    %v1220 = vshrl.u32 %v1219, 7
    %v1221 = vsub.s32 0, %v1220
    %v1222 = vrot.slane %v1217, %v1221
    %v1228 = vunpack.c.l.b16 %v1213
    %v1229 = vunpack.c.l.b16 %v1214
    %v1230 = vunpack.c.l.b16 %v1215
    %v1231 = vunpack.c.l.b16 %v1216
    %v1232 = vpack.c.b16 %v1229, %v1228
    %v1233 = vpack.c.b16 %v1231, %v1230
    %v1237 = vsel %vm1076, %v1209, 0
    %v1240 = vsel %vm1076, %v1210, 0
    %v1243 = vsel %vm1076, %v1211, 0
    %v1246 = vsel %vm1076, %v1212, 0
    %1248 = vmatprep.subr.bf16.mxu0 0
    %1249 = vmatpush1.bf16.msra.mxu0 %v1232
    %1250 = vmatprep.subr.bf16.mxu0 0
    %1251 = vmatpush1.bf16.msra.mxu0 %v1233
    %1252 = vmatprep.subr.bf16.mxu0 0
    %1253 = vmatpush1.bf16.msra.mxu0 0
    %1254 = vmatprep.subr.bf16.mxu0 0
    %1255 = vmatpush1.bf16.msra.mxu0 0
    %1256 = vmatprep.subr.bf16.mxu0 0
    %1257 = vmatpush1.bf16.msra.mxu0 0
    %1258 = vmatprep.subr.bf16.mxu0 0
    %1259 = vmatpush1.bf16.msra.mxu0 0
    %1260 = vmatprep.subr.bf16.mxu0 0
    %1261 = vmatpush1.bf16.msra.mxu0 0
    %1262 = vmatprep.subr.bf16.mxu0 0
    %1263 = vmatpush1.bf16.msra.mxu0 0
    %1264 = vmatprep.subr.bf16.mxu0 0
    %1265 = vmatpush1.bf16.msra.mxu0 0
    %1266 = vmatprep.subr.bf16.mxu0 0
    %1267 = vmatpush1.bf16.msra.mxu0 0
    %1268 = vmatprep.subr.bf16.mxu0 0
    %1269 = vmatpush1.bf16.msra.mxu0 0
    %1270 = vmatprep.subr.bf16.mxu0 0
    %1271 = vmatpush1.bf16.msra.mxu0 0
    %1272 = vmatprep.subr.bf16.mxu0 0
    %1273 = vmatpush1.bf16.msra.mxu0 0
    %1274 = vmatprep.subr.bf16.mxu0 0
    %1275 = vmatpush1.bf16.msra.mxu0 0
    %1276 = vmatprep.subr.bf16.mxu0 0
    %1277 = vmatpush1.bf16.msra.mxu0 0
    %1278 = vmatprep.subr.bf16.mxu0 0
    %1279 = vmatpush1.bf16.msra.mxu0 0
    %1280 = vmatprep.mubr.bf16.mxu0 0
    %1281 = vmatmul.mubr.bf16.gmra.mrb[0].mxu0 %v1237
    %v1282 = vpop.f32.mrb[0].mxu0
    %v1283 = vadd.f32 %v1222, %v1282
    %v1284 = vpop.f32.mrb[0].mxu0
    %v1285 = vpop.f32.mrb[0].mxu0
    %v1286 = vadd.f32 %v1222, %v1285
    %v1287 = vpop.f32.mrb[0].mxu0
    %1288 = vmatprep.mubr.bf16.mxu0 0
    %1289 = vmatmul.mubr.bf16.gmra.mrb[0].mxu0 %v1240
    %v1290 = vpop.f32.mrb[0].mxu0
    %v1291 = vadd.f32 %v1222, %v1290
    %v1292 = vpop.f32.mrb[0].mxu0
    %v1293 = vpop.f32.mrb[0].mxu0
    %v1294 = vadd.f32 %v1222, %v1293
    %v1295 = vpop.f32.mrb[0].mxu0
    %1296 = vmatprep.mubr.bf16.mxu0 0
    %1297 = vmatmul.mubr.bf16.gmra.mrb[0].mxu0 %v1243
    %v1298 = vpop.f32.mrb[0].mxu0
    %v1299 = vadd.f32 %v1222, %v1298
    %v1300 = vpop.f32.mrb[0].mxu0
    %v1301 = vpop.f32.mrb[0].mxu0
    %v1302 = vadd.f32 %v1222, %v1301
    %v1303 = vpop.f32.mrb[0].mxu0
    %1304 = vmatprep.mubr.bf16.mxu0 0
    %1305 = vmatmul.mubr.bf16.gmra.mrb[0].mxu0 %v1246
    %v1306 = vpop.f32.mrb[0].mxu0
    %v1307 = vadd.f32 %v1222, %v1306
    %v1308 = vpop.f32.mrb[0].mxu0
    %v1309 = vpop.f32.mrb[0].mxu0
    %v1310 = vadd.f32 %v1222, %v1309
    %v1311 = vpop.f32.mrb[0].mxu0
    %1312 = vdwg.mxu0
    %v1313 = vmul.f32 %v1283, 0.5
    %v1314 = vmul.f32 %v1286, 0.5
    %v1315 = vmul.f32 %v1291, 0.5
    %v1316 = vmul.f32 %v1294, 0.5
    %v1317 = vmul.f32 %v1299, 0.5
    %v1318 = vmul.f32 %v1302, 0.5
    %v1319 = vmul.f32 %v1307, 0.5
    %v1320 = vmul.f32 %v1310, 0.5
    %v1321 = vmul.f32 %v1283, 0.044715
    %v1322 = vmul.f32 %v1286, 0.044715
    %v1323 = vmul.f32 %v1291, 0.044715
    %v1324 = vmul.f32 %v1294, 0.044715
    %v1325 = vmul.f32 %v1299, 0.044715
    %v1326 = vmul.f32 %v1302, 0.044715
    %v1327 = vmul.f32 %v1307, 0.044715
    %v1328 = vmul.f32 %v1310, 0.044715
    %v1329 = vmul.f32 %v1321, %v1283
    %v1330 = vmul.f32 %v1322, %v1286
    %v1331 = vmul.f32 %v1323, %v1291
    %v1332 = vmul.f32 %v1324, %v1294
    %v1333 = vmul.f32 %v1325, %v1299
    %v1334 = vmul.f32 %v1326, %v1302
    %v1335 = vmul.f32 %v1327, %v1307
    %v1336 = vmul.f32 %v1328, %v1310
    %v1337 = vmul.f32 %v1329, %v1283
    %v1338 = vmul.f32 %v1330, %v1286
    %v1339 = vmul.f32 %v1331, %v1291
    %v1340 = vmul.f32 %v1332, %v1294
    %v1341 = vmul.f32 %v1333, %v1299
    %v1342 = vmul.f32 %v1334, %v1302
    %v1343 = vmul.f32 %v1335, %v1307
    %v1344 = vmul.f32 %v1336, %v1310
    %v1345 = vadd.f32 %v1283, %v1337
    %v1346 = vadd.f32 %v1286, %v1338
    %v1347 = vadd.f32 %v1291, %v1339
    %v1348 = vadd.f32 %v1294, %v1340
    %v1349 = vadd.f32 %v1299, %v1341
    %v1350 = vadd.f32 %v1302, %v1342
    %v1351 = vadd.f32 %v1307, %v1343
    %v1352 = vadd.f32 %v1310, %v1344
    %v1353 = vmul.f32 %v1345, 0.7978846
    %v1354 = vmul.f32 %v1346, 0.7978846
    %v1355 = vmul.f32 %v1347, 0.7978846
    %v1356 = vmul.f32 %v1348, 0.7978846
    %v1357 = vmul.f32 %v1349, 0.7978846
    %v1358 = vmul.f32 %v1350, 0.7978846
    %v1359 = vmul.f32 %v1351, 0.7978846
    %v1360 = vmul.f32 %v1352, 0.7978846
    %v1361 = vtanh.pop %v1353
    %v1362 = vtanh.pop %v1354
    %v1363 = vtanh.pop %v1355
    %v1364 = vtanh.pop %v1356
    %v1365 = vtanh.pop %v1357
    %v1366 = vtanh.pop %v1358
    %v1367 = vtanh.pop %v1359
    %v1368 = vtanh.pop %v1360
    %v1369 = vadd.f32 %v1361, 1.0
    %v1370 = vadd.f32 %v1362, 1.0
    %v1371 = vadd.f32 %v1363, 1.0
    %v1372 = vadd.f32 %v1364, 1.0
    %v1373 = vadd.f32 %v1365, 1.0
    %v1374 = vadd.f32 %v1366, 1.0
    %v1375 = vadd.f32 %v1367, 1.0
    %v1376 = vadd.f32 %v1368, 1.0
    %v1377 = vmul.f32 %v1313, %v1369
    %v1378 = vmul.f32 %v1314, %v1370
    %v1379 = vmul.f32 %v1315, %v1371
    %v1380 = vmul.f32 %v1316, %v1372
    %v1381 = vmul.f32 %v1317, %v1373
    %v1382 = vmul.f32 %v1318, %v1374
    %v1383 = vmul.f32 %v1319, %v1375
    %v1384 = vmul.f32 %v1320, %v1376
    %v1385 = vpack.c.bf16 %v1378, %v1377
    %v1386 = vpack.c.bf16 %v1380, %v1379
    %v1387 = vpack.c.bf16 %v1382, %v1381
    %v1388 = vpack.c.bf16 %v1384, %v1383
    %v1389 = vld [vmem:[%s11] sm:$0xf]
    %v1390 = vld [vmem:[%s11 + $0x4] sm:$0xf]
    %v1391 = vld [vmem:[%s11 + $0x8] sm:$0xf]
    %v1392 = vld [vmem:[%s11 + $0xc] sm:$0xf]
    %v1393 = vld [vmem:[%s11 + $0x10] sm:$0xf]
    %v1394 = vld [vmem:[%s11 + $0x14] sm:$0xf]
    %v1395 = vld [vmem:[%s11 + $0x18] sm:$0xf]
    %v1396 = vld [vmem:[%s11 + $0x1c] sm:$0xf]
    %v1397 = vld [vmem:[%s12] sm:$0x1]
    %v1399 = vlaneseq
    %v1400 = vshrl.u32 %v1399, 7
    %v1401 = vsub.s32 0, %v1400
    %v1402 = vrot.slane %v1397, %v1401
    %v1412 = vunpack.c.l.b16 %v1389
    %v1413 = vunpack.c.l.b16 %v1390
    %v1414 = vunpack.c.l.b16 %v1391
    %v1415 = vunpack.c.l.b16 %v1392
    %v1416 = vunpack.c.l.b16 %v1393
    %v1417 = vunpack.c.l.b16 %v1394
    %v1418 = vunpack.c.l.b16 %v1395
    %v1419 = vunpack.c.l.b16 %v1396
    %v1420 = vpack.c.b16 %v1413, %v1412
    %v1421 = vpack.c.b16 %v1415, %v1414
    %v1422 = vpack.c.b16 %v1417, %v1416
    %v1423 = vpack.c.b16 %v1419, %v1418
    %vm1428 = vcmask 523264
    %v1430 = vsel %vm1428, %v1385, 0
    %v1433 = vsel %vm1428, %v1386, 0
    %v1436 = vsel %vm1428, %v1387, 0
    %v1439 = vsel %vm1428, %v1388, 0
    %1441 = vmatprep.subr.bf16.mxu0 0
    %1442 = vmatpush1.bf16.msra.mxu0 %v1420
    %1443 = vmatprep.subr.bf16.mxu0 0
    %1444 = vmatpush1.bf16.msra.mxu0 %v1421
    %1445 = vmatprep.subr.bf16.mxu0 0
    %1446 = vmatpush1.bf16.msra.mxu0 %v1422
    %1447 = vmatprep.subr.bf16.mxu0 0
    %1448 = vmatpush1.bf16.msra.mxu0 %v1423
    %1449 = vmatprep.subr.bf16.mxu0 0
    %1450 = vmatpush1.bf16.msra.mxu0 0
    %1451 = vmatprep.subr.bf16.mxu0 0
    %1452 = vmatpush1.bf16.msra.mxu0 0
    %1453 = vmatprep.subr.bf16.mxu0 0
    %1454 = vmatpush1.bf16.msra.mxu0 0
    %1455 = vmatprep.subr.bf16.mxu0 0
    %1456 = vmatpush1.bf16.msra.mxu0 0
    %1457 = vmatprep.subr.bf16.mxu0 0
    %1458 = vmatpush1.bf16.msra.mxu0 0
    %1459 = vmatprep.subr.bf16.mxu0 0
    %1460 = vmatpush1.bf16.msra.mxu0 0
    %1461 = vmatprep.subr.bf16.mxu0 0
    %1462 = vmatpush1.bf16.msra.mxu0 0
    %1463 = vmatprep.subr.bf16.mxu0 0
    %1464 = vmatpush1.bf16.msra.mxu0 0
    %1465 = vmatprep.subr.bf16.mxu0 0
    %1466 = vmatpush1.bf16.msra.mxu0 0
    %1467 = vmatprep.subr.bf16.mxu0 0
    %1468 = vmatpush1.bf16.msra.mxu0 0
    %1469 = vmatprep.subr.bf16.mxu0 0
    %1470 = vmatpush1.bf16.msra.mxu0 0
    %1471 = vmatprep.subr.bf16.mxu0 0
    %1472 = vmatpush1.bf16.msra.mxu0 0
    %1473 = vmatprep.mubr.bf16.mxu0 0
    %1474 = vmatmul.mubr.bf16.gmra.mrb[0].mxu0 %v1430
    %v1475 = vpop.f32.mrb[0].mxu0
    %v1476 = vadd.f32 %v1402, %v1475
    %v1477 = vpop.f32.mrb[0].mxu0
    %v1478 = vpop.f32.mrb[0].mxu0
    %v1479 = vadd.f32 %v1402, %v1478
    %v1480 = vpop.f32.mrb[0].mxu0
    %1481 = vmatprep.mubr.bf16.mxu0 0
    %1482 = vmatmul.mubr.bf16.gmra.mrb[0].mxu0 %v1433
    %v1483 = vpop.f32.mrb[0].mxu0
    %v1484 = vadd.f32 %v1402, %v1483
    %v1485 = vpop.f32.mrb[0].mxu0
    %v1486 = vpop.f32.mrb[0].mxu0
    %v1487 = vadd.f32 %v1402, %v1486
    %v1488 = vpop.f32.mrb[0].mxu0
    %1489 = vmatprep.mubr.bf16.mxu0 0
    %1490 = vmatmul.mubr.bf16.gmra.mrb[0].mxu0 %v1436
    %v1491 = vpop.f32.mrb[0].mxu0
    %v1492 = vadd.f32 %v1402, %v1491
    %v1493 = vpop.f32.mrb[0].mxu0
    %v1494 = vpop.f32.mrb[0].mxu0
    %v1495 = vadd.f32 %v1402, %v1494
    %v1496 = vpop.f32.mrb[0].mxu0
    %1497 = vmatprep.mubr.bf16.mxu0 0
    %1498 = vmatmul.mubr.bf16.gmra.mrb[0].mxu0 %v1439
    %v1499 = vpop.f32.mrb[0].mxu0
    %v1500 = vadd.f32 %v1402, %v1499
    %v1501 = vpop.f32.mrb[0].mxu0
    %v1502 = vpop.f32.mrb[0].mxu0
    %v1503 = vadd.f32 %v1402, %v1502
    %v1504 = vpop.f32.mrb[0].mxu0
    %1505 = vdwg.mxu0
    %v1506 = vadd.f32 %v1066, %v1476
    %v1507 = vadd.f32 %v1067, %v1479
    %v1508 = vadd.f32 %v1068, %v1484
    %v1509 = vadd.f32 %v1069, %v1487
    %v1510 = vadd.f32 %v1070, %v1492
    %v1511 = vadd.f32 %v1071, %v1495
    %v1512 = vadd.f32 %v1072, %v1500
    %v1513 = vadd.f32 %v1073, %v1503
    %s1514 = scalar_lea.vmem %s3, 8
    %v1515 = vld [vmem:[%s1514] sm:$0xf]
    %v1516 = vld [vmem:[%s1514 + $0x4] sm:$0xf]
    %s1517 = scalar_lea.vmem %s5, 4
    %v1518 = vld [vmem:[%s1517] sm:$0xf]
    %v1519 = vpack.c.bf16 %v1507, %v1506
    %v1520 = vpack.c.bf16 %v1509, %v1508
    %v1521 = vpack.c.bf16 %v1511, %v1510
    %v1522 = vpack.c.bf16 %v1513, %v1512
    %v1527 = vunpack.c.l.b16 %v1519
    %v1528 = vunpack.c.h.b16 %v1519
    %v1529 = vunpack.c.l.b16 %v1520
    %v1530 = vunpack.c.h.b16 %v1520
    %v1531 = vunpack.c.l.b16 %v1521
    %v1532 = vunpack.c.h.b16 %v1521
    %v1533 = vunpack.c.l.b16 %v1522
    %v1534 = vunpack.c.h.b16 %v1522
    %v1535 = vpack.c.b16 %v1527, %v1527
    %v1536 = vpack.c.b16 %v1528, %v1528
    %v1537 = vpack.c.b16 %v1529, %v1529
    %v1538 = vpack.c.b16 %v1530, %v1530
    %v1539 = vpack.c.b16 %v1531, %v1531
    %v1540 = vpack.c.b16 %v1532, %v1532
    %v1541 = vpack.c.b16 %v1533, %v1533
    %v1542 = vpack.c.b16 %v1534, %v1534
    %s1543 = scalar_lea.vmem %s4, 16
    %v1544 = vld [vmem:[%s1543] sm:$0xff]
    %v1545 = vld [vmem:[%s1543 + $0x8] sm:$0xff]
    %1547 = vset.pattern.permute.xlu0 0
    %1548 = vperm.xlu0 %1547, %v1544
    %v1549 = vpop.permute.xlu0 %1548
    %1552 = vset.pattern.permute.xlu0 0
    %1553 = vperm.xlu0 %1552, %v1545
    %v1554 = vpop.permute.xlu0 %1553
    %v1558 = vunpack.c.l.b16 %v1515
    %v1559 = vunpack.c.l.b16 %v1516
    %v1560 = vpack.c.b16 %v1559, %v1558
    %v1562 = vsel %vm227, %v1560, 0
    %v1565 = vsel %vm231, %v1535, 0
    %1567 = vmatprep.subr.bf16.mxu0 0
    %1568 = vmatpush1.bf16.msra.mxu0 %v1565
    %1569 = vmatprep.subr.bf16.mxu0 0
    %1570 = vmatpush1.bf16.msra.mxu0 0
    %1571 = vmatprep.subr.bf16.mxu0 0
    %1572 = vmatpush1.bf16.msra.mxu0 0
    %1573 = vmatprep.subr.bf16.mxu0 0
    %1574 = vmatpush1.bf16.msra.mxu0 0
    %1575 = vmatprep.subr.bf16.mxu0 0
    %1576 = vmatpush1.bf16.msra.mxu0 0
    %1577 = vmatprep.subr.bf16.mxu0 0
    %1578 = vmatpush1.bf16.msra.mxu0 0
    %1579 = vmatprep.subr.bf16.mxu0 0
    %1580 = vmatpush1.bf16.msra.mxu0 0
    %1581 = vmatprep.subr.bf16.mxu0 0
    %1582 = vmatpush1.bf16.msra.mxu0 0
    %1583 = vmatprep.subr.bf16.mxu0 0
    %1584 = vmatpush1.bf16.msra.mxu0 0
    %1585 = vmatprep.subr.bf16.mxu0 0
    %1586 = vmatpush1.bf16.msra.mxu0 0
    %1587 = vmatprep.subr.bf16.mxu0 0
    %1588 = vmatpush1.bf16.msra.mxu0 0
    %1589 = vmatprep.subr.bf16.mxu0 0
    %1590 = vmatpush1.bf16.msra.mxu0 0
    %1591 = vmatprep.subr.bf16.mxu0 0
    %1592 = vmatpush1.bf16.msra.mxu0 0
    %1593 = vmatprep.subr.bf16.mxu0 0
    %1594 = vmatpush1.bf16.msra.mxu0 0
    %1595 = vmatprep.subr.bf16.mxu0 0
    %1596 = vmatpush1.bf16.msra.mxu0 0
    %1597 = vmatprep.subr.bf16.mxu0 0
    %1598 = vmatpush1.bf16.msra.mxu0 0
    %1599 = vmatprep.mubr.bf16.mxu0 0
    %1600 = vmatmul.mubr.bf16.gmra.mrb[0].mxu0 %v1562
    %v1601 = vpop.f32.mrb[0].mxu0
    %v1602 = vadd.f32 %v1549, %v1601
    %v1603 = vpop.f32.mrb[0].mxu0
    %v1604 = vpop.f32.mrb[0].mxu0
    %v1605 = vadd.f32 %v1554, %v1604
    %v1606 = vpop.f32.mrb[0].mxu0
    %1607 = vdwg.mxu0
    %v1609 = vsel %vm231, %v1536, 0
    %1611 = vmatprep.subr.bf16.mxu0 0
    %1612 = vmatpush1.bf16.msra.mxu0 %v1609
    %1613 = vmatprep.subr.bf16.mxu0 0
    %1614 = vmatpush1.bf16.msra.mxu0 0
    %1615 = vmatprep.subr.bf16.mxu0 0
    %1616 = vmatpush1.bf16.msra.mxu0 0
    %1617 = vmatprep.subr.bf16.mxu0 0
    %1618 = vmatpush1.bf16.msra.mxu0 0
    %1619 = vmatprep.subr.bf16.mxu0 0
    %1620 = vmatpush1.bf16.msra.mxu0 0
    %1621 = vmatprep.subr.bf16.mxu0 0
    %1622 = vmatpush1.bf16.msra.mxu0 0
    %1623 = vmatprep.subr.bf16.mxu0 0
    %1624 = vmatpush1.bf16.msra.mxu0 0
    %1625 = vmatprep.subr.bf16.mxu0 0
    %1626 = vmatpush1.bf16.msra.mxu0 0
    %1627 = vmatprep.subr.bf16.mxu0 0
    %1628 = vmatpush1.bf16.msra.mxu0 0
    %1629 = vmatprep.subr.bf16.mxu0 0
    %1630 = vmatpush1.bf16.msra.mxu0 0
    %1631 = vmatprep.subr.bf16.mxu0 0
    %1632 = vmatpush1.bf16.msra.mxu0 0
    %1633 = vmatprep.subr.bf16.mxu0 0
    %1634 = vmatpush1.bf16.msra.mxu0 0
    %1635 = vmatprep.subr.bf16.mxu0 0
    %1636 = vmatpush1.bf16.msra.mxu0 0
    %1637 = vmatprep.subr.bf16.mxu0 0
    %1638 = vmatpush1.bf16.msra.mxu0 0
    %1639 = vmatprep.subr.bf16.mxu0 0
    %1640 = vmatpush1.bf16.msra.mxu0 0
    %1641 = vmatprep.subr.bf16.mxu0 0
    %1642 = vmatpush1.bf16.msra.mxu0 0
    %1643 = vmatprep.mubr.bf16.mxu0 0
    %1644 = vmatmul.mubr.bf16.gmra.mrb[0].mxu0 %v1562
    %v1645 = vpop.f32.mrb[0].mxu0
    %v1646 = vadd.f32 %v1549, %v1645
    %v1647 = vpop.f32.mrb[0].mxu0
    %v1648 = vpop.f32.mrb[0].mxu0
    %v1649 = vadd.f32 %v1554, %v1648
    %v1650 = vpop.f32.mrb[0].mxu0
    %1651 = vdwg.mxu0
    %v1653 = vsel %vm231, %v1537, 0
    %1655 = vmatprep.subr.bf16.mxu0 0
    %1656 = vmatpush1.bf16.msra.mxu0 %v1653
    %1657 = vmatprep.subr.bf16.mxu0 0
    %1658 = vmatpush1.bf16.msra.mxu0 0
    %1659 = vmatprep.subr.bf16.mxu0 0
    %1660 = vmatpush1.bf16.msra.mxu0 0
    %1661 = vmatprep.subr.bf16.mxu0 0
    %1662 = vmatpush1.bf16.msra.mxu0 0
    %1663 = vmatprep.subr.bf16.mxu0 0
    %1664 = vmatpush1.bf16.msra.mxu0 0
    %1665 = vmatprep.subr.bf16.mxu0 0
    %1666 = vmatpush1.bf16.msra.mxu0 0
    %1667 = vmatprep.subr.bf16.mxu0 0
    %1668 = vmatpush1.bf16.msra.mxu0 0
    %1669 = vmatprep.subr.bf16.mxu0 0
    %1670 = vmatpush1.bf16.msra.mxu0 0
    %1671 = vmatprep.subr.bf16.mxu0 0
    %1672 = vmatpush1.bf16.msra.mxu0 0
    %1673 = vmatprep.subr.bf16.mxu0 0
    %1674 = vmatpush1.bf16.msra.mxu0 0
    %1675 = vmatprep.subr.bf16.mxu0 0
    %1676 = vmatpush1.bf16.msra.mxu0 0
    %1677 = vmatprep.subr.bf16.mxu0 0
    %1678 = vmatpush1.bf16.msra.mxu0 0
    %1679 = vmatprep.subr.bf16.mxu0 0
    %1680 = vmatpush1.bf16.msra.mxu0 0
    %1681 = vmatprep.subr.bf16.mxu0 0
    %1682 = vmatpush1.bf16.msra.mxu0 0
    %1683 = vmatprep.subr.bf16.mxu0 0
    %1684 = vmatpush1.bf16.msra.mxu0 0
    %1685 = vmatprep.subr.bf16.mxu0 0
    %1686 = vmatpush1.bf16.msra.mxu0 0
    %1687 = vmatprep.mubr.bf16.mxu0 0
    %1688 = vmatmul.mubr.bf16.gmra.mrb[0].mxu0 %v1562
    %v1689 = vpop.f32.mrb[0].mxu0
    %v1690 = vadd.f32 %v1549, %v1689
    %v1691 = vpop.f32.mrb[0].mxu0
    %v1692 = vpop.f32.mrb[0].mxu0
    %v1693 = vadd.f32 %v1554, %v1692
    %v1694 = vpop.f32.mrb[0].mxu0
    %1695 = vdwg.mxu0
    %v1697 = vsel %vm231, %v1538, 0
    %1699 = vmatprep.subr.bf16.mxu0 0
    %1700 = vmatpush1.bf16.msra.mxu0 %v1697
    %1701 = vmatprep.subr.bf16.mxu0 0
    %1702 = vmatpush1.bf16.msra.mxu0 0
    %1703 = vmatprep.subr.bf16.mxu0 0
    %1704 = vmatpush1.bf16.msra.mxu0 0
    %1705 = vmatprep.subr.bf16.mxu0 0
    %1706 = vmatpush1.bf16.msra.mxu0 0
    %1707 = vmatprep.subr.bf16.mxu0 0
    %1708 = vmatpush1.bf16.msra.mxu0 0
    %1709 = vmatprep.subr.bf16.mxu0 0
    %1710 = vmatpush1.bf16.msra.mxu0 0
    %1711 = vmatprep.subr.bf16.mxu0 0
    %1712 = vmatpush1.bf16.msra.mxu0 0
    %1713 = vmatprep.subr.bf16.mxu0 0
    %1714 = vmatpush1.bf16.msra.mxu0 0
    %1715 = vmatprep.subr.bf16.mxu0 0
    %1716 = vmatpush1.bf16.msra.mxu0 0
    %1717 = vmatprep.subr.bf16.mxu0 0
    %1718 = vmatpush1.bf16.msra.mxu0 0
    %1719 = vmatprep.subr.bf16.mxu0 0
    %1720 = vmatpush1.bf16.msra.mxu0 0
    %1721 = vmatprep.subr.bf16.mxu0 0
    %1722 = vmatpush1.bf16.msra.mxu0 0
    %1723 = vmatprep.subr.bf16.mxu0 0
    %1724 = vmatpush1.bf16.msra.mxu0 0
    %1725 = vmatprep.subr.bf16.mxu0 0
    %1726 = vmatpush1.bf16.msra.mxu0 0
    %1727 = vmatprep.subr.bf16.mxu0 0
    %1728 = vmatpush1.bf16.msra.mxu0 0
    %1729 = vmatprep.subr.bf16.mxu0 0
    %1730 = vmatpush1.bf16.msra.mxu0 0
    %1731 = vmatprep.mubr.bf16.mxu0 0
    %1732 = vmatmul.mubr.bf16.gmra.mrb[0].mxu0 %v1562
    %v1733 = vpop.f32.mrb[0].mxu0
    %v1734 = vadd.f32 %v1549, %v1733
    %v1735 = vpop.f32.mrb[0].mxu0
    %v1736 = vpop.f32.mrb[0].mxu0
    %v1737 = vadd.f32 %v1554, %v1736
    %v1738 = vpop.f32.mrb[0].mxu0
    %1739 = vdwg.mxu0
    %v1741 = vsel %vm231, %v1539, 0
    %1743 = vmatprep.subr.bf16.mxu0 0
    %1744 = vmatpush1.bf16.msra.mxu0 %v1741
    %1745 = vmatprep.subr.bf16.mxu0 0
    %1746 = vmatpush1.bf16.msra.mxu0 0
    %1747 = vmatprep.subr.bf16.mxu0 0
    %1748 = vmatpush1.bf16.msra.mxu0 0
    %1749 = vmatprep.subr.bf16.mxu0 0
    %1750 = vmatpush1.bf16.msra.mxu0 0
    %1751 = vmatprep.subr.bf16.mxu0 0
    %1752 = vmatpush1.bf16.msra.mxu0 0
    %1753 = vmatprep.subr.bf16.mxu0 0
    %1754 = vmatpush1.bf16.msra.mxu0 0
    %1755 = vmatprep.subr.bf16.mxu0 0
    %1756 = vmatpush1.bf16.msra.mxu0 0
    %1757 = vmatprep.subr.bf16.mxu0 0
    %1758 = vmatpush1.bf16.msra.mxu0 0
    %1759 = vmatprep.subr.bf16.mxu0 0
    %1760 = vmatpush1.bf16.msra.mxu0 0
    %1761 = vmatprep.subr.bf16.mxu0 0
    %1762 = vmatpush1.bf16.msra.mxu0 0
    %1763 = vmatprep.subr.bf16.mxu0 0
    %1764 = vmatpush1.bf16.msra.mxu0 0
    %1765 = vmatprep.subr.bf16.mxu0 0
    %1766 = vmatpush1.bf16.msra.mxu0 0
    %1767 = vmatprep.subr.bf16.mxu0 0
    %1768 = vmatpush1.bf16.msra.mxu0 0
    %1769 = vmatprep.subr.bf16.mxu0 0
    %1770 = vmatpush1.bf16.msra.mxu0 0
    %1771 = vmatprep.subr.bf16.mxu0 0
    %1772 = vmatpush1.bf16.msra.mxu0 0
    %1773 = vmatprep.subr.bf16.mxu0 0
    %1774 = vmatpush1.bf16.msra.mxu0 0
    %1775 = vmatprep.mubr.bf16.mxu0 0
    %1776 = vmatmul.mubr.bf16.gmra.mrb[0].mxu0 %v1562
    %v1777 = vpop.f32.mrb[0].mxu0
    %v1778 = vadd.f32 %v1549, %v1777
    %v1779 = vpop.f32.mrb[0].mxu0
    %v1780 = vpop.f32.mrb[0].mxu0
    %v1781 = vadd.f32 %v1554, %v1780
    %v1782 = vpop.f32.mrb[0].mxu0
    %1783 = vdwg.mxu0
    %v1785 = vsel %vm231, %v1540, 0
    %1787 = vmatprep.subr.bf16.mxu0 0
    %1788 = vmatpush1.bf16.msra.mxu0 %v1785
    %1789 = vmatprep.subr.bf16.mxu0 0
    %1790 = vmatpush1.bf16.msra.mxu0 0
    %1791 = vmatprep.subr.bf16.mxu0 0
    %1792 = vmatpush1.bf16.msra.mxu0 0
    %1793 = vmatprep.subr.bf16.mxu0 0
    %1794 = vmatpush1.bf16.msra.mxu0 0
    %1795 = vmatprep.subr.bf16.mxu0 0
    %1796 = vmatpush1.bf16.msra.mxu0 0
    %1797 = vmatprep.subr.bf16.mxu0 0
    %1798 = vmatpush1.bf16.msra.mxu0 0
    %1799 = vmatprep.subr.bf16.mxu0 0
    %1800 = vmatpush1.bf16.msra.mxu0 0
    %1801 = vmatprep.subr.bf16.mxu0 0
    %1802 = vmatpush1.bf16.msra.mxu0 0
    %1803 = vmatprep.subr.bf16.mxu0 0
    %1804 = vmatpush1.bf16.msra.mxu0 0
    %1805 = vmatprep.subr.bf16.mxu0 0
    %1806 = vmatpush1.bf16.msra.mxu0 0
    %1807 = vmatprep.subr.bf16.mxu0 0
    %1808 = vmatpush1.bf16.msra.mxu0 0
    %1809 = vmatprep.subr.bf16.mxu0 0
    %1810 = vmatpush1.bf16.msra.mxu0 0
    %1811 = vmatprep.subr.bf16.mxu0 0
    %1812 = vmatpush1.bf16.msra.mxu0 0
    %1813 = vmatprep.subr.bf16.mxu0 0
    %1814 = vmatpush1.bf16.msra.mxu0 0
    %1815 = vmatprep.subr.bf16.mxu0 0
    %1816 = vmatpush1.bf16.msra.mxu0 0
    %1817 = vmatprep.subr.bf16.mxu0 0
    %1818 = vmatpush1.bf16.msra.mxu0 0
    %1819 = vmatprep.mubr.bf16.mxu0 0
    %1820 = vmatmul.mubr.bf16.gmra.mrb[0].mxu0 %v1562
    %v1821 = vpop.f32.mrb[0].mxu0
    %v1822 = vadd.f32 %v1549, %v1821
    %v1823 = vpop.f32.mrb[0].mxu0
    %v1824 = vpop.f32.mrb[0].mxu0
    %v1825 = vadd.f32 %v1554, %v1824
    %v1826 = vpop.f32.mrb[0].mxu0
    %1827 = vdwg.mxu0
    %v1829 = vsel %vm231, %v1541, 0
    %1831 = vmatprep.subr.bf16.mxu0 0
    %1832 = vmatpush1.bf16.msra.mxu0 %v1829
    %1833 = vmatprep.subr.bf16.mxu0 0
    %1834 = vmatpush1.bf16.msra.mxu0 0
    %1835 = vmatprep.subr.bf16.mxu0 0
    %1836 = vmatpush1.bf16.msra.mxu0 0
    %1837 = vmatprep.subr.bf16.mxu0 0
    %1838 = vmatpush1.bf16.msra.mxu0 0
    %1839 = vmatprep.subr.bf16.mxu0 0
    %1840 = vmatpush1.bf16.msra.mxu0 0
    %1841 = vmatprep.subr.bf16.mxu0 0
    %1842 = vmatpush1.bf16.msra.mxu0 0
    %1843 = vmatprep.subr.bf16.mxu0 0
    %1844 = vmatpush1.bf16.msra.mxu0 0
    %1845 = vmatprep.subr.bf16.mxu0 0
    %1846 = vmatpush1.bf16.msra.mxu0 0
    %1847 = vmatprep.subr.bf16.mxu0 0
    %1848 = vmatpush1.bf16.msra.mxu0 0
    %1849 = vmatprep.subr.bf16.mxu0 0
    %1850 = vmatpush1.bf16.msra.mxu0 0
    %1851 = vmatprep.subr.bf16.mxu0 0
    %1852 = vmatpush1.bf16.msra.mxu0 0
    %1853 = vmatprep.subr.bf16.mxu0 0
    %1854 = vmatpush1.bf16.msra.mxu0 0
    %1855 = vmatprep.subr.bf16.mxu0 0
    %1856 = vmatpush1.bf16.msra.mxu0 0
    %1857 = vmatprep.subr.bf16.mxu0 0
    %1858 = vmatpush1.bf16.msra.mxu0 0
    %1859 = vmatprep.subr.bf16.mxu0 0
    %1860 = vmatpush1.bf16.msra.mxu0 0
    %1861 = vmatprep.subr.bf16.mxu0 0
    %1862 = vmatpush1.bf16.msra.mxu0 0
    %1863 = vmatprep.mubr.bf16.mxu0 0
    %1864 = vmatmul.mubr.bf16.gmra.mrb[0].mxu0 %v1562
    %v1865 = vpop.f32.mrb[0].mxu0
    %v1866 = vadd.f32 %v1549, %v1865
    %v1867 = vpop.f32.mrb[0].mxu0
    %v1868 = vpop.f32.mrb[0].mxu0
    %v1869 = vadd.f32 %v1554, %v1868
    %v1870 = vpop.f32.mrb[0].mxu0
    %1871 = vdwg.mxu0
    %v1873 = vsel %vm231, %v1542, 0
    %1875 = vmatprep.subr.bf16.mxu0 0
    %1876 = vmatpush1.bf16.msra.mxu0 %v1873
    %1877 = vmatprep.subr.bf16.mxu0 0
    %1878 = vmatpush1.bf16.msra.mxu0 0
    %1879 = vmatprep.subr.bf16.mxu0 0
    %1880 = vmatpush1.bf16.msra.mxu0 0
    %1881 = vmatprep.subr.bf16.mxu0 0
    %1882 = vmatpush1.bf16.msra.mxu0 0
    %1883 = vmatprep.subr.bf16.mxu0 0
    %1884 = vmatpush1.bf16.msra.mxu0 0
    %1885 = vmatprep.subr.bf16.mxu0 0
    %1886 = vmatpush1.bf16.msra.mxu0 0
    %1887 = vmatprep.subr.bf16.mxu0 0
    %1888 = vmatpush1.bf16.msra.mxu0 0
    %1889 = vmatprep.subr.bf16.mxu0 0
    %1890 = vmatpush1.bf16.msra.mxu0 0
    %1891 = vmatprep.subr.bf16.mxu0 0
    %1892 = vmatpush1.bf16.msra.mxu0 0
    %1893 = vmatprep.subr.bf16.mxu0 0
    %1894 = vmatpush1.bf16.msra.mxu0 0
    %1895 = vmatprep.subr.bf16.mxu0 0
    %1896 = vmatpush1.bf16.msra.mxu0 0
    %1897 = vmatprep.subr.bf16.mxu0 0
    %1898 = vmatpush1.bf16.msra.mxu0 0
    %1899 = vmatprep.subr.bf16.mxu0 0
    %1900 = vmatpush1.bf16.msra.mxu0 0
    %1901 = vmatprep.subr.bf16.mxu0 0
    %1902 = vmatpush1.bf16.msra.mxu0 0
    %1903 = vmatprep.subr.bf16.mxu0 0
    %1904 = vmatpush1.bf16.msra.mxu0 0
    %1905 = vmatprep.subr.bf16.mxu0 0
    %1906 = vmatpush1.bf16.msra.mxu0 0
    %1907 = vmatprep.mubr.bf16.mxu0 0
    %1908 = vmatmul.mubr.bf16.gmra.mrb[0].mxu0 %v1562
    %v1909 = vpop.f32.mrb[0].mxu0
    %v1910 = vadd.f32 %v1549, %v1909
    %v1911 = vpop.f32.mrb[0].mxu0
    %v1912 = vpop.f32.mrb[0].mxu0
    %v1913 = vadd.f32 %v1554, %v1912
    %v1914 = vpop.f32.mrb[0].mxu0
    %1915 = vdwg.mxu0
    %v1916 = vmul.f32 %v1602, 0.5
    %v1917 = vmul.f32 %v1605, 0.5
    %v1918 = vmul.f32 %v1646, 0.5
    %v1919 = vmul.f32 %v1649, 0.5
    %v1920 = vmul.f32 %v1690, 0.5
    %v1921 = vmul.f32 %v1693, 0.5
    %v1922 = vmul.f32 %v1734, 0.5
    %v1923 = vmul.f32 %v1737, 0.5
    %v1924 = vmul.f32 %v1778, 0.5
    %v1925 = vmul.f32 %v1781, 0.5
    %v1926 = vmul.f32 %v1822, 0.5
    %v1927 = vmul.f32 %v1825, 0.5
    %v1928 = vmul.f32 %v1866, 0.5
    %v1929 = vmul.f32 %v1869, 0.5
    %v1930 = vmul.f32 %v1910, 0.5
    %v1931 = vmul.f32 %v1913, 0.5
    %v1932 = vmul.f32 %v1602, 0.044715
    %v1933 = vmul.f32 %v1605, 0.044715
    %v1934 = vmul.f32 %v1646, 0.044715
    %v1935 = vmul.f32 %v1649, 0.044715
    %v1936 = vmul.f32 %v1690, 0.044715
    %v1937 = vmul.f32 %v1693, 0.044715
    %v1938 = vmul.f32 %v1734, 0.044715
    %v1939 = vmul.f32 %v1737, 0.044715
    %v1940 = vmul.f32 %v1778, 0.044715
    %v1941 = vmul.f32 %v1781, 0.044715
    %v1942 = vmul.f32 %v1822, 0.044715
    %v1943 = vmul.f32 %v1825, 0.044715
    %v1944 = vmul.f32 %v1866, 0.044715
    %v1945 = vmul.f32 %v1869, 0.044715
    %v1946 = vmul.f32 %v1910, 0.044715
    %v1947 = vmul.f32 %v1913, 0.044715
    %v1948 = vmul.f32 %v1932, %v1602
    %v1949 = vmul.f32 %v1933, %v1605
    %v1950 = vmul.f32 %v1934, %v1646
    %v1951 = vmul.f32 %v1935, %v1649
    %v1952 = vmul.f32 %v1936, %v1690
    %v1953 = vmul.f32 %v1937, %v1693
    %v1954 = vmul.f32 %v1938, %v1734
    %v1955 = vmul.f32 %v1939, %v1737
    %v1956 = vmul.f32 %v1940, %v1778
    %v1957 = vmul.f32 %v1941, %v1781
    %v1958 = vmul.f32 %v1942, %v1822
    %v1959 = vmul.f32 %v1943, %v1825
    %v1960 = vmul.f32 %v1944, %v1866
    %v1961 = vmul.f32 %v1945, %v1869
    %v1962 = vmul.f32 %v1946, %v1910
    %v1963 = vmul.f32 %v1947, %v1913
    %v1964 = vmul.f32 %v1948, %v1602
    %v1965 = vmul.f32 %v1949, %v1605
    %v1966 = vmul.f32 %v1950, %v1646
    %v1967 = vmul.f32 %v1951, %v1649
    %v1968 = vmul.f32 %v1952, %v1690
    %v1969 = vmul.f32 %v1953, %v1693
    %v1970 = vmul.f32 %v1954, %v1734
    %v1971 = vmul.f32 %v1955, %v1737
    %v1972 = vmul.f32 %v1956, %v1778
    %v1973 = vmul.f32 %v1957, %v1781
    %v1974 = vmul.f32 %v1958, %v1822
    %v1975 = vmul.f32 %v1959, %v1825
    %v1976 = vmul.f32 %v1960, %v1866
    %v1977 = vmul.f32 %v1961, %v1869
    %v1978 = vmul.f32 %v1962, %v1910
    %v1979 = vmul.f32 %v1963, %v1913
    %v1980 = vadd.f32 %v1602, %v1964
    %v1981 = vadd.f32 %v1605, %v1965
    %v1982 = vadd.f32 %v1646, %v1966
    %v1983 = vadd.f32 %v1649, %v1967
    %v1984 = vadd.f32 %v1690, %v1968
    %v1985 = vadd.f32 %v1693, %v1969
    %v1986 = vadd.f32 %v1734, %v1970
    %v1987 = vadd.f32 %v1737, %v1971
    %v1988 = vadd.f32 %v1778, %v1972
    %v1989 = vadd.f32 %v1781, %v1973
    %v1990 = vadd.f32 %v1822, %v1974
    %v1991 = vadd.f32 %v1825, %v1975
    %v1992 = vadd.f32 %v1866, %v1976
    %v1993 = vadd.f32 %v1869, %v1977
    %v1994 = vadd.f32 %v1910, %v1978
    %v1995 = vadd.f32 %v1913, %v1979
    %v1996 = vmul.f32 %v1980, 0.7978846
    %v1997 = vmul.f32 %v1981, 0.7978846
    %v1998 = vmul.f32 %v1982, 0.7978846
    %v1999 = vmul.f32 %v1983, 0.7978846
    %v2000 = vmul.f32 %v1984, 0.7978846
    %v2001 = vmul.f32 %v1985, 0.7978846
    %v2002 = vmul.f32 %v1986, 0.7978846
    %v2003 = vmul.f32 %v1987, 0.7978846
    %v2004 = vmul.f32 %v1988, 0.7978846
    %v2005 = vmul.f32 %v1989, 0.7978846
    %v2006 = vmul.f32 %v1990, 0.7978846
    %v2007 = vmul.f32 %v1991, 0.7978846
    %v2008 = vmul.f32 %v1992, 0.7978846
    %v2009 = vmul.f32 %v1993, 0.7978846
    %v2010 = vmul.f32 %v1994, 0.7978846
    %v2011 = vmul.f32 %v1995, 0.7978846
    %v2012 = vtanh.pop %v1996
    %v2013 = vtanh.pop %v1997
    %v2014 = vtanh.pop %v1998
    %v2015 = vtanh.pop %v1999
    %v2016 = vtanh.pop %v2000
    %v2017 = vtanh.pop %v2001
    %v2018 = vtanh.pop %v2002
    %v2019 = vtanh.pop %v2003
    %v2020 = vtanh.pop %v2004
    %v2021 = vtanh.pop %v2005
    %v2022 = vtanh.pop %v2006
    %v2023 = vtanh.pop %v2007
    %v2024 = vtanh.pop %v2008
    %v2025 = vtanh.pop %v2009
    %v2026 = vtanh.pop %v2010
    %v2027 = vtanh.pop %v2011
    %v2028 = vadd.f32 %v2012, 1.0
    %v2029 = vadd.f32 %v2013, 1.0
    %v2030 = vadd.f32 %v2014, 1.0
    %v2031 = vadd.f32 %v2015, 1.0
    %v2032 = vadd.f32 %v2016, 1.0
    %v2033 = vadd.f32 %v2017, 1.0
    %v2034 = vadd.f32 %v2018, 1.0
    %v2035 = vadd.f32 %v2019, 1.0
    %v2036 = vadd.f32 %v2020, 1.0
    %v2037 = vadd.f32 %v2021, 1.0
    %v2038 = vadd.f32 %v2022, 1.0
    %v2039 = vadd.f32 %v2023, 1.0
    %v2040 = vadd.f32 %v2024, 1.0
    %v2041 = vadd.f32 %v2025, 1.0
    %v2042 = vadd.f32 %v2026, 1.0
    %v2043 = vadd.f32 %v2027, 1.0
    %v2044 = vmul.f32 %v1916, %v2028
    %v2045 = vmul.f32 %v1917, %v2029
    %v2046 = vmul.f32 %v1918, %v2030
    %v2047 = vmul.f32 %v1919, %v2031
    %v2048 = vmul.f32 %v1920, %v2032
    %v2049 = vmul.f32 %v1921, %v2033
    %v2050 = vmul.f32 %v1922, %v2034
    %v2051 = vmul.f32 %v1923, %v2035
    %v2052 = vmul.f32 %v1924, %v2036
    %v2053 = vmul.f32 %v1925, %v2037
    %v2054 = vmul.f32 %v1926, %v2038
    %v2055 = vmul.f32 %v1927, %v2039
    %v2056 = vmul.f32 %v1928, %v2040
    %v2057 = vmul.f32 %v1929, %v2041
    %v2058 = vmul.f32 %v1930, %v2042
    %v2059 = vmul.f32 %v1931, %v2043
    %v2060 = vpack.c.bf16 %v2045, %v2044
    %v2061 = vpack.c.bf16 %v2047, %v2046
    %v2062 = vpack.c.bf16 %v2049, %v2048
    %v2063 = vpack.c.bf16 %v2051, %v2050
    %v2064 = vpack.c.bf16 %v2053, %v2052
    %v2065 = vpack.c.bf16 %v2055, %v2054
    %v2066 = vpack.c.bf16 %v2057, %v2056
    %v2067 = vpack.c.bf16 %v2059, %v2058
    %s2068 = scalar_lea.vmem %s6, 8
    %v2069 = vld [vmem:[%s2068] sm:$0xff]
    %2071 = vset.pattern.permute.xlu0 0
    %2072 = vperm.xlu0 %2071, %v2069
    %v2073 = vpop.permute.xlu0 %2072
    %v2076 = vsel %vm742, %v1518, 0
    %2078 = vmatprep.subr.bf16.mxu0 0
    %2079 = vmatpush1.bf16.msra.mxu0 %v2060
    %2080 = vmatprep.subr.bf16.mxu0 0
    %2081 = vmatpush1.bf16.msra.mxu0 0
    %2082 = vmatprep.subr.bf16.mxu0 0
    %2083 = vmatpush1.bf16.msra.mxu0 0
    %2084 = vmatprep.subr.bf16.mxu0 0
    %2085 = vmatpush1.bf16.msra.mxu0 0
    %2086 = vmatprep.subr.bf16.mxu0 0
    %2087 = vmatpush1.bf16.msra.mxu0 0
    %2088 = vmatprep.subr.bf16.mxu0 0
    %2089 = vmatpush1.bf16.msra.mxu0 0
    %2090 = vmatprep.subr.bf16.mxu0 0
    %2091 = vmatpush1.bf16.msra.mxu0 0
    %2092 = vmatprep.subr.bf16.mxu0 0
    %2093 = vmatpush1.bf16.msra.mxu0 0
    %2094 = vmatprep.subr.bf16.mxu0 0
    %2095 = vmatpush1.bf16.msra.mxu0 0
    %2096 = vmatprep.subr.bf16.mxu0 0
    %2097 = vmatpush1.bf16.msra.mxu0 0
    %2098 = vmatprep.subr.bf16.mxu0 0
    %2099 = vmatpush1.bf16.msra.mxu0 0
    %2100 = vmatprep.subr.bf16.mxu0 0
    %2101 = vmatpush1.bf16.msra.mxu0 0
    %2102 = vmatprep.subr.bf16.mxu0 0
    %2103 = vmatpush1.bf16.msra.mxu0 0
    %2104 = vmatprep.subr.bf16.mxu0 0
    %2105 = vmatpush1.bf16.msra.mxu0 0
    %2106 = vmatprep.subr.bf16.mxu0 0
    %2107 = vmatpush1.bf16.msra.mxu0 0
    %2108 = vmatprep.subr.bf16.mxu0 0
    %2109 = vmatpush1.bf16.msra.mxu0 0
    %2110 = vmatprep.mubr.bf16.mxu0 0
    %2111 = vmatmul.mubr.bf16.gmra.mrb[0].mxu0 %v2076
    %v2112 = vpop.f32.mrb[0].mxu0
    %v2113 = vadd.f32 %v2073, %v2112
    %v2114 = vpop.f32.mrb[0].mxu0
    %v2115 = vpop.f32.mrb[0].mxu0
    %v2116 = vpop.f32.mrb[0].mxu0
    %2117 = vdwg.mxu0
    %2118 = vmatprep.subr.bf16.mxu0 0
    %2119 = vmatpush1.bf16.msra.mxu0 %v2061
    %2120 = vmatprep.subr.bf16.mxu0 0
    %2121 = vmatpush1.bf16.msra.mxu0 0
    %2122 = vmatprep.subr.bf16.mxu0 0
    %2123 = vmatpush1.bf16.msra.mxu0 0
    %2124 = vmatprep.subr.bf16.mxu0 0
    %2125 = vmatpush1.bf16.msra.mxu0 0
    %2126 = vmatprep.subr.bf16.mxu0 0
    %2127 = vmatpush1.bf16.msra.mxu0 0
    %2128 = vmatprep.subr.bf16.mxu0 0
    %2129 = vmatpush1.bf16.msra.mxu0 0
    %2130 = vmatprep.subr.bf16.mxu0 0
    %2131 = vmatpush1.bf16.msra.mxu0 0
    %2132 = vmatprep.subr.bf16.mxu0 0
    %2133 = vmatpush1.bf16.msra.mxu0 0
    %2134 = vmatprep.subr.bf16.mxu0 0
    %2135 = vmatpush1.bf16.msra.mxu0 0
    %2136 = vmatprep.subr.bf16.mxu0 0
    %2137 = vmatpush1.bf16.msra.mxu0 0
    %2138 = vmatprep.subr.bf16.mxu0 0
    %2139 = vmatpush1.bf16.msra.mxu0 0
    %2140 = vmatprep.subr.bf16.mxu0 0
    %2141 = vmatpush1.bf16.msra.mxu0 0
    %2142 = vmatprep.subr.bf16.mxu0 0
    %2143 = vmatpush1.bf16.msra.mxu0 0
    %2144 = vmatprep.subr.bf16.mxu0 0
    %2145 = vmatpush1.bf16.msra.mxu0 0
    %2146 = vmatprep.subr.bf16.mxu0 0
    %2147 = vmatpush1.bf16.msra.mxu0 0
    %2148 = vmatprep.subr.bf16.mxu0 0
    %2149 = vmatpush1.bf16.msra.mxu0 0
    %2150 = vmatprep.mubr.bf16.mxu0 0
    %2151 = vmatmul.mubr.bf16.gmra.mrb[0].mxu0 %v2076
    %v2152 = vpop.f32.mrb[0].mxu0
    %v2153 = vadd.f32 %v2073, %v2152
    %v2154 = vpop.f32.mrb[0].mxu0
    %v2155 = vpop.f32.mrb[0].mxu0
    %v2156 = vpop.f32.mrb[0].mxu0
    %2157 = vdwg.mxu0
    %2158 = vmatprep.subr.bf16.mxu0 0
    %2159 = vmatpush1.bf16.msra.mxu0 %v2062
    %2160 = vmatprep.subr.bf16.mxu0 0
    %2161 = vmatpush1.bf16.msra.mxu0 0
    %2162 = vmatprep.subr.bf16.mxu0 0
    %2163 = vmatpush1.bf16.msra.mxu0 0
    %2164 = vmatprep.subr.bf16.mxu0 0
    %2165 = vmatpush1.bf16.msra.mxu0 0
    %2166 = vmatprep.subr.bf16.mxu0 0
    %2167 = vmatpush1.bf16.msra.mxu0 0
    %2168 = vmatprep.subr.bf16.mxu0 0
    %2169 = vmatpush1.bf16.msra.mxu0 0
    %2170 = vmatprep.subr.bf16.mxu0 0
    %2171 = vmatpush1.bf16.msra.mxu0 0
    %2172 = vmatprep.subr.bf16.mxu0 0
    %2173 = vmatpush1.bf16.msra.mxu0 0
    %2174 = vmatprep.subr.bf16.mxu0 0
    %2175 = vmatpush1.bf16.msra.mxu0 0
    %2176 = vmatprep.subr.bf16.mxu0 0
    %2177 = vmatpush1.bf16.msra.mxu0 0
    %2178 = vmatprep.subr.bf16.mxu0 0
    %2179 = vmatpush1.bf16.msra.mxu0 0
    %2180 = vmatprep.subr.bf16.mxu0 0
    %2181 = vmatpush1.bf16.msra.mxu0 0
    %2182 = vmatprep.subr.bf16.mxu0 0
    %2183 = vmatpush1.bf16.msra.mxu0 0
    %2184 = vmatprep.subr.bf16.mxu0 0
    %2185 = vmatpush1.bf16.msra.mxu0 0
    %2186 = vmatprep.subr.bf16.mxu0 0
    %2187 = vmatpush1.bf16.msra.mxu0 0
    %2188 = vmatprep.subr.bf16.mxu0 0
    %2189 = vmatpush1.bf16.msra.mxu0 0
    %2190 = vmatprep.mubr.bf16.mxu0 0
    %2191 = vmatmul.mubr.bf16.gmra.mrb[0].mxu0 %v2076
    %v2192 = vpop.f32.mrb[0].mxu0
    %v2193 = vadd.f32 %v2073, %v2192
    %v2194 = vpop.f32.mrb[0].mxu0
    %v2195 = vpop.f32.mrb[0].mxu0
    %v2196 = vpop.f32.mrb[0].mxu0
    %2197 = vdwg.mxu0
    %2198 = vmatprep.subr.bf16.mxu0 0
    %2199 = vmatpush1.bf16.msra.mxu0 %v2063
    %2200 = vmatprep.subr.bf16.mxu0 0
    %2201 = vmatpush1.bf16.msra.mxu0 0
    %2202 = vmatprep.subr.bf16.mxu0 0
    %2203 = vmatpush1.bf16.msra.mxu0 0
    %2204 = vmatprep.subr.bf16.mxu0 0
    %2205 = vmatpush1.bf16.msra.mxu0 0
    %2206 = vmatprep.subr.bf16.mxu0 0
    %2207 = vmatpush1.bf16.msra.mxu0 0
    %2208 = vmatprep.subr.bf16.mxu0 0
    %2209 = vmatpush1.bf16.msra.mxu0 0
    %2210 = vmatprep.subr.bf16.mxu0 0
    %2211 = vmatpush1.bf16.msra.mxu0 0
    %2212 = vmatprep.subr.bf16.mxu0 0
    %2213 = vmatpush1.bf16.msra.mxu0 0
    %2214 = vmatprep.subr.bf16.mxu0 0
    %2215 = vmatpush1.bf16.msra.mxu0 0
    %2216 = vmatprep.subr.bf16.mxu0 0
    %2217 = vmatpush1.bf16.msra.mxu0 0
    %2218 = vmatprep.subr.bf16.mxu0 0
    %2219 = vmatpush1.bf16.msra.mxu0 0
    %2220 = vmatprep.subr.bf16.mxu0 0
    %2221 = vmatpush1.bf16.msra.mxu0 0
    %2222 = vmatprep.subr.bf16.mxu0 0
    %2223 = vmatpush1.bf16.msra.mxu0 0
    %2224 = vmatprep.subr.bf16.mxu0 0
    %2225 = vmatpush1.bf16.msra.mxu0 0
    %2226 = vmatprep.subr.bf16.mxu0 0
    %2227 = vmatpush1.bf16.msra.mxu0 0
    %2228 = vmatprep.subr.bf16.mxu0 0
    %2229 = vmatpush1.bf16.msra.mxu0 0
    %2230 = vmatprep.mubr.bf16.mxu0 0
    %2231 = vmatmul.mubr.bf16.gmra.mrb[0].mxu0 %v2076
    %v2232 = vpop.f32.mrb[0].mxu0
    %v2233 = vadd.f32 %v2073, %v2232
    %v2234 = vpop.f32.mrb[0].mxu0
    %v2235 = vpop.f32.mrb[0].mxu0
    %v2236 = vpop.f32.mrb[0].mxu0
    %2237 = vdwg.mxu0
    %2238 = vmatprep.subr.bf16.mxu0 0
    %2239 = vmatpush1.bf16.msra.mxu0 %v2064
    %2240 = vmatprep.subr.bf16.mxu0 0
    %2241 = vmatpush1.bf16.msra.mxu0 0
    %2242 = vmatprep.subr.bf16.mxu0 0
    %2243 = vmatpush1.bf16.msra.mxu0 0
    %2244 = vmatprep.subr.bf16.mxu0 0
    %2245 = vmatpush1.bf16.msra.mxu0 0
    %2246 = vmatprep.subr.bf16.mxu0 0
    %2247 = vmatpush1.bf16.msra.mxu0 0
    %2248 = vmatprep.subr.bf16.mxu0 0
    %2249 = vmatpush1.bf16.msra.mxu0 0
    %2250 = vmatprep.subr.bf16.mxu0 0
    %2251 = vmatpush1.bf16.msra.mxu0 0
    %2252 = vmatprep.subr.bf16.mxu0 0
    %2253 = vmatpush1.bf16.msra.mxu0 0
    %2254 = vmatprep.subr.bf16.mxu0 0
    %2255 = vmatpush1.bf16.msra.mxu0 0
    %2256 = vmatprep.subr.bf16.mxu0 0
    %2257 = vmatpush1.bf16.msra.mxu0 0
    %2258 = vmatprep.subr.bf16.mxu0 0
    %2259 = vmatpush1.bf16.msra.mxu0 0
    %2260 = vmatprep.subr.bf16.mxu0 0
    %2261 = vmatpush1.bf16.msra.mxu0 0
    %2262 = vmatprep.subr.bf16.mxu0 0
    %2263 = vmatpush1.bf16.msra.mxu0 0
    %2264 = vmatprep.subr.bf16.mxu0 0
    %2265 = vmatpush1.bf16.msra.mxu0 0
    %2266 = vmatprep.subr.bf16.mxu0 0
    %2267 = vmatpush1.bf16.msra.mxu0 0
    %2268 = vmatprep.subr.bf16.mxu0 0
    %2269 = vmatpush1.bf16.msra.mxu0 0
    %2270 = vmatprep.mubr.bf16.mxu0 0
    %2271 = vmatmul.mubr.bf16.gmra.mrb[0].mxu0 %v2076
    %v2272 = vpop.f32.mrb[0].mxu0
    %v2273 = vadd.f32 %v2073, %v2272
    %v2274 = vpop.f32.mrb[0].mxu0
    %v2275 = vpop.f32.mrb[0].mxu0
    %v2276 = vpop.f32.mrb[0].mxu0
    %2277 = vdwg.mxu0
    %2278 = vmatprep.subr.bf16.mxu0 0
    %2279 = vmatpush1.bf16.msra.mxu0 %v2065
    %2280 = vmatprep.subr.bf16.mxu0 0
    %2281 = vmatpush1.bf16.msra.mxu0 0
    %2282 = vmatprep.subr.bf16.mxu0 0
    %2283 = vmatpush1.bf16.msra.mxu0 0
    %2284 = vmatprep.subr.bf16.mxu0 0
    %2285 = vmatpush1.bf16.msra.mxu0 0
    %2286 = vmatprep.subr.bf16.mxu0 0
    %2287 = vmatpush1.bf16.msra.mxu0 0
    %2288 = vmatprep.subr.bf16.mxu0 0
    %2289 = vmatpush1.bf16.msra.mxu0 0
    %2290 = vmatprep.subr.bf16.mxu0 0
    %2291 = vmatpush1.bf16.msra.mxu0 0
    %2292 = vmatprep.subr.bf16.mxu0 0
    %2293 = vmatpush1.bf16.msra.mxu0 0
    %2294 = vmatprep.subr.bf16.mxu0 0
    %2295 = vmatpush1.bf16.msra.mxu0 0
    %2296 = vmatprep.subr.bf16.mxu0 0
    %2297 = vmatpush1.bf16.msra.mxu0 0
    %2298 = vmatprep.subr.bf16.mxu0 0
    %2299 = vmatpush1.bf16.msra.mxu0 0
    %2300 = vmatprep.subr.bf16.mxu0 0
    %2301 = vmatpush1.bf16.msra.mxu0 0
    %2302 = vmatprep.subr.bf16.mxu0 0
    %2303 = vmatpush1.bf16.msra.mxu0 0
    %2304 = vmatprep.subr.bf16.mxu0 0
    %2305 = vmatpush1.bf16.msra.mxu0 0
    %2306 = vmatprep.subr.bf16.mxu0 0
    %2307 = vmatpush1.bf16.msra.mxu0 0
    %2308 = vmatprep.subr.bf16.mxu0 0
    %2309 = vmatpush1.bf16.msra.mxu0 0
    %2310 = vmatprep.mubr.bf16.mxu0 0
    %2311 = vmatmul.mubr.bf16.gmra.mrb[0].mxu0 %v2076
    %v2312 = vpop.f32.mrb[0].mxu0
    %v2313 = vadd.f32 %v2073, %v2312
    %v2314 = vpop.f32.mrb[0].mxu0
    %v2315 = vpop.f32.mrb[0].mxu0
    %v2316 = vpop.f32.mrb[0].mxu0
    %2317 = vdwg.mxu0
    %2318 = vmatprep.subr.bf16.mxu0 0
    %2319 = vmatpush1.bf16.msra.mxu0 %v2066
    %2320 = vmatprep.subr.bf16.mxu0 0
    %2321 = vmatpush1.bf16.msra.mxu0 0
    %2322 = vmatprep.subr.bf16.mxu0 0
    %2323 = vmatpush1.bf16.msra.mxu0 0
    %2324 = vmatprep.subr.bf16.mxu0 0
    %2325 = vmatpush1.bf16.msra.mxu0 0
    %2326 = vmatprep.subr.bf16.mxu0 0
    %2327 = vmatpush1.bf16.msra.mxu0 0
    %2328 = vmatprep.subr.bf16.mxu0 0
    %2329 = vmatpush1.bf16.msra.mxu0 0
    %2330 = vmatprep.subr.bf16.mxu0 0
    %2331 = vmatpush1.bf16.msra.mxu0 0
    %2332 = vmatprep.subr.bf16.mxu0 0
    %2333 = vmatpush1.bf16.msra.mxu0 0
    %2334 = vmatprep.subr.bf16.mxu0 0
    %2335 = vmatpush1.bf16.msra.mxu0 0
    %2336 = vmatprep.subr.bf16.mxu0 0
    %2337 = vmatpush1.bf16.msra.mxu0 0
    %2338 = vmatprep.subr.bf16.mxu0 0
    %2339 = vmatpush1.bf16.msra.mxu0 0
    %2340 = vmatprep.subr.bf16.mxu0 0
    %2341 = vmatpush1.bf16.msra.mxu0 0
    %2342 = vmatprep.subr.bf16.mxu0 0
    %2343 = vmatpush1.bf16.msra.mxu0 0
    %2344 = vmatprep.subr.bf16.mxu0 0
    %2345 = vmatpush1.bf16.msra.mxu0 0
    %2346 = vmatprep.subr.bf16.mxu0 0
    %2347 = vmatpush1.bf16.msra.mxu0 0
    %2348 = vmatprep.subr.bf16.mxu0 0
    %2349 = vmatpush1.bf16.msra.mxu0 0
    %2350 = vmatprep.mubr.bf16.mxu0 0
    %2351 = vmatmul.mubr.bf16.gmra.mrb[0].mxu0 %v2076
    %v2352 = vpop.f32.mrb[0].mxu0
    %v2353 = vadd.f32 %v2073, %v2352
    %v2354 = vpop.f32.mrb[0].mxu0
    %v2355 = vpop.f32.mrb[0].mxu0
    %v2356 = vpop.f32.mrb[0].mxu0
    %2357 = vdwg.mxu0
    %2358 = vmatprep.subr.bf16.mxu0 0
    %2359 = vmatpush1.bf16.msra.mxu0 %v2067
    %2360 = vmatprep.subr.bf16.mxu0 0
    %2361 = vmatpush1.bf16.msra.mxu0 0
    %2362 = vmatprep.subr.bf16.mxu0 0
    %2363 = vmatpush1.bf16.msra.mxu0 0
    %2364 = vmatprep.subr.bf16.mxu0 0
    %2365 = vmatpush1.bf16.msra.mxu0 0
    %2366 = vmatprep.subr.bf16.mxu0 0
    %2367 = vmatpush1.bf16.msra.mxu0 0
    %2368 = vmatprep.subr.bf16.mxu0 0
    %2369 = vmatpush1.bf16.msra.mxu0 0
    %2370 = vmatprep.subr.bf16.mxu0 0
    %2371 = vmatpush1.bf16.msra.mxu0 0
    %2372 = vmatprep.subr.bf16.mxu0 0
    %2373 = vmatpush1.bf16.msra.mxu0 0
    %2374 = vmatprep.subr.bf16.mxu0 0
    %2375 = vmatpush1.bf16.msra.mxu0 0
    %2376 = vmatprep.subr.bf16.mxu0 0
    %2377 = vmatpush1.bf16.msra.mxu0 0
    %2378 = vmatprep.subr.bf16.mxu0 0
    %2379 = vmatpush1.bf16.msra.mxu0 0
    %2380 = vmatprep.subr.bf16.mxu0 0
    %2381 = vmatpush1.bf16.msra.mxu0 0
    %2382 = vmatprep.subr.bf16.mxu0 0
    %2383 = vmatpush1.bf16.msra.mxu0 0
    %2384 = vmatprep.subr.bf16.mxu0 0
    %2385 = vmatpush1.bf16.msra.mxu0 0
    %2386 = vmatprep.subr.bf16.mxu0 0
    %2387 = vmatpush1.bf16.msra.mxu0 0
    %2388 = vmatprep.subr.bf16.mxu0 0
    %2389 = vmatpush1.bf16.msra.mxu0 0
    %2390 = vmatprep.mubr.bf16.mxu0 0
    %2391 = vmatmul.mubr.bf16.gmra.mrb[0].mxu0 %v2076
    %v2392 = vpop.f32.mrb[0].mxu0
    %v2393 = vadd.f32 %v2073, %v2392
    %v2394 = vpop.f32.mrb[0].mxu0
    %v2395 = vpop.f32.mrb[0].mxu0
    %v2396 = vpop.f32.mrb[0].mxu0
    %2397 = vdwg.mxu0
    %v2398 = vadd.f32 %v1506, %v2113
    %v2399 = vadd.f32 %v1507, %v2153
    %v2400 = vadd.f32 %v1508, %v2193
    %v2401 = vadd.f32 %v1509, %v2233
    %v2402 = vadd.f32 %v1510, %v2273
    %v2403 = vadd.f32 %v1511, %v2313
    %v2404 = vadd.f32 %v1512, %v2353
    %v2405 = vadd.f32 %v1513, %v2393
    %s2406 = scalar_lea.vmem %s7, 1
    %v2407 = vld [vmem:[%s2406] sm:$0x1]
    %s2408 = scalar_lea.vmem %s8, 1
    %v2409 = vld [vmem:[%s2408] sm:$0x1]
    %v2410 = vsel %vm1076, %v2398, 0.0
    %2411 = vadd.xlane.f32.xlu0 %v2410
    %v2412 = vpop.xlane.xlu0 %2411
    %v2413 = vsel %vm1076, %v2399, 0.0
    %2414 = vadd.xlane.f32.xlu0 %v2413
    %v2415 = vpop.xlane.xlu0 %2414
    %v2416 = vsel %vm1076, %v2400, 0.0
    %2417 = vadd.xlane.f32.xlu0 %v2416
    %v2418 = vpop.xlane.xlu0 %2417
    %v2419 = vsel %vm1076, %v2401, 0.0
    %2420 = vadd.xlane.f32.xlu0 %v2419
    %v2421 = vpop.xlane.xlu0 %2420
    %v2422 = vsel %vm1076, %v2402, 0.0
    %2423 = vadd.xlane.f32.xlu0 %v2422
    %v2424 = vpop.xlane.xlu0 %2423
    %v2425 = vsel %vm1076, %v2403, 0.0
    %2426 = vadd.xlane.f32.xlu0 %v2425
    %v2427 = vpop.xlane.xlu0 %2426
    %v2428 = vsel %vm1076, %v2404, 0.0
    %2429 = vadd.xlane.f32.xlu0 %v2428
    %v2430 = vpop.xlane.xlu0 %2429
    %v2431 = vsel %vm1076, %v2405, 0.0
    %2432 = vadd.xlane.f32.xlu0 %v2431
    %v2433 = vpop.xlane.xlu0 %2432
    %v2434 = vmul.f32 %v2412, 0.03125
    %v2435 = vmul.f32 %v2415, 0.03125
    %v2436 = vmul.f32 %v2418, 0.03125
    %v2437 = vmul.f32 %v2421, 0.03125
    %v2438 = vmul.f32 %v2424, 0.03125
    %v2439 = vmul.f32 %v2427, 0.03125
    %v2440 = vmul.f32 %v2430, 0.03125
    %v2441 = vmul.f32 %v2433, 0.03125
    %v2442 = vsub.f32 %v2398, %v2434
    %v2443 = vsub.f32 %v2399, %v2435
    %v2444 = vsub.f32 %v2400, %v2436
    %v2445 = vsub.f32 %v2401, %v2437
    %v2446 = vsub.f32 %v2402, %v2438
    %v2447 = vsub.f32 %v2403, %v2439
    %v2448 = vsub.f32 %v2404, %v2440
    %v2449 = vsub.f32 %v2405, %v2441
    %v2450 = vmul.f32 %v2442, %v2442
    %v2451 = vmul.f32 %v2443, %v2443
    %v2452 = vmul.f32 %v2444, %v2444
    %v2453 = vmul.f32 %v2445, %v2445
    %v2454 = vmul.f32 %v2446, %v2446
    %v2455 = vmul.f32 %v2447, %v2447
    %v2456 = vmul.f32 %v2448, %v2448
    %v2457 = vmul.f32 %v2449, %v2449
    %v2458 = vsel %vm1076, %v2450, 0.0
    %2459 = vadd.xlane.f32.xlu0 %v2458
    %v2460 = vpop.xlane.xlu0 %2459
    %v2461 = vsel %vm1076, %v2451, 0.0
    %2462 = vadd.xlane.f32.xlu0 %v2461
    %v2463 = vpop.xlane.xlu0 %2462
    %v2464 = vsel %vm1076, %v2452, 0.0
    %2465 = vadd.xlane.f32.xlu0 %v2464
    %v2466 = vpop.xlane.xlu0 %2465
    %v2467 = vsel %vm1076, %v2453, 0.0
    %2468 = vadd.xlane.f32.xlu0 %v2467
    %v2469 = vpop.xlane.xlu0 %2468
    %v2470 = vsel %vm1076, %v2454, 0.0
    %2471 = vadd.xlane.f32.xlu0 %v2470
    %v2472 = vpop.xlane.xlu0 %2471
    %v2473 = vsel %vm1076, %v2455, 0.0
    %2474 = vadd.xlane.f32.xlu0 %v2473
    %v2475 = vpop.xlane.xlu0 %2474
    %v2476 = vsel %vm1076, %v2456, 0.0
    %2477 = vadd.xlane.f32.xlu0 %v2476
    %v2478 = vpop.xlane.xlu0 %2477
    %v2479 = vsel %vm1076, %v2457, 0.0
    %2480 = vadd.xlane.f32.xlu0 %v2479
    %v2481 = vpop.xlane.xlu0 %2480
    %v2482 = vmul.f32 %v2460, 0.03125
    %v2483 = vmul.f32 %v2463, 0.03125
    %v2484 = vmul.f32 %v2466, 0.03125
    %v2485 = vmul.f32 %v2469, 0.03125
    %v2486 = vmul.f32 %v2472, 0.03125
    %v2487 = vmul.f32 %v2475, 0.03125
    %v2488 = vmul.f32 %v2478, 0.03125
    %v2489 = vmul.f32 %v2481, 0.03125
    %v2490 = vadd.f32 %v2482, 1e-05
    %v2491 = vadd.f32 %v2483, 1e-05
    %v2492 = vadd.f32 %v2484, 1e-05
    %v2493 = vadd.f32 %v2485, 1e-05
    %v2494 = vadd.f32 %v2486, 1e-05
    %v2495 = vadd.f32 %v2487, 1e-05
    %v2496 = vadd.f32 %v2488, 1e-05
    %v2497 = vadd.f32 %v2489, 1e-05
    %v2498 = vrsqrt.pop %v2490
    %v2499 = vrsqrt.pop %v2491
    %v2500 = vrsqrt.pop %v2492
    %v2501 = vrsqrt.pop %v2493
    %v2502 = vrsqrt.pop %v2494
    %v2503 = vrsqrt.pop %v2495
    %v2504 = vrsqrt.pop %v2496
    %v2505 = vrsqrt.pop %v2497
    %v2506 = vmul.f32 %v2442, %v2498
    %v2507 = vmul.f32 %v2443, %v2499
    %v2508 = vmul.f32 %v2444, %v2500
    %v2509 = vmul.f32 %v2445, %v2501
    %v2510 = vmul.f32 %v2446, %v2502
    %v2511 = vmul.f32 %v2447, %v2503
    %v2512 = vmul.f32 %v2448, %v2504
    %v2513 = vmul.f32 %v2449, %v2505
    %v2515 = vlaneseq
    %v2516 = vshrl.u32 %v2515, 7
    %v2517 = vsub.s32 0, %v2516
    %v2518 = vrot.slane %v2407, %v2517
    %v2520 = vmul.f32 %v2506, %v2518
    %v2521 = vmul.f32 %v2507, %v2518
    %v2522 = vmul.f32 %v2508, %v2518
    %v2523 = vmul.f32 %v2509, %v2518
    %v2524 = vmul.f32 %v2510, %v2518
    %v2525 = vmul.f32 %v2511, %v2518
    %v2526 = vmul.f32 %v2512, %v2518
    %v2527 = vmul.f32 %v2513, %v2518
    %v2529 = vlaneseq
    %v2530 = vshrl.u32 %v2529, 7
    %v2531 = vsub.s32 0, %v2530
    %v2532 = vrot.slane %v2409, %v2531
    %v2534 = vadd.f32 %v2520, %v2532
    %v2535 = vadd.f32 %v2521, %v2532
    %v2536 = vadd.f32 %v2522, %v2532
    %v2537 = vadd.f32 %v2523, %v2532
    %v2538 = vadd.f32 %v2524, %v2532
    %v2539 = vadd.f32 %v2525, %v2532
    %v2540 = vadd.f32 %v2526, %v2532
    %v2541 = vadd.f32 %v2527, %v2532
    %v2542 = vpack.c.bf16 %v2535, %v2534
    %v2543 = vpack.c.bf16 %v2537, %v2536
    %v2544 = vpack.c.bf16 %v2539, %v2538
    %v2545 = vpack.c.bf16 %v2541, %v2540
    %s2546 = scalar_lea.vmem %s9, 16
    %v2547 = vld [vmem:[%s2546] sm:$0xf]
    %v2548 = vld [vmem:[%s2546 + $0x4] sm:$0xf]
    %v2549 = vld [vmem:[%s2546 + $0x8] sm:$0xf]
    %v2550 = vld [vmem:[%s2546 + $0xc] sm:$0xf]
    %s2551 = scalar_lea.vmem %s10, 1
    %v2552 = vld [vmem:[%s2551] sm:$0x1]
    %v2554 = vlaneseq
    %v2555 = vshrl.u32 %v2554, 7
    %v2556 = vsub.s32 0, %v2555
    %v2557 = vrot.slane %v2552, %v2556
    %v2563 = vunpack.c.l.b16 %v2547
    %v2564 = vunpack.c.l.b16 %v2548
    %v2565 = vunpack.c.l.b16 %v2549
    %v2566 = vunpack.c.l.b16 %v2550
    %v2567 = vpack.c.b16 %v2564, %v2563
    %v2568 = vpack.c.b16 %v2566, %v2565
    %v2572 = vsel %vm1076, %v2542, 0
    %v2575 = vsel %vm1076, %v2543, 0
    %v2578 = vsel %vm1076, %v2544, 0
    %v2581 = vsel %vm1076, %v2545, 0
    %2583 = vmatprep.subr.bf16.mxu0 0
    %2584 = vmatpush1.bf16.msra.mxu0 %v2567
    %2585 = vmatprep.subr.bf16.mxu0 0
    %2586 = vmatpush1.bf16.msra.mxu0 %v2568
    %2587 = vmatprep.subr.bf16.mxu0 0
    %2588 = vmatpush1.bf16.msra.mxu0 0
    %2589 = vmatprep.subr.bf16.mxu0 0
    %2590 = vmatpush1.bf16.msra.mxu0 0
    %2591 = vmatprep.subr.bf16.mxu0 0
    %2592 = vmatpush1.bf16.msra.mxu0 0
    %2593 = vmatprep.subr.bf16.mxu0 0
    %2594 = vmatpush1.bf16.msra.mxu0 0
    %2595 = vmatprep.subr.bf16.mxu0 0
    %2596 = vmatpush1.bf16.msra.mxu0 0
    %2597 = vmatprep.subr.bf16.mxu0 0
    %2598 = vmatpush1.bf16.msra.mxu0 0
    %2599 = vmatprep.subr.bf16.mxu0 0
    %2600 = vmatpush1.bf16.msra.mxu0 0
    %2601 = vmatprep.subr.bf16.mxu0 0
    %2602 = vmatpush1.bf16.msra.mxu0 0
    %2603 = vmatprep.subr.bf16.mxu0 0
    %2604 = vmatpush1.bf16.msra.mxu0 0
    %2605 = vmatprep.subr.bf16.mxu0 0
    %2606 = vmatpush1.bf16.msra.mxu0 0
    %2607 = vmatprep.subr.bf16.mxu0 0
    %2608 = vmatpush1.bf16.msra.mxu0 0
    %2609 = vmatprep.subr.bf16.mxu0 0
    %2610 = vmatpush1.bf16.msra.mxu0 0
    %2611 = vmatprep.subr.bf16.mxu0 0
    %2612 = vmatpush1.bf16.msra.mxu0 0
    %2613 = vmatprep.subr.bf16.mxu0 0
    %2614 = vmatpush1.bf16.msra.mxu0 0
    %2615 = vmatprep.mubr.bf16.mxu0 0
    %2616 = vmatmul.mubr.bf16.gmra.mrb[0].mxu0 %v2572
    %v2617 = vpop.f32.mrb[0].mxu0
    %v2618 = vadd.f32 %v2557, %v2617
    %v2619 = vpop.f32.mrb[0].mxu0
    %v2620 = vpop.f32.mrb[0].mxu0
    %v2621 = vadd.f32 %v2557, %v2620
    %v2622 = vpop.f32.mrb[0].mxu0
    %2623 = vmatprep.mubr.bf16.mxu0 0
    %2624 = vmatmul.mubr.bf16.gmra.mrb[0].mxu0 %v2575
    %v2625 = vpop.f32.mrb[0].mxu0
    %v2626 = vadd.f32 %v2557, %v2625
    %v2627 = vpop.f32.mrb[0].mxu0
    %v2628 = vpop.f32.mrb[0].mxu0
    %v2629 = vadd.f32 %v2557, %v2628
    %v2630 = vpop.f32.mrb[0].mxu0
    %2631 = vmatprep.mubr.bf16.mxu0 0
    %2632 = vmatmul.mubr.bf16.gmra.mrb[0].mxu0 %v2578
    %v2633 = vpop.f32.mrb[0].mxu0
    %v2634 = vadd.f32 %v2557, %v2633
    %v2635 = vpop.f32.mrb[0].mxu0
    %v2636 = vpop.f32.mrb[0].mxu0
    %v2637 = vadd.f32 %v2557, %v2636
    %v2638 = vpop.f32.mrb[0].mxu0
    %2639 = vmatprep.mubr.bf16.mxu0 0
    %2640 = vmatmul.mubr.bf16.gmra.mrb[0].mxu0 %v2581
    %v2641 = vpop.f32.mrb[0].mxu0
    %v2642 = vadd.f32 %v2557, %v2641
    %v2643 = vpop.f32.mrb[0].mxu0
    %v2644 = vpop.f32.mrb[0].mxu0
    %v2645 = vadd.f32 %v2557, %v2644
    %v2646 = vpop.f32.mrb[0].mxu0
    %2647 = vdwg.mxu0
    %v2648 = vmul.f32 %v2618, 0.5
    %v2649 = vmul.f32 %v2621, 0.5
    %v2650 = vmul.f32 %v2626, 0.5
    %v2651 = vmul.f32 %v2629, 0.5
    %v2652 = vmul.f32 %v2634, 0.5
    %v2653 = vmul.f32 %v2637, 0.5
    %v2654 = vmul.f32 %v2642, 0.5
    %v2655 = vmul.f32 %v2645, 0.5
    %v2656 = vmul.f32 %v2618, 0.044715
    %v2657 = vmul.f32 %v2621, 0.044715
    %v2658 = vmul.f32 %v2626, 0.044715
    %v2659 = vmul.f32 %v2629, 0.044715
    %v2660 = vmul.f32 %v2634, 0.044715
    %v2661 = vmul.f32 %v2637, 0.044715
    %v2662 = vmul.f32 %v2642, 0.044715
    %v2663 = vmul.f32 %v2645, 0.044715
    %v2664 = vmul.f32 %v2656, %v2618
    %v2665 = vmul.f32 %v2657, %v2621
    %v2666 = vmul.f32 %v2658, %v2626
    %v2667 = vmul.f32 %v2659, %v2629
    %v2668 = vmul.f32 %v2660, %v2634
    %v2669 = vmul.f32 %v2661, %v2637
    %v2670 = vmul.f32 %v2662, %v2642
    %v2671 = vmul.f32 %v2663, %v2645
    %v2672 = vmul.f32 %v2664, %v2618
    %v2673 = vmul.f32 %v2665, %v2621
    %v2674 = vmul.f32 %v2666, %v2626
    %v2675 = vmul.f32 %v2667, %v2629
    %v2676 = vmul.f32 %v2668, %v2634
    %v2677 = vmul.f32 %v2669, %v2637
    %v2678 = vmul.f32 %v2670, %v2642
    %v2679 = vmul.f32 %v2671, %v2645
    %v2680 = vadd.f32 %v2618, %v2672
    %v2681 = vadd.f32 %v2621, %v2673
    %v2682 = vadd.f32 %v2626, %v2674
    %v2683 = vadd.f32 %v2629, %v2675
    %v2684 = vadd.f32 %v2634, %v2676
    %v2685 = vadd.f32 %v2637, %v2677
    %v2686 = vadd.f32 %v2642, %v2678
    %v2687 = vadd.f32 %v2645, %v2679
    %v2688 = vmul.f32 %v2680, 0.7978846
    %v2689 = vmul.f32 %v2681, 0.7978846
    %v2690 = vmul.f32 %v2682, 0.7978846
    %v2691 = vmul.f32 %v2683, 0.7978846
    %v2692 = vmul.f32 %v2684, 0.7978846
    %v2693 = vmul.f32 %v2685, 0.7978846
    %v2694 = vmul.f32 %v2686, 0.7978846
    %v2695 = vmul.f32 %v2687, 0.7978846
    %v2696 = vtanh.pop %v2688
    %v2697 = vtanh.pop %v2689
    %v2698 = vtanh.pop %v2690
    %v2699 = vtanh.pop %v2691
    %v2700 = vtanh.pop %v2692
    %v2701 = vtanh.pop %v2693
    %v2702 = vtanh.pop %v2694
    %v2703 = vtanh.pop %v2695
    %v2704 = vadd.f32 %v2696, 1.0
    %v2705 = vadd.f32 %v2697, 1.0
    %v2706 = vadd.f32 %v2698, 1.0
    %v2707 = vadd.f32 %v2699, 1.0
    %v2708 = vadd.f32 %v2700, 1.0
    %v2709 = vadd.f32 %v2701, 1.0
    %v2710 = vadd.f32 %v2702, 1.0
    %v2711 = vadd.f32 %v2703, 1.0
    %v2712 = vmul.f32 %v2648, %v2704
    %v2713 = vmul.f32 %v2649, %v2705
    %v2714 = vmul.f32 %v2650, %v2706
    %v2715 = vmul.f32 %v2651, %v2707
    %v2716 = vmul.f32 %v2652, %v2708
    %v2717 = vmul.f32 %v2653, %v2709
    %v2718 = vmul.f32 %v2654, %v2710
    %v2719 = vmul.f32 %v2655, %v2711
    %v2720 = vpack.c.bf16 %v2713, %v2712
    %v2721 = vpack.c.bf16 %v2715, %v2714
    %v2722 = vpack.c.bf16 %v2717, %v2716
    %v2723 = vpack.c.bf16 %v2719, %v2718
    %s2724 = scalar_lea.vmem %s11, 32
    %v2725 = vld [vmem:[%s2724] sm:$0xf]
    %v2726 = vld [vmem:[%s2724 + $0x4] sm:$0xf]
    %v2727 = vld [vmem:[%s2724 + $0x8] sm:$0xf]
    %v2728 = vld [vmem:[%s2724 + $0xc] sm:$0xf]
    %v2729 = vld [vmem:[%s2724 + $0x10] sm:$0xf]
    %v2730 = vld [vmem:[%s2724 + $0x14] sm:$0xf]
    %v2731 = vld [vmem:[%s2724 + $0x18] sm:$0xf]
    %v2732 = vld [vmem:[%s2724 + $0x1c] sm:$0xf]
    %s2733 = scalar_lea.vmem %s12, 1
    %v2734 = vld [vmem:[%s2733] sm:$0x1]
    %v2736 = vlaneseq
    %v2737 = vshrl.u32 %v2736, 7
    %v2738 = vsub.s32 0, %v2737
    %v2739 = vrot.slane %v2734, %v2738
    %v2749 = vunpack.c.l.b16 %v2725
    %v2750 = vunpack.c.l.b16 %v2726
    %v2751 = vunpack.c.l.b16 %v2727
    %v2752 = vunpack.c.l.b16 %v2728
    %v2753 = vunpack.c.l.b16 %v2729
    %v2754 = vunpack.c.l.b16 %v2730
    %v2755 = vunpack.c.l.b16 %v2731
    %v2756 = vunpack.c.l.b16 %v2732
    %v2757 = vpack.c.b16 %v2750, %v2749
    %v2758 = vpack.c.b16 %v2752, %v2751
    %v2759 = vpack.c.b16 %v2754, %v2753
    %v2760 = vpack.c.b16 %v2756, %v2755
    %v2766 = vsel %vm1428, %v2720, 0
    %v2769 = vsel %vm1428, %v2721, 0
    %v2772 = vsel %vm1428, %v2722, 0
    %v2775 = vsel %vm1428, %v2723, 0
    %2777 = vmatprep.subr.bf16.mxu0 0
    %2778 = vmatpush1.bf16.msra.mxu0 %v2757
    %2779 = vmatprep.subr.bf16.mxu0 0
    %2780 = vmatpush1.bf16.msra.mxu0 %v2758
    %2781 = vmatprep.subr.bf16.mxu0 0
    %2782 = vmatpush1.bf16.msra.mxu0 %v2759
    %2783 = vmatprep.subr.bf16.mxu0 0
    %2784 = vmatpush1.bf16.msra.mxu0 %v2760
    %2785 = vmatprep.subr.bf16.mxu0 0
    %2786 = vmatpush1.bf16.msra.mxu0 0
    %2787 = vmatprep.subr.bf16.mxu0 0
    %2788 = vmatpush1.bf16.msra.mxu0 0
    %2789 = vmatprep.subr.bf16.mxu0 0
    %2790 = vmatpush1.bf16.msra.mxu0 0
    %2791 = vmatprep.subr.bf16.mxu0 0
    %2792 = vmatpush1.bf16.msra.mxu0 0
    %2793 = vmatprep.subr.bf16.mxu0 0
    %2794 = vmatpush1.bf16.msra.mxu0 0
    %2795 = vmatprep.subr.bf16.mxu0 0
    %2796 = vmatpush1.bf16.msra.mxu0 0
    %2797 = vmatprep.subr.bf16.mxu0 0
    %2798 = vmatpush1.bf16.msra.mxu0 0
    %2799 = vmatprep.subr.bf16.mxu0 0
    %2800 = vmatpush1.bf16.msra.mxu0 0
    %2801 = vmatprep.subr.bf16.mxu0 0
    %2802 = vmatpush1.bf16.msra.mxu0 0
    %2803 = vmatprep.subr.bf16.mxu0 0
    %2804 = vmatpush1.bf16.msra.mxu0 0
    %2805 = vmatprep.subr.bf16.mxu0 0
    %2806 = vmatpush1.bf16.msra.mxu0 0
    %2807 = vmatprep.subr.bf16.mxu0 0
    %2808 = vmatpush1.bf16.msra.mxu0 0
    %2809 = vmatprep.mubr.bf16.mxu0 0
    %2810 = vmatmul.mubr.bf16.gmra.mrb[0].mxu0 %v2766
    %v2811 = vpop.f32.mrb[0].mxu0
    %v2812 = vadd.f32 %v2739, %v2811
    %v2813 = vpop.f32.mrb[0].mxu0
    %v2814 = vpop.f32.mrb[0].mxu0
    %v2815 = vadd.f32 %v2739, %v2814
    %v2816 = vpop.f32.mrb[0].mxu0
    %2817 = vmatprep.mubr.bf16.mxu0 0
    %2818 = vmatmul.mubr.bf16.gmra.mrb[0].mxu0 %v2769
    %v2819 = vpop.f32.mrb[0].mxu0
    %v2820 = vadd.f32 %v2739, %v2819
    %v2821 = vpop.f32.mrb[0].mxu0
    %v2822 = vpop.f32.mrb[0].mxu0
    %v2823 = vadd.f32 %v2739, %v2822
    %v2824 = vpop.f32.mrb[0].mxu0
    %2825 = vmatprep.mubr.bf16.mxu0 0
    %2826 = vmatmul.mubr.bf16.gmra.mrb[0].mxu0 %v2772
    %v2827 = vpop.f32.mrb[0].mxu0
    %v2828 = vadd.f32 %v2739, %v2827
    %v2829 = vpop.f32.mrb[0].mxu0
    %v2830 = vpop.f32.mrb[0].mxu0
    %v2831 = vadd.f32 %v2739, %v2830
    %v2832 = vpop.f32.mrb[0].mxu0
    %2833 = vmatprep.mubr.bf16.mxu0 0
    %2834 = vmatmul.mubr.bf16.gmra.mrb[0].mxu0 %v2775
    %v2835 = vpop.f32.mrb[0].mxu0
    %v2836 = vadd.f32 %v2739, %v2835
    %v2837 = vpop.f32.mrb[0].mxu0
    %v2838 = vpop.f32.mrb[0].mxu0
    %v2839 = vadd.f32 %v2739, %v2838
    %v2840 = vpop.f32.mrb[0].mxu0
    %2841 = vdwg.mxu0
    %v2842 = vadd.f32 %v2398, %v2812
    %v2843 = vadd.f32 %v2399, %v2815
    %v2844 = vadd.f32 %v2400, %v2820
    %v2845 = vadd.f32 %v2401, %v2823
    %v2846 = vadd.f32 %v2402, %v2828
    %v2847 = vadd.f32 %v2403, %v2831
    %v2848 = vadd.f32 %v2404, %v2836
    %v2849 = vadd.f32 %v2405, %v2839
    %v2850 = vld [vmem:[%s13] sm:$0x1]
    %v2851 = vld [vmem:[%s14] sm:$0x1]
    %v2852 = vsel %vm1076, %v2842, 0.0
    %2853 = vadd.xlane.f32.xlu0 %v2852
    %v2854 = vpop.xlane.xlu0 %2853
    %v2855 = vsel %vm1076, %v2843, 0.0
    %2856 = vadd.xlane.f32.xlu0 %v2855
    %v2857 = vpop.xlane.xlu0 %2856
    %v2858 = vsel %vm1076, %v2844, 0.0
    %2859 = vadd.xlane.f32.xlu0 %v2858
    %v2860 = vpop.xlane.xlu0 %2859
    %v2861 = vsel %vm1076, %v2845, 0.0
    %2862 = vadd.xlane.f32.xlu0 %v2861
    %v2863 = vpop.xlane.xlu0 %2862
    %v2864 = vsel %vm1076, %v2846, 0.0
    %2865 = vadd.xlane.f32.xlu0 %v2864
    %v2866 = vpop.xlane.xlu0 %2865
    %v2867 = vsel %vm1076, %v2847, 0.0
    %2868 = vadd.xlane.f32.xlu0 %v2867
    %v2869 = vpop.xlane.xlu0 %2868
    %v2870 = vsel %vm1076, %v2848, 0.0
    %2871 = vadd.xlane.f32.xlu0 %v2870
    %v2872 = vpop.xlane.xlu0 %2871
    %v2873 = vsel %vm1076, %v2849, 0.0
    %2874 = vadd.xlane.f32.xlu0 %v2873
    %v2875 = vpop.xlane.xlu0 %2874
    %v2876 = vmul.f32 %v2854, 0.03125
    %v2877 = vmul.f32 %v2857, 0.03125
    %v2878 = vmul.f32 %v2860, 0.03125
    %v2879 = vmul.f32 %v2863, 0.03125
    %v2880 = vmul.f32 %v2866, 0.03125
    %v2881 = vmul.f32 %v2869, 0.03125
    %v2882 = vmul.f32 %v2872, 0.03125
    %v2883 = vmul.f32 %v2875, 0.03125
    %v2884 = vsub.f32 %v2842, %v2876
    %v2885 = vsub.f32 %v2843, %v2877
    %v2886 = vsub.f32 %v2844, %v2878
    %v2887 = vsub.f32 %v2845, %v2879
    %v2888 = vsub.f32 %v2846, %v2880
    %v2889 = vsub.f32 %v2847, %v2881
    %v2890 = vsub.f32 %v2848, %v2882
    %v2891 = vsub.f32 %v2849, %v2883
    %v2892 = vmul.f32 %v2884, %v2884
    %v2893 = vmul.f32 %v2885, %v2885
    %v2894 = vmul.f32 %v2886, %v2886
    %v2895 = vmul.f32 %v2887, %v2887
    %v2896 = vmul.f32 %v2888, %v2888
    %v2897 = vmul.f32 %v2889, %v2889
    %v2898 = vmul.f32 %v2890, %v2890
    %v2899 = vmul.f32 %v2891, %v2891
    %v2900 = vsel %vm1076, %v2892, 0.0
    %2901 = vadd.xlane.f32.xlu0 %v2900
    %v2902 = vpop.xlane.xlu0 %2901
    %v2903 = vsel %vm1076, %v2893, 0.0
    %2904 = vadd.xlane.f32.xlu0 %v2903
    %v2905 = vpop.xlane.xlu0 %2904
    %v2906 = vsel %vm1076, %v2894, 0.0
    %2907 = vadd.xlane.f32.xlu0 %v2906
    %v2908 = vpop.xlane.xlu0 %2907
    %v2909 = vsel %vm1076, %v2895, 0.0
    %2910 = vadd.xlane.f32.xlu0 %v2909
    %v2911 = vpop.xlane.xlu0 %2910
    %v2912 = vsel %vm1076, %v2896, 0.0
    %2913 = vadd.xlane.f32.xlu0 %v2912
    %v2914 = vpop.xlane.xlu0 %2913
    %v2915 = vsel %vm1076, %v2897, 0.0
    %2916 = vadd.xlane.f32.xlu0 %v2915
    %v2917 = vpop.xlane.xlu0 %2916
    %v2918 = vsel %vm1076, %v2898, 0.0
    %2919 = vadd.xlane.f32.xlu0 %v2918
    %v2920 = vpop.xlane.xlu0 %2919
    %v2921 = vsel %vm1076, %v2899, 0.0
    %2922 = vadd.xlane.f32.xlu0 %v2921
    %v2923 = vpop.xlane.xlu0 %2922
    %v2924 = vmul.f32 %v2902, 0.03125
    %v2925 = vmul.f32 %v2905, 0.03125
    %v2926 = vmul.f32 %v2908, 0.03125
    %v2927 = vmul.f32 %v2911, 0.03125
    %v2928 = vmul.f32 %v2914, 0.03125
    %v2929 = vmul.f32 %v2917, 0.03125
    %v2930 = vmul.f32 %v2920, 0.03125
    %v2931 = vmul.f32 %v2923, 0.03125
    %v2932 = vadd.f32 %v2924, 1e-05
    %v2933 = vadd.f32 %v2925, 1e-05
    %v2934 = vadd.f32 %v2926, 1e-05
    %v2935 = vadd.f32 %v2927, 1e-05
    %v2936 = vadd.f32 %v2928, 1e-05
    %v2937 = vadd.f32 %v2929, 1e-05
    %v2938 = vadd.f32 %v2930, 1e-05
    %v2939 = vadd.f32 %v2931, 1e-05
    %v2940 = vrsqrt.pop %v2932
    %v2941 = vrsqrt.pop %v2933
    %v2942 = vrsqrt.pop %v2934
    %v2943 = vrsqrt.pop %v2935
    %v2944 = vrsqrt.pop %v2936
    %v2945 = vrsqrt.pop %v2937
    %v2946 = vrsqrt.pop %v2938
    %v2947 = vrsqrt.pop %v2939
    %v2948 = vmul.f32 %v2884, %v2940
    %v2949 = vmul.f32 %v2885, %v2941
    %v2950 = vmul.f32 %v2886, %v2942
    %v2951 = vmul.f32 %v2887, %v2943
    %v2952 = vmul.f32 %v2888, %v2944
    %v2953 = vmul.f32 %v2889, %v2945
    %v2954 = vmul.f32 %v2890, %v2946
    %v2955 = vmul.f32 %v2891, %v2947
    %v2957 = vlaneseq
    %v2958 = vshrl.u32 %v2957, 7
    %v2959 = vsub.s32 0, %v2958
    %v2960 = vrot.slane %v2850, %v2959
    %v2962 = vmul.f32 %v2948, %v2960
    %v2963 = vmul.f32 %v2949, %v2960
    %v2964 = vmul.f32 %v2950, %v2960
    %v2965 = vmul.f32 %v2951, %v2960
    %v2966 = vmul.f32 %v2952, %v2960
    %v2967 = vmul.f32 %v2953, %v2960
    %v2968 = vmul.f32 %v2954, %v2960
    %v2969 = vmul.f32 %v2955, %v2960
    %v2971 = vlaneseq
    %v2972 = vshrl.u32 %v2971, 7
    %v2973 = vsub.s32 0, %v2972
    %v2974 = vrot.slane %v2851, %v2973
    %v2976 = vadd.f32 %v2962, %v2974
    %v2977 = vadd.f32 %v2963, %v2974
    %v2978 = vadd.f32 %v2964, %v2974
    %v2979 = vadd.f32 %v2965, %v2974
    %v2980 = vadd.f32 %v2966, %v2974
    %v2981 = vadd.f32 %v2967, %v2974
    %v2982 = vadd.f32 %v2968, %v2974
    %v2983 = vadd.f32 %v2969, %v2974
    %v2984 = vsel %vm1076, %v2976, 0.0
    %v2985 = vrot.slane %v2984, 4
    %v2986 = vadd.f32 %v2984, %v2985
    %v2987 = vrot.slane %v2986, 2
    %v2988 = vadd.f32 %v2986, %v2987
    %v2989 = vrot.slane %v2988, 1
    %v2990 = vadd.f32 %v2988, %v2989
    %v2991 = vsel %vm1076, %v2977, 0.0
    %v2992 = vrot.slane %v2991, 4
    %v2993 = vadd.f32 %v2991, %v2992
    %v2994 = vrot.slane %v2993, 2
    %v2995 = vadd.f32 %v2993, %v2994
    %v2996 = vrot.slane %v2995, 1
    %v2997 = vadd.f32 %v2995, %v2996
    %v2998 = vsel %vm1076, %v2978, 0.0
    %v2999 = vrot.slane %v2998, 4
    %v3000 = vadd.f32 %v2998, %v2999
    %v3001 = vrot.slane %v3000, 2
    %v3002 = vadd.f32 %v3000, %v3001
    %v3003 = vrot.slane %v3002, 1
    %v3004 = vadd.f32 %v3002, %v3003
    %v3005 = vsel %vm1076, %v2979, 0.0
    %v3006 = vrot.slane %v3005, 4
    %v3007 = vadd.f32 %v3005, %v3006
    %v3008 = vrot.slane %v3007, 2
    %v3009 = vadd.f32 %v3007, %v3008
    %v3010 = vrot.slane %v3009, 1
    %v3011 = vadd.f32 %v3009, %v3010
    %v3012 = vsel %vm1076, %v2980, 0.0
    %v3013 = vrot.slane %v3012, 4
    %v3014 = vadd.f32 %v3012, %v3013
    %v3015 = vrot.slane %v3014, 2
    %v3016 = vadd.f32 %v3014, %v3015
    %v3017 = vrot.slane %v3016, 1
    %v3018 = vadd.f32 %v3016, %v3017
    %v3019 = vsel %vm1076, %v2981, 0.0
    %v3020 = vrot.slane %v3019, 4
    %v3021 = vadd.f32 %v3019, %v3020
    %v3022 = vrot.slane %v3021, 2
    %v3023 = vadd.f32 %v3021, %v3022
    %v3024 = vrot.slane %v3023, 1
    %v3025 = vadd.f32 %v3023, %v3024
    %v3026 = vsel %vm1076, %v2982, 0.0
    %v3027 = vrot.slane %v3026, 4
    %v3028 = vadd.f32 %v3026, %v3027
    %v3029 = vrot.slane %v3028, 2
    %v3030 = vadd.f32 %v3028, %v3029
    %v3031 = vrot.slane %v3030, 1
    %v3032 = vadd.f32 %v3030, %v3031
    %v3033 = vsel %vm1076, %v2983, 0.0
    %v3034 = vrot.slane %v3033, 4
    %v3035 = vadd.f32 %v3033, %v3034
    %v3036 = vrot.slane %v3035, 2
    %v3037 = vadd.f32 %v3035, %v3036
    %v3038 = vrot.slane %v3037, 1
    %v3039 = vadd.f32 %v3037, %v3038
    %v3040 = vmul.f32 %v2990, 0.125
    %v3041 = vmul.f32 %v2997, 0.125
    %v3042 = vmul.f32 %v3004, 0.125
    %v3043 = vmul.f32 %v3011, 0.125
    %v3044 = vmul.f32 %v3018, 0.125
    %v3045 = vmul.f32 %v3025, 0.125
    %v3046 = vmul.f32 %v3032, 0.125
    %v3047 = vmul.f32 %v3039, 0.125
    %v3048 = vpack.c.bf16 %v3040, %v3040
    %v3049 = vpack.c.bf16 %v3041, %v3041
    %v3050 = vpack.c.bf16 %v3042, %v3042
    %v3051 = vpack.c.bf16 %v3043, %v3043
    %v3052 = vpack.c.bf16 %v3044, %v3044
    %v3053 = vpack.c.bf16 %v3045, %v3045
    %v3054 = vpack.c.bf16 %v3046, %v3046
    %v3055 = vpack.c.bf16 %v3047, %v3047
    %v3056 = vld [vmem:[%s15] sm:$0xf]
    %v3057 = vld [vmem:[%s15 + $0x4] sm:$0xf]
    %v3058 = vld [vmem:[%s15 + $0x8] sm:$0xf]
    %v3059 = vld [vmem:[%s15 + $0xc] sm:$0xf]
    %v3060 = vld [vmem:[%s16] sm:$0x1]
    %v3062 = vlaneseq
    %v3063 = vshrl.u32 %v3062, 7
    %v3064 = vsub.s32 0, %v3063
    %v3065 = vrot.slane %v3060, %v3064
    %v3075 = vunpack.c.l.b16 %v3048
    %v3076 = vunpack.c.l.b16 %v3049
    %v3077 = vunpack.c.l.b16 %v3050
    %v3078 = vunpack.c.l.b16 %v3051
    %v3079 = vunpack.c.l.b16 %v3052
    %v3080 = vunpack.c.l.b16 %v3053
    %v3081 = vunpack.c.l.b16 %v3054
    %v3082 = vunpack.c.l.b16 %v3055
    %vm3083 = vcmask 1041409
    %v3084 = vsel %vm3083, %v3076, %v3075
    %vm3085 = vcmask 1042434
    %v3086 = vsel %vm3085, %v3077, %v3084
    %vm3087 = vcmask 1043459
    %v3088 = vsel %vm3087, %v3078, %v3086
    %vm3089 = vcmask 1044484
    %v3090 = vsel %vm3089, %v3079, %v3088
    %vm3091 = vcmask 1045509
    %v3092 = vsel %vm3091, %v3080, %v3090
    %vm3093 = vcmask 1046534
    %v3094 = vsel %vm3093, %v3081, %v3092
    %vm3095 = vcmask 1047559
    %v3096 = vsel %vm3095, %v3082, %v3094
    %v3097 = vpack.c.b16 %v3096, %v3096
    %v3102 = vunpack.c.l.b16 %v3056
    %v3103 = vunpack.c.l.b16 %v3057
    %v3104 = vunpack.c.l.b16 %v3058
    %v3105 = vunpack.c.l.b16 %v3059
    %v3106 = vpack.c.b16 %v3103, %v3102
    %v3107 = vpack.c.b16 %v3105, %v3104
    %v3111 = vsel %vm1076, %v3097, 0
    %3113 = vmatprep.subr.bf16.mxu0 0
    %3114 = vmatpush1.bf16.msra.mxu0 %v3106
    %3115 = vmatprep.subr.bf16.mxu0 0
    %3116 = vmatpush1.bf16.msra.mxu0 %v3107
    %3117 = vmatprep.subr.bf16.mxu0 0
    %3118 = vmatpush1.bf16.msra.mxu0 0
    %3119 = vmatprep.subr.bf16.mxu0 0
    %3120 = vmatpush1.bf16.msra.mxu0 0
    %3121 = vmatprep.subr.bf16.mxu0 0
    %3122 = vmatpush1.bf16.msra.mxu0 0
    %3123 = vmatprep.subr.bf16.mxu0 0
    %3124 = vmatpush1.bf16.msra.mxu0 0
    %3125 = vmatprep.subr.bf16.mxu0 0
    %3126 = vmatpush1.bf16.msra.mxu0 0
    %3127 = vmatprep.subr.bf16.mxu0 0
    %3128 = vmatpush1.bf16.msra.mxu0 0
    %3129 = vmatprep.subr.bf16.mxu0 0
    %3130 = vmatpush1.bf16.msra.mxu0 0
    %3131 = vmatprep.subr.bf16.mxu0 0
    %3132 = vmatpush1.bf16.msra.mxu0 0
    %3133 = vmatprep.subr.bf16.mxu0 0
    %3134 = vmatpush1.bf16.msra.mxu0 0
    %3135 = vmatprep.subr.bf16.mxu0 0
    %3136 = vmatpush1.bf16.msra.mxu0 0
    %3137 = vmatprep.subr.bf16.mxu0 0
    %3138 = vmatpush1.bf16.msra.mxu0 0
    %3139 = vmatprep.subr.bf16.mxu0 0
    %3140 = vmatpush1.bf16.msra.mxu0 0
    %3141 = vmatprep.subr.bf16.mxu0 0
    %3142 = vmatpush1.bf16.msra.mxu0 0
    %3143 = vmatprep.subr.bf16.mxu0 0
    %3144 = vmatpush1.bf16.msra.mxu0 0
    %3145 = vmatprep.mubr.bf16.mxu0 0
    %3146 = vmatmul.mubr.bf16.gmra.mrb[0].mxu0 %v3111
    %v3147 = vpop.f32.mrb[0].mxu0
    %v3148 = vadd.f32 %v3065, %v3147
    %v3149 = vpop.f32.mrb[0].mxu0
    %v3150 = vpop.f32.mrb[0].mxu0
    %v3151 = vpop.f32.mrb[0].mxu0
    %3152 = vdwg.mxu0
    %3153 = vst [vmem:[#allocation2] sm:$0xff] %v3148
    // Predicated region
    $region70: #{tpu_custom_call.1} parent=1 // pred_check
      _
    $region71: #{tpu_custom_call.1} parent=1 // pred_check_branch
      %3155 = sbr.rel (0) target = $region73
    $region72: #{tpu_custom_call.1} parent=1 // pred_region
      %s3157 = ssub.s32 128, 128
      %3158 = vsyncadd [#allocation3], %s3157
      %s3160 = sshll.u32 [#allocation2], 4
      %s3161 = int_to_ptr.vmem [resolvable:$true] %s3160
      %3163 = dma.vmem_to_hbm [thread:$0]  %s3161, 128, %s17, [#allocation3]
    $region73: #{tpu_custom_call.1} parent=1 // pred_fallthru
      _
    // Predicated region
    $region74: #{tpu_custom_call.1} parent=1 // pred_check
      _
    $region75: #{tpu_custom_call.1} parent=1 // pred_check_branch
      %3165 = sbr.rel (0) target = $region77
    $region76: #{tpu_custom_call.1} parent=1 // pred_region
      %3166 = dma.done [#allocation3], 128
    $region77: #{tpu_custom_call.1} parent=1 // pred_fallthru
      _
    %3167 = vsyncpa [#allocation3], 1

// kernel: tpu_custom_call.1
$region0: #{tpu_custom_call.1}
  #allocation0 [shape = 'u32[]', space=smem, size = 0x4, offset = 0x4, fixed_abs, tag = 'smem constant byte address 0x4 - core index']
  #allocation1 [shape = 'u32[144,128]{1,0:T(1,128)}', space=vmem, size = 0x12000, scoped, tag = 'internal scratch']
  %s0 = inlined_call_operand.vmem [shape: bf16[8,8,12], index: 0, kind: input, shape index: {}]
  %s1 = inlined_call_operand.vmem [shape: f32[64,32], index: 1, kind: input, shape index: {}]
  %s2 = inlined_call_operand.vmem [shape: bf16[12,32], index: 2, kind: input, shape index: {}]
  %s3 = inlined_call_operand.vmem [shape: bf16[2,16,8], index: 3, kind: input, shape index: {}]
  %s4 = inlined_call_operand.vmem [shape: f32[2,16,1], index: 4, kind: input, shape index: {}]
  %s5 = inlined_call_operand.vmem [shape: bf16[2,8,16], index: 5, kind: input, shape index: {}]
  %s6 = inlined_call_operand.vmem [shape: f32[2,8,1], index: 6, kind: input, shape index: {}]
  %s7 = inlined_call_operand.vmem [shape: f32[2,1,32], index: 7, kind: input, shape index: {}]
  %s8 = inlined_call_operand.vmem [shape: f32[2,1,32], index: 8, kind: input, shape index: {}]
  %s9 = inlined_call_operand.vmem [shape: bf16[2,32,64], index: 9, kind: input, shape index: {}]
  %s10 = inlined_call_operand.vmem [shape: f32[2,1,64], index: 10, kind: input, shape index: {}]
  %s11 = inlined_call_operand.vmem [shape: bf16[2,64,32], index: 11, kind: input, shape index: {}]
  %s12 = inlined_call_operand.vmem [shape: f32[2,1,32], index: 12, kind: input, shape index: {}]
  %s13 = inlined_call_operand.vmem [shape: f32[1,32], index: 13, kind: input, shape index: {}]
  %s14 = inlined_call_operand.vmem [shape: f32[1,32], index: 14, kind: input, shape index: {}]
  %s15 = inlined_call_operand.vmem [shape: bf16[32,128], index: 15, kind: input, shape index: {}]
  %s16 = inlined_call_operand.vmem [shape: f32[1,128], index: 16, kind: input, shape index: {}]
  %s17 = inlined_call_operand.hbm [shape: f32[1,8,128], index: 17, kind: output, shape index: {}]
  %s18 = sld [smem:[#allocation0]]
  $region78: #{tpu_custom_call.1} parent=0
    _
  %s20 = ssub.s32 1, %s18
  %s21 = scalar_select 0, %s20, %s18
  $region1: #{tpu_custom_call.1} parent=0
    #allocation2 [shape = 'u8[4096]{0}', space=vmem, size = 0x1000, scoped, tag = 'output window, operand 0, single buffered']
    #allocation3 [shape = 's32[1]{0}', space=sflag, size = 0x4, scoped, tag = 'scoped memory for tpu_custom_call.1']
    %22 = vsyncpa [#allocation3], 0
    // Predicated region
    $region2: #{tpu_custom_call.1} parent=1 // pred_check
      _
    $region3: #{tpu_custom_call.1} parent=1 // pred_check_branch
      %24 = sbr.rel (0) target = $region5
    $region4: #{tpu_custom_call.1} parent=1 // pred_region
      _
    $region5: #{tpu_custom_call.1} parent=1 // pred_fallthru
      _
    // Predicated region
    $region6: #{tpu_custom_call.1} parent=1 // pred_check
      _
    $region7: #{tpu_custom_call.1} parent=1 // pred_check_branch
      %26 = sbr.rel (0) target = $region9
    $region8: #{tpu_custom_call.1} parent=1 // pred_region
      _
    $region9: #{tpu_custom_call.1} parent=1 // pred_fallthru
      _
    // Predicated region
    $region10: #{tpu_custom_call.1} parent=1 // pred_check
      _
    $region11: #{tpu_custom_call.1} parent=1 // pred_check_branch
      %28 = sbr.rel (0) target = $region13
    $region12: #{tpu_custom_call.1} parent=1 // pred_region
      _
    $region13: #{tpu_custom_call.1} parent=1 // pred_fallthru
      _
    // Predicated region
    $region14: #{tpu_custom_call.1} parent=1 // pred_check
      _
    $region15: #{tpu_custom_call.1} parent=1 // pred_check_branch
      %30 = sbr.rel (0) target = $region17
    $region16: #{tpu_custom_call.1} parent=1 // pred_region
      _
    $region17: #{tpu_custom_call.1} parent=1 // pred_fallthru
      _
    // Predicated region
    $region18: #{tpu_custom_call.1} parent=1 // pred_check
      _
    $region19: #{tpu_custom_call.1} parent=1 // pred_check_branch
      %32 = sbr.rel (0) target = $region21
    $region20: #{tpu_custom_call.1} parent=1 // pred_region
      _
    $region21: #{tpu_custom_call.1} parent=1 // pred_fallthru
      _
    // Predicated region
    $region22: #{tpu_custom_call.1} parent=1 // pred_check
      _
    $region23: #{tpu_custom_call.1} parent=1 // pred_check_branch
      %34 = sbr.rel (0) target = $region25
    $region24: #{tpu_custom_call.1} parent=1 // pred_region
      _
    $region25: #{tpu_custom_call.1} parent=1 // pred_fallthru
      _
    // Predicated region
    $region26: #{tpu_custom_call.1} parent=1 // pred_check
      _
    $region27: #{tpu_custom_call.1} parent=1 // pred_check_branch
      %36 = sbr.rel (0) target = $region29
    $region28: #{tpu_custom_call.1} parent=1 // pred_region
      _
    $region29: #{tpu_custom_call.1} parent=1 // pred_fallthru
      _
    // Predicated region
    $region30: #{tpu_custom_call.1} parent=1 // pred_check
      _
    $region31: #{tpu_custom_call.1} parent=1 // pred_check_branch
      %38 = sbr.rel (0) target = $region33
    $region32: #{tpu_custom_call.1} parent=1 // pred_region
      _
    $region33: #{tpu_custom_call.1} parent=1 // pred_fallthru
      _
    // Predicated region
    $region34: #{tpu_custom_call.1} parent=1 // pred_check
      _
    $region35: #{tpu_custom_call.1} parent=1 // pred_check_branch
      %40 = sbr.rel (0) target = $region37
    $region36: #{tpu_custom_call.1} parent=1 // pred_region
      _
    $region37: #{tpu_custom_call.1} parent=1 // pred_fallthru
      _
    // Predicated region
    $region38: #{tpu_custom_call.1} parent=1 // pred_check
      _
    $region39: #{tpu_custom_call.1} parent=1 // pred_check_branch
      %42 = sbr.rel (0) target = $region41
    $region40: #{tpu_custom_call.1} parent=1 // pred_region
      _
    $region41: #{tpu_custom_call.1} parent=1 // pred_fallthru
      _
    // Predicated region
    $region42: #{tpu_custom_call.1} parent=1 // pred_check
      _
    $region43: #{tpu_custom_call.1} parent=1 // pred_check_branch
      %44 = sbr.rel (0) target = $region45
    $region44: #{tpu_custom_call.1} parent=1 // pred_region
      _
    $region45: #{tpu_custom_call.1} parent=1 // pred_fallthru
      _
    // Predicated region
    $region46: #{tpu_custom_call.1} parent=1 // pred_check
      _
    $region47: #{tpu_custom_call.1} parent=1 // pred_check_branch
      %46 = sbr.rel (0) target = $region49
    $region48: #{tpu_custom_call.1} parent=1 // pred_region
      _
    $region49: #{tpu_custom_call.1} parent=1 // pred_fallthru
      _
    // Predicated region
    $region50: #{tpu_custom_call.1} parent=1 // pred_check
      _
    $region51: #{tpu_custom_call.1} parent=1 // pred_check_branch
      %48 = sbr.rel (0) target = $region53
    $region52: #{tpu_custom_call.1} parent=1 // pred_region
      _
    $region53: #{tpu_custom_call.1} parent=1 // pred_fallthru
      _
    // Predicated region
    $region54: #{tpu_custom_call.1} parent=1 // pred_check
      _
    $region55: #{tpu_custom_call.1} parent=1 // pred_check_branch
      %50 = sbr.rel (0) target = $region57
    $region56: #{tpu_custom_call.1} parent=1 // pred_region
      _
    $region57: #{tpu_custom_call.1} parent=1 // pred_fallthru
      _
    // Predicated region
    $region58: #{tpu_custom_call.1} parent=1 // pred_check
      _
    $region59: #{tpu_custom_call.1} parent=1 // pred_check_branch
      %52 = sbr.rel (0) target = $region61
    $region60: #{tpu_custom_call.1} parent=1 // pred_region
      _
    $region61: #{tpu_custom_call.1} parent=1 // pred_fallthru
      _
    // Predicated region
    $region62: #{tpu_custom_call.1} parent=1 // pred_check
      _
    $region63: #{tpu_custom_call.1} parent=1 // pred_check_branch
      %54 = sbr.rel (0) target = $region65
    $region64: #{tpu_custom_call.1} parent=1 // pred_region
      _
    $region65: #{tpu_custom_call.1} parent=1 // pred_fallthru
      _
    // Predicated region
    $region66: #{tpu_custom_call.1} parent=1 // pred_check
      _
    $region67: #{tpu_custom_call.1} parent=1 // pred_check_branch
      %56 = sbr.rel (0) target = $region69
    $region68: #{tpu_custom_call.1} parent=1 // pred_region
      _
    $region69: #{tpu_custom_call.1} parent=1 // pred_fallthru
      _
    %v58 = vld [vmem:[%s0] sm:$0xf]
    %v59 = vld [vmem:[%s0 + $0x4] sm:$0xf]
    %v60 = vld [vmem:[%s0 + $0x8] sm:$0xf]
    %v61 = vld [vmem:[%s0 + $0xc] sm:$0xf]
    %v62 = vld [vmem:[%s0 + $0x10] sm:$0xf]
    %v63 = vld [vmem:[%s0 + $0x14] sm:$0xf]
    %v64 = vld [vmem:[%s0 + $0x18] sm:$0xf]
    %v65 = vld [vmem:[%s0 + $0x1c] sm:$0xf]
    %v66 = vld [vmem:[%s2] sm:$0xf]
    %v67 = vld [vmem:[%s2 + $0x4] sm:$0x3]
    %v68 = vld [vmem:[%s1] sm:$0xff]
    %v69 = vld [vmem:[%s1 + $0x8] sm:$0xff]
    %v70 = vld [vmem:[%s1 + $0x10] sm:$0xff]
    %v71 = vld [vmem:[%s1 + $0x18] sm:$0xff]
    %v72 = vld [vmem:[%s1 + $0x20] sm:$0xff]
    %v73 = vld [vmem:[%s1 + $0x28] sm:$0xff]
    %v74 = vld [vmem:[%s1 + $0x30] sm:$0xff]
    %v75 = vld [vmem:[%s1 + $0x38] sm:$0xff]
    %v84 = vunpack.c.l.b16 %v58
    %v85 = vunpack.c.l.b16 %v59
    %v86 = vunpack.c.l.b16 %v60
    %v87 = vunpack.c.l.b16 %v61
    %v88 = vunpack.c.l.b16 %v62
    %v89 = vunpack.c.l.b16 %v63
    %v90 = vunpack.c.l.b16 %v64
    %v91 = vunpack.c.l.b16 %v65
    %v92 = vpack.c.b16 %v85, %v84
    %v93 = vpack.c.b16 %v87, %v86
    %v94 = vpack.c.b16 %v89, %v88
    %v95 = vpack.c.b16 %v91, %v90
    %v98 = vunpack.c.l.b16 %v66
    %v99 = vunpack.c.l.b16 %v67
    %v100 = vpack.c.b16 %v99, %v98
    %vm101 = vcmask 97280
    %v103 = vsel %vm101, %v92, 0
    %v106 = vsel %vm101, %v93, 0
    %v109 = vsel %vm101, %v94, 0
    %v112 = vsel %vm101, %v95, 0
    %vm114 = vcmask 1045504
    %v116 = vsel %vm114, %v100, 0
    %118 = vmatprep.subr.bf16.mxu0 0
    %119 = vmatpush1.bf16.msra.mxu0 %v116
    %120 = vmatprep.subr.bf16.mxu0 0
    %121 = vmatpush1.bf16.msra.mxu0 0
    %122 = vmatprep.subr.bf16.mxu0 0
    %123 = vmatpush1.bf16.msra.mxu0 0
    %124 = vmatprep.subr.bf16.mxu0 0
    %125 = vmatpush1.bf16.msra.mxu0 0
    %126 = vmatprep.subr.bf16.mxu0 0
    %127 = vmatpush1.bf16.msra.mxu0 0
    %128 = vmatprep.subr.bf16.mxu0 0
    %129 = vmatpush1.bf16.msra.mxu0 0
    %130 = vmatprep.subr.bf16.mxu0 0
    %131 = vmatpush1.bf16.msra.mxu0 0
    %132 = vmatprep.subr.bf16.mxu0 0
    %133 = vmatpush1.bf16.msra.mxu0 0
    %134 = vmatprep.subr.bf16.mxu0 0
    %135 = vmatpush1.bf16.msra.mxu0 0
    %136 = vmatprep.subr.bf16.mxu0 0
    %137 = vmatpush1.bf16.msra.mxu0 0
    %138 = vmatprep.subr.bf16.mxu0 0
    %139 = vmatpush1.bf16.msra.mxu0 0
    %140 = vmatprep.subr.bf16.mxu0 0
    %141 = vmatpush1.bf16.msra.mxu0 0
    %142 = vmatprep.subr.bf16.mxu0 0
    %143 = vmatpush1.bf16.msra.mxu0 0
    %144 = vmatprep.subr.bf16.mxu0 0
    %145 = vmatpush1.bf16.msra.mxu0 0
    %146 = vmatprep.subr.bf16.mxu0 0
    %147 = vmatpush1.bf16.msra.mxu0 0
    %148 = vmatprep.subr.bf16.mxu0 0
    %149 = vmatpush1.bf16.msra.mxu0 0
    %150 = vmatprep.mubr.bf16.mxu0 0
    %151 = vmatmul.mubr.bf16.gmra.mrb[0].mxu0 %v103
    %v152 = vpop.f32.mrb[0].mxu0
    %v153 = vadd.f32 %v68, %v152
    %v154 = vpop.f32.mrb[0].mxu0
    %v155 = vpop.f32.mrb[0].mxu0
    %v156 = vadd.f32 %v69, %v155
    %v157 = vpop.f32.mrb[0].mxu0
    %158 = vmatprep.mubr.bf16.mxu0 0
    %159 = vmatmul.mubr.bf16.gmra.mrb[0].mxu0 %v106
    %v160 = vpop.f32.mrb[0].mxu0
    %v161 = vadd.f32 %v70, %v160
    %v162 = vpop.f32.mrb[0].mxu0
    %v163 = vpop.f32.mrb[0].mxu0
    %v164 = vadd.f32 %v71, %v163
    %v165 = vpop.f32.mrb[0].mxu0
    %166 = vmatprep.mubr.bf16.mxu0 0
    %167 = vmatmul.mubr.bf16.gmra.mrb[0].mxu0 %v109
    %v168 = vpop.f32.mrb[0].mxu0
    %v169 = vadd.f32 %v72, %v168
    %v170 = vpop.f32.mrb[0].mxu0
    %v171 = vpop.f32.mrb[0].mxu0
    %v172 = vadd.f32 %v73, %v171
    %v173 = vpop.f32.mrb[0].mxu0
    %174 = vmatprep.mubr.bf16.mxu0 0
    %175 = vmatmul.mubr.bf16.gmra.mrb[0].mxu0 %v112
    %v176 = vpop.f32.mrb[0].mxu0
    %v177 = vadd.f32 %v74, %v176
    %v178 = vpop.f32.mrb[0].mxu0
    %v179 = vpop.f32.mrb[0].mxu0
    %v180 = vadd.f32 %v75, %v179
    %v181 = vpop.f32.mrb[0].mxu0
    %182 = vdwg.mxu0
    %v183 = vld [vmem:[%s3] sm:$0xf]
    %v184 = vld [vmem:[%s3 + $0x4] sm:$0xf]
    %v185 = vld [vmem:[%s5] sm:$0xf]
    %v186 = vpack.c.bf16 %v156, %v153
    %v187 = vpack.c.bf16 %v164, %v161
    %v188 = vpack.c.bf16 %v172, %v169
    %v189 = vpack.c.bf16 %v180, %v177
    %v194 = vunpack.c.l.b16 %v186
    %v195 = vunpack.c.h.b16 %v186
    %v196 = vunpack.c.l.b16 %v187
    %v197 = vunpack.c.h.b16 %v187
    %v198 = vunpack.c.l.b16 %v188
    %v199 = vunpack.c.h.b16 %v188
    %v200 = vunpack.c.l.b16 %v189
    %v201 = vunpack.c.h.b16 %v189
    %v202 = vpack.c.b16 %v194, %v194
    %v203 = vpack.c.b16 %v195, %v195
    %v204 = vpack.c.b16 %v196, %v196
    %v205 = vpack.c.b16 %v197, %v197
    %v206 = vpack.c.b16 %v198, %v198
    %v207 = vpack.c.b16 %v199, %v199
    %v208 = vpack.c.b16 %v200, %v200
    %v209 = vpack.c.b16 %v201, %v201
    %v210 = vld [vmem:[%s4] sm:$0xff]
    %v211 = vld [vmem:[%s4 + $0x8] sm:$0xff]
    %213 = vset.pattern.permute.xlu0 0
    %214 = vperm.xlu0 %213, %v210
    %v215 = vpop.permute.xlu0 %214
    %218 = vset.pattern.permute.xlu0 0
    %219 = vperm.xlu0 %218, %v211
    %v220 = vpop.permute.xlu0 %219
    %v224 = vunpack.c.l.b16 %v183
    %v225 = vunpack.c.l.b16 %v184
    %v226 = vpack.c.b16 %v225, %v224
    %vm227 = vcmask 64512
    %v229 = vsel %vm227, %v226, 0
    %vm231 = vcmask 1043456
    %v233 = vsel %vm231, %v202, 0
    %235 = vmatprep.subr.bf16.mxu0 0
    %236 = vmatpush1.bf16.msra.mxu0 %v233
    %237 = vmatprep.subr.bf16.mxu0 0
    %238 = vmatpush1.bf16.msra.mxu0 0
    %239 = vmatprep.subr.bf16.mxu0 0
    %240 = vmatpush1.bf16.msra.mxu0 0
    %241 = vmatprep.subr.bf16.mxu0 0
    %242 = vmatpush1.bf16.msra.mxu0 0
    %243 = vmatprep.subr.bf16.mxu0 0
    %244 = vmatpush1.bf16.msra.mxu0 0
    %245 = vmatprep.subr.bf16.mxu0 0
    %246 = vmatpush1.bf16.msra.mxu0 0
    %247 = vmatprep.subr.bf16.mxu0 0
    %248 = vmatpush1.bf16.msra.mxu0 0
    %249 = vmatprep.subr.bf16.mxu0 0
    %250 = vmatpush1.bf16.msra.mxu0 0
    %251 = vmatprep.subr.bf16.mxu0 0
    %252 = vmatpush1.bf16.msra.mxu0 0
    %253 = vmatprep.subr.bf16.mxu0 0
    %254 = vmatpush1.bf16.msra.mxu0 0
    %255 = vmatprep.subr.bf16.mxu0 0
    %256 = vmatpush1.bf16.msra.mxu0 0
    %257 = vmatprep.subr.bf16.mxu0 0
    %258 = vmatpush1.bf16.msra.mxu0 0
    %259 = vmatprep.subr.bf16.mxu0 0
    %260 = vmatpush1.bf16.msra.mxu0 0
    %261 = vmatprep.subr.bf16.mxu0 0
    %262 = vmatpush1.bf16.msra.mxu0 0
    %263 = vmatprep.subr.bf16.mxu0 0
    %264 = vmatpush1.bf16.msra.mxu0 0
    %265 = vmatprep.subr.bf16.mxu0 0
    %266 = vmatpush1.bf16.msra.mxu0 0
    %267 = vmatprep.mubr.bf16.mxu0 0
    %268 = vmatmul.mubr.bf16.gmra.mrb[0].mxu0 %v229
    %v269 = vpop.f32.mrb[0].mxu0
    %v270 = vadd.f32 %v215, %v269
    %v271 = vpop.f32.mrb[0].mxu0
    %v272 = vpop.f32.mrb[0].mxu0
    %v273 = vadd.f32 %v220, %v272
    %v274 = vpop.f32.mrb[0].mxu0
    %275 = vdwg.mxu0
    %v277 = vsel %vm231, %v203, 0
    %279 = vmatprep.subr.bf16.mxu0 0
    %280 = vmatpush1.bf16.msra.mxu0 %v277
    %281 = vmatprep.subr.bf16.mxu0 0
    %282 = vmatpush1.bf16.msra.mxu0 0
    %283 = vmatprep.subr.bf16.mxu0 0
    %284 = vmatpush1.bf16.msra.mxu0 0
    %285 = vmatprep.subr.bf16.mxu0 0
    %286 = vmatpush1.bf16.msra.mxu0 0
    %287 = vmatprep.subr.bf16.mxu0 0
    %288 = vmatpush1.bf16.msra.mxu0 0
    %289 = vmatprep.subr.bf16.mxu0 0
    %290 = vmatpush1.bf16.msra.mxu0 0
    %291 = vmatprep.subr.bf16.mxu0 0
    %292 = vmatpush1.bf16.msra.mxu0 0
    %293 = vmatprep.subr.bf16.mxu0 0
    %294 = vmatpush1.bf16.msra.mxu0 0
    %295 = vmatprep.subr.bf16.mxu0 0
    %296 = vmatpush1.bf16.msra.mxu0 0
    %297 = vmatprep.subr.bf16.mxu0 0
    %298 = vmatpush1.bf16.msra.mxu0 0
    %299 = vmatprep.subr.bf16.mxu0 0
    %300 = vmatpush1.bf16.msra.mxu0 0
    %301 = vmatprep.subr.bf16.mxu0 0
    %302 = vmatpush1.bf16.msra.mxu0 0
    %303 = vmatprep.subr.bf16.mxu0 0
    %304 = vmatpush1.bf16.msra.mxu0 0
    %305 = vmatprep.subr.bf16.mxu0 0
    %306 = vmatpush1.bf16.msra.mxu0 0
    %307 = vmatprep.subr.bf16.mxu0 0
    %308 = vmatpush1.bf16.msra.mxu0 0
    %309 = vmatprep.subr.bf16.mxu0 0
    %310 = vmatpush1.bf16.msra.mxu0 0
    %311 = vmatprep.mubr.bf16.mxu0 0
    %312 = vmatmul.mubr.bf16.gmra.mrb[0].mxu0 %v229
    %v313 = vpop.f32.mrb[0].mxu0
    %v314 = vadd.f32 %v215, %v313
    %v315 = vpop.f32.mrb[0].mxu0
    %v316 = vpop.f32.mrb[0].mxu0
    %v317 = vadd.f32 %v220, %v316
    %v318 = vpop.f32.mrb[0].mxu0
    %319 = vdwg.mxu0
    %v321 = vsel %vm231, %v204, 0
    %323 = vmatprep.subr.bf16.mxu0 0
    %324 = vmatpush1.bf16.msra.mxu0 %v321
    %325 = vmatprep.subr.bf16.mxu0 0
    %326 = vmatpush1.bf16.msra.mxu0 0
    %327 = vmatprep.subr.bf16.mxu0 0
    %328 = vmatpush1.bf16.msra.mxu0 0
    %329 = vmatprep.subr.bf16.mxu0 0
    %330 = vmatpush1.bf16.msra.mxu0 0
    %331 = vmatprep.subr.bf16.mxu0 0
    %332 = vmatpush1.bf16.msra.mxu0 0
    %333 = vmatprep.subr.bf16.mxu0 0
    %334 = vmatpush1.bf16.msra.mxu0 0
    %335 = vmatprep.subr.bf16.mxu0 0
    %336 = vmatpush1.bf16.msra.mxu0 0
    %337 = vmatprep.subr.bf16.mxu0 0
    %338 = vmatpush1.bf16.msra.mxu0 0
    %339 = vmatprep.subr.bf16.mxu0 0
    %340 = vmatpush1.bf16.msra.mxu0 0
    %341 = vmatprep.subr.bf16.mxu0 0
    %342 = vmatpush1.bf16.msra.mxu0 0
    %343 = vmatprep.subr.bf16.mxu0 0
    %344 = vmatpush1.bf16.msra.mxu0 0
    %345 = vmatprep.subr.bf16.mxu0 0
    %346 = vmatpush1.bf16.msra.mxu0 0
    %347 = vmatprep.subr.bf16.mxu0 0
    %348 = vmatpush1.bf16.msra.mxu0 0
    %349 = vmatprep.subr.bf16.mxu0 0
    %350 = vmatpush1.bf16.msra.mxu0 0
    %351 = vmatprep.subr.bf16.mxu0 0
    %352 = vmatpush1.bf16.msra.mxu0 0
    %353 = vmatprep.subr.bf16.mxu0 0
    %354 = vmatpush1.bf16.msra.mxu0 0
    %355 = vmatprep.mubr.bf16.mxu0 0
    %356 = vmatmul.mubr.bf16.gmra.mrb[0].mxu0 %v229
    %v357 = vpop.f32.mrb[0].mxu0
    %v358 = vadd.f32 %v215, %v357
    %v359 = vpop.f32.mrb[0].mxu0
    %v360 = vpop.f32.mrb[0].mxu0
    %v361 = vadd.f32 %v220, %v360
    %v362 = vpop.f32.mrb[0].mxu0
    %363 = vdwg.mxu0
    %v365 = vsel %vm231, %v205, 0
    %367 = vmatprep.subr.bf16.mxu0 0
    %368 = vmatpush1.bf16.msra.mxu0 %v365
    %369 = vmatprep.subr.bf16.mxu0 0
    %370 = vmatpush1.bf16.msra.mxu0 0
    %371 = vmatprep.subr.bf16.mxu0 0
    %372 = vmatpush1.bf16.msra.mxu0 0
    %373 = vmatprep.subr.bf16.mxu0 0
    %374 = vmatpush1.bf16.msra.mxu0 0
    %375 = vmatprep.subr.bf16.mxu0 0
    %376 = vmatpush1.bf16.msra.mxu0 0
    %377 = vmatprep.subr.bf16.mxu0 0
    %378 = vmatpush1.bf16.msra.mxu0 0
    %379 = vmatprep.subr.bf16.mxu0 0
    %380 = vmatpush1.bf16.msra.mxu0 0
    %381 = vmatprep.subr.bf16.mxu0 0
    %382 = vmatpush1.bf16.msra.mxu0 0
    %383 = vmatprep.subr.bf16.mxu0 0
    %384 = vmatpush1.bf16.msra.mxu0 0
    %385 = vmatprep.subr.bf16.mxu0 0
    %386 = vmatpush1.bf16.msra.mxu0 0
    %387 = vmatprep.subr.bf16.mxu0 0
    %388 = vmatpush1.bf16.msra.mxu0 0
    %389 = vmatprep.subr.bf16.mxu0 0
    %390 = vmatpush1.bf16.msra.mxu0 0
    %391 = vmatprep.subr.bf16.mxu0 0
    %392 = vmatpush1.bf16.msra.mxu0 0
    %393 = vmatprep.subr.bf16.mxu0 0
    %394 = vmatpush1.bf16.msra.mxu0 0
    %395 = vmatprep.subr.bf16.mxu0 0
    %396 = vmatpush1.bf16.msra.mxu0 0
    %397 = vmatprep.subr.bf16.mxu0 0
    %398 = vmatpush1.bf16.msra.mxu0 0
    %399 = vmatprep.mubr.bf16.mxu0 0
    %400 = vmatmul.mubr.bf16.gmra.mrb[0].mxu0 %v229
    %v401 = vpop.f32.mrb[0].mxu0
    %v402 = vadd.f32 %v215, %v401
    %v403 = vpop.f32.mrb[0].mxu0
    %v404 = vpop.f32.mrb[0].mxu0
    %v405 = vadd.f32 %v220, %v404
    %v406 = vpop.f32.mrb[0].mxu0
    %407 = vdwg.mxu0
    %v409 = vsel %vm231, %v206, 0
    %411 = vmatprep.subr.bf16.mxu0 0
    %412 = vmatpush1.bf16.msra.mxu0 %v409
    %413 = vmatprep.subr.bf16.mxu0 0
    %414 = vmatpush1.bf16.msra.mxu0 0
    %415 = vmatprep.subr.bf16.mxu0 0
    %416 = vmatpush1.bf16.msra.mxu0 0
    %417 = vmatprep.subr.bf16.mxu0 0
    %418 = vmatpush1.bf16.msra.mxu0 0
    %419 = vmatprep.subr.bf16.mxu0 0
    %420 = vmatpush1.bf16.msra.mxu0 0
    %421 = vmatprep.subr.bf16.mxu0 0
    %422 = vmatpush1.bf16.msra.mxu0 0
    %423 = vmatprep.subr.bf16.mxu0 0
    %424 = vmatpush1.bf16.msra.mxu0 0
    %425 = vmatprep.subr.bf16.mxu0 0
    %426 = vmatpush1.bf16.msra.mxu0 0
    %427 = vmatprep.subr.bf16.mxu0 0
    %428 = vmatpush1.bf16.msra.mxu0 0
    %429 = vmatprep.subr.bf16.mxu0 0
    %430 = vmatpush1.bf16.msra.mxu0 0
    %431 = vmatprep.subr.bf16.mxu0 0
    %432 = vmatpush1.bf16.msra.mxu0 0
    %433 = vmatprep.subr.bf16.mxu0 0
    %434 = vmatpush1.bf16.msra.mxu0 0
    %435 = vmatprep.subr.bf16.mxu0 0
    %436 = vmatpush1.bf16.msra.mxu0 0
    %437 = vmatprep.subr.bf16.mxu0 0
    %438 = vmatpush1.bf16.msra.mxu0 0
    %439 = vmatprep.subr.bf16.mxu0 0
    %440 = vmatpush1.bf16.msra.mxu0 0
    %441 = vmatprep.subr.bf16.mxu0 0
    %442 = vmatpush1.bf16.msra.mxu0 0
    %443 = vmatprep.mubr.bf16.mxu0 0
    %444 = vmatmul.mubr.bf16.gmra.mrb[0].mxu0 %v229
    %v445 = vpop.f32.mrb[0].mxu0
    %v446 = vadd.f32 %v215, %v445
    %v447 = vpop.f32.mrb[0].mxu0
    %v448 = vpop.f32.mrb[0].mxu0
    %v449 = vadd.f32 %v220, %v448
    %v450 = vpop.f32.mrb[0].mxu0
    %451 = vdwg.mxu0
    %v453 = vsel %vm231, %v207, 0
    %455 = vmatprep.subr.bf16.mxu0 0
    %456 = vmatpush1.bf16.msra.mxu0 %v453
    %457 = vmatprep.subr.bf16.mxu0 0
    %458 = vmatpush1.bf16.msra.mxu0 0
    %459 = vmatprep.subr.bf16.mxu0 0
    %460 = vmatpush1.bf16.msra.mxu0 0
    %461 = vmatprep.subr.bf16.mxu0 0
    %462 = vmatpush1.bf16.msra.mxu0 0
    %463 = vmatprep.subr.bf16.mxu0 0
    %464 = vmatpush1.bf16.msra.mxu0 0
    %465 = vmatprep.subr.bf16.mxu0 0
    %466 = vmatpush1.bf16.msra.mxu0 0
    %467 = vmatprep.subr.bf16.mxu0 0
    %468 = vmatpush1.bf16.msra.mxu0 0
    %469 = vmatprep.subr.bf16.mxu0 0
    %470 = vmatpush1.bf16.msra.mxu0 0
    %471 = vmatprep.subr.bf16.mxu0 0
    %472 = vmatpush1.bf16.msra.mxu0 0
    %473 = vmatprep.subr.bf16.mxu0 0
    %474 = vmatpush1.bf16.msra.mxu0 0
    %475 = vmatprep.subr.bf16.mxu0 0
    %476 = vmatpush1.bf16.msra.mxu0 0
    %477 = vmatprep.subr.bf16.mxu0 0
    %478 = vmatpush1.bf16.msra.mxu0 0
    %479 = vmatprep.subr.bf16.mxu0 0
    %480 = vmatpush1.bf16.msra.mxu0 0
    %481 = vmatprep.subr.bf16.mxu0 0
    %482 = vmatpush1.bf16.msra.mxu0 0
    %483 = vmatprep.subr.bf16.mxu0 0
    %484 = vmatpush1.bf16.msra.mxu0 0
    %485 = vmatprep.subr.bf16.mxu0 0
    %486 = vmatpush1.bf16.msra.mxu0 0
    %487 = vmatprep.mubr.bf16.mxu0 0
    %488 = vmatmul.mubr.bf16.gmra.mrb[0].mxu0 %v229
    %v489 = vpop.f32.mrb[0].mxu0
    %v490 = vadd.f32 %v215, %v489
    %v491 = vpop.f32.mrb[0].mxu0
    %v492 = vpop.f32.mrb[0].mxu0
    %v493 = vadd.f32 %v220, %v492
    %v494 = vpop.f32.mrb[0].mxu0
    %495 = vdwg.mxu0
    %v497 = vsel %vm231, %v208, 0
    %499 = vmatprep.subr.bf16.mxu0 0
    %500 = vmatpush1.bf16.msra.mxu0 %v497
    %501 = vmatprep.subr.bf16.mxu0 0
    %502 = vmatpush1.bf16.msra.mxu0 0
    %503 = vmatprep.subr.bf16.mxu0 0
    %504 = vmatpush1.bf16.msra.mxu0 0
    %505 = vmatprep.subr.bf16.mxu0 0
    %506 = vmatpush1.bf16.msra.mxu0 0
    %507 = vmatprep.subr.bf16.mxu0 0
    %508 = vmatpush1.bf16.msra.mxu0 0
    %509 = vmatprep.subr.bf16.mxu0 0
    %510 = vmatpush1.bf16.msra.mxu0 0
    %511 = vmatprep.subr.bf16.mxu0 0
    %512 = vmatpush1.bf16.msra.mxu0 0
    %513 = vmatprep.subr.bf16.mxu0 0
    %514 = vmatpush1.bf16.msra.mxu0 0
    %515 = vmatprep.subr.bf16.mxu0 0
    %516 = vmatpush1.bf16.msra.mxu0 0
    %517 = vmatprep.subr.bf16.mxu0 0
    %518 = vmatpush1.bf16.msra.mxu0 0
    %519 = vmatprep.subr.bf16.mxu0 0
    %520 = vmatpush1.bf16.msra.mxu0 0
    %521 = vmatprep.subr.bf16.mxu0 0
    %522 = vmatpush1.bf16.msra.mxu0 0
    %523 = vmatprep.subr.bf16.mxu0 0
    %524 = vmatpush1.bf16.msra.mxu0 0
    %525 = vmatprep.subr.bf16.mxu0 0
    %526 = vmatpush1.bf16.msra.mxu0 0
    %527 = vmatprep.subr.bf16.mxu0 0
    %528 = vmatpush1.bf16.msra.mxu0 0
    %529 = vmatprep.subr.bf16.mxu0 0
    %530 = vmatpush1.bf16.msra.mxu0 0
    %531 = vmatprep.mubr.bf16.mxu0 0
    %532 = vmatmul.mubr.bf16.gmra.mrb[0].mxu0 %v229
    %v533 = vpop.f32.mrb[0].mxu0
    %v534 = vadd.f32 %v215, %v533
    %v535 = vpop.f32.mrb[0].mxu0
    %v536 = vpop.f32.mrb[0].mxu0
    %v537 = vadd.f32 %v220, %v536
    %v538 = vpop.f32.mrb[0].mxu0
    %539 = vdwg.mxu0
    %v541 = vsel %vm231, %v209, 0
    %543 = vmatprep.subr.bf16.mxu0 0
    %544 = vmatpush1.bf16.msra.mxu0 %v541
    %545 = vmatprep.subr.bf16.mxu0 0
    %546 = vmatpush1.bf16.msra.mxu0 0
    %547 = vmatprep.subr.bf16.mxu0 0
    %548 = vmatpush1.bf16.msra.mxu0 0
    %549 = vmatprep.subr.bf16.mxu0 0
    %550 = vmatpush1.bf16.msra.mxu0 0
    %551 = vmatprep.subr.bf16.mxu0 0
    %552 = vmatpush1.bf16.msra.mxu0 0
    %553 = vmatprep.subr.bf16.mxu0 0
    %554 = vmatpush1.bf16.msra.mxu0 0
    %555 = vmatprep.subr.bf16.mxu0 0
    %556 = vmatpush1.bf16.msra.mxu0 0
    %557 = vmatprep.subr.bf16.mxu0 0
    %558 = vmatpush1.bf16.msra.mxu0 0
    %559 = vmatprep.subr.bf16.mxu0 0
    %560 = vmatpush1.bf16.msra.mxu0 0
    %561 = vmatprep.subr.bf16.mxu0 0
    %562 = vmatpush1.bf16.msra.mxu0 0
    %563 = vmatprep.subr.bf16.mxu0 0
    %564 = vmatpush1.bf16.msra.mxu0 0
    %565 = vmatprep.subr.bf16.mxu0 0
    %566 = vmatpush1.bf16.msra.mxu0 0
    %567 = vmatprep.subr.bf16.mxu0 0
    %568 = vmatpush1.bf16.msra.mxu0 0
    %569 = vmatprep.subr.bf16.mxu0 0
    %570 = vmatpush1.bf16.msra.mxu0 0
    %571 = vmatprep.subr.bf16.mxu0 0
    %572 = vmatpush1.bf16.msra.mxu0 0
    %573 = vmatprep.subr.bf16.mxu0 0
    %574 = vmatpush1.bf16.msra.mxu0 0
    %575 = vmatprep.mubr.bf16.mxu0 0
    %576 = vmatmul.mubr.bf16.gmra.mrb[0].mxu0 %v229
    %v577 = vpop.f32.mrb[0].mxu0
    %v578 = vadd.f32 %v215, %v577
    %v579 = vpop.f32.mrb[0].mxu0
    %v580 = vpop.f32.mrb[0].mxu0
    %v581 = vadd.f32 %v220, %v580
    %v582 = vpop.f32.mrb[0].mxu0
    %583 = vdwg.mxu0
    %v584 = vmul.f32 %v270, 0.5
    %v585 = vmul.f32 %v273, 0.5
    %v586 = vmul.f32 %v314, 0.5
    %v587 = vmul.f32 %v317, 0.5
    %v588 = vmul.f32 %v358, 0.5
    %v589 = vmul.f32 %v361, 0.5
    %v590 = vmul.f32 %v402, 0.5
    %v591 = vmul.f32 %v405, 0.5
    %v592 = vmul.f32 %v446, 0.5
    %v593 = vmul.f32 %v449, 0.5
    %v594 = vmul.f32 %v490, 0.5
    %v595 = vmul.f32 %v493, 0.5
    %v596 = vmul.f32 %v534, 0.5
    %v597 = vmul.f32 %v537, 0.5
    %v598 = vmul.f32 %v578, 0.5
    %v599 = vmul.f32 %v581, 0.5
    %v600 = vmul.f32 %v270, 0.044715
    %v601 = vmul.f32 %v273, 0.044715
    %v602 = vmul.f32 %v314, 0.044715
    %v603 = vmul.f32 %v317, 0.044715
    %v604 = vmul.f32 %v358, 0.044715
    %v605 = vmul.f32 %v361, 0.044715
    %v606 = vmul.f32 %v402, 0.044715
    %v607 = vmul.f32 %v405, 0.044715
    %v608 = vmul.f32 %v446, 0.044715
    %v609 = vmul.f32 %v449, 0.044715
    %v610 = vmul.f32 %v490, 0.044715
    %v611 = vmul.f32 %v493, 0.044715
    %v612 = vmul.f32 %v534, 0.044715
    %v613 = vmul.f32 %v537, 0.044715
    %v614 = vmul.f32 %v578, 0.044715
    %v615 = vmul.f32 %v581, 0.044715
    %v616 = vmul.f32 %v600, %v270
    %v617 = vmul.f32 %v601, %v273
    %v618 = vmul.f32 %v602, %v314
    %v619 = vmul.f32 %v603, %v317
    %v620 = vmul.f32 %v604, %v358
    %v621 = vmul.f32 %v605, %v361
    %v622 = vmul.f32 %v606, %v402
    %v623 = vmul.f32 %v607, %v405
    %v624 = vmul.f32 %v608, %v446
    %v625 = vmul.f32 %v609, %v449
    %v626 = vmul.f32 %v610, %v490
    %v627 = vmul.f32 %v611, %v493
    %v628 = vmul.f32 %v612, %v534
    %v629 = vmul.f32 %v613, %v537
    %v630 = vmul.f32 %v614, %v578
    %v631 = vmul.f32 %v615, %v581
    %v632 = vmul.f32 %v616, %v270
    %v633 = vmul.f32 %v617, %v273
    %v634 = vmul.f32 %v618, %v314
    %v635 = vmul.f32 %v619, %v317
    %v636 = vmul.f32 %v620, %v358
    %v637 = vmul.f32 %v621, %v361
    %v638 = vmul.f32 %v622, %v402
    %v639 = vmul.f32 %v623, %v405
    %v640 = vmul.f32 %v624, %v446
    %v641 = vmul.f32 %v625, %v449
    %v642 = vmul.f32 %v626, %v490
    %v643 = vmul.f32 %v627, %v493
    %v644 = vmul.f32 %v628, %v534
    %v645 = vmul.f32 %v629, %v537
    %v646 = vmul.f32 %v630, %v578
    %v647 = vmul.f32 %v631, %v581
    %v648 = vadd.f32 %v270, %v632
    %v649 = vadd.f32 %v273, %v633
    %v650 = vadd.f32 %v314, %v634
    %v651 = vadd.f32 %v317, %v635
    %v652 = vadd.f32 %v358, %v636
    %v653 = vadd.f32 %v361, %v637
    %v654 = vadd.f32 %v402, %v638
    %v655 = vadd.f32 %v405, %v639
    %v656 = vadd.f32 %v446, %v640
    %v657 = vadd.f32 %v449, %v641
    %v658 = vadd.f32 %v490, %v642
    %v659 = vadd.f32 %v493, %v643
    %v660 = vadd.f32 %v534, %v644
    %v661 = vadd.f32 %v537, %v645
    %v662 = vadd.f32 %v578, %v646
    %v663 = vadd.f32 %v581, %v647
    %v664 = vmul.f32 %v648, 0.7978846
    %v665 = vmul.f32 %v649, 0.7978846
    %v666 = vmul.f32 %v650, 0.7978846
    %v667 = vmul.f32 %v651, 0.7978846
    %v668 = vmul.f32 %v652, 0.7978846
    %v669 = vmul.f32 %v653, 0.7978846
    %v670 = vmul.f32 %v654, 0.7978846
    %v671 = vmul.f32 %v655, 0.7978846
    %v672 = vmul.f32 %v656, 0.7978846
    %v673 = vmul.f32 %v657, 0.7978846
    %v674 = vmul.f32 %v658, 0.7978846
    %v675 = vmul.f32 %v659, 0.7978846
    %v676 = vmul.f32 %v660, 0.7978846
    %v677 = vmul.f32 %v661, 0.7978846
    %v678 = vmul.f32 %v662, 0.7978846
    %v679 = vmul.f32 %v663, 0.7978846
    %v680 = vtanh.pop %v664
    %v681 = vtanh.pop %v665
    %v682 = vtanh.pop %v666
    %v683 = vtanh.pop %v667
    %v684 = vtanh.pop %v668
    %v685 = vtanh.pop %v669
    %v686 = vtanh.pop %v670
    %v687 = vtanh.pop %v671
    %v688 = vtanh.pop %v672
    %v689 = vtanh.pop %v673
    %v690 = vtanh.pop %v674
    %v691 = vtanh.pop %v675
    %v692 = vtanh.pop %v676
    %v693 = vtanh.pop %v677
    %v694 = vtanh.pop %v678
    %v695 = vtanh.pop %v679
    %v696 = vadd.f32 %v680, 1.0
    %v697 = vadd.f32 %v681, 1.0
    %v698 = vadd.f32 %v682, 1.0
    %v699 = vadd.f32 %v683, 1.0
    %v700 = vadd.f32 %v684, 1.0
    %v701 = vadd.f32 %v685, 1.0
    %v702 = vadd.f32 %v686, 1.0
    %v703 = vadd.f32 %v687, 1.0
    %v704 = vadd.f32 %v688, 1.0
    %v705 = vadd.f32 %v689, 1.0
    %v706 = vadd.f32 %v690, 1.0
    %v707 = vadd.f32 %v691, 1.0
    %v708 = vadd.f32 %v692, 1.0
    %v709 = vadd.f32 %v693, 1.0
    %v710 = vadd.f32 %v694, 1.0
    %v711 = vadd.f32 %v695, 1.0
    %v712 = vmul.f32 %v584, %v696
    %v713 = vmul.f32 %v585, %v697
    %v714 = vmul.f32 %v586, %v698
    %v715 = vmul.f32 %v587, %v699
    %v716 = vmul.f32 %v588, %v700
    %v717 = vmul.f32 %v589, %v701
    %v718 = vmul.f32 %v590, %v702
    %v719 = vmul.f32 %v591, %v703
    %v720 = vmul.f32 %v592, %v704
    %v721 = vmul.f32 %v593, %v705
    %v722 = vmul.f32 %v594, %v706
    %v723 = vmul.f32 %v595, %v707
    %v724 = vmul.f32 %v596, %v708
    %v725 = vmul.f32 %v597, %v709
    %v726 = vmul.f32 %v598, %v710
    %v727 = vmul.f32 %v599, %v711
    %v728 = vpack.c.bf16 %v713, %v712
    %v729 = vpack.c.bf16 %v715, %v714
    %v730 = vpack.c.bf16 %v717, %v716
    %v731 = vpack.c.bf16 %v719, %v718
    %v732 = vpack.c.bf16 %v721, %v720
    %v733 = vpack.c.bf16 %v723, %v722
    %v734 = vpack.c.bf16 %v725, %v724
    %v735 = vpack.c.bf16 %v727, %v726
    %v736 = vld [vmem:[%s6] sm:$0xff]
    %738 = vset.pattern.permute.xlu0 0
    %739 = vperm.xlu0 %738, %v736
    %v740 = vpop.permute.xlu0 %739
    %vm742 = vcmask 130048
    %v744 = vsel %vm742, %v185, 0
    %746 = vmatprep.subr.bf16.mxu0 0
    %747 = vmatpush1.bf16.msra.mxu0 %v728
    %748 = vmatprep.subr.bf16.mxu0 0
    %749 = vmatpush1.bf16.msra.mxu0 0
    %750 = vmatprep.subr.bf16.mxu0 0
    %751 = vmatpush1.bf16.msra.mxu0 0
    %752 = vmatprep.subr.bf16.mxu0 0
    %753 = vmatpush1.bf16.msra.mxu0 0
    %754 = vmatprep.subr.bf16.mxu0 0
    %755 = vmatpush1.bf16.msra.mxu0 0
    %756 = vmatprep.subr.bf16.mxu0 0
    %757 = vmatpush1.bf16.msra.mxu0 0
    %758 = vmatprep.subr.bf16.mxu0 0
    %759 = vmatpush1.bf16.msra.mxu0 0
    %760 = vmatprep.subr.bf16.mxu0 0
    %761 = vmatpush1.bf16.msra.mxu0 0
    %762 = vmatprep.subr.bf16.mxu0 0
    %763 = vmatpush1.bf16.msra.mxu0 0
    %764 = vmatprep.subr.bf16.mxu0 0
    %765 = vmatpush1.bf16.msra.mxu0 0
    %766 = vmatprep.subr.bf16.mxu0 0
    %767 = vmatpush1.bf16.msra.mxu0 0
    %768 = vmatprep.subr.bf16.mxu0 0
    %769 = vmatpush1.bf16.msra.mxu0 0
    %770 = vmatprep.subr.bf16.mxu0 0
    %771 = vmatpush1.bf16.msra.mxu0 0
    %772 = vmatprep.subr.bf16.mxu0 0
    %773 = vmatpush1.bf16.msra.mxu0 0
    %774 = vmatprep.subr.bf16.mxu0 0
    %775 = vmatpush1.bf16.msra.mxu0 0
    %776 = vmatprep.subr.bf16.mxu0 0
    %777 = vmatpush1.bf16.msra.mxu0 0
    %778 = vmatprep.mubr.bf16.mxu0 0
    %779 = vmatmul.mubr.bf16.gmra.mrb[0].mxu0 %v744
    %v780 = vpop.f32.mrb[0].mxu0
    %v781 = vadd.f32 %v740, %v780
    %v782 = vpop.f32.mrb[0].mxu0
    %v783 = vpop.f32.mrb[0].mxu0
    %v784 = vpop.f32.mrb[0].mxu0
    %785 = vdwg.mxu0
    %786 = vmatprep.subr.bf16.mxu0 0
    %787 = vmatpush1.bf16.msra.mxu0 %v729
    %788 = vmatprep.subr.bf16.mxu0 0
    %789 = vmatpush1.bf16.msra.mxu0 0
    %790 = vmatprep.subr.bf16.mxu0 0
    %791 = vmatpush1.bf16.msra.mxu0 0
    %792 = vmatprep.subr.bf16.mxu0 0
    %793 = vmatpush1.bf16.msra.mxu0 0
    %794 = vmatprep.subr.bf16.mxu0 0
    %795 = vmatpush1.bf16.msra.mxu0 0
    %796 = vmatprep.subr.bf16.mxu0 0
    %797 = vmatpush1.bf16.msra.mxu0 0
    %798 = vmatprep.subr.bf16.mxu0 0
    %799 = vmatpush1.bf16.msra.mxu0 0
    %800 = vmatprep.subr.bf16.mxu0 0
    %801 = vmatpush1.bf16.msra.mxu0 0
    %802 = vmatprep.subr.bf16.mxu0 0
    %803 = vmatpush1.bf16.msra.mxu0 0
    %804 = vmatprep.subr.bf16.mxu0 0
    %805 = vmatpush1.bf16.msra.mxu0 0
    %806 = vmatprep.subr.bf16.mxu0 0
    %807 = vmatpush1.bf16.msra.mxu0 0
    %808 = vmatprep.subr.bf16.mxu0 0
    %809 = vmatpush1.bf16.msra.mxu0 0
    %810 = vmatprep.subr.bf16.mxu0 0
    %811 = vmatpush1.bf16.msra.mxu0 0
    %812 = vmatprep.subr.bf16.mxu0 0
    %813 = vmatpush1.bf16.msra.mxu0 0
    %814 = vmatprep.subr.bf16.mxu0 0
    %815 = vmatpush1.bf16.msra.mxu0 0
    %816 = vmatprep.subr.bf16.mxu0 0
    %817 = vmatpush1.bf16.msra.mxu0 0
    %818 = vmatprep.mubr.bf16.mxu0 0
    %819 = vmatmul.mubr.bf16.gmra.mrb[0].mxu0 %v744
    %v820 = vpop.f32.mrb[0].mxu0
    %v821 = vadd.f32 %v740, %v820
    %v822 = vpop.f32.mrb[0].mxu0
    %v823 = vpop.f32.mrb[0].mxu0
    %v824 = vpop.f32.mrb[0].mxu0
    %825 = vdwg.mxu0
    %826 = vmatprep.subr.bf16.mxu0 0
    %827 = vmatpush1.bf16.msra.mxu0 %v730
    %828 = vmatprep.subr.bf16.mxu0 0
    %829 = vmatpush1.bf16.msra.mxu0 0
    %830 = vmatprep.subr.bf16.mxu0 0
    %831 = vmatpush1.bf16.msra.mxu0 0
    %832 = vmatprep.subr.bf16.mxu0 0
    %833 = vmatpush1.bf16.msra.mxu0 0
    %834 = vmatprep.subr.bf16.mxu0 0
    %835 = vmatpush1.bf16.msra.mxu0 0
    %836 = vmatprep.subr.bf16.mxu0 0
    %837 = vmatpush1.bf16.msra.mxu0 0
    %838 = vmatprep.subr.bf16.mxu0 0
    %839 = vmatpush1.bf16.msra.mxu0 0
    %840 = vmatprep.subr.bf16.mxu0 0
    %841 = vmatpush1.bf16.msra.mxu0 0
    %842 = vmatprep.subr.bf16.mxu0 0
    %843 = vmatpush1.bf16.msra.mxu0 0
    %844 = vmatprep.subr.bf16.mxu0 0
    %845 = vmatpush1.bf16.msra.mxu0 0
    %846 = vmatprep.subr.bf16.mxu0 0
    %847 = vmatpush1.bf16.msra.mxu0 0
    %848 = vmatprep.subr.bf16.mxu0 0
    %849 = vmatpush1.bf16.msra.mxu0 0
    %850 = vmatprep.subr.bf16.mxu0 0
    %851 = vmatpush1.bf16.msra.mxu0 0
    %852 = vmatprep.subr.bf16.mxu0 0
    %853 = vmatpush1.bf16.msra.mxu0 0
    %854 = vmatprep.subr.bf16.mxu0 0
    %855 = vmatpush1.bf16.msra.mxu0 0
    %856 = vmatprep.subr.bf16.mxu0 0
    %857 = vmatpush1.bf16.msra.mxu0 0
    %858 = vmatprep.mubr.bf16.mxu0 0
    %859 = vmatmul.mubr.bf16.gmra.mrb[0].mxu0 %v744
    %v860 = vpop.f32.mrb[0].mxu0
    %v861 = vadd.f32 %v740, %v860
    %v862 = vpop.f32.mrb[0].mxu0
    %v863 = vpop.f32.mrb[0].mxu0
    %v864 = vpop.f32.mrb[0].mxu0
    %865 = vdwg.mxu0
    %866 = vmatprep.subr.bf16.mxu0 0
    %867 = vmatpush1.bf16.msra.mxu0 %v731
    %868 = vmatprep.subr.bf16.mxu0 0
    %869 = vmatpush1.bf16.msra.mxu0 0
    %870 = vmatprep.subr.bf16.mxu0 0
    %871 = vmatpush1.bf16.msra.mxu0 0
    %872 = vmatprep.subr.bf16.mxu0 0
    %873 = vmatpush1.bf16.msra.mxu0 0
    %874 = vmatprep.subr.bf16.mxu0 0
    %875 = vmatpush1.bf16.msra.mxu0 0
    %876 = vmatprep.subr.bf16.mxu0 0
    %877 = vmatpush1.bf16.msra.mxu0 0
    %878 = vmatprep.subr.bf16.mxu0 0
    %879 = vmatpush1.bf16.msra.mxu0 0
    %880 = vmatprep.subr.bf16.mxu0 0
    %881 = vmatpush1.bf16.msra.mxu0 0
    %882 = vmatprep.subr.bf16.mxu0 0
    %883 = vmatpush1.bf16.msra.mxu0 0
    %884 = vmatprep.subr.bf16.mxu0 0
    %885 = vmatpush1.bf16.msra.mxu0 0
    %886 = vmatprep.subr.bf16.mxu0 0
    %887 = vmatpush1.bf16.msra.mxu0 0
    %888 = vmatprep.subr.bf16.mxu0 0
    %889 = vmatpush1.bf16.msra.mxu0 0
    %890 = vmatprep.subr.bf16.mxu0 0
    %891 = vmatpush1.bf16.msra.mxu0 0
    %892 = vmatprep.subr.bf16.mxu0 0
    %893 = vmatpush1.bf16.msra.mxu0 0
    %894 = vmatprep.subr.bf16.mxu0 0
    %895 = vmatpush1.bf16.msra.mxu0 0
    %896 = vmatprep.subr.bf16.mxu0 0
    %897 = vmatpush1.bf16.msra.mxu0 0
    %898 = vmatprep.mubr.bf16.mxu0 0
    %899 = vmatmul.mubr.bf16.gmra.mrb[0].mxu0 %v744
    %v900 = vpop.f32.mrb[0].mxu0
    %v901 = vadd.f32 %v740, %v900
    %v902 = vpop.f32.mrb[0].mxu0
    %v903 = vpop.f32.mrb[0].mxu0
    %v904 = vpop.f32.mrb[0].mxu0
    %905 = vdwg.mxu0
    %906 = vmatprep.subr.bf16.mxu0 0
    %907 = vmatpush1.bf16.msra.mxu0 %v732
    %908 = vmatprep.subr.bf16.mxu0 0
    %909 = vmatpush1.bf16.msra.mxu0 0
    %910 = vmatprep.subr.bf16.mxu0 0
    %911 = vmatpush1.bf16.msra.mxu0 0
    %912 = vmatprep.subr.bf16.mxu0 0
    %913 = vmatpush1.bf16.msra.mxu0 0
    %914 = vmatprep.subr.bf16.mxu0 0
    %915 = vmatpush1.bf16.msra.mxu0 0
    %916 = vmatprep.subr.bf16.mxu0 0
    %917 = vmatpush1.bf16.msra.mxu0 0
    %918 = vmatprep.subr.bf16.mxu0 0
    %919 = vmatpush1.bf16.msra.mxu0 0
    %920 = vmatprep.subr.bf16.mxu0 0
    %921 = vmatpush1.bf16.msra.mxu0 0
    %922 = vmatprep.subr.bf16.mxu0 0
    %923 = vmatpush1.bf16.msra.mxu0 0
    %924 = vmatprep.subr.bf16.mxu0 0
    %925 = vmatpush1.bf16.msra.mxu0 0
    %926 = vmatprep.subr.bf16.mxu0 0
    %927 = vmatpush1.bf16.msra.mxu0 0
    %928 = vmatprep.subr.bf16.mxu0 0
    %929 = vmatpush1.bf16.msra.mxu0 0
    %930 = vmatprep.subr.bf16.mxu0 0
    %931 = vmatpush1.bf16.msra.mxu0 0
    %932 = vmatprep.subr.bf16.mxu0 0
    %933 = vmatpush1.bf16.msra.mxu0 0
    %934 = vmatprep.subr.bf16.mxu0 0
    %935 = vmatpush1.bf16.msra.mxu0 0
    %936 = vmatprep.subr.bf16.mxu0 0
    %937 = vmatpush1.bf16.msra.mxu0 0
    %938 = vmatprep.mubr.bf16.mxu0 0
    %939 = vmatmul.mubr.bf16.gmra.mrb[0].mxu0 %v744
    %v940 = vpop.f32.mrb[0].mxu0
    %v941 = vadd.f32 %v740, %v940
    %v942 = vpop.f32.mrb[0].mxu0
    %v943 = vpop.f32.mrb[0].mxu0
    %v944 = vpop.f32.mrb[0].mxu0
    %945 = vdwg.mxu0
    %946 = vmatprep.subr.bf16.mxu0 0
    %947 = vmatpush1.bf16.msra.mxu0 %v733
    %948 = vmatprep.subr.bf16.mxu0 0
    %949 = vmatpush1.bf16.msra.mxu0 0
    %950 = vmatprep.subr.bf16.mxu0 0
    %951 = vmatpush1.bf16.msra.mxu0 0
    %952 = vmatprep.subr.bf16.mxu0 0
    %953 = vmatpush1.bf16.msra.mxu0 0
    %954 = vmatprep.subr.bf16.mxu0 0
    %955 = vmatpush1.bf16.msra.mxu0 0
    %956 = vmatprep.subr.bf16.mxu0 0
    %957 = vmatpush1.bf16.msra.mxu0 0
    %958 = vmatprep.subr.bf16.mxu0 0
    %959 = vmatpush1.bf16.msra.mxu0 0
    %960 = vmatprep.subr.bf16.mxu0 0
    %961 = vmatpush1.bf16.msra.mxu0 0
    %962 = vmatprep.subr.bf16.mxu0 0
    %963 = vmatpush1.bf16.msra.mxu0 0
    %964 = vmatprep.subr.bf16.mxu0 0
    %965 = vmatpush1.bf16.msra.mxu0 0
    %966 = vmatprep.subr.bf16.mxu0 0
    %967 = vmatpush1.bf16.msra.mxu0 0
    %968 = vmatprep.subr.bf16.mxu0 0
    %969 = vmatpush1.bf16.msra.mxu0 0
    %970 = vmatprep.subr.bf16.mxu0 0
    %971 = vmatpush1.bf16.msra.mxu0 0
    %972 = vmatprep.subr.bf16.mxu0 0
    %973 = vmatpush1.bf16.msra.mxu0 0
    %974 = vmatprep.subr.bf16.mxu0 0
    %975 = vmatpush1.bf16.msra.mxu0 0
    %976 = vmatprep.subr.bf16.mxu0 0
    %977 = vmatpush1.bf16.msra.mxu0 0
    %978 = vmatprep.mubr.bf16.mxu0 0
    %979 = vmatmul.mubr.bf16.gmra.mrb[0].mxu0 %v744
    %v980 = vpop.f32.mrb[0].mxu0
    %v981 = vadd.f32 %v740, %v980
    %v982 = vpop.f32.mrb[0].mxu0
    %v983 = vpop.f32.mrb[0].mxu0
    %v984 = vpop.f32.mrb[0].mxu0
    %985 = vdwg.mxu0
    %986 = vmatprep.subr.bf16.mxu0 0
    %987 = vmatpush1.bf16.msra.mxu0 %v734
    %988 = vmatprep.subr.bf16.mxu0 0
    %989 = vmatpush1.bf16.msra.mxu0 0
    %990 = vmatprep.subr.bf16.mxu0 0
    %991 = vmatpush1.bf16.msra.mxu0 0
    %992 = vmatprep.subr.bf16.mxu0 0
    %993 = vmatpush1.bf16.msra.mxu0 0
    %994 = vmatprep.subr.bf16.mxu0 0
    %995 = vmatpush1.bf16.msra.mxu0 0
    %996 = vmatprep.subr.bf16.mxu0 0
    %997 = vmatpush1.bf16.msra.mxu0 0
    %998 = vmatprep.subr.bf16.mxu0 0
    %999 = vmatpush1.bf16.msra.mxu0 0
    %1000 = vmatprep.subr.bf16.mxu0 0
    %1001 = vmatpush1.bf16.msra.mxu0 0
    %1002 = vmatprep.subr.bf16.mxu0 0
    %1003 = vmatpush1.bf16.msra.mxu0 0
    %1004 = vmatprep.subr.bf16.mxu0 0
    %1005 = vmatpush1.bf16.msra.mxu0 0
    %1006 = vmatprep.subr.bf16.mxu0 0
    %1007 = vmatpush1.bf16.msra.mxu0 0
    %1008 = vmatprep.subr.bf16.mxu0 0
    %1009 = vmatpush1.bf16.msra.mxu0 0
    %1010 = vmatprep.subr.bf16.mxu0 0
    %1011 = vmatpush1.bf16.msra.mxu0 0
    %1012 = vmatprep.subr.bf16.mxu0 0
    %1013 = vmatpush1.bf16.msra.mxu0 0
    %1014 = vmatprep.subr.bf16.mxu0 0
    %1015 = vmatpush1.bf16.msra.mxu0 0
    %1016 = vmatprep.subr.bf16.mxu0 0
    %1017 = vmatpush1.bf16.msra.mxu0 0
    %1018 = vmatprep.mubr.bf16.mxu0 0
    %1019 = vmatmul.mubr.bf16.gmra.mrb[0].mxu0 %v744
    %v1020 = vpop.f32.mrb[0].mxu0
    %v1021 = vadd.f32 %v740, %v1020
    %v1022 = vpop.f32.mrb[0].mxu0
    %v1023 = vpop.f32.mrb[0].mxu0
    %v1024 = vpop.f32.mrb[0].mxu0
    %1025 = vdwg.mxu0
    %1026 = vmatprep.subr.bf16.mxu0 0
    %1027 = vmatpush1.bf16.msra.mxu0 %v735
    %1028 = vmatprep.subr.bf16.mxu0 0
    %1029 = vmatpush1.bf16.msra.mxu0 0
    %1030 = vmatprep.subr.bf16.mxu0 0
    %1031 = vmatpush1.bf16.msra.mxu0 0
    %1032 = vmatprep.subr.bf16.mxu0 0
    %1033 = vmatpush1.bf16.msra.mxu0 0
    %1034 = vmatprep.subr.bf16.mxu0 0
    %1035 = vmatpush1.bf16.msra.mxu0 0
    %1036 = vmatprep.subr.bf16.mxu0 0
    %1037 = vmatpush1.bf16.msra.mxu0 0
    %1038 = vmatprep.subr.bf16.mxu0 0
    %1039 = vmatpush1.bf16.msra.mxu0 0
    %1040 = vmatprep.subr.bf16.mxu0 0
    %1041 = vmatpush1.bf16.msra.mxu0 0
    %1042 = vmatprep.subr.bf16.mxu0 0
    %1043 = vmatpush1.bf16.msra.mxu0 0
    %1044 = vmatprep.subr.bf16.mxu0 0
    %1045 = vmatpush1.bf16.msra.mxu0 0
    %1046 = vmatprep.subr.bf16.mxu0 0
    %1047 = vmatpush1.bf16.msra.mxu0 0
    %1048 = vmatprep.subr.bf16.mxu0 0
    %1049 = vmatpush1.bf16.msra.mxu0 0
    %1050 = vmatprep.subr.bf16.mxu0 0
    %1051 = vmatpush1.bf16.msra.mxu0 0
    %1052 = vmatprep.subr.bf16.mxu0 0
    %1053 = vmatpush1.bf16.msra.mxu0 0
    %1054 = vmatprep.subr.bf16.mxu0 0
    %1055 = vmatpush1.bf16.msra.mxu0 0
    %1056 = vmatprep.subr.bf16.mxu0 0
    %1057 = vmatpush1.bf16.msra.mxu0 0
    %1058 = vmatprep.mubr.bf16.mxu0 0
    %1059 = vmatmul.mubr.bf16.gmra.mrb[0].mxu0 %v744
    %v1060 = vpop.f32.mrb[0].mxu0
    %v1061 = vadd.f32 %v740, %v1060
    %v1062 = vpop.f32.mrb[0].mxu0
    %v1063 = vpop.f32.mrb[0].mxu0
    %v1064 = vpop.f32.mrb[0].mxu0
    %1065 = vdwg.mxu0
    %v1066 = vadd.f32 %v153, %v781
    %v1067 = vadd.f32 %v156, %v821
    %v1068 = vadd.f32 %v161, %v861
    %v1069 = vadd.f32 %v164, %v901
    %v1070 = vadd.f32 %v169, %v941
    %v1071 = vadd.f32 %v172, %v981
    %v1072 = vadd.f32 %v177, %v1021
    %v1073 = vadd.f32 %v180, %v1061
    %v1074 = vld [vmem:[%s7] sm:$0x1]
    %v1075 = vld [vmem:[%s8] sm:$0x1]
    %vm1076 = vcmask 261120
    %v1077 = vsel %vm1076, %v1066, 0.0
    %1078 = vadd.xlane.f32.xlu0 %v1077
    %v1079 = vpop.xlane.xlu0 %1078
    %v1080 = vsel %vm1076, %v1067, 0.0
    %1081 = vadd.xlane.f32.xlu0 %v1080
    %v1082 = vpop.xlane.xlu0 %1081
    %v1083 = vsel %vm1076, %v1068, 0.0
    %1084 = vadd.xlane.f32.xlu0 %v1083
    %v1085 = vpop.xlane.xlu0 %1084
    %v1086 = vsel %vm1076, %v1069, 0.0
    %1087 = vadd.xlane.f32.xlu0 %v1086
    %v1088 = vpop.xlane.xlu0 %1087
    %v1089 = vsel %vm1076, %v1070, 0.0
    %1090 = vadd.xlane.f32.xlu0 %v1089
    %v1091 = vpop.xlane.xlu0 %1090
    %v1092 = vsel %vm1076, %v1071, 0.0
    %1093 = vadd.xlane.f32.xlu0 %v1092
    %v1094 = vpop.xlane.xlu0 %1093
    %v1095 = vsel %vm1076, %v1072, 0.0
    %1096 = vadd.xlane.f32.xlu0 %v1095
    %v1097 = vpop.xlane.xlu0 %1096
    %v1098 = vsel %vm1076, %v1073, 0.0
    %1099 = vadd.xlane.f32.xlu0 %v1098
    %v1100 = vpop.xlane.xlu0 %1099
    %v1101 = vmul.f32 %v1079, 0.03125
    %v1102 = vmul.f32 %v1082, 0.03125
    %v1103 = vmul.f32 %v1085, 0.03125
    %v1104 = vmul.f32 %v1088, 0.03125
    %v1105 = vmul.f32 %v1091, 0.03125
    %v1106 = vmul.f32 %v1094, 0.03125
    %v1107 = vmul.f32 %v1097, 0.03125
    %v1108 = vmul.f32 %v1100, 0.03125
    %v1109 = vsub.f32 %v1066, %v1101
    %v1110 = vsub.f32 %v1067, %v1102
    %v1111 = vsub.f32 %v1068, %v1103
    %v1112 = vsub.f32 %v1069, %v1104
    %v1113 = vsub.f32 %v1070, %v1105
    %v1114 = vsub.f32 %v1071, %v1106
    %v1115 = vsub.f32 %v1072, %v1107
    %v1116 = vsub.f32 %v1073, %v1108
    %v1117 = vmul.f32 %v1109, %v1109
    %v1118 = vmul.f32 %v1110, %v1110
    %v1119 = vmul.f32 %v1111, %v1111
    %v1120 = vmul.f32 %v1112, %v1112
    %v1121 = vmul.f32 %v1113, %v1113
    %v1122 = vmul.f32 %v1114, %v1114
    %v1123 = vmul.f32 %v1115, %v1115
    %v1124 = vmul.f32 %v1116, %v1116
    %v1125 = vsel %vm1076, %v1117, 0.0
    %1126 = vadd.xlane.f32.xlu0 %v1125
    %v1127 = vpop.xlane.xlu0 %1126
    %v1128 = vsel %vm1076, %v1118, 0.0
    %1129 = vadd.xlane.f32.xlu0 %v1128
    %v1130 = vpop.xlane.xlu0 %1129
    %v1131 = vsel %vm1076, %v1119, 0.0
    %1132 = vadd.xlane.f32.xlu0 %v1131
    %v1133 = vpop.xlane.xlu0 %1132
    %v1134 = vsel %vm1076, %v1120, 0.0
    %1135 = vadd.xlane.f32.xlu0 %v1134
    %v1136 = vpop.xlane.xlu0 %1135
    %v1137 = vsel %vm1076, %v1121, 0.0
    %1138 = vadd.xlane.f32.xlu0 %v1137
    %v1139 = vpop.xlane.xlu0 %1138
    %v1140 = vsel %vm1076, %v1122, 0.0
    %1141 = vadd.xlane.f32.xlu0 %v1140
    %v1142 = vpop.xlane.xlu0 %1141
    %v1143 = vsel %vm1076, %v1123, 0.0
    %1144 = vadd.xlane.f32.xlu0 %v1143
    %v1145 = vpop.xlane.xlu0 %1144
    %v1146 = vsel %vm1076, %v1124, 0.0
    %1147 = vadd.xlane.f32.xlu0 %v1146
    %v1148 = vpop.xlane.xlu0 %1147
    %v1149 = vmul.f32 %v1127, 0.03125
    %v1150 = vmul.f32 %v1130, 0.03125
    %v1151 = vmul.f32 %v1133, 0.03125
    %v1152 = vmul.f32 %v1136, 0.03125
    %v1153 = vmul.f32 %v1139, 0.03125
    %v1154 = vmul.f32 %v1142, 0.03125
    %v1155 = vmul.f32 %v1145, 0.03125
    %v1156 = vmul.f32 %v1148, 0.03125
    %v1157 = vadd.f32 %v1149, 1e-05
    %v1158 = vadd.f32 %v1150, 1e-05
    %v1159 = vadd.f32 %v1151, 1e-05
    %v1160 = vadd.f32 %v1152, 1e-05
    %v1161 = vadd.f32 %v1153, 1e-05
    %v1162 = vadd.f32 %v1154, 1e-05
    %v1163 = vadd.f32 %v1155, 1e-05
    %v1164 = vadd.f32 %v1156, 1e-05
    %v1165 = vrsqrt.pop %v1157
    %v1166 = vrsqrt.pop %v1158
    %v1167 = vrsqrt.pop %v1159
    %v1168 = vrsqrt.pop %v1160
    %v1169 = vrsqrt.pop %v1161
    %v1170 = vrsqrt.pop %v1162
    %v1171 = vrsqrt.pop %v1163
    %v1172 = vrsqrt.pop %v1164
    %v1173 = vmul.f32 %v1109, %v1165
    %v1174 = vmul.f32 %v1110, %v1166
    %v1175 = vmul.f32 %v1111, %v1167
    %v1176 = vmul.f32 %v1112, %v1168
    %v1177 = vmul.f32 %v1113, %v1169
    %v1178 = vmul.f32 %v1114, %v1170
    %v1179 = vmul.f32 %v1115, %v1171
    %v1180 = vmul.f32 %v1116, %v1172
    %v1182 = vlaneseq
    %v1183 = vshrl.u32 %v1182, 7
    %v1184 = vsub.s32 0, %v1183
    %v1185 = vrot.slane %v1074, %v1184
    %v1187 = vmul.f32 %v1173, %v1185
    %v1188 = vmul.f32 %v1174, %v1185
    %v1189 = vmul.f32 %v1175, %v1185
    %v1190 = vmul.f32 %v1176, %v1185
    %v1191 = vmul.f32 %v1177, %v1185
    %v1192 = vmul.f32 %v1178, %v1185
    %v1193 = vmul.f32 %v1179, %v1185
    %v1194 = vmul.f32 %v1180, %v1185
    %v1196 = vlaneseq
    %v1197 = vshrl.u32 %v1196, 7
    %v1198 = vsub.s32 0, %v1197
    %v1199 = vrot.slane %v1075, %v1198
    %v1201 = vadd.f32 %v1187, %v1199
    %v1202 = vadd.f32 %v1188, %v1199
    %v1203 = vadd.f32 %v1189, %v1199
    %v1204 = vadd.f32 %v1190, %v1199
    %v1205 = vadd.f32 %v1191, %v1199
    %v1206 = vadd.f32 %v1192, %v1199
    %v1207 = vadd.f32 %v1193, %v1199
    %v1208 = vadd.f32 %v1194, %v1199
    %v1209 = vpack.c.bf16 %v1202, %v1201
    %v1210 = vpack.c.bf16 %v1204, %v1203
    %v1211 = vpack.c.bf16 %v1206, %v1205
    %v1212 = vpack.c.bf16 %v1208, %v1207
    %v1213 = vld [vmem:[%s9] sm:$0xf]
    %v1214 = vld [vmem:[%s9 + $0x4] sm:$0xf]
    %v1215 = vld [vmem:[%s9 + $0x8] sm:$0xf]
    %v1216 = vld [vmem:[%s9 + $0xc] sm:$0xf]
    %v1217 = vld [vmem:[%s10] sm:$0x1]
    %v1219 = vlaneseq
    %v1220 = vshrl.u32 %v1219, 7
    %v1221 = vsub.s32 0, %v1220
    %v1222 = vrot.slane %v1217, %v1221
    %v1228 = vunpack.c.l.b16 %v1213
    %v1229 = vunpack.c.l.b16 %v1214
    %v1230 = vunpack.c.l.b16 %v1215
    %v1231 = vunpack.c.l.b16 %v1216
    %v1232 = vpack.c.b16 %v1229, %v1228
    %v1233 = vpack.c.b16 %v1231, %v1230
    %v1237 = vsel %vm1076, %v1209, 0
    %v1240 = vsel %vm1076, %v1210, 0
    %v1243 = vsel %vm1076, %v1211, 0
    %v1246 = vsel %vm1076, %v1212, 0
    %1248 = vmatprep.subr.bf16.mxu0 0
    %1249 = vmatpush1.bf16.msra.mxu0 %v1232
    %1250 = vmatprep.subr.bf16.mxu0 0
    %1251 = vmatpush1.bf16.msra.mxu0 %v1233
    %1252 = vmatprep.subr.bf16.mxu0 0
    %1253 = vmatpush1.bf16.msra.mxu0 0
    %1254 = vmatprep.subr.bf16.mxu0 0
    %1255 = vmatpush1.bf16.msra.mxu0 0
    %1256 = vmatprep.subr.bf16.mxu0 0
    %1257 = vmatpush1.bf16.msra.mxu0 0
    %1258 = vmatprep.subr.bf16.mxu0 0
    %1259 = vmatpush1.bf16.msra.mxu0 0
    %1260 = vmatprep.subr.bf16.mxu0 0
    %1261 = vmatpush1.bf16.msra.mxu0 0
    %1262 = vmatprep.subr.bf16.mxu0 0
    %1263 = vmatpush1.bf16.msra.mxu0 0
    %1264 = vmatprep.subr.bf16.mxu0 0
    %1265 = vmatpush1.bf16.msra.mxu0 0
    %1266 = vmatprep.subr.bf16.mxu0 0
    %1267 = vmatpush1.bf16.msra.mxu0 0
    %1268 = vmatprep.subr.bf16.mxu0 0
    %1269 = vmatpush1.bf16.msra.mxu0 0
    %1270 = vmatprep.subr.bf16.mxu0 0
    %1271 = vmatpush1.bf16.msra.mxu0 0
    %1272 = vmatprep.subr.bf16.mxu0 0
    %1273 = vmatpush1.bf16.msra.mxu0 0
    %1274 = vmatprep.subr.bf16.mxu0 0
    %1275 = vmatpush1.bf16.msra.mxu0 0
    %1276 = vmatprep.subr.bf16.mxu0 0
    %1277 = vmatpush1.bf16.msra.mxu0 0
    %1278 = vmatprep.subr.bf16.mxu0 0
    %1279 = vmatpush1.bf16.msra.mxu0 0
    %1280 = vmatprep.mubr.bf16.mxu0 0
    %1281 = vmatmul.mubr.bf16.gmra.mrb[0].mxu0 %v1237
    %v1282 = vpop.f32.mrb[0].mxu0
    %v1283 = vadd.f32 %v1222, %v1282
    %v1284 = vpop.f32.mrb[0].mxu0
    %v1285 = vpop.f32.mrb[0].mxu0
    %v1286 = vadd.f32 %v1222, %v1285
    %v1287 = vpop.f32.mrb[0].mxu0
    %1288 = vmatprep.mubr.bf16.mxu0 0
    %1289 = vmatmul.mubr.bf16.gmra.mrb[0].mxu0 %v1240
    %v1290 = vpop.f32.mrb[0].mxu0
    %v1291 = vadd.f32 %v1222, %v1290
    %v1292 = vpop.f32.mrb[0].mxu0
    %v1293 = vpop.f32.mrb[0].mxu0
    %v1294 = vadd.f32 %v1222, %v1293
    %v1295 = vpop.f32.mrb[0].mxu0
    %1296 = vmatprep.mubr.bf16.mxu0 0
    %1297 = vmatmul.mubr.bf16.gmra.mrb[0].mxu0 %v1243
    %v1298 = vpop.f32.mrb[0].mxu0
    %v1299 = vadd.f32 %v1222, %v1298
    %v1300 = vpop.f32.mrb[0].mxu0
    %v1301 = vpop.f32.mrb[0].mxu0
    %v1302 = vadd.f32 %v1222, %v1301
    %v1303 = vpop.f32.mrb[0].mxu0
    %1304 = vmatprep.mubr.bf16.mxu0 0
    %1305 = vmatmul.mubr.bf16.gmra.mrb[0].mxu0 %v1246
    %v1306 = vpop.f32.mrb[0].mxu0
    %v1307 = vadd.f32 %v1222, %v1306
    %v1308 = vpop.f32.mrb[0].mxu0
    %v1309 = vpop.f32.mrb[0].mxu0
    %v1310 = vadd.f32 %v1222, %v1309
    %v1311 = vpop.f32.mrb[0].mxu0
    %1312 = vdwg.mxu0
    %v1313 = vmul.f32 %v1283, 0.5
    %v1314 = vmul.f32 %v1286, 0.5
    %v1315 = vmul.f32 %v1291, 0.5
    %v1316 = vmul.f32 %v1294, 0.5
    %v1317 = vmul.f32 %v1299, 0.5
    %v1318 = vmul.f32 %v1302, 0.5
    %v1319 = vmul.f32 %v1307, 0.5
    %v1320 = vmul.f32 %v1310, 0.5
    %v1321 = vmul.f32 %v1283, 0.044715
    %v1322 = vmul.f32 %v1286, 0.044715
    %v1323 = vmul.f32 %v1291, 0.044715
    %v1324 = vmul.f32 %v1294, 0.044715
    %v1325 = vmul.f32 %v1299, 0.044715
    %v1326 = vmul.f32 %v1302, 0.044715
    %v1327 = vmul.f32 %v1307, 0.044715
    %v1328 = vmul.f32 %v1310, 0.044715
    %v1329 = vmul.f32 %v1321, %v1283
    %v1330 = vmul.f32 %v1322, %v1286
    %v1331 = vmul.f32 %v1323, %v1291
    %v1332 = vmul.f32 %v1324, %v1294
    %v1333 = vmul.f32 %v1325, %v1299
    %v1334 = vmul.f32 %v1326, %v1302
    %v1335 = vmul.f32 %v1327, %v1307
    %v1336 = vmul.f32 %v1328, %v1310
    %v1337 = vmul.f32 %v1329, %v1283
    %v1338 = vmul.f32 %v1330, %v1286
    %v1339 = vmul.f32 %v1331, %v1291
    %v1340 = vmul.f32 %v1332, %v1294
    %v1341 = vmul.f32 %v1333, %v1299
    %v1342 = vmul.f32 %v1334, %v1302
    %v1343 = vmul.f32 %v1335, %v1307
    %v1344 = vmul.f32 %v1336, %v1310
    %v1345 = vadd.f32 %v1283, %v1337
    %v1346 = vadd.f32 %v1286, %v1338
    %v1347 = vadd.f32 %v1291, %v1339
    %v1348 = vadd.f32 %v1294, %v1340
    %v1349 = vadd.f32 %v1299, %v1341
    %v1350 = vadd.f32 %v1302, %v1342
    %v1351 = vadd.f32 %v1307, %v1343
    %v1352 = vadd.f32 %v1310, %v1344
    %v1353 = vmul.f32 %v1345, 0.7978846
    %v1354 = vmul.f32 %v1346, 0.7978846
    %v1355 = vmul.f32 %v1347, 0.7978846
    %v1356 = vmul.f32 %v1348, 0.7978846
    %v1357 = vmul.f32 %v1349, 0.7978846
    %v1358 = vmul.f32 %v1350, 0.7978846
    %v1359 = vmul.f32 %v1351, 0.7978846
    %v1360 = vmul.f32 %v1352, 0.7978846
    %v1361 = vtanh.pop %v1353
    %v1362 = vtanh.pop %v1354
    %v1363 = vtanh.pop %v1355
    %v1364 = vtanh.pop %v1356
    %v1365 = vtanh.pop %v1357
    %v1366 = vtanh.pop %v1358
    %v1367 = vtanh.pop %v1359
    %v1368 = vtanh.pop %v1360
    %v1369 = vadd.f32 %v1361, 1.0
    %v1370 = vadd.f32 %v1362, 1.0
    %v1371 = vadd.f32 %v1363, 1.0
    %v1372 = vadd.f32 %v1364, 1.0
    %v1373 = vadd.f32 %v1365, 1.0
    %v1374 = vadd.f32 %v1366, 1.0
    %v1375 = vadd.f32 %v1367, 1.0
    %v1376 = vadd.f32 %v1368, 1.0
    %v1377 = vmul.f32 %v1313, %v1369
    %v1378 = vmul.f32 %v1314, %v1370
    %v1379 = vmul.f32 %v1315, %v1371
    %v1380 = vmul.f32 %v1316, %v1372
    %v1381 = vmul.f32 %v1317, %v1373
    %v1382 = vmul.f32 %v1318, %v1374
    %v1383 = vmul.f32 %v1319, %v1375
    %v1384 = vmul.f32 %v1320, %v1376
    %v1385 = vpack.c.bf16 %v1378, %v1377
    %v1386 = vpack.c.bf16 %v1380, %v1379
    %v1387 = vpack.c.bf16 %v1382, %v1381
    %v1388 = vpack.c.bf16 %v1384, %v1383
    %v1389 = vld [vmem:[%s11] sm:$0xf]
    %v1390 = vld [vmem:[%s11 + $0x4] sm:$0xf]
    %v1391 = vld [vmem:[%s11 + $0x8] sm:$0xf]
    %v1392 = vld [vmem:[%s11 + $0xc] sm:$0xf]
    %v1393 = vld [vmem:[%s11 + $0x10] sm:$0xf]
    %v1394 = vld [vmem:[%s11 + $0x14] sm:$0xf]
    %v1395 = vld [vmem:[%s11 + $0x18] sm:$0xf]
    %v1396 = vld [vmem:[%s11 + $0x1c] sm:$0xf]
    %v1397 = vld [vmem:[%s12] sm:$0x1]
    %v1399 = vlaneseq
    %v1400 = vshrl.u32 %v1399, 7
    %v1401 = vsub.s32 0, %v1400
    %v1402 = vrot.slane %v1397, %v1401
    %v1412 = vunpack.c.l.b16 %v1389
    %v1413 = vunpack.c.l.b16 %v1390
    %v1414 = vunpack.c.l.b16 %v1391
    %v1415 = vunpack.c.l.b16 %v1392
    %v1416 = vunpack.c.l.b16 %v1393
    %v1417 = vunpack.c.l.b16 %v1394
    %v1418 = vunpack.c.l.b16 %v1395
    %v1419 = vunpack.c.l.b16 %v1396
    %v1420 = vpack.c.b16 %v1413, %v1412
    %v1421 = vpack.c.b16 %v1415, %v1414
    %v1422 = vpack.c.b16 %v1417, %v1416
    %v1423 = vpack.c.b16 %v1419, %v1418
    %vm1428 = vcmask 523264
    %v1430 = vsel %vm1428, %v1385, 0
    %v1433 = vsel %vm1428, %v1386, 0
    %v1436 = vsel %vm1428, %v1387, 0
    %v1439 = vsel %vm1428, %v1388, 0
    %1441 = vmatprep.subr.bf16.mxu0 0
    %1442 = vmatpush1.bf16.msra.mxu0 %v1420
    %1443 = vmatprep.subr.bf16.mxu0 0
    %1444 = vmatpush1.bf16.msra.mxu0 %v1421
    %1445 = vmatprep.subr.bf16.mxu0 0
    %1446 = vmatpush1.bf16.msra.mxu0 %v1422
    %1447 = vmatprep.subr.bf16.mxu0 0
    %1448 = vmatpush1.bf16.msra.mxu0 %v1423
    %1449 = vmatprep.subr.bf16.mxu0 0
    %1450 = vmatpush1.bf16.msra.mxu0 0
    %1451 = vmatprep.subr.bf16.mxu0 0
    %1452 = vmatpush1.bf16.msra.mxu0 0
    %1453 = vmatprep.subr.bf16.mxu0 0
    %1454 = vmatpush1.bf16.msra.mxu0 0
    %1455 = vmatprep.subr.bf16.mxu0 0
    %1456 = vmatpush1.bf16.msra.mxu0 0
    %1457 = vmatprep.subr.bf16.mxu0 0
    %1458 = vmatpush1.bf16.msra.mxu0 0
    %1459 = vmatprep.subr.bf16.mxu0 0
    %1460 = vmatpush1.bf16.msra.mxu0 0
    %1461 = vmatprep.subr.bf16.mxu0 0
    %1462 = vmatpush1.bf16.msra.mxu0 0
    %1463 = vmatprep.subr.bf16.mxu0 0
    %1464 = vmatpush1.bf16.msra.mxu0 0
    %1465 = vmatprep.subr.bf16.mxu0 0
    %1466 = vmatpush1.bf16.msra.mxu0 0
    %1467 = vmatprep.subr.bf16.mxu0 0
    %1468 = vmatpush1.bf16.msra.mxu0 0
    %1469 = vmatprep.subr.bf16.mxu0 0
    %1470 = vmatpush1.bf16.msra.mxu0 0
    %1471 = vmatprep.subr.bf16.mxu0 0
    %1472 = vmatpush1.bf16.msra.mxu0 0
    %1473 = vmatprep.mubr.bf16.mxu0 0
    %1474 = vmatmul.mubr.bf16.gmra.mrb[0].mxu0 %v1430
    %v1475 = vpop.f32.mrb[0].mxu0
    %v1476 = vadd.f32 %v1402, %v1475
    %v1477 = vpop.f32.mrb[0].mxu0
    %v1478 = vpop.f32.mrb[0].mxu0
    %v1479 = vadd.f32 %v1402, %v1478
    %v1480 = vpop.f32.mrb[0].mxu0
    %1481 = vmatprep.mubr.bf16.mxu0 0
    %1482 = vmatmul.mubr.bf16.gmra.mrb[0].mxu0 %v1433
    %v1483 = vpop.f32.mrb[0].mxu0
    %v1484 = vadd.f32 %v1402, %v1483
    %v1485 = vpop.f32.mrb[0].mxu0
    %v1486 = vpop.f32.mrb[0].mxu0
    %v1487 = vadd.f32 %v1402, %v1486
    %v1488 = vpop.f32.mrb[0].mxu0
    %1489 = vmatprep.mubr.bf16.mxu0 0
    %1490 = vmatmul.mubr.bf16.gmra.mrb[0].mxu0 %v1436
    %v1491 = vpop.f32.mrb[0].mxu0
    %v1492 = vadd.f32 %v1402, %v1491
    %v1493 = vpop.f32.mrb[0].mxu0
    %v1494 = vpop.f32.mrb[0].mxu0
    %v1495 = vadd.f32 %v1402, %v1494
    %v1496 = vpop.f32.mrb[0].mxu0
    %1497 = vmatprep.mubr.bf16.mxu0 0
    %1498 = vmatmul.mubr.bf16.gmra.mrb[0].mxu0 %v1439
    %v1499 = vpop.f32.mrb[0].mxu0
    %v1500 = vadd.f32 %v1402, %v1499
    %v1501 = vpop.f32.mrb[0].mxu0
    %v1502 = vpop.f32.mrb[0].mxu0
    %v1503 = vadd.f32 %v1402, %v1502
    %v1504 = vpop.f32.mrb[0].mxu0
    %1505 = vdwg.mxu0
    %v1506 = vadd.f32 %v1066, %v1476
    %v1507 = vadd.f32 %v1067, %v1479
    %v1508 = vadd.f32 %v1068, %v1484
    %v1509 = vadd.f32 %v1069, %v1487
    %v1510 = vadd.f32 %v1070, %v1492
    %v1511 = vadd.f32 %v1071, %v1495
    %v1512 = vadd.f32 %v1072, %v1500
    %v1513 = vadd.f32 %v1073, %v1503
    %s1514 = scalar_lea.vmem %s3, 8
    %v1515 = vld [vmem:[%s1514] sm:$0xf]
    %v1516 = vld [vmem:[%s1514 + $0x4] sm:$0xf]
    %s1517 = scalar_lea.vmem %s5, 4
    %v1518 = vld [vmem:[%s1517] sm:$0xf]
    %v1519 = vpack.c.bf16 %v1507, %v1506
    %v1520 = vpack.c.bf16 %v1509, %v1508
    %v1521 = vpack.c.bf16 %v1511, %v1510
    %v1522 = vpack.c.bf16 %v1513, %v1512
    %v1527 = vunpack.c.l.b16 %v1519
    %v1528 = vunpack.c.h.b16 %v1519
    %v1529 = vunpack.c.l.b16 %v1520
    %v1530 = vunpack.c.h.b16 %v1520
    %v1531 = vunpack.c.l.b16 %v1521
    %v1532 = vunpack.c.h.b16 %v1521
    %v1533 = vunpack.c.l.b16 %v1522
    %v1534 = vunpack.c.h.b16 %v1522
    %v1535 = vpack.c.b16 %v1527, %v1527
    %v1536 = vpack.c.b16 %v1528, %v1528
    %v1537 = vpack.c.b16 %v1529, %v1529
    %v1538 = vpack.c.b16 %v1530, %v1530
    %v1539 = vpack.c.b16 %v1531, %v1531
    %v1540 = vpack.c.b16 %v1532, %v1532
    %v1541 = vpack.c.b16 %v1533, %v1533
    %v1542 = vpack.c.b16 %v1534, %v1534
    %s1543 = scalar_lea.vmem %s4, 16
    %v1544 = vld [vmem:[%s1543] sm:$0xff]
    %v1545 = vld [vmem:[%s1543 + $0x8] sm:$0xff]
    %1547 = vset.pattern.permute.xlu0 0
    %1548 = vperm.xlu0 %1547, %v1544
    %v1549 = vpop.permute.xlu0 %1548
    %1552 = vset.pattern.permute.xlu0 0
    %1553 = vperm.xlu0 %1552, %v1545
    %v1554 = vpop.permute.xlu0 %1553
    %v1558 = vunpack.c.l.b16 %v1515
    %v1559 = vunpack.c.l.b16 %v1516
    %v1560 = vpack.c.b16 %v1559, %v1558
    %v1562 = vsel %vm227, %v1560, 0
    %v1565 = vsel %vm231, %v1535, 0
    %1567 = vmatprep.subr.bf16.mxu0 0
    %1568 = vmatpush1.bf16.msra.mxu0 %v1565
    %1569 = vmatprep.subr.bf16.mxu0 0
    %1570 = vmatpush1.bf16.msra.mxu0 0
    %1571 = vmatprep.subr.bf16.mxu0 0
    %1572 = vmatpush1.bf16.msra.mxu0 0
    %1573 = vmatprep.subr.bf16.mxu0 0
    %1574 = vmatpush1.bf16.msra.mxu0 0
    %1575 = vmatprep.subr.bf16.mxu0 0
    %1576 = vmatpush1.bf16.msra.mxu0 0
    %1577 = vmatprep.subr.bf16.mxu0 0
    %1578 = vmatpush1.bf16.msra.mxu0 0
    %1579 = vmatprep.subr.bf16.mxu0 0
    %1580 = vmatpush1.bf16.msra.mxu0 0
    %1581 = vmatprep.subr.bf16.mxu0 0
    %1582 = vmatpush1.bf16.msra.mxu0 0
    %1583 = vmatprep.subr.bf16.mxu0 0
    %1584 = vmatpush1.bf16.msra.mxu0 0
    %1585 = vmatprep.subr.bf16.mxu0 0
    %1586 = vmatpush1.bf16.msra.mxu0 0
    %1587 = vmatprep.subr.bf16.mxu0 0
    %1588 = vmatpush1.bf16.msra.mxu0 0
    %1589 = vmatprep.subr.bf16.mxu0 0
    %1590 = vmatpush1.bf16.msra.mxu0 0
    %1591 = vmatprep.subr.bf16.mxu0 0
    %1592 = vmatpush1.bf16.msra.mxu0 0
    %1593 = vmatprep.subr.bf16.mxu0 0
    %1594 = vmatpush1.bf16.msra.mxu0 0
    %1595 = vmatprep.subr.bf16.mxu0 0
    %1596 = vmatpush1.bf16.msra.mxu0 0
    %1597 = vmatprep.subr.bf16.mxu0 0
    %1598 = vmatpush1.bf16.msra.mxu0 0
    %1599 = vmatprep.mubr.bf16.mxu0 0
    %1600 = vmatmul.mubr.bf16.gmra.mrb[0].mxu0 %v1562
    %v1601 = vpop.f32.mrb[0].mxu0
    %v1602 = vadd.f32 %v1549, %v1601
    %v1603 = vpop.f32.mrb[0].mxu0
    %v1604 = vpop.f32.mrb[0].mxu0
    %v1605 = vadd.f32 %v1554, %v1604
    %v1606 = vpop.f32.mrb[0].mxu0
    %1607 = vdwg.mxu0
    %v1609 = vsel %vm231, %v1536, 0
    %1611 = vmatprep.subr.bf16.mxu0 0
    %1612 = vmatpush1.bf16.msra.mxu0 %v1609
    %1613 = vmatprep.subr.bf16.mxu0 0
    %1614 = vmatpush1.bf16.msra.mxu0 0
    %1615 = vmatprep.subr.bf16.mxu0 0
    %1616 = vmatpush1.bf16.msra.mxu0 0
    %1617 = vmatprep.subr.bf16.mxu0 0
    %1618 = vmatpush1.bf16.msra.mxu0 0
    %1619 = vmatprep.subr.bf16.mxu0 0
    %1620 = vmatpush1.bf16.msra.mxu0 0
    %1621 = vmatprep.subr.bf16.mxu0 0
    %1622 = vmatpush1.bf16.msra.mxu0 0
    %1623 = vmatprep.subr.bf16.mxu0 0
    %1624 = vmatpush1.bf16.msra.mxu0 0
    %1625 = vmatprep.subr.bf16.mxu0 0
    %1626 = vmatpush1.bf16.msra.mxu0 0
    %1627 = vmatprep.subr.bf16.mxu0 0
    %1628 = vmatpush1.bf16.msra.mxu0 0
    %1629 = vmatprep.subr.bf16.mxu0 0
    %1630 = vmatpush1.bf16.msra.mxu0 0
    %1631 = vmatprep.subr.bf16.mxu0 0
    %1632 = vmatpush1.bf16.msra.mxu0 0
    %1633 = vmatprep.subr.bf16.mxu0 0
    %1634 = vmatpush1.bf16.msra.mxu0 0
    %1635 = vmatprep.subr.bf16.mxu0 0
    %1636 = vmatpush1.bf16.msra.mxu0 0
    %1637 = vmatprep.subr.bf16.mxu0 0
    %1638 = vmatpush1.bf16.msra.mxu0 0
    %1639 = vmatprep.subr.bf16.mxu0 0
    %1640 = vmatpush1.bf16.msra.mxu0 0
    %1641 = vmatprep.subr.bf16.mxu0 0
    %1642 = vmatpush1.bf16.msra.mxu0 0
    %1643 = vmatprep.mubr.bf16.mxu0 0
    %1644 = vmatmul.mubr.bf16.gmra.mrb[0].mxu0 %v1562
    %v1645 = vpop.f32.mrb[0].mxu0
    %v1646 = vadd.f32 %v1549, %v1645
    %v1647 = vpop.f32.mrb[0].mxu0
    %v1648 = vpop.f32.mrb[0].mxu0
    %v1649 = vadd.f32 %v1554, %v1648
    %v1650 = vpop.f32.mrb[0].mxu0
    %1651 = vdwg.mxu0
    %v1653 = vsel %vm231, %v1537, 0
    %1655 = vmatprep.subr.bf16.mxu0 0
    %1656 = vmatpush1.bf16.msra.mxu0 %v1653
    %1657 = vmatprep.subr.bf16.mxu0 0
    %1658 = vmatpush1.bf16.msra.mxu0 0
    %1659 = vmatprep.subr.bf16.mxu0 0
    %1660 = vmatpush1.bf16.msra.mxu0 0
    %1661 = vmatprep.subr.bf16.mxu0 0
    %1662 = vmatpush1.bf16.msra.mxu0 0
    %1663 = vmatprep.subr.bf16.mxu0 0
    %1664 = vmatpush1.bf16.msra.mxu0 0
    %1665 = vmatprep.subr.bf16.mxu0 0
    %1666 = vmatpush1.bf16.msra.mxu0 0
    %1667 = vmatprep.subr.bf16.mxu0 0
    %1668 = vmatpush1.bf16.msra.mxu0 0
    %1669 = vmatprep.subr.bf16.mxu0 0
    %1670 = vmatpush1.bf16.msra.mxu0 0
    %1671 = vmatprep.subr.bf16.mxu0 0
    %1672 = vmatpush1.bf16.msra.mxu0 0
    %1673 = vmatprep.subr.bf16.mxu0 0
    %1674 = vmatpush1.bf16.msra.mxu0 0
    %1675 = vmatprep.subr.bf16.mxu0 0
    %1676 = vmatpush1.bf16.msra.mxu0 0
    %1677 = vmatprep.subr.bf16.mxu0 0
    %1678 = vmatpush1.bf16.msra.mxu0 0
    %1679 = vmatprep.subr.bf16.mxu0 0
    %1680 = vmatpush1.bf16.msra.mxu0 0
    %1681 = vmatprep.subr.bf16.mxu0 0
    %1682 = vmatpush1.bf16.msra.mxu0 0
    %1683 = vmatprep.subr.bf16.mxu0 0
    %1684 = vmatpush1.bf16.msra.mxu0 0
    %1685 = vmatprep.subr.bf16.mxu0 0
    %1686 = vmatpush1.bf16.msra.mxu0 0
    %1687 = vmatprep.mubr.bf16.mxu0 0
    %1688 = vmatmul.mubr.bf16.gmra.mrb[0].mxu0 %v1562
    %v1689 = vpop.f32.mrb[0].mxu0
    %v1690 = vadd.f32 %v1549, %v1689
    %v1691 = vpop.f32.mrb[0].mxu0
    %v1692 = vpop.f32.mrb[0].mxu0
    %v1693 = vadd.f32 %v1554, %v1692
    %v1694 = vpop.f32.mrb[0].mxu0
    %1695 = vdwg.mxu0
    %v1697 = vsel %vm231, %v1538, 0
    %1699 = vmatprep.subr.bf16.mxu0 0
    %1700 = vmatpush1.bf16.msra.mxu0 %v1697
    %1701 = vmatprep.subr.bf16.mxu0 0
    %1702 = vmatpush1.bf16.msra.mxu0 0
    %1703 = vmatprep.subr.bf16.mxu0 0
    %1704 = vmatpush1.bf16.msra.mxu0 0
    %1705 = vmatprep.subr.bf16.mxu0 0
    %1706 = vmatpush1.bf16.msra.mxu0 0
    %1707 = vmatprep.subr.bf16.mxu0 0
    %1708 = vmatpush1.bf16.msra.mxu0 0
    %1709 = vmatprep.subr.bf16.mxu0 0
    %1710 = vmatpush1.bf16.msra.mxu0 0
    %1711 = vmatprep.subr.bf16.mxu0 0
    %1712 = vmatpush1.bf16.msra.mxu0 0
    %1713 = vmatprep.subr.bf16.mxu0 0
    %1714 = vmatpush1.bf16.msra.mxu0 0
    %1715 = vmatprep.subr.bf16.mxu0 0
    %1716 = vmatpush1.bf16.msra.mxu0 0
    %1717 = vmatprep.subr.bf16.mxu0 0
    %1718 = vmatpush1.bf16.msra.mxu0 0
    %1719 = vmatprep.subr.bf16.mxu0 0
    %1720 = vmatpush1.bf16.msra.mxu0 0
    %1721 = vmatprep.subr.bf16.mxu0 0
    %1722 = vmatpush1.bf16.msra.mxu0 0
    %1723 = vmatprep.subr.bf16.mxu0 0
    %1724 = vmatpush1.bf16.msra.mxu0 0
    %1725 = vmatprep.subr.bf16.mxu0 0
    %1726 = vmatpush1.bf16.msra.mxu0 0
    %1727 = vmatprep.subr.bf16.mxu0 0
    %1728 = vmatpush1.bf16.msra.mxu0 0
    %1729 = vmatprep.subr.bf16.mxu0 0
    %1730 = vmatpush1.bf16.msra.mxu0 0
    %1731 = vmatprep.mubr.bf16.mxu0 0
    %1732 = vmatmul.mubr.bf16.gmra.mrb[0].mxu0 %v1562
    %v1733 = vpop.f32.mrb[0].mxu0
    %v1734 = vadd.f32 %v1549, %v1733
    %v1735 = vpop.f32.mrb[0].mxu0
    %v1736 = vpop.f32.mrb[0].mxu0
    %v1737 = vadd.f32 %v1554, %v1736
    %v1738 = vpop.f32.mrb[0].mxu0
    %1739 = vdwg.mxu0
    %v1741 = vsel %vm231, %v1539, 0
    %1743 = vmatprep.subr.bf16.mxu0 0
    %1744 = vmatpush1.bf16.msra.mxu0 %v1741
    %1745 = vmatprep.subr.bf16.mxu0 0
    %1746 = vmatpush1.bf16.msra.mxu0 0
    %1747 = vmatprep.subr.bf16.mxu0 0
    %1748 = vmatpush1.bf16.msra.mxu0 0
    %1749 = vmatprep.subr.bf16.mxu0 0
    %1750 = vmatpush1.bf16.msra.mxu0 0
    %1751 = vmatprep.subr.bf16.mxu0 0
    %1752 = vmatpush1.bf16.msra.mxu0 0
    %1753 = vmatprep.subr.bf16.mxu0 0
    %1754 = vmatpush1.bf16.msra.mxu0 0
    %1755 = vmatprep.subr.bf16.mxu0 0
    %1756 = vmatpush1.bf16.msra.mxu0 0
    %1757 = vmatprep.subr.bf16.mxu0 0
    %1758 = vmatpush1.bf16.msra.mxu0 0
    %1759 = vmatprep.subr.bf16.mxu0 0
    %1760 = vmatpush1.bf16.msra.mxu0 0
    %1761 = vmatprep.subr.bf16.mxu0 0
    %1762 = vmatpush1.bf16.msra.mxu0 0
    %1763 = vmatprep.subr.bf16.mxu0 0
    %1764 = vmatpush1.bf16.msra.mxu0 0
    %1765 = vmatprep.subr.bf16.mxu0 0
    %1766 = vmatpush1.bf16.msra.mxu0 0
    %1767 = vmatprep.subr.bf16.mxu0 0
    %1768 = vmatpush1.bf16.msra.mxu0 0
    %1769 = vmatprep.subr.bf16.mxu0 0
    %1770 = vmatpush1.bf16.msra.mxu0 0
    %1771 = vmatprep.subr.bf16.mxu0 0
    %1772 = vmatpush1.bf16.msra.mxu0 0
    %1773 = vmatprep.subr.bf16.mxu0 0
    %1774 = vmatpush1.bf16.msra.mxu0 0
    %1775 = vmatprep.mubr.bf16.mxu0 0
    %1776 = vmatmul.mubr.bf16.gmra.mrb[0].mxu0 %v1562
    %v1777 = vpop.f32.mrb[0].mxu0
    %v1778 = vadd.f32 %v1549, %v1777
    %v1779 = vpop.f32.mrb[0].mxu0
    %v1780 = vpop.f32.mrb[0].mxu0
    %v1781 = vadd.f32 %v1554, %v1780
    %v1782 = vpop.f32.mrb[0].mxu0
    %1783 = vdwg.mxu0
    %v1785 = vsel %vm231, %v1540, 0
    %1787 = vmatprep.subr.bf16.mxu0 0
    %1788 = vmatpush1.bf16.msra.mxu0 %v1785
    %1789 = vmatprep.subr.bf16.mxu0 0
    %1790 = vmatpush1.bf16.msra.mxu0 0
    %1791 = vmatprep.subr.bf16.mxu0 0
    %1792 = vmatpush1.bf16.msra.mxu0 0
    %1793 = vmatprep.subr.bf16.mxu0 0
    %1794 = vmatpush1.bf16.msra.mxu0 0
    %1795 = vmatprep.subr.bf16.mxu0 0
    %1796 = vmatpush1.bf16.msra.mxu0 0
    %1797 = vmatprep.subr.bf16.mxu0 0
    %1798 = vmatpush1.bf16.msra.mxu0 0
    %1799 = vmatprep.subr.bf16.mxu0 0
    %1800 = vmatpush1.bf16.msra.mxu0 0
    %1801 = vmatprep.subr.bf16.mxu0 0
    %1802 = vmatpush1.bf16.msra.mxu0 0
    %1803 = vmatprep.subr.bf16.mxu0 0
    %1804 = vmatpush1.bf16.msra.mxu0 0
    %1805 = vmatprep.subr.bf16.mxu0 0
    %1806 = vmatpush1.bf16.msra.mxu0 0
    %1807 = vmatprep.subr.bf16.mxu0 0
    %1808 = vmatpush1.bf16.msra.mxu0 0
    %1809 = vmatprep.subr.bf16.mxu0 0
    %1810 = vmatpush1.bf16.msra.mxu0 0
    %1811 = vmatprep.subr.bf16.mxu0 0
    %1812 = vmatpush1.bf16.msra.mxu0 0
    %1813 = vmatprep.subr.bf16.mxu0 0
    %1814 = vmatpush1.bf16.msra.mxu0 0
    %1815 = vmatprep.subr.bf16.mxu0 0
    %1816 = vmatpush1.bf16.msra.mxu0 0
    %1817 = vmatprep.subr.bf16.mxu0 0
    %1818 = vmatpush1.bf16.msra.mxu0 0
    %1819 = vmatprep.mubr.bf16.mxu0 0
    %1820 = vmatmul.mubr.bf16.gmra.mrb[0].mxu0 %v1562
    %v1821 = vpop.f32.mrb[0].mxu0
    %v1822 = vadd.f32 %v1549, %v1821
    %v1823 = vpop.f32.mrb[0].mxu0
    %v1824 = vpop.f32.mrb[0].mxu0
    %v1825 = vadd.f32 %v1554, %v1824
    %v1826 = vpop.f32.mrb[0].mxu0
    %1827 = vdwg.mxu0
    %v1829 = vsel %vm231, %v1541, 0
    %1831 = vmatprep.subr.bf16.mxu0 0
    %1832 = vmatpush1.bf16.msra.mxu0 %v1829
    %1833 = vmatprep.subr.bf16.mxu0 0
    %1834 = vmatpush1.bf16.msra.mxu0 0
    %1835 = vmatprep.subr.bf16.mxu0 0
    %1836 = vmatpush1.bf16.msra.mxu0 0
    %1837 = vmatprep.subr.bf16.mxu0 0
    %1838 = vmatpush1.bf16.msra.mxu0 0
    %1839 = vmatprep.subr.bf16.mxu0 0
    %1840 = vmatpush1.bf16.msra.mxu0 0
    %1841 = vmatprep.subr.bf16.mxu0 0
    %1842 = vmatpush1.bf16.msra.mxu0 0
    %1843 = vmatprep.subr.bf16.mxu0 0
    %1844 = vmatpush1.bf16.msra.mxu0 0
    %1845 = vmatprep.subr.bf16.mxu0 0
    %1846 = vmatpush1.bf16.msra.mxu0 0
    %1847 = vmatprep.subr.bf16.mxu0 0
    %1848 = vmatpush1.bf16.msra.mxu0 0
    %1849 = vmatprep.subr.bf16.mxu0 0
    %1850 = vmatpush1.bf16.msra.mxu0 0
    %1851 = vmatprep.subr.bf16.mxu0 0
    %1852 = vmatpush1.bf16.msra.mxu0 0
    %1853 = vmatprep.subr.bf16.mxu0 0
    %1854 = vmatpush1.bf16.msra.mxu0 0
    %1855 = vmatprep.subr.bf16.mxu0 0
    %1856 = vmatpush1.bf16.msra.mxu0 0
    %1857 = vmatprep.subr.bf16.mxu0 0
    %1858 = vmatpush1.bf16.msra.mxu0 0
    %1859 = vmatprep.subr.bf16.mxu0 0
    %1860 = vmatpush1.bf16.msra.mxu0 0
    %1861 = vmatprep.subr.bf16.mxu0 0
    %1862 = vmatpush1.bf16.msra.mxu0 0
    %1863 = vmatprep.mubr.bf16.mxu0 0
    %1864 = vmatmul.mubr.bf16.gmra.mrb[0].mxu0 %v1562
    %v1865 = vpop.f32.mrb[0].mxu0
    %v1866 = vadd.f32 %v1549, %v1865
    %v1867 = vpop.f32.mrb[0].mxu0
    %v1868 = vpop.f32.mrb[0].mxu0
    %v1869 = vadd.f32 %v1554, %v1868
    %v1870 = vpop.f32.mrb[0].mxu0
    %1871 = vdwg.mxu0
    %v1873 = vsel %vm231, %v1542, 0
    %1875 = vmatprep.subr.bf16.mxu0 0
    %1876 = vmatpush1.bf16.msra.mxu0 %v1873
    %1877 = vmatprep.subr.bf16.mxu0 0
    %1878 = vmatpush1.bf16.msra.mxu0 0
    %1879 = vmatprep.subr.bf16.mxu0 0
    %1880 = vmatpush1.bf16.msra.mxu0 0
    %1881 = vmatprep.subr.bf16.mxu0 0
    %1882 = vmatpush1.bf16.msra.mxu0 0
    %1883 = vmatprep.subr.bf16.mxu0 0
    %1884 = vmatpush1.bf16.msra.mxu0 0
    %1885 = vmatprep.subr.bf16.mxu0 0
    %1886 = vmatpush1.bf16.msra.mxu0 0
    %1887 = vmatprep.subr.bf16.mxu0 0
    %1888 = vmatpush1.bf16.msra.mxu0 0
    %1889 = vmatprep.subr.bf16.mxu0 0
    %1890 = vmatpush1.bf16.msra.mxu0 0
    %1891 = vmatprep.subr.bf16.mxu0 0
    %1892 = vmatpush1.bf16.msra.mxu0 0
    %1893 = vmatprep.subr.bf16.mxu0 0
    %1894 = vmatpush1.bf16.msra.mxu0 0
    %1895 = vmatprep.subr.bf16.mxu0 0
    %1896 = vmatpush1.bf16.msra.mxu0 0
    %1897 = vmatprep.subr.bf16.mxu0 0
    %1898 = vmatpush1.bf16.msra.mxu0 0
    %1899 = vmatprep.subr.bf16.mxu0 0
    %1900 = vmatpush1.bf16.msra.mxu0 0
    %1901 = vmatprep.subr.bf16.mxu0 0
    %1902 = vmatpush1.bf16.msra.mxu0 0
    %1903 = vmatprep.subr.bf16.mxu0 0
    %1904 = vmatpush1.bf16.msra.mxu0 0
    %1905 = vmatprep.subr.bf16.mxu0 0
    %1906 = vmatpush1.bf16.msra.mxu0 0
    %1907 = vmatprep.mubr.bf16.mxu0 0
    %1908 = vmatmul.mubr.bf16.gmra.mrb[0].mxu0 %v1562
    %v1909 = vpop.f32.mrb[0].mxu0
    %v1910 = vadd.f32 %v1549, %v1909
    %v1911 = vpop.f32.mrb[0].mxu0
    %v1912 = vpop.f32.mrb[0].mxu0
    %v1913 = vadd.f32 %v1554, %v1912
    %v1914 = vpop.f32.mrb[0].mxu0
    %1915 = vdwg.mxu0
    %v1916 = vmul.f32 %v1602, 0.5
    %v1917 = vmul.f32 %v1605, 0.5
    %v1918 = vmul.f32 %v1646, 0.5
    %v1919 = vmul.f32 %v1649, 0.5
    %v1920 = vmul.f32 %v1690, 0.5
    %v1921 = vmul.f32 %v1693, 0.5
    %v1922 = vmul.f32 %v1734, 0.5
    %v1923 = vmul.f32 %v1737, 0.5
    %v1924 = vmul.f32 %v1778, 0.5
    %v1925 = vmul.f32 %v1781, 0.5
    %v1926 = vmul.f32 %v1822, 0.5
    %v1927 = vmul.f32 %v1825, 0.5
    %v1928 = vmul.f32 %v1866, 0.5
    %v1929 = vmul.f32 %v1869, 0.5
    %v1930 = vmul.f32 %v1910, 0.5
    %v1931 = vmul.f32 %v1913, 0.5
    %v1932 = vmul.f32 %v1602, 0.044715
    %v1933 = vmul.f32 %v1605, 0.044715
    %v1934 = vmul.f32 %v1646, 0.044715
    %v1935 = vmul.f32 %v1649, 0.044715
    %v1936 = vmul.f32 %v1690, 0.044715
    %v1937 = vmul.f32 %v1693, 0.044715
    %v1938 = vmul.f32 %v1734, 0.044715
    %v1939 = vmul.f32 %v1737, 0.044715
    %v1940 = vmul.f32 %v1778, 0.044715
    %v1941 = vmul.f32 %v1781, 0.044715
    %v1942 = vmul.f32 %v1822, 0.044715
    %v1943 = vmul.f32 %v1825, 0.044715
    %v1944 = vmul.f32 %v1866, 0.044715
    %v1945 = vmul.f32 %v1869, 0.044715
    %v1946 = vmul.f32 %v1910, 0.044715
    %v1947 = vmul.f32 %v1913, 0.044715
    %v1948 = vmul.f32 %v1932, %v1602
    %v1949 = vmul.f32 %v1933, %v1605
    %v1950 = vmul.f32 %v1934, %v1646
    %v1951 = vmul.f32 %v1935, %v1649
    %v1952 = vmul.f32 %v1936, %v1690
    %v1953 = vmul.f32 %v1937, %v1693
    %v1954 = vmul.f32 %v1938, %v1734
    %v1955 = vmul.f32 %v1939, %v1737
    %v1956 = vmul.f32 %v1940, %v1778
    %v1957 = vmul.f32 %v1941, %v1781
    %v1958 = vmul.f32 %v1942, %v1822
    %v1959 = vmul.f32 %v1943, %v1825
    %v1960 = vmul.f32 %v1944, %v1866
    %v1961 = vmul.f32 %v1945, %v1869
    %v1962 = vmul.f32 %v1946, %v1910
    %v1963 = vmul.f32 %v1947, %v1913
    %v1964 = vmul.f32 %v1948, %v1602
    %v1965 = vmul.f32 %v1949, %v1605
    %v1966 = vmul.f32 %v1950, %v1646
    %v1967 = vmul.f32 %v1951, %v1649
    %v1968 = vmul.f32 %v1952, %v1690
    %v1969 = vmul.f32 %v1953, %v1693
    %v1970 = vmul.f32 %v1954, %v1734
    %v1971 = vmul.f32 %v1955, %v1737
    %v1972 = vmul.f32 %v1956, %v1778
    %v1973 = vmul.f32 %v1957, %v1781
    %v1974 = vmul.f32 %v1958, %v1822
    %v1975 = vmul.f32 %v1959, %v1825
    %v1976 = vmul.f32 %v1960, %v1866
    %v1977 = vmul.f32 %v1961, %v1869
    %v1978 = vmul.f32 %v1962, %v1910
    %v1979 = vmul.f32 %v1963, %v1913
    %v1980 = vadd.f32 %v1602, %v1964
    %v1981 = vadd.f32 %v1605, %v1965
    %v1982 = vadd.f32 %v1646, %v1966
    %v1983 = vadd.f32 %v1649, %v1967
    %v1984 = vadd.f32 %v1690, %v1968
    %v1985 = vadd.f32 %v1693, %v1969
    %v1986 = vadd.f32 %v1734, %v1970
    %v1987 = vadd.f32 %v1737, %v1971
    %v1988 = vadd.f32 %v1778, %v1972
    %v1989 = vadd.f32 %v1781, %v1973
    %v1990 = vadd.f32 %v1822, %v1974
    %v1991 = vadd.f32 %v1825, %v1975
    %v1992 = vadd.f32 %v1866, %v1976
    %v1993 = vadd.f32 %v1869, %v1977
    %v1994 = vadd.f32 %v1910, %v1978
    %v1995 = vadd.f32 %v1913, %v1979
    %v1996 = vmul.f32 %v1980, 0.7978846
    %v1997 = vmul.f32 %v1981, 0.7978846
    %v1998 = vmul.f32 %v1982, 0.7978846
    %v1999 = vmul.f32 %v1983, 0.7978846
    %v2000 = vmul.f32 %v1984, 0.7978846
    %v2001 = vmul.f32 %v1985, 0.7978846
    %v2002 = vmul.f32 %v1986, 0.7978846
    %v2003 = vmul.f32 %v1987, 0.7978846
    %v2004 = vmul.f32 %v1988, 0.7978846
    %v2005 = vmul.f32 %v1989, 0.7978846
    %v2006 = vmul.f32 %v1990, 0.7978846
    %v2007 = vmul.f32 %v1991, 0.7978846
    %v2008 = vmul.f32 %v1992, 0.7978846
    %v2009 = vmul.f32 %v1993, 0.7978846
    %v2010 = vmul.f32 %v1994, 0.7978846
    %v2011 = vmul.f32 %v1995, 0.7978846
    %v2012 = vtanh.pop %v1996
    %v2013 = vtanh.pop %v1997
    %v2014 = vtanh.pop %v1998
    %v2015 = vtanh.pop %v1999
    %v2016 = vtanh.pop %v2000
    %v2017 = vtanh.pop %v2001
    %v2018 = vtanh.pop %v2002
    %v2019 = vtanh.pop %v2003
    %v2020 = vtanh.pop %v2004
    %v2021 = vtanh.pop %v2005
    %v2022 = vtanh.pop %v2006
    %v2023 = vtanh.pop %v2007
    %v2024 = vtanh.pop %v2008
    %v2025 = vtanh.pop %v2009
    %v2026 = vtanh.pop %v2010
    %v2027 = vtanh.pop %v2011
    %v2028 = vadd.f32 %v2012, 1.0
    %v2029 = vadd.f32 %v2013, 1.0
    %v2030 = vadd.f32 %v2014, 1.0
    %v2031 = vadd.f32 %v2015, 1.0
    %v2032 = vadd.f32 %v2016, 1.0
    %v2033 = vadd.f32 %v2017, 1.0
    %v2034 = vadd.f32 %v2018, 1.0
    %v2035 = vadd.f32 %v2019, 1.0
    %v2036 = vadd.f32 %v2020, 1.0
    %v2037 = vadd.f32 %v2021, 1.0
    %v2038 = vadd.f32 %v2022, 1.0
    %v2039 = vadd.f32 %v2023, 1.0
    %v2040 = vadd.f32 %v2024, 1.0
    %v2041 = vadd.f32 %v2025, 1.0
    %v2042 = vadd.f32 %v2026, 1.0
    %v2043 = vadd.f32 %v2027, 1.0
    %v2044 = vmul.f32 %v1916, %v2028
    %v2045 = vmul.f32 %v1917, %v2029
    %v2046 = vmul.f32 %v1918, %v2030
    %v2047 = vmul.f32 %v1919, %v2031
    %v2048 = vmul.f32 %v1920, %v2032
    %v2049 = vmul.f32 %v1921, %v2033
    %v2050 = vmul.f32 %v1922, %v2034
    %v2051 = vmul.f32 %v1923, %v2035
    %v2052 = vmul.f32 %v1924, %v2036
    %v2053 = vmul.f32 %v1925, %v2037
    %v2054 = vmul.f32 %v1926, %v2038
    %v2055 = vmul.f32 %v1927, %v2039
    %v2056 = vmul.f32 %v1928, %v2040
    %v2057 = vmul.f32 %v1929, %v2041
    %v2058 = vmul.f32 %v1930, %v2042
    %v2059 = vmul.f32 %v1931, %v2043
    %v2060 = vpack.c.bf16 %v2045, %v2044
    %v2061 = vpack.c.bf16 %v2047, %v2046
    %v2062 = vpack.c.bf16 %v2049, %v2048
    %v2063 = vpack.c.bf16 %v2051, %v2050
    %v2064 = vpack.c.bf16 %v2053, %v2052
    %v2065 = vpack.c.bf16 %v2055, %v2054
    %v2066 = vpack.c.bf16 %v2057, %v2056
    %v2067 = vpack.c.bf16 %v2059, %v2058
    %s2068 = scalar_lea.vmem %s6, 8
    %v2069 = vld [vmem:[%s2068] sm:$0xff]
    %2071 = vset.pattern.permute.xlu0 0
    %2072 = vperm.xlu0 %2071, %v2069
    %v2073 = vpop.permute.xlu0 %2072
    %v2076 = vsel %vm742, %v1518, 0
    %2078 = vmatprep.subr.bf16.mxu0 0
    %2079 = vmatpush1.bf16.msra.mxu0 %v2060
    %2080 = vmatprep.subr.bf16.mxu0 0
    %2081 = vmatpush1.bf16.msra.mxu0 0
    %2082 = vmatprep.subr.bf16.mxu0 0
    %2083 = vmatpush1.bf16.msra.mxu0 0
    %2084 = vmatprep.subr.bf16.mxu0 0
    %2085 = vmatpush1.bf16.msra.mxu0 0
    %2086 = vmatprep.subr.bf16.mxu0 0
    %2087 = vmatpush1.bf16.msra.mxu0 0
    %2088 = vmatprep.subr.bf16.mxu0 0
    %2089 = vmatpush1.bf16.msra.mxu0 0
    %2090 = vmatprep.subr.bf16.mxu0 0
    %2091 = vmatpush1.bf16.msra.mxu0 0
    %2092 = vmatprep.subr.bf16.mxu0 0
    %2093 = vmatpush1.bf16.msra.mxu0 0
    %2094 = vmatprep.subr.bf16.mxu0 0
    %2095 = vmatpush1.bf16.msra.mxu0 0
    %2096 = vmatprep.subr.bf16.mxu0 0
    %2097 = vmatpush1.bf16.msra.mxu0 0
    %2098 = vmatprep.subr.bf16.mxu0 0
    %2099 = vmatpush1.bf16.msra.mxu0 0
    %2100 = vmatprep.subr.bf16.mxu0 0
    %2101 = vmatpush1.bf16.msra.mxu0 0
    %2102 = vmatprep.subr.bf16.mxu0 0
    %2103 = vmatpush1.bf16.msra.mxu0 0
    %2104 = vmatprep.subr.bf16.mxu0 0
    %2105 = vmatpush1.bf16.msra.mxu0 0
    %2106 = vmatprep.subr.bf16.mxu0 0
    %2107 = vmatpush1.bf16.msra.mxu0 0
    %2108 = vmatprep.subr.bf16.mxu0 0
    %2109 = vmatpush1.bf16.msra.mxu0 0
    %2110 = vmatprep.mubr.bf16.mxu0 0
    %2111 = vmatmul.mubr.bf16.gmra.mrb[0].mxu0 %v2076
    %v2112 = vpop.f32.mrb[0].mxu0
    %v2113 = vadd.f32 %v2073, %v2112
    %v2114 = vpop.f32.mrb[0].mxu0
    %v2115 = vpop.f32.mrb[0].mxu0
    %v2116 = vpop.f32.mrb[0].mxu0
    %2117 = vdwg.mxu0
    %2118 = vmatprep.subr.bf16.mxu0 0
    %2119 = vmatpush1.bf16.msra.mxu0 %v2061
    %2120 = vmatprep.subr.bf16.mxu0 0
    %2121 = vmatpush1.bf16.msra.mxu0 0
    %2122 = vmatprep.subr.bf16.mxu0 0
    %2123 = vmatpush1.bf16.msra.mxu0 0
    %2124 = vmatprep.subr.bf16.mxu0 0
    %2125 = vmatpush1.bf16.msra.mxu0 0
    %2126 = vmatprep.subr.bf16.mxu0 0
    %2127 = vmatpush1.bf16.msra.mxu0 0
    %2128 = vmatprep.subr.bf16.mxu0 0
    %2129 = vmatpush1.bf16.msra.mxu0 0
    %2130 = vmatprep.subr.bf16.mxu0 0
    %2131 = vmatpush1.bf16.msra.mxu0 0
    %2132 = vmatprep.subr.bf16.mxu0 0
    %2133 = vmatpush1.bf16.msra.mxu0 0
    %2134 = vmatprep.subr.bf16.mxu0 0
    %2135 = vmatpush1.bf16.msra.mxu0 0
    %2136 = vmatprep.subr.bf16.mxu0 0
    %2137 = vmatpush1.bf16.msra.mxu0 0
    %2138 = vmatprep.subr.bf16.mxu0 0
    %2139 = vmatpush1.bf16.msra.mxu0 0
    %2140 = vmatprep.subr.bf16.mxu0 0
    %2141 = vmatpush1.bf16.msra.mxu0 0
    %2142 = vmatprep.subr.bf16.mxu0 0
    %2143 = vmatpush1.bf16.msra.mxu0 0
    %2144 = vmatprep.subr.bf16.mxu0 0
    %2145 = vmatpush1.bf16.msra.mxu0 0
    %2146 = vmatprep.subr.bf16.mxu0 0
    %2147 = vmatpush1.bf16.msra.mxu0 0
    %2148 = vmatprep.subr.bf16.mxu0 0
    %2149 = vmatpush1.bf16.msra.mxu0 0
    %2150 = vmatprep.mubr.bf16.mxu0 0
    %2151 = vmatmul.mubr.bf16.gmra.mrb[0].mxu0 %v2076
    %v2152 = vpop.f32.mrb[0].mxu0
    %v2153 = vadd.f32 %v2073, %v2152
    %v2154 = vpop.f32.mrb[0].mxu0
    %v2155 = vpop.f32.mrb[0].mxu0
    %v2156 = vpop.f32.mrb[0].mxu0
    %2157 = vdwg.mxu0
    %2158 = vmatprep.subr.bf16.mxu0 0
    %2159 = vmatpush1.bf16.msra.mxu0 %v2062
    %2160 = vmatprep.subr.bf16.mxu0 0
    %2161 = vmatpush1.bf16.msra.mxu0 0
    %2162 = vmatprep.subr.bf16.mxu0 0
    %2163 = vmatpush1.bf16.msra.mxu0 0
    %2164 = vmatprep.subr.bf16.mxu0 0
    %2165 = vmatpush1.bf16.msra.mxu0 0
    %2166 = vmatprep.subr.bf16.mxu0 0
    %2167 = vmatpush1.bf16.msra.mxu0 0
    %2168 = vmatprep.subr.bf16.mxu0 0
    %2169 = vmatpush1.bf16.msra.mxu0 0
    %2170 = vmatprep.subr.bf16.mxu0 0
    %2171 = vmatpush1.bf16.msra.mxu0 0
    %2172 = vmatprep.subr.bf16.mxu0 0
    %2173 = vmatpush1.bf16.msra.mxu0 0
    %2174 = vmatprep.subr.bf16.mxu0 0
    %2175 = vmatpush1.bf16.msra.mxu0 0
    %2176 = vmatprep.subr.bf16.mxu0 0
    %2177 = vmatpush1.bf16.msra.mxu0 0
    %2178 = vmatprep.subr.bf16.mxu0 0
    %2179 = vmatpush1.bf16.msra.mxu0 0
    %2180 = vmatprep.subr.bf16.mxu0 0
    %2181 = vmatpush1.bf16.msra.mxu0 0
    %2182 = vmatprep.subr.bf16.mxu0 0
    %2183 = vmatpush1.bf16.msra.mxu0 0
    %2184 = vmatprep.subr.bf16.mxu0 0
    %2185 = vmatpush1.bf16.msra.mxu0 0
    %2186 = vmatprep.subr.bf16.mxu0 0
    %2187 = vmatpush1.bf16.msra.mxu0 0
    %2188 = vmatprep.subr.bf16.mxu0 0
    %2189 = vmatpush1.bf16.msra.mxu0 0
    %2190 = vmatprep.mubr.bf16.mxu0 0
    %2191 = vmatmul.mubr.bf16.gmra.mrb[0].mxu0 %v2076
    %v2192 = vpop.f32.mrb[0].mxu0
    %v2193 = vadd.f32 %v2073, %v2192
    %v2194 = vpop.f32.mrb[0].mxu0
    %v2195 = vpop.f32.mrb[0].mxu0
    %v2196 = vpop.f32.mrb[0].mxu0
    %2197 = vdwg.mxu0
    %2198 = vmatprep.subr.bf16.mxu0 0
    %2199 = vmatpush1.bf16.msra.mxu0 %v2063
    %2200 = vmatprep.subr.bf16.mxu0 0
    %2201 = vmatpush1.bf16.msra.mxu0 0
    %2202 = vmatprep.subr.bf16.mxu0 0
    %2203 = vmatpush1.bf16.msra.mxu0 0
    %2204 = vmatprep.subr.bf16.mxu0 0
    %2205 = vmatpush1.bf16.msra.mxu0 0
    %2206 = vmatprep.subr.bf16.mxu0 0
    %2207 = vmatpush1.bf16.msra.mxu0 0
    %2208 = vmatprep.subr.bf16.mxu0 0
    %2209 = vmatpush1.bf16.msra.mxu0 0
    %2210 = vmatprep.subr.bf16.mxu0 0
    %2211 = vmatpush1.bf16.msra.mxu0 0
    %2212 = vmatprep.subr.bf16.mxu0 0
    %2213 = vmatpush1.bf16.msra.mxu0 0
    %2214 = vmatprep.subr.bf16.mxu0 0
    %2215 = vmatpush1.bf16.msra.mxu0 0
    %2216 = vmatprep.subr.bf16.mxu0 0
    %2217 = vmatpush1.bf16.msra.mxu0 0
    %2218 = vmatprep.subr.bf16.mxu0 0
    %2219 = vmatpush1.bf16.msra.mxu0 0
    %2220 = vmatprep.subr.bf16.mxu0 0
    %2221 = vmatpush1.bf16.msra.mxu0 0
    %2222 = vmatprep.subr.bf16.mxu0 0
    %2223 = vmatpush1.bf16.msra.mxu0 0
    %2224 = vmatprep.subr.bf16.mxu0 0
    %2225 = vmatpush1.bf16.msra.mxu0 0
    %2226 = vmatprep.subr.bf16.mxu0 0
    %2227 = vmatpush1.bf16.msra.mxu0 0
    %2228 = vmatprep.subr.bf16.mxu0 0
    %2229 = vmatpush1.bf16.msra.mxu0 0
    %2230 = vmatprep.mubr.bf16.mxu0 0
    %2231 = vmatmul.mubr.bf16.gmra.mrb[0].mxu0 %v2076
    %v2232 = vpop.f32.mrb[0].mxu0
    %v2233 = vadd.f32 %v2073, %v2232
    %v2234 = vpop.f32.mrb[0].mxu0
    %v2235 = vpop.f32.mrb[0].mxu0
    %v2236 = vpop.f32.mrb[0].mxu0
    %2237 = vdwg.mxu0
    %2238 = vmatprep.subr.bf16.mxu0 0
    %2239 = vmatpush1.bf16.msra.mxu0 %v2064
    %2240 = vmatprep.subr.bf16.mxu0 0
    %2241 = vmatpush1.bf16.msra.mxu0 0
    %2242 = vmatprep.subr.bf16.mxu0 0
    %2243 = vmatpush1.bf16.msra.mxu0 0
    %2244 = vmatprep.subr.bf16.mxu0 0
    %2245 = vmatpush1.bf16.msra.mxu0 0
    %2246 = vmatprep.subr.bf16.mxu0 0
    %2247 = vmatpush1.bf16.msra.mxu0 0
    %2248 = vmatprep.subr.bf16.mxu0 0
    %2249 = vmatpush1.bf16.msra.mxu0 0
    %2250 = vmatprep.subr.bf16.mxu0 0
    %2251 = vmatpush1.bf16.msra.mxu0 0
    %2252 = vmatprep.subr.bf16.mxu0 0
    %2253 = vmatpush1.bf16.msra.mxu0 0
    %2254 = vmatprep.subr.bf16.mxu0 0
    %2255 = vmatpush1.bf16.msra.mxu0 0
    %2256 = vmatprep.subr.bf16.mxu0 0
    %2257 = vmatpush1.bf16.msra.mxu0 0
    %2258 = vmatprep.subr.bf16.mxu0 0
    %2259 = vmatpush1.bf16.msra.mxu0 0
    %2260 = vmatprep.subr.bf16.mxu0 0
    %2261 = vmatpush1.bf16.msra.mxu0 0
    %2262 = vmatprep.subr.bf16.mxu0 0
    %2263 = vmatpush1.bf16.msra.mxu0 0
    %2264 = vmatprep.subr.bf16.mxu0 0
    %2265 = vmatpush1.bf16.msra.mxu0 0
    %2266 = vmatprep.subr.bf16.mxu0 0
    %2267 = vmatpush1.bf16.msra.mxu0 0
    %2268 = vmatprep.subr.bf16.mxu0 0
    %2269 = vmatpush1.bf16.msra.mxu0 0
    %2270 = vmatprep.mubr.bf16.mxu0 0
    %2271 = vmatmul.mubr.bf16.gmra.mrb[0].mxu0 %v2076
    %v2272 = vpop.f32.mrb[0].mxu0
    %v2273 = vadd.f32 %v2073, %v2272
    %v2274 = vpop.f32.mrb[0].mxu0
    %v2275 = vpop.f32.mrb[0].mxu0
    %v2276 = vpop.f32.mrb[0].mxu0
    %2277 = vdwg.mxu0
    %2278 = vmatprep.subr.bf16.mxu0 0
    %2279 = vmatpush1.bf16.msra.mxu0 %v2065
    %2280 = vmatprep.subr.bf16.mxu0 0
    %2281 = vmatpush1.bf16.msra.mxu0 0
    %2282 = vmatprep.subr.bf16.mxu0 0
    %2283 = vmatpush1.bf16.msra.mxu0 0
    %2284 = vmatprep.subr.bf16.mxu0 0
    %2285 = vmatpush1.bf16.msra.mxu0 0
    %2286 = vmatprep.subr.bf16.mxu0 0
    %2287 = vmatpush1.bf16.msra.mxu0 0
    %2288 = vmatprep.subr.bf16.mxu0 0
    %2289 = vmatpush1.bf16.msra.mxu0 0
    %2290 = vmatprep.subr.bf16.mxu0 0
    %2291 = vmatpush1.bf16.msra.mxu0 0
    %2292 = vmatprep.subr.bf16.mxu0 0
    %2293 = vmatpush1.bf16.msra.mxu0 0
    %2294 = vmatprep.subr.bf16.mxu0 0
    %2295 = vmatpush1.bf16.msra.mxu0 0
    %2296 = vmatprep.subr.bf16.mxu0 0
    %2297 = vmatpush1.bf16.msra.mxu0 0
    %2298 = vmatprep.subr.bf16.mxu0 0
    %2299 = vmatpush1.bf16.msra.mxu0 0
    %2300 = vmatprep.subr.bf16.mxu0 0
    %2301 = vmatpush1.bf16.msra.mxu0 0
    %2302 = vmatprep.subr.bf16.mxu0 0
    %2303 = vmatpush1.bf16.msra.mxu0 0
    %2304 = vmatprep.subr.bf16.mxu0 0
    %2305 = vmatpush1.bf16.msra.mxu0 0
    %2306 = vmatprep.subr.bf16.mxu0 0
    %2307 = vmatpush1.bf16.msra.mxu0 0
    %2308 = vmatprep.subr.bf16.mxu0 0
    %2309 = vmatpush1.bf16.msra.mxu0 0
    %2310 = vmatprep.mubr.bf16.mxu0 0
    %2311 = vmatmul.mubr.bf16.gmra.mrb[0].mxu0 %v2076
    %v2312 = vpop.f32.mrb[0].mxu0
    %v2313 = vadd.f32 %v2073, %v2312
    %v2314 = vpop.f32.mrb[0].mxu0
    %v2315 = vpop.f32.mrb[0].mxu0
    %v2316 = vpop.f32.mrb[0].mxu0
    %2317 = vdwg.mxu0
    %2318 = vmatprep.subr.bf16.mxu0 0
    %2319 = vmatpush1.bf16.msra.mxu0 %v2066
    %2320 = vmatprep.subr.bf16.mxu0 0
    %2321 = vmatpush1.bf16.msra.mxu0 0
    %2322 = vmatprep.subr.bf16.mxu0 0
    %2323 = vmatpush1.bf16.msra.mxu0 0
    %2324 = vmatprep.subr.bf16.mxu0 0
    %2325 = vmatpush1.bf16.msra.mxu0 0
    %2326 = vmatprep.subr.bf16.mxu0 0
    %2327 = vmatpush1.bf16.msra.mxu0 0
    %2328 = vmatprep.subr.bf16.mxu0 0
    %2329 = vmatpush1.bf16.msra.mxu0 0
    %2330 = vmatprep.subr.bf16.mxu0 0
    %2331 = vmatpush1.bf16.msra.mxu0 0
    %2332 = vmatprep.subr.bf16.mxu0 0
    %2333 = vmatpush1.bf16.msra.mxu0 0
    %2334 = vmatprep.subr.bf16.mxu0 0
    %2335 = vmatpush1.bf16.msra.mxu0 0
    %2336 = vmatprep.subr.bf16.mxu0 0
    %2337 = vmatpush1.bf16.msra.mxu0 0
    %2338 = vmatprep.subr.bf16.mxu0 0
    %2339 = vmatpush1.bf16.msra.mxu0 0
    %2340 = vmatprep.subr.bf16.mxu0 0
    %2341 = vmatpush1.bf16.msra.mxu0 0
    %2342 = vmatprep.subr.bf16.mxu0 0
    %2343 = vmatpush1.bf16.msra.mxu0 0
    %2344 = vmatprep.subr.bf16.mxu0 0
    %2345 = vmatpush1.bf16.msra.mxu0 0
    %2346 = vmatprep.subr.bf16.mxu0 0
    %2347 = vmatpush1.bf16.msra.mxu0 0
    %2348 = vmatprep.subr.bf16.mxu0 0
    %2349 = vmatpush1.bf16.msra.mxu0 0
    %2350 = vmatprep.mubr.bf16.mxu0 0
    %2351 = vmatmul.mubr.bf16.gmra.mrb[0].mxu0 %v2076
    %v2352 = vpop.f32.mrb[0].mxu0
    %v2353 = vadd.f32 %v2073, %v2352
    %v2354 = vpop.f32.mrb[0].mxu0
    %v2355 = vpop.f32.mrb[0].mxu0
    %v2356 = vpop.f32.mrb[0].mxu0
    %2357 = vdwg.mxu0
    %2358 = vmatprep.subr.bf16.mxu0 0
    %2359 = vmatpush1.bf16.msra.mxu0 %v2067
    %2360 = vmatprep.subr.bf16.mxu0 0
    %2361 = vmatpush1.bf16.msra.mxu0 0
    %2362 = vmatprep.subr.bf16.mxu0 0
    %2363 = vmatpush1.bf16.msra.mxu0 0
    %2364 = vmatprep.subr.bf16.mxu0 0
    %2365 = vmatpush1.bf16.msra.mxu0 0
    %2366 = vmatprep.subr.bf16.mxu0 0
    %2367 = vmatpush1.bf16.msra.mxu0 0
    %2368 = vmatprep.subr.bf16.mxu0 0
    %2369 = vmatpush1.bf16.msra.mxu0 0
    %2370 = vmatprep.subr.bf16.mxu0 0
    %2371 = vmatpush1.bf16.msra.mxu0 0
    %2372 = vmatprep.subr.bf16.mxu0 0
    %2373 = vmatpush1.bf16.msra.mxu0 0
    %2374 = vmatprep.subr.bf16.mxu0 0
    %2375 = vmatpush1.bf16.msra.mxu0 0
    %2376 = vmatprep.subr.bf16.mxu0 0
    %2377 = vmatpush1.bf16.msra.mxu0 0
    %2378 = vmatprep.subr.bf16.mxu0 0
    %2379 = vmatpush1.bf16.msra.mxu0 0
    %2380 = vmatprep.subr.bf16.mxu0 0
    %2381 = vmatpush1.bf16.msra.mxu0 0
    %2382 = vmatprep.subr.bf16.mxu0 0
    %2383 = vmatpush1.bf16.msra.mxu0 0
    %2384 = vmatprep.subr.bf16.mxu0 0
    %2385 = vmatpush1.bf16.msra.mxu0 0
    %2386 = vmatprep.subr.bf16.mxu0 0
    %2387 = vmatpush1.bf16.msra.mxu0 0
    %2388 = vmatprep.subr.bf16.mxu0 0
    %2389 = vmatpush1.bf16.msra.mxu0 0
    %2390 = vmatprep.mubr.bf16.mxu0 0
    %2391 = vmatmul.mubr.bf16.gmra.mrb[0].mxu0 %v2076
    %v2392 = vpop.f32.mrb[0].mxu0
    %v2393 = vadd.f32 %v2073, %v2392
    %v2394 = vpop.f32.mrb[0].mxu0
    %v2395 = vpop.f32.mrb[0].mxu0
    %v2396 = vpop.f32.mrb[0].mxu0
    %2397 = vdwg.mxu0
    %v2398 = vadd.f32 %v1506, %v2113
    %v2399 = vadd.f32 %v1507, %v2153
    %v2400 = vadd.f32 %v1508, %v2193
    %v2401 = vadd.f32 %v1509, %v2233
    %v2402 = vadd.f32 %v1510, %v2273
    %v2403 = vadd.f32 %v1511, %v2313
    %v2404 = vadd.f32 %v1512, %v2353
    %v2405 = vadd.f32 %v1513, %v2393
    %s2406 = scalar_lea.vmem %s7, 1
    %v2407 = vld [vmem:[%s2406] sm:$0x1]
    %s2408 = scalar_lea.vmem %s8, 1
    %v2409 = vld [vmem:[%s2408] sm:$0x1]
    %v2410 = vsel %vm1076, %v2398, 0.0
    %2411 = vadd.xlane.f32.xlu0 %v2410
    %v2412 = vpop.xlane.xlu0 %2411
    %v2413 = vsel %vm1076, %v2399, 0.0
    %2414 = vadd.xlane.f32.xlu0 %v2413
    %v2415 = vpop.xlane.xlu0 %2414
    %v2416 = vsel %vm1076, %v2400, 0.0
    %2417 = vadd.xlane.f32.xlu0 %v2416
    %v2418 = vpop.xlane.xlu0 %2417
    %v2419 = vsel %vm1076, %v2401, 0.0
    %2420 = vadd.xlane.f32.xlu0 %v2419
    %v2421 = vpop.xlane.xlu0 %2420
    %v2422 = vsel %vm1076, %v2402, 0.0
    %2423 = vadd.xlane.f32.xlu0 %v2422
    %v2424 = vpop.xlane.xlu0 %2423
    %v2425 = vsel %vm1076, %v2403, 0.0
    %2426 = vadd.xlane.f32.xlu0 %v2425
    %v2427 = vpop.xlane.xlu0 %2426
    %v2428 = vsel %vm1076, %v2404, 0.0
    %2429 = vadd.xlane.f32.xlu0 %v2428
    %v2430 = vpop.xlane.xlu0 %2429
    %v2431 = vsel %vm1076, %v2405, 0.0
    %2432 = vadd.xlane.f32.xlu0 %v2431
    %v2433 = vpop.xlane.xlu0 %2432
    %v2434 = vmul.f32 %v2412, 0.03125
    %v2435 = vmul.f32 %v2415, 0.03125
    %v2436 = vmul.f32 %v2418, 0.03125
    %v2437 = vmul.f32 %v2421, 0.03125
    %v2438 = vmul.f32 %v2424, 0.03125
    %v2439 = vmul.f32 %v2427, 0.03125
    %v2440 = vmul.f32 %v2430, 0.03125
    %v2441 = vmul.f32 %v2433, 0.03125
    %v2442 = vsub.f32 %v2398, %v2434
    %v2443 = vsub.f32 %v2399, %v2435
    %v2444 = vsub.f32 %v2400, %v2436
    %v2445 = vsub.f32 %v2401, %v2437
    %v2446 = vsub.f32 %v2402, %v2438
    %v2447 = vsub.f32 %v2403, %v2439
    %v2448 = vsub.f32 %v2404, %v2440
    %v2449 = vsub.f32 %v2405, %v2441
    %v2450 = vmul.f32 %v2442, %v2442
    %v2451 = vmul.f32 %v2443, %v2443
    %v2452 = vmul.f32 %v2444, %v2444
    %v2453 = vmul.f32 %v2445, %v2445
    %v2454 = vmul.f32 %v2446, %v2446
    %v2455 = vmul.f32 %v2447, %v2447
    %v2456 = vmul.f32 %v2448, %v2448
    %v2457 = vmul.f32 %v2449, %v2449
    %v2458 = vsel %vm1076, %v2450, 0.0
    %2459 = vadd.xlane.f32.xlu0 %v2458
    %v2460 = vpop.xlane.xlu0 %2459
    %v2461 = vsel %vm1076, %v2451, 0.0
    %2462 = vadd.xlane.f32.xlu0 %v2461
    %v2463 = vpop.xlane.xlu0 %2462
    %v2464 = vsel %vm1076, %v2452, 0.0
    %2465 = vadd.xlane.f32.xlu0 %v2464
    %v2466 = vpop.xlane.xlu0 %2465
    %v2467 = vsel %vm1076, %v2453, 0.0
    %2468 = vadd.xlane.f32.xlu0 %v2467
    %v2469 = vpop.xlane.xlu0 %2468
    %v2470 = vsel %vm1076, %v2454, 0.0
    %2471 = vadd.xlane.f32.xlu0 %v2470
    %v2472 = vpop.xlane.xlu0 %2471
    %v2473 = vsel %vm1076, %v2455, 0.0
    %2474 = vadd.xlane.f32.xlu0 %v2473
    %v2475 = vpop.xlane.xlu0 %2474
    %v2476 = vsel %vm1076, %v2456, 0.0
    %2477 = vadd.xlane.f32.xlu0 %v2476
    %v2478 = vpop.xlane.xlu0 %2477
    %v2479 = vsel %vm1076, %v2457, 0.0
    %2480 = vadd.xlane.f32.xlu0 %v2479
    %v2481 = vpop.xlane.xlu0 %2480
    %v2482 = vmul.f32 %v2460, 0.03125
    %v2483 = vmul.f32 %v2463, 0.03125
    %v2484 = vmul.f32 %v2466, 0.03125
    %v2485 = vmul.f32 %v2469, 0.03125
    %v2486 = vmul.f32 %v2472, 0.03125
    %v2487 = vmul.f32 %v2475, 0.03125
    %v2488 = vmul.f32 %v2478, 0.03125
    %v2489 = vmul.f32 %v2481, 0.03125
    %v2490 = vadd.f32 %v2482, 1e-05
    %v2491 = vadd.f32 %v2483, 1e-05
    %v2492 = vadd.f32 %v2484, 1e-05
    %v2493 = vadd.f32 %v2485, 1e-05
    %v2494 = vadd.f32 %v2486, 1e-05
    %v2495 = vadd.f32 %v2487, 1e-05
    %v2496 = vadd.f32 %v2488, 1e-05
    %v2497 = vadd.f32 %v2489, 1e-05
    %v2498 = vrsqrt.pop %v2490
    %v2499 = vrsqrt.pop %v2491
    %v2500 = vrsqrt.pop %v2492
    %v2501 = vrsqrt.pop %v2493
    %v2502 = vrsqrt.pop %v2494
    %v2503 = vrsqrt.pop %v2495
    %v2504 = vrsqrt.pop %v2496
    %v2505 = vrsqrt.pop %v2497
    %v2506 = vmul.f32 %v2442, %v2498
    %v2507 = vmul.f32 %v2443, %v2499
    %v2508 = vmul.f32 %v2444, %v2500
    %v2509 = vmul.f32 %v2445, %v2501
    %v2510 = vmul.f32 %v2446, %v2502
    %v2511 = vmul.f32 %v2447, %v2503
    %v2512 = vmul.f32 %v2448, %v2504
    %v2513 = vmul.f32 %v2449, %v2505
    %v2515 = vlaneseq
    %v2516 = vshrl.u32 %v2515, 7
    %v2517 = vsub.s32 0, %v2516
    %v2518 = vrot.slane %v2407, %v2517
    %v2520 = vmul.f32 %v2506, %v2518
    %v2521 = vmul.f32 %v2507, %v2518
    %v2522 = vmul.f32 %v2508, %v2518
    %v2523 = vmul.f32 %v2509, %v2518
    %v2524 = vmul.f32 %v2510, %v2518
    %v2525 = vmul.f32 %v2511, %v2518
    %v2526 = vmul.f32 %v2512, %v2518
    %v2527 = vmul.f32 %v2513, %v2518
    %v2529 = vlaneseq
    %v2530 = vshrl.u32 %v2529, 7
    %v2531 = vsub.s32 0, %v2530
    %v2532 = vrot.slane %v2409, %v2531
    %v2534 = vadd.f32 %v2520, %v2532
    %v2535 = vadd.f32 %v2521, %v2532
    %v2536 = vadd.f32 %v2522, %v2532
    %v2537 = vadd.f32 %v2523, %v2532
    %v2538 = vadd.f32 %v2524, %v2532
    %v2539 = vadd.f32 %v2525, %v2532
    %v2540 = vadd.f32 %v2526, %v2532
    %v2541 = vadd.f32 %v2527, %v2532
    %v2542 = vpack.c.bf16 %v2535, %v2534
    %v2543 = vpack.c.bf16 %v2537, %v2536
    %v2544 = vpack.c.bf16 %v2539, %v2538
    %v2545 = vpack.c.bf16 %v2541, %v2540
    %s2546 = scalar_lea.vmem %s9, 16
    %v2547 = vld [vmem:[%s2546] sm:$0xf]
    %v2548 = vld [vmem:[%s2546 + $0x4] sm:$0xf]
    %v2549 = vld [vmem:[%s2546 + $0x8] sm:$0xf]
    %v2550 = vld [vmem:[%s2546 + $0xc] sm:$0xf]
    %s2551 = scalar_lea.vmem %s10, 1
    %v2552 = vld [vmem:[%s2551] sm:$0x1]
    %v2554 = vlaneseq
    %v2555 = vshrl.u32 %v2554, 7
    %v2556 = vsub.s32 0, %v2555
    %v2557 = vrot.slane %v2552, %v2556
    %v2563 = vunpack.c.l.b16 %v2547
    %v2564 = vunpack.c.l.b16 %v2548
    %v2565 = vunpack.c.l.b16 %v2549
    %v2566 = vunpack.c.l.b16 %v2550
    %v2567 = vpack.c.b16 %v2564, %v2563
    %v2568 = vpack.c.b16 %v2566, %v2565
    %v2572 = vsel %vm1076, %v2542, 0
    %v2575 = vsel %vm1076, %v2543, 0
    %v2578 = vsel %vm1076, %v2544, 0
    %v2581 = vsel %vm1076, %v2545, 0
    %2583 = vmatprep.subr.bf16.mxu0 0
    %2584 = vmatpush1.bf16.msra.mxu0 %v2567
    %2585 = vmatprep.subr.bf16.mxu0 0
    %2586 = vmatpush1.bf16.msra.mxu0 %v2568
    %2587 = vmatprep.subr.bf16.mxu0 0
    %2588 = vmatpush1.bf16.msra.mxu0 0
    %2589 = vmatprep.subr.bf16.mxu0 0
    %2590 = vmatpush1.bf16.msra.mxu0 0
    %2591 = vmatprep.subr.bf16.mxu0 0
    %2592 = vmatpush1.bf16.msra.mxu0 0
    %2593 = vmatprep.subr.bf16.mxu0 0
    %2594 = vmatpush1.bf16.msra.mxu0 0
    %2595 = vmatprep.subr.bf16.mxu0 0
    %2596 = vmatpush1.bf16.msra.mxu0 0
    %2597 = vmatprep.subr.bf16.mxu0 0
    %2598 = vmatpush1.bf16.msra.mxu0 0
    %2599 = vmatprep.subr.bf16.mxu0 0
    %2600 = vmatpush1.bf16.msra.mxu0 0
    %2601 = vmatprep.subr.bf16.mxu0 0
    %2602 = vmatpush1.bf16.msra.mxu0 0
    %2603 = vmatprep.subr.bf16.mxu0 0
    %2604 = vmatpush1.bf16.msra.mxu0 0
    %2605 = vmatprep.subr.bf16.mxu0 0
    %2606 = vmatpush1.bf16.msra.mxu0 0
    %2607 = vmatprep.subr.bf16.mxu0 0
    %2608 = vmatpush1.bf16.msra.mxu0 0
    %2609 = vmatprep.subr.bf16.mxu0 0
    %2610 = vmatpush1.bf16.msra.mxu0 0
    %2611 = vmatprep.subr.bf16.mxu0 0
    %2612 = vmatpush1.bf16.msra.mxu0 0
    %2613 = vmatprep.subr.bf16.mxu0 0
    %2614 = vmatpush1.bf16.msra.mxu0 0
    %2615 = vmatprep.mubr.bf16.mxu0 0
    %2616 = vmatmul.mubr.bf16.gmra.mrb[0].mxu0 %v2572
    %v2617 = vpop.f32.mrb[0].mxu0
    %v2618 = vadd.f32 %v2557, %v2617
    %v2619 = vpop.f32.mrb[0].mxu0
    %v2620 = vpop.f32.mrb[0].mxu0
    %v2621 = vadd.f32 %v2557, %v2620
    %v2622 = vpop.f32.mrb[0].mxu0
    %2623 = vmatprep.mubr.bf16.mxu0 0
    %2624 = vmatmul.mubr.bf16.gmra.mrb[0].mxu0 %v2575
    %v2625 = vpop.f32.mrb[0].mxu0
    %v2626 = vadd.f32 %v2557, %v2625
    %v2627 = vpop.f32.mrb[0].mxu0
    %v2628 = vpop.f32.mrb[0].mxu0
    %v2629 = vadd.f32 %v2557, %v2628
    %v2630 = vpop.f32.mrb[0].mxu0
    %2631 = vmatprep.mubr.bf16.mxu0 0
    %2632 = vmatmul.mubr.bf16.gmra.mrb[0].mxu0 %v2578
    %v2633 = vpop.f32.mrb[0].mxu0
    %v2634 = vadd.f32 %v2557, %v2633
    %v2635 = vpop.f32.mrb[0].mxu0
    %v2636 = vpop.f32.mrb[0].mxu0
    %v2637 = vadd.f32 %v2557, %v2636
    %v2638 = vpop.f32.mrb[0].mxu0
    %2639 = vmatprep.mubr.bf16.mxu0 0
    %2640 = vmatmul.mubr.bf16.gmra.mrb[0].mxu0 %v2581
    %v2641 = vpop.f32.mrb[0].mxu0
    %v2642 = vadd.f32 %v2557, %v2641
    %v2643 = vpop.f32.mrb[0].mxu0
    %v2644 = vpop.f32.mrb[0].mxu0
    %v2645 = vadd.f32 %v2557, %v2644
    %v2646 = vpop.f32.mrb[0].mxu0
    %2647 = vdwg.mxu0
    %v2648 = vmul.f32 %v2618, 0.5
    %v2649 = vmul.f32 %v2621, 0.5
    %v2650 = vmul.f32 %v2626, 0.5
    %v2651 = vmul.f32 %v2629, 0.5
    %v2652 = vmul.f32 %v2634, 0.5
    %v2653 = vmul.f32 %v2637, 0.5
    %v2654 = vmul.f32 %v2642, 0.5
    %v2655 = vmul.f32 %v2645, 0.5
    %v2656 = vmul.f32 %v2618, 0.044715
    %v2657 = vmul.f32 %v2621, 0.044715
    %v2658 = vmul.f32 %v2626, 0.044715
    %v2659 = vmul.f32 %v2629, 0.044715
    %v2660 = vmul.f32 %v2634, 0.044715
    %v2661 = vmul.f32 %v2637, 0.044715
    %v2662 = vmul.f32 %v2642, 0.044715
    %v2663 = vmul.f32 %v2645, 0.044715
    %v2664 = vmul.f32 %v2656, %v2618
    %v2665 = vmul.f32 %v2657, %v2621
    %v2666 = vmul.f32 %v2658, %v2626
    %v2667 = vmul.f32 %v2659, %v2629
    %v2668 = vmul.f32 %v2660, %v2634
    %v2669 = vmul.f32 %v2661, %v2637
    %v2670 = vmul.f32 %v2662, %v2642
    %v2671 = vmul.f32 %v2663, %v2645
    %v2672 = vmul.f32 %v2664, %v2618
    %v2673 = vmul.f32 %v2665, %v2621
    %v2674 = vmul.f32 %v2666, %v2626
    %v2675 = vmul.f32 %v2667, %v2629
    %v2676 = vmul.f32 %v2668, %v2634
    %v2677 = vmul.f32 %v2669, %v2637
    %v2678 = vmul.f32 %v2670, %v2642
    %v2679 = vmul.f32 %v2671, %v2645
    %v2680 = vadd.f32 %v2618, %v2672
    %v2681 = vadd.f32 %v2621, %v2673
    %v2682 = vadd.f32 %v2626, %v2674
    %v2683 = vadd.f32 %v2629, %v2675
    %v2684 = vadd.f32 %v2634, %v2676
    %v2685 = vadd.f32 %v2637, %v2677
    %v2686 = vadd.f32 %v2642, %v2678
    %v2687 = vadd.f32 %v2645, %v2679
    %v2688 = vmul.f32 %v2680, 0.7978846
    %v2689 = vmul.f32 %v2681, 0.7978846
    %v2690 = vmul.f32 %v2682, 0.7978846
    %v2691 = vmul.f32 %v2683, 0.7978846
    %v2692 = vmul.f32 %v2684, 0.7978846
    %v2693 = vmul.f32 %v2685, 0.7978846
    %v2694 = vmul.f32 %v2686, 0.7978846
    %v2695 = vmul.f32 %v2687, 0.7978846
    %v2696 = vtanh.pop %v2688
    %v2697 = vtanh.pop %v2689
    %v2698 = vtanh.pop %v2690
    %v2699 = vtanh.pop %v2691
    %v2700 = vtanh.pop %v2692
    %v2701 = vtanh.pop %v2693
    %v2702 = vtanh.pop %v2694
    %v2703 = vtanh.pop %v2695
    %v2704 = vadd.f32 %v2696, 1.0
    %v2705 = vadd.f32 %v2697, 1.0
    %v2706 = vadd.f32 %v2698, 1.0
    %v2707 = vadd.f32 %v2699, 1.0
    %v2708 = vadd.f32 %v2700, 1.0
    %v2709 = vadd.f32 %v2701, 1.0
    %v2710 = vadd.f32 %v2702, 1.0
    %v2711 = vadd.f32 %v2703, 1.0
    %v2712 = vmul.f32 %v2648, %v2704
    %v2713 = vmul.f32 %v2649, %v2705
    %v2714 = vmul.f32 %v2650, %v2706
    %v2715 = vmul.f32 %v2651, %v2707
    %v2716 = vmul.f32 %v2652, %v2708
    %v2717 = vmul.f32 %v2653, %v2709
    %v2718 = vmul.f32 %v2654, %v2710
    %v2719 = vmul.f32 %v2655, %v2711
    %v2720 = vpack.c.bf16 %v2713, %v2712
    %v2721 = vpack.c.bf16 %v2715, %v2714
    %v2722 = vpack.c.bf16 %v2717, %v2716
    %v2723 = vpack.c.bf16 %v2719, %v2718
    %s2724 = scalar_lea.vmem %s11, 32
    %v2725 = vld [vmem:[%s2724] sm:$0xf]
    %v2726 = vld [vmem:[%s2724 + $0x4] sm:$0xf]
    %v2727 = vld [vmem:[%s2724 + $0x8] sm:$0xf]
    %v2728 = vld [vmem:[%s2724 + $0xc] sm:$0xf]
    %v2729 = vld [vmem:[%s2724 + $0x10] sm:$0xf]
    %v2730 = vld [vmem:[%s2724 + $0x14] sm:$0xf]
    %v2731 = vld [vmem:[%s2724 + $0x18] sm:$0xf]
    %v2732 = vld [vmem:[%s2724 + $0x1c] sm:$0xf]
    %s2733 = scalar_lea.vmem %s12, 1
    %v2734 = vld [vmem:[%s2733] sm:$0x1]
    %v2736 = vlaneseq
    %v2737 = vshrl.u32 %v2736, 7
    %v2738 = vsub.s32 0, %v2737
    %v2739 = vrot.slane %v2734, %v2738
    %v2749 = vunpack.c.l.b16 %v2725
    %v2750 = vunpack.c.l.b16 %v2726
    %v2751 = vunpack.c.l.b16 %v2727
    %v2752 = vunpack.c.l.b16 %v2728
    %v2753 = vunpack.c.l.b16 %v2729
    %v2754 = vunpack.c.l.b16 %v2730
    %v2755 = vunpack.c.l.b16 %v2731
    %v2756 = vunpack.c.l.b16 %v2732
    %v2757 = vpack.c.b16 %v2750, %v2749
    %v2758 = vpack.c.b16 %v2752, %v2751
    %v2759 = vpack.c.b16 %v2754, %v2753
    %v2760 = vpack.c.b16 %v2756, %v2755
    %v2766 = vsel %vm1428, %v2720, 0
    %v2769 = vsel %vm1428, %v2721, 0
    %v2772 = vsel %vm1428, %v2722, 0
    %v2775 = vsel %vm1428, %v2723, 0
    %2777 = vmatprep.subr.bf16.mxu0 0
    %2778 = vmatpush1.bf16.msra.mxu0 %v2757
    %2779 = vmatprep.subr.bf16.mxu0 0
    %2780 = vmatpush1.bf16.msra.mxu0 %v2758
    %2781 = vmatprep.subr.bf16.mxu0 0
    %2782 = vmatpush1.bf16.msra.mxu0 %v2759
    %2783 = vmatprep.subr.bf16.mxu0 0
    %2784 = vmatpush1.bf16.msra.mxu0 %v2760
    %2785 = vmatprep.subr.bf16.mxu0 0
    %2786 = vmatpush1.bf16.msra.mxu0 0
    %2787 = vmatprep.subr.bf16.mxu0 0
    %2788 = vmatpush1.bf16.msra.mxu0 0
    %2789 = vmatprep.subr.bf16.mxu0 0
    %2790 = vmatpush1.bf16.msra.mxu0 0
    %2791 = vmatprep.subr.bf16.mxu0 0
    %2792 = vmatpush1.bf16.msra.mxu0 0
    %2793 = vmatprep.subr.bf16.mxu0 0
    %2794 = vmatpush1.bf16.msra.mxu0 0
    %2795 = vmatprep.subr.bf16.mxu0 0
    %2796 = vmatpush1.bf16.msra.mxu0 0
    %2797 = vmatprep.subr.bf16.mxu0 0
    %2798 = vmatpush1.bf16.msra.mxu0 0
    %2799 = vmatprep.subr.bf16.mxu0 0
    %2800 = vmatpush1.bf16.msra.mxu0 0
    %2801 = vmatprep.subr.bf16.mxu0 0
    %2802 = vmatpush1.bf16.msra.mxu0 0
    %2803 = vmatprep.subr.bf16.mxu0 0
    %2804 = vmatpush1.bf16.msra.mxu0 0
    %2805 = vmatprep.subr.bf16.mxu0 0
    %2806 = vmatpush1.bf16.msra.mxu0 0
    %2807 = vmatprep.subr.bf16.mxu0 0
    %2808 = vmatpush1.bf16.msra.mxu0 0
    %2809 = vmatprep.mubr.bf16.mxu0 0
    %2810 = vmatmul.mubr.bf16.gmra.mrb[0].mxu0 %v2766
    %v2811 = vpop.f32.mrb[0].mxu0
    %v2812 = vadd.f32 %v2739, %v2811
    %v2813 = vpop.f32.mrb[0].mxu0
    %v2814 = vpop.f32.mrb[0].mxu0
    %v2815 = vadd.f32 %v2739, %v2814
    %v2816 = vpop.f32.mrb[0].mxu0
    %2817 = vmatprep.mubr.bf16.mxu0 0
    %2818 = vmatmul.mubr.bf16.gmra.mrb[0].mxu0 %v2769
    %v2819 = vpop.f32.mrb[0].mxu0
    %v2820 = vadd.f32 %v2739, %v2819
    %v2821 = vpop.f32.mrb[0].mxu0
    %v2822 = vpop.f32.mrb[0].mxu0
    %v2823 = vadd.f32 %v2739, %v2822
    %v2824 = vpop.f32.mrb[0].mxu0
    %2825 = vmatprep.mubr.bf16.mxu0 0
    %2826 = vmatmul.mubr.bf16.gmra.mrb[0].mxu0 %v2772
    %v2827 = vpop.f32.mrb[0].mxu0
    %v2828 = vadd.f32 %v2739, %v2827
    %v2829 = vpop.f32.mrb[0].mxu0
    %v2830 = vpop.f32.mrb[0].mxu0
    %v2831 = vadd.f32 %v2739, %v2830
    %v2832 = vpop.f32.mrb[0].mxu0
    %2833 = vmatprep.mubr.bf16.mxu0 0
    %2834 = vmatmul.mubr.bf16.gmra.mrb[0].mxu0 %v2775
    %v2835 = vpop.f32.mrb[0].mxu0
    %v2836 = vadd.f32 %v2739, %v2835
    %v2837 = vpop.f32.mrb[0].mxu0
    %v2838 = vpop.f32.mrb[0].mxu0
    %v2839 = vadd.f32 %v2739, %v2838
    %v2840 = vpop.f32.mrb[0].mxu0
    %2841 = vdwg.mxu0
    %v2842 = vadd.f32 %v2398, %v2812
    %v2843 = vadd.f32 %v2399, %v2815
    %v2844 = vadd.f32 %v2400, %v2820
    %v2845 = vadd.f32 %v2401, %v2823
    %v2846 = vadd.f32 %v2402, %v2828
    %v2847 = vadd.f32 %v2403, %v2831
    %v2848 = vadd.f32 %v2404, %v2836
    %v2849 = vadd.f32 %v2405, %v2839
    %v2850 = vld [vmem:[%s13] sm:$0x1]
    %v2851 = vld [vmem:[%s14] sm:$0x1]
    %v2852 = vsel %vm1076, %v2842, 0.0
    %2853 = vadd.xlane.f32.xlu0 %v2852
    %v2854 = vpop.xlane.xlu0 %2853
    %v2855 = vsel %vm1076, %v2843, 0.0
    %2856 = vadd.xlane.f32.xlu0 %v2855
    %v2857 = vpop.xlane.xlu0 %2856
    %v2858 = vsel %vm1076, %v2844, 0.0
    %2859 = vadd.xlane.f32.xlu0 %v2858
    %v2860 = vpop.xlane.xlu0 %2859
    %v2861 = vsel %vm1076, %v2845, 0.0
    %2862 = vadd.xlane.f32.xlu0 %v2861
    %v2863 = vpop.xlane.xlu0 %2862
    %v2864 = vsel %vm1076, %v2846, 0.0
    %2865 = vadd.xlane.f32.xlu0 %v2864
    %v2866 = vpop.xlane.xlu0 %2865
    %v2867 = vsel %vm1076, %v2847, 0.0
    %2868 = vadd.xlane.f32.xlu0 %v2867
    %v2869 = vpop.xlane.xlu0 %2868
    %v2870 = vsel %vm1076, %v2848, 0.0
    %2871 = vadd.xlane.f32.xlu0 %v2870
    %v2872 = vpop.xlane.xlu0 %2871
    %v2873 = vsel %vm1076, %v2849, 0.0
    %2874 = vadd.xlane.f32.xlu0 %v2873
    %v2875 = vpop.xlane.xlu0 %2874
    %v2876 = vmul.f32 %v2854, 0.03125
    %v2877 = vmul.f32 %v2857, 0.03125
    %v2878 = vmul.f32 %v2860, 0.03125
    %v2879 = vmul.f32 %v2863, 0.03125
    %v2880 = vmul.f32 %v2866, 0.03125
    %v2881 = vmul.f32 %v2869, 0.03125
    %v2882 = vmul.f32 %v2872, 0.03125
    %v2883 = vmul.f32 %v2875, 0.03125
    %v2884 = vsub.f32 %v2842, %v2876
    %v2885 = vsub.f32 %v2843, %v2877
    %v2886 = vsub.f32 %v2844, %v2878
    %v2887 = vsub.f32 %v2845, %v2879
    %v2888 = vsub.f32 %v2846, %v2880
    %v2889 = vsub.f32 %v2847, %v2881
    %v2890 = vsub.f32 %v2848, %v2882
    %v2891 = vsub.f32 %v2849, %v2883
    %v2892 = vmul.f32 %v2884, %v2884
    %v2893 = vmul.f32 %v2885, %v2885
    %v2894 = vmul.f32 %v2886, %v2886
    %v2895 = vmul.f32 %v2887, %v2887
    %v2896 = vmul.f32 %v2888, %v2888
    %v2897 = vmul.f32 %v2889, %v2889
    %v2898 = vmul.f32 %v2890, %v2890
    %v2899 = vmul.f32 %v2891, %v2891
    %v2900 = vsel %vm1076, %v2892, 0.0
    %2901 = vadd.xlane.f32.xlu0 %v2900
    %v2902 = vpop.xlane.xlu0 %2901
    %v2903 = vsel %vm1076, %v2893, 0.0
    %2904 = vadd.xlane.f32.xlu0 %v2903
    %v2905 = vpop.xlane.xlu0 %2904
    %v2906 = vsel %vm1076, %v2894, 0.0
    %2907 = vadd.xlane.f32.xlu0 %v2906
    %v2908 = vpop.xlane.xlu0 %2907
    %v2909 = vsel %vm1076, %v2895, 0.0
    %2910 = vadd.xlane.f32.xlu0 %v2909
    %v2911 = vpop.xlane.xlu0 %2910
    %v2912 = vsel %vm1076, %v2896, 0.0
    %2913 = vadd.xlane.f32.xlu0 %v2912
    %v2914 = vpop.xlane.xlu0 %2913
    %v2915 = vsel %vm1076, %v2897, 0.0
    %2916 = vadd.xlane.f32.xlu0 %v2915
    %v2917 = vpop.xlane.xlu0 %2916
    %v2918 = vsel %vm1076, %v2898, 0.0
    %2919 = vadd.xlane.f32.xlu0 %v2918
    %v2920 = vpop.xlane.xlu0 %2919
    %v2921 = vsel %vm1076, %v2899, 0.0
    %2922 = vadd.xlane.f32.xlu0 %v2921
    %v2923 = vpop.xlane.xlu0 %2922
    %v2924 = vmul.f32 %v2902, 0.03125
    %v2925 = vmul.f32 %v2905, 0.03125
    %v2926 = vmul.f32 %v2908, 0.03125
    %v2927 = vmul.f32 %v2911, 0.03125
    %v2928 = vmul.f32 %v2914, 0.03125
    %v2929 = vmul.f32 %v2917, 0.03125
    %v2930 = vmul.f32 %v2920, 0.03125
    %v2931 = vmul.f32 %v2923, 0.03125
    %v2932 = vadd.f32 %v2924, 1e-05
    %v2933 = vadd.f32 %v2925, 1e-05
    %v2934 = vadd.f32 %v2926, 1e-05
    %v2935 = vadd.f32 %v2927, 1e-05
    %v2936 = vadd.f32 %v2928, 1e-05
    %v2937 = vadd.f32 %v2929, 1e-05
    %v2938 = vadd.f32 %v2930, 1e-05
    %v2939 = vadd.f32 %v2931, 1e-05
    %v2940 = vrsqrt.pop %v2932
    %v2941 = vrsqrt.pop %v2933
    %v2942 = vrsqrt.pop %v2934
    %v2943 = vrsqrt.pop %v2935
    %v2944 = vrsqrt.pop %v2936
    %v2945 = vrsqrt.pop %v2937
    %v2946 = vrsqrt.pop %v2938
    %v2947 = vrsqrt.pop %v2939
    %v2948 = vmul.f32 %v2884, %v2940
    %v2949 = vmul.f32 %v2885, %v2941
    %v2950 = vmul.f32 %v2886, %v2942
    %v2951 = vmul.f32 %v2887, %v2943
    %v2952 = vmul.f32 %v2888, %v2944
    %v2953 = vmul.f32 %v2889, %v2945
    %v2954 = vmul.f32 %v2890, %v2946
    %v2955 = vmul.f32 %v2891, %v2947
    %v2957 = vlaneseq
    %v2958 = vshrl.u32 %v2957, 7
    %v2959 = vsub.s32 0, %v2958
    %v2960 = vrot.slane %v2850, %v2959
    %v2962 = vmul.f32 %v2948, %v2960
    %v2963 = vmul.f32 %v2949, %v2960
    %v2964 = vmul.f32 %v2950, %v2960
    %v2965 = vmul.f32 %v2951, %v2960
    %v2966 = vmul.f32 %v2952, %v2960
    %v2967 = vmul.f32 %v2953, %v2960
    %v2968 = vmul.f32 %v2954, %v2960
    %v2969 = vmul.f32 %v2955, %v2960
    %v2971 = vlaneseq
    %v2972 = vshrl.u32 %v2971, 7
    %v2973 = vsub.s32 0, %v2972
    %v2974 = vrot.slane %v2851, %v2973
    %v2976 = vadd.f32 %v2962, %v2974
    %v2977 = vadd.f32 %v2963, %v2974
    %v2978 = vadd.f32 %v2964, %v2974
    %v2979 = vadd.f32 %v2965, %v2974
    %v2980 = vadd.f32 %v2966, %v2974
    %v2981 = vadd.f32 %v2967, %v2974
    %v2982 = vadd.f32 %v2968, %v2974
    %v2983 = vadd.f32 %v2969, %v2974
    %v2984 = vsel %vm1076, %v2976, 0.0
    %v2985 = vrot.slane %v2984, 4
    %v2986 = vadd.f32 %v2984, %v2985
    %v2987 = vrot.slane %v2986, 2
    %v2988 = vadd.f32 %v2986, %v2987
    %v2989 = vrot.slane %v2988, 1
    %v2990 = vadd.f32 %v2988, %v2989
    %v2991 = vsel %vm1076, %v2977, 0.0
    %v2992 = vrot.slane %v2991, 4
    %v2993 = vadd.f32 %v2991, %v2992
    %v2994 = vrot.slane %v2993, 2
    %v2995 = vadd.f32 %v2993, %v2994
    %v2996 = vrot.slane %v2995, 1
    %v2997 = vadd.f32 %v2995, %v2996
    %v2998 = vsel %vm1076, %v2978, 0.0
    %v2999 = vrot.slane %v2998, 4
    %v3000 = vadd.f32 %v2998, %v2999
    %v3001 = vrot.slane %v3000, 2
    %v3002 = vadd.f32 %v3000, %v3001
    %v3003 = vrot.slane %v3002, 1
    %v3004 = vadd.f32 %v3002, %v3003
    %v3005 = vsel %vm1076, %v2979, 0.0
    %v3006 = vrot.slane %v3005, 4
    %v3007 = vadd.f32 %v3005, %v3006
    %v3008 = vrot.slane %v3007, 2
    %v3009 = vadd.f32 %v3007, %v3008
    %v3010 = vrot.slane %v3009, 1
    %v3011 = vadd.f32 %v3009, %v3010
    %v3012 = vsel %vm1076, %v2980, 0.0
    %v3013 = vrot.slane %v3012, 4
    %v3014 = vadd.f32 %v3012, %v3013
    %v3015 = vrot.slane %v3014, 2
    %v3016 = vadd.f32 %v3014, %v3015
    %v3017 = vrot.slane %v3016, 1
    %v3018 = vadd.f32 %v3016, %v3017
    %v3019 = vsel %vm1076, %v2981, 0.0
    %v3020 = vrot.slane %v3019, 4
    %v3021 = vadd.f32 %v3019, %v3020
    %v3022 = vrot.slane %v3021, 2
    %v3023 = vadd.f32 %v3021, %v3022
    %v3024 = vrot.slane %v3023, 1
    %v3025 = vadd.f32 %v3023, %v3024
    %v3026 = vsel %vm1076, %v2982, 0.0
    %v3027 = vrot.slane %v3026, 4
    %v3028 = vadd.f32 %v3026, %v3027
    %v3029 = vrot.slane %v3028, 2
    %v3030 = vadd.f32 %v3028, %v3029
    %v3031 = vrot.slane %v3030, 1
    %v3032 = vadd.f32 %v3030, %v3031
    %v3033 = vsel %vm1076, %v2983, 0.0
    %v3034 = vrot.slane %v3033, 4
    %v3035 = vadd.f32 %v3033, %v3034
    %v3036 = vrot.slane %v3035, 2
    %v3037 = vadd.f32 %v3035, %v3036
    %v3038 = vrot.slane %v3037, 1
    %v3039 = vadd.f32 %v3037, %v3038
    %v3040 = vmul.f32 %v2990, 0.125
    %v3041 = vmul.f32 %v2997, 0.125
    %v3042 = vmul.f32 %v3004, 0.125
    %v3043 = vmul.f32 %v3011, 0.125
    %v3044 = vmul.f32 %v3018, 0.125
    %v3045 = vmul.f32 %v3025, 0.125
    %v3046 = vmul.f32 %v3032, 0.125
    %v3047 = vmul.f32 %v3039, 0.125
    %v3048 = vpack.c.bf16 %v3040, %v3040
    %v3049 = vpack.c.bf16 %v3041, %v3041
    %v3050 = vpack.c.bf16 %v3042, %v3042
    %v3051 = vpack.c.bf16 %v3043, %v3043
    %v3052 = vpack.c.bf16 %v3044, %v3044
    %v3053 = vpack.c.bf16 %v3045, %v3045
    %v3054 = vpack.c.bf16 %v3046, %v3046
    %v3055 = vpack.c.bf16 %v3047, %v3047
    %v3056 = vld [vmem:[%s15] sm:$0xf]
    %v3057 = vld [vmem:[%s15 + $0x4] sm:$0xf]
    %v3058 = vld [vmem:[%s15 + $0x8] sm:$0xf]
    %v3059 = vld [vmem:[%s15 + $0xc] sm:$0xf]
    %v3060 = vld [vmem:[%s16] sm:$0x1]
    %v3062 = vlaneseq
    %v3063 = vshrl.u32 %v3062, 7
    %v3064 = vsub.s32 0, %v3063
    %v3065 = vrot.slane %v3060, %v3064
    %v3075 = vunpack.c.l.b16 %v3048
    %v3076 = vunpack.c.l.b16 %v3049
    %v3077 = vunpack.c.l.b16 %v3050
    %v3078 = vunpack.c.l.b16 %v3051
    %v3079 = vunpack.c.l.b16 %v3052
    %v3080 = vunpack.c.l.b16 %v3053
    %v3081 = vunpack.c.l.b16 %v3054
    %v3082 = vunpack.c.l.b16 %v3055
    %vm3083 = vcmask 1041409
    %v3084 = vsel %vm3083, %v3076, %v3075
    %vm3085 = vcmask 1042434
    %v3086 = vsel %vm3085, %v3077, %v3084
    %vm3087 = vcmask 1043459
    %v3088 = vsel %vm3087, %v3078, %v3086
    %vm3089 = vcmask 1044484
    %v3090 = vsel %vm3089, %v3079, %v3088
    %vm3091 = vcmask 1045509
    %v3092 = vsel %vm3091, %v3080, %v3090
    %vm3093 = vcmask 1046534
    %v3094 = vsel %vm3093, %v3081, %v3092
    %vm3095 = vcmask 1047559
    %v3096 = vsel %vm3095, %v3082, %v3094
    %v3097 = vpack.c.b16 %v3096, %v3096
    %v3102 = vunpack.c.l.b16 %v3056
    %v3103 = vunpack.c.l.b16 %v3057
    %v3104 = vunpack.c.l.b16 %v3058
    %v3105 = vunpack.c.l.b16 %v3059
    %v3106 = vpack.c.b16 %v3103, %v3102
    %v3107 = vpack.c.b16 %v3105, %v3104
    %v3111 = vsel %vm1076, %v3097, 0
    %3113 = vmatprep.subr.bf16.mxu0 0
    %3114 = vmatpush1.bf16.msra.mxu0 %v3106
    %3115 = vmatprep.subr.bf16.mxu0 0
    %3116 = vmatpush1.bf16.msra.mxu0 %v3107
    %3117 = vmatprep.subr.bf16.mxu0 0
    %3118 = vmatpush1.bf16.msra.mxu0 0
    %3119 = vmatprep.subr.bf16.mxu0 0
    %3120 = vmatpush1.bf16.msra.mxu0 0
    %3121 = vmatprep.subr.bf16.mxu0 0
    %3122 = vmatpush1.bf16.msra.mxu0 0
    %3123 = vmatprep.subr.bf16.mxu0 0
    %3124 = vmatpush1.bf16.msra.mxu0 0
    %3125 = vmatprep.subr.bf16.mxu0 0
    %3126 = vmatpush1.bf16.msra.mxu0 0
    %3127 = vmatprep.subr.bf16.mxu0 0
    %3128 = vmatpush1.bf16.msra.mxu0 0
    %3129 = vmatprep.subr.bf16.mxu0 0
    %3130 = vmatpush1.bf16.msra.mxu0 0
    %3131 = vmatprep.subr.bf16.mxu0 0
    %3132 = vmatpush1.bf16.msra.mxu0 0
    %3133 = vmatprep.subr.bf16.mxu0 0
    %3134 = vmatpush1.bf16.msra.mxu0 0
    %3135 = vmatprep.subr.bf16.mxu0 0
    %3136 = vmatpush1.bf16.msra.mxu0 0
    %3137 = vmatprep.subr.bf16.mxu0 0
    %3138 = vmatpush1.bf16.msra.mxu0 0
    %3139 = vmatprep.subr.bf16.mxu0 0
    %3140 = vmatpush1.bf16.msra.mxu0 0
    %3141 = vmatprep.subr.bf16.mxu0 0
    %3142 = vmatpush1.bf16.msra.mxu0 0
    %3143 = vmatprep.subr.bf16.mxu0 0
    %3144 = vmatpush1.bf16.msra.mxu0 0
    %3145 = vmatprep.mubr.bf16.mxu0 0
    %3146 = vmatmul.mubr.bf16.gmra.mrb[0].mxu0 %v3111
    %v3147 = vpop.f32.mrb[0].mxu0
    %v3148 = vadd.f32 %v3065, %v3147
    %v3149 = vpop.f32.mrb[0].mxu0
    %v3150 = vpop.f32.mrb[0].mxu0
    %v3151 = vpop.f32.mrb[0].mxu0
    %3152 = vdwg.mxu0
    %3153 = vst [vmem:[#allocation2] sm:$0xff] %v3148
    // Predicated region
    $region70: #{tpu_custom_call.1} parent=1 // pred_check
      _
    $region71: #{tpu_custom_call.1} parent=1 // pred_check_branch
      %3155 = sbr.rel (0) target = $region73
    $region72: #{tpu_custom_call.1} parent=1 // pred_region
      %s3157 = ssub.s32 128, 128
      %3158 = vsyncadd [#allocation3], %s3157
      %s3160 = sshll.u32 [#allocation2], 4
      %s3161 = int_to_ptr.vmem [resolvable:$true] %s3160
      %3163 = dma.vmem_to_hbm [thread:$0]  %s3161, 128, %s17, [#allocation3]
    $region73: #{tpu_custom_call.1} parent=1 // pred_fallthru
      _
    // Predicated region
    $region74: #{tpu_custom_call.1} parent=1 // pred_check
      _
    $region75: #{tpu_custom_call.1} parent=1 // pred_check_branch
      %3165 = sbr.rel (0) target = $region77
    $region76: #{tpu_custom_call.1} parent=1 // pred_region
      %3166 = dma.done [#allocation3], 128
    $region77: #{tpu_custom_call.1} parent=1 // pred_fallthru
      _
    %3167 = vsyncpa [#allocation3], 1

</llo_original>
